<compile_context>
chip_gen: v5e
topology: v5e:2x2
jax: 0.10.0
libtpu: 0.0.40
codegen_flags: <defaults>
</compile_context>

<pallas_src>
import functools

import jax
import jax.numpy as jnp
from jax.experimental import pallas as pl
from jax.experimental.pallas import tpu as pltpu


MATMUL_DTYPE = jnp.bfloat16   # MXU operand dtype; all accumulation stays f32
LN_EPS = 1e-5                 # PyTorch LayerNorm default eps


def _gelu(x):
    # TODO(synk): PyTorch nn.GELU defaults to the exact erf GELU; the tanh
    # approximation is used in-kernel (Mosaic-safe transcendentals), max abs err ~1e-3.
    return jax.nn.gelu(x, approximate=True)


def _largest_divisor(n, candidates):
    for c in candidates:
        if c <= n and n % c == 0:
            return c
    return n


def _row_tile(m):
    # Largest row tile (multiple of 8, <= 512) that divides M; else the full M.
    return _largest_divisor(m, (512, 256, 128, 64, 32, 16, 8))


# ----------------------------- Pallas kernels -----------------------------

def _ln_linear_kernel(x_ref, g_ref, b_ref, w_ref, *rest, has_bias, act):
    """out = act( LayerNorm(x) @ W (+ bias) ) for one row tile."""
    if has_bias:
        bias_ref, o_ref = rest
    else:
        (o_ref,) = rest
    x = x_ref[...]                                             # (TM, C) f32
    mu = jnp.mean(x, axis=-1, keepdims=True)
    var = jnp.mean((x - mu) ** 2, axis=-1, keepdims=True)
    xn = (x - mu) * jax.lax.rsqrt(var + LN_EPS)
    xn = xn * g_ref[...] + b_ref[...]
    y = jnp.dot(xn.astype(MATMUL_DTYPE), w_ref[...],           # W already bf16
                preferred_element_type=jnp.float32)
    if has_bias:
        y = y + bias_ref[...]
    if act == "gelu":
        y = _gelu(y)
    o_ref[...] = y


def _add_linear_residual_kernel(a_ref, b_ref, r_ref, w_ref, bias_ref, o_ref):
    """out = resid + (a + b) @ W + bias for one row tile."""
    xin = (a_ref[...] + b_ref[...]).astype(MATMUL_DTYPE)
    y = jnp.dot(xin, w_ref[...], preferred_element_type=jnp.float32)
    o_ref[...] = r_ref[...] + y + bias_ref[...]


def _window_attn_kernel(q_ref, k_ref, v_ref, o_ref, *, scale):
    """Windowed MHSA for a tile of windows.

    q/k/v: (TG, heads, n, d) bf16; output written lane-dense as (TG, n, heads*d) f32."""
    num_heads = q_ref.shape[1]
    outs = []
    for h in range(num_heads):                                 # small static loop
        q = q_ref[:, h, :, :]
        k = k_ref[:, h, :, :]
        v = v_ref[:, h, :, :]
        s = jnp.einsum("gnd,gmd->gnm", q, k,
                       preferred_element_type=jnp.float32) * scale
        s = s - jnp.max(s, axis=-1, keepdims=True)
        p = jnp.exp(s)
        p = p * pl.reciprocal(jnp.sum(p, axis=-1, keepdims=True), approx=True)
        outs.append(jnp.einsum("gnm,gmd->gnd", p.astype(MATMUL_DTYPE), v,
                               preferred_element_type=jnp.float32))
    o_ref[...] = jnp.concatenate(outs, axis=-1)                # (TG, n, C) dense store


def _dwconv3x3_kernel(top_ref, mid_ref, bot_ref, w_ref, b_ref, *rest, fuse_ln_act):
    """Depthwise 3x3 conv on a (1, TH, W, C) row chunk.

    Halo rows come from two extra 1-row BlockSpecs (clamped at the image edges,
    masked to zero here).  The zero-padded (TH+2, W+2, C) tile is assembled
    in-register with concats (cheap: axis 0 is a leading dim, axis 1 a 1-wide
    sublane pad) -- no HBM padding copy, no scratch stores.  Optionally fuses
    the MLP norm_act (LayerNorm + GELU) epilogue."""
    if fuse_ln_act:
        g_ref, beta_ref, o_ref = rest
    else:
        (o_ref,) = rest

    j = pl.program_id(1)
    nj = pl.num_programs(1)
    TH, W, C = mid_ref.shape[1], mid_ref.shape[2], mid_ref.shape[3]

    top = jnp.where(j > 0, 1.0, 0.0) * top_ref[0, 0]           # (W, C), zero at image top
    bot = jnp.where(j < nj - 1, 1.0, 0.0) * bot_ref[0, 0]      # (W, C), zero at image bottom
    rows = jnp.concatenate([top[None], mid_ref[0], bot[None]], axis=0)   # (TH+2, W, C)
    zcol = jnp.zeros((TH + 2, 1, C), jnp.float32)
    xp = jnp.concatenate([zcol, rows, zcol], axis=1)                     # (TH+2, W+2, C)

    w = w_ref[...]                                             # (9, C) taps, row-major
    acc = jnp.zeros((TH, W, C), jnp.float32)
    for dy in range(3):
        for dx in range(3):
            acc = acc + xp[dy:dy + TH, dx:dx + W, :] * w[3 * dy + dx][None, None, :]
    y = acc + b_ref[0][None, None, :]

    if fuse_ln_act:
        mu = jnp.mean(y, axis=-1, keepdims=True)
        var = jnp.mean((y - mu) ** 2, axis=-1, keepdims=True)
        y = (y - mu) * jax.lax.rsqrt(var + LN_EPS)
        y = y * g_ref[0][None, None, :] + beta_ref[0][None, None, :]
        y = _gelu(y)
    o_ref[0] = y


# ----------------------------- kernel wrappers -----------------------------

def ln_linear(x2d, g, b, w, bias=None, act=None):
    M, C = x2d.shape
    N = w.shape[1]
    TM = _row_tile(M)
    in_specs = [
        pl.BlockSpec((TM, C), lambda i: (i, 0)),
        pl.BlockSpec((1, C), lambda i: (0, 0)),
        pl.BlockSpec((1, C), lambda i: (0, 0)),
        pl.BlockSpec((C, N), lambda i: (0, 0)),
    ]
    args = [x2d, g, b, w.astype(MATMUL_DTYPE)]     # pre-cast weight: halves its DMA
    if bias is not None:
        in_specs.append(pl.BlockSpec((1, N), lambda i: (0, 0)))
        args.append(bias)
    kern = functools.partial(_ln_linear_kernel, has_bias=bias is not None, act=act)
    return pl.pallas_call(
        kern,
        out_shape=jax.ShapeDtypeStruct((M, N), jnp.float32),
        grid=(M // TM,),
        in_specs=in_specs,
        out_specs=pl.BlockSpec((TM, N), lambda i: (i, 0)),
        compiler_params=pltpu.CompilerParams(dimension_semantics=("parallel",)),
    )(*args)


def add_linear_residual(a, b, resid, w, bias):
    M, K = a.shape
    N = w.shape[1]
    TM = _row_tile(M)
    return pl.pallas_call(
        _add_linear_residual_kernel,
        out_shape=jax.ShapeDtypeStruct((M, N), jnp.float32),
        grid=(M // TM,),
        in_specs=[
            pl.BlockSpec((TM, K), lambda i: (i, 0)),
            pl.BlockSpec((TM, K), lambda i: (i, 0)),
            pl.BlockSpec((TM, N), lambda i: (i, 0)),
            pl.BlockSpec((K, N), lambda i: (0, 0)),
            pl.BlockSpec((1, N), lambda i: (0, 0)),
        ],
        out_specs=pl.BlockSpec((TM, N), lambda i: (i, 0)),
        compiler_params=pltpu.CompilerParams(dimension_semantics=("parallel",)),
    )(a, b, resid, w.astype(MATMUL_DTYPE), bias)


def windowed_attention(qg, kg, vg, scale):
    # qg/kg/vg: (G, heads, n, d) -> output (G, n, heads*d) lane-dense
    G, h, n, d = qg.shape
    C = h * d
    TG = _largest_divisor(G, (64, 32, 16, 8, 4, 2, 1))
    kern = functools.partial(_window_attn_kernel, scale=scale)
    return pl.pallas_call(
        kern,
        out_shape=jax.ShapeDtypeStruct((G, n, C), jnp.float32),
        grid=(G // TG,),
        in_specs=[
            pl.BlockSpec((TG, h, n, d), lambda i: (i, 0, 0, 0)),
            pl.BlockSpec((TG, h, n, d), lambda i: (i, 0, 0, 0)),
            pl.BlockSpec((TG, h, n, d), lambda i: (i, 0, 0, 0)),
        ],
        out_specs=pl.BlockSpec((TG, n, C), lambda i: (i, 0, 0)),
        compiler_params=pltpu.CompilerParams(dimension_semantics=("parallel",)),
    )(qg.astype(MATMUL_DTYPE), kg.astype(MATMUL_DTYPE), vg.astype(MATMUL_DTYPE))


def dwconv3x3(x_nhwc, w9c, b1c, ln_g=None, ln_b=None):
    B, H, W, C = x_nhwc.shape
    TH = _largest_divisor(H, (32, 16, 8, 4, 2, 1))
    nj = H // TH
    fuse = ln_g is not None

    in_specs = [
        # top halo row (clamped at the image top; masked to zero in-kernel)
        pl.BlockSpec((1, 1, W, C), lambda bb, j: (bb, jnp.maximum(j * TH - 1, 0), 0, 0)),
        # current row chunk
        pl.BlockSpec((1, TH, W, C), lambda bb, j: (bb, j, 0, 0)),
        # bottom halo row (clamped at the image bottom; masked to zero in-kernel)
        pl.BlockSpec((1, 1, W, C), lambda bb, j: (bb, jnp.minimum((j + 1) * TH, H - 1), 0, 0)),
        pl.BlockSpec((9, C), lambda bb, j: (0, 0)),
        pl.BlockSpec((1, C), lambda bb, j: (0, 0)),
    ]
    args = [x_nhwc, x_nhwc, x_nhwc, w9c, b1c]
    if fuse:
        in_specs += [pl.BlockSpec((1, C), lambda bb, j: (0, 0)),
                     pl.BlockSpec((1, C), lambda bb, j: (0, 0))]
        args += [ln_g, ln_b]

    kern = functools.partial(_dwconv3x3_kernel, fuse_ln_act=fuse)
    return pl.pallas_call(
        kern,
        out_shape=jax.ShapeDtypeStruct((B, H, W, C), jnp.float32),
        grid=(B, nj),
        in_specs=in_specs,
        out_specs=pl.BlockSpec((1, TH, W, C), lambda bb, j: (bb, j, 0, 0)),
        compiler_params=pltpu.CompilerParams(
            dimension_semantics=("parallel", "parallel")),
    )(*args)


# ------------------------ grouping glue (pure reshape) ----------------------

def _img2group_heads(t, H, W, ws, num_heads):
    # (B, H*W, C) -> (B*Gh*Gw, num_heads, ws*ws, C // num_heads)   (matches img2group)
    B, N, C = t.shape
    Gh, Gw = H // ws, W // ws
    d = C // num_heads
    t = t.reshape(B, Gh, ws, Gw, ws, num_heads, d)
    t = t.transpose(0, 1, 3, 5, 2, 4, 6)                  # B, Gh, Gw, h, ws_r, ws_c, d
    return t.reshape(B * Gh * Gw, num_heads, ws * ws, d)


def _group2image(t, B, H, W, ws):
    # (B*Gh*Gw, ws*ws, C) -> (B*H*W, C)   (matches group2image with pad_opt=False)
    Gh, Gw = H // ws, W // ws
    C = t.shape[-1]
    t = t.reshape(B, Gh, Gw, ws, ws, C).transpose(0, 1, 3, 2, 4, 5)
    return t.reshape(B * H * W, C)


# ------------------------------ full forward -------------------------------

def dilated_block_forward(x, p, H, W, *, num_heads, ws):
    B, L, C = x.shape
    assert L == H * W, "flatten img_tokens has wrong size"
    # TODO(synk): the pad_opt branch of local_group (H%ws!=0 / W%ws!=0) is not implemented.
    assert H % ws == 0 and W % ws == 0
    head_dim = C // num_heads
    scale = head_dim ** (-0.5)
    x2d = x.reshape(B * L, C)

    # ---------------- attention branch ----------------
    # norm1 + qkv (no bias, matching qkv_bias=False) fused into one kernel.
    qkv = ln_linear(x2d, p["ln1_g"], p["ln1_b"], p["w_qkv"])           # (B*L, 3C)
    qkv = qkv.reshape(B, L, 3, C)
    # Matches torch: qkv.reshape(B, -1, 3, C) -> index 0/1/2 on the "3" axis.
    q, k, v = qkv[:, :, 0, :], qkv[:, :, 1, :], qkv[:, :, 2, :]

    # lepe: depthwise 3x3 conv over v (NHWC here, same math as the NCHW reference).
    lepe = dwconv3x3(v.reshape(B, H, W, C), p["lepe_w"], p["lepe_b"]).reshape(B * L, C)

    qg = _img2group_heads(q, H, W, ws, num_heads)
    kg = _img2group_heads(k, H, W, ws, num_heads)
    vg = _img2group_heads(v, H, W, ws, num_heads)
    attn = windowed_attention(qg, kg, vg, scale)                       # (G, n, C)
    attn_img = _group2image(attn, B, H, W, ws)                         # (B*L, C)

    # proj GEMM with fused "+ lepe" input add and "+ x" residual.
    x_attn = add_linear_residual(attn_img, lepe, x2d, p["w_proj"], p["b_proj"])

    # ---------------- MLP branch ----------------
    # norm2 + fc1 + GELU fused.
    y = ln_linear(x_attn, p["ln2_g"], p["ln2_b"], p["fc1_w"], bias=p["fc1_b"], act="gelu")
    hid = y.shape[-1]
    # dwconv + norm_act (LayerNorm + GELU) fused epilogue.
    y1 = dwconv3x3(y.reshape(B, H, W, hid), p["dw_w"], p["dw_b"],
                   ln_g=p["ln3_g"], ln_b=p["ln3_b"]).reshape(B * L, hid)
    # fc2 GEMM with fused "(y + y1)" input add and "+ x_attn" residual.
    out = add_linear_residual(y, y1, x_attn, p["fc2_w"], p["fc2_b"])
    return out.reshape(B, L, C)


# ------------------------------ parameter init ------------------------------

def init_params(key, dim, hidden):
    ks = jax.random.split(key, 12)

    def nrm(k, shape, s=0.02):
        return (s * jax.random.normal(k, shape)).astype(jnp.float32)

    return dict(
        ln1_g=jnp.ones((1, dim), jnp.float32),
        ln1_b=jnp.zeros((1, dim), jnp.float32),
        w_qkv=nrm(ks[0], (dim, 3 * dim)),      # torch qkv.weight.T; cols [0:C,C:2C,2C:3C]=q,k,v
        w_proj=nrm(ks[1], (dim, dim)),
        b_proj=nrm(ks[2], (1, dim)),
        lepe_w=nrm(ks[3], (9, dim)),           # depthwise 3x3 taps, row-major, per-channel
        lepe_b=nrm(ks[4], (1, dim)),
        ln2_g=jnp.ones((1, dim), jnp.float32),
        ln2_b=jnp.zeros((1, dim), jnp.float32),
        fc1_w=nrm(ks[5], (dim, hidden)),
        fc1_b=nrm(ks[6], (1, hidden)),
        dw_w=nrm(ks[7], (9, hidden)),
        dw_b=nrm(ks[8], (1, hidden)),
        ln3_g=jnp.ones((1, hidden), jnp.float32),
        ln3_b=jnp.zeros((1, hidden), jnp.float32),
        fc2_w=nrm(ks[9], (hidden, dim)),
        fc2_b=nrm(ks[10], (1, dim)),
    )


if __name__ == "__main__":
    # Small shapes consistent with DilatedBlock(dim=32, num_heads=4, ws=4, ds=4, mlp_ratio=2)
    B, H, W = 2, 8, 8
    dim, num_heads, ws = 32, 4, 4
    mlp_ratio = 2.0

    key = jax.random.PRNGKey(0)
    kx, kp = jax.random.split(key)
    x = jax.random.normal(kx, (B, H * W, dim), jnp.float32)
    params = init_params(kp, dim, int(dim * mlp_ratio))

    fwd = jax.jit(lambda xx, pp: dilated_block_forward(
        xx, pp, H, W, num_heads=num_heads, ws=ws))
    out = jax.block_until_ready(fwd(x, params))
    assert out.shape == (B, H * W, dim)
    assert bool(jnp.all(jnp.isfinite(out)))
    print("KERNEL_OK")
</pallas_src>

<mosaic_0001>
module attributes {stable_mosaic.version = 11 : i64} {
  func.func @_ln_linear_kernel(%arg0: i32, %arg1: memref<128x32xf32, #tpu.memory_space<vmem>>, %arg2: memref<1x32xf32, #tpu.memory_space<vmem>>, %arg3: memref<1x32xf32, #tpu.memory_space<vmem>>, %arg4: memref<32x96xbf16, #tpu.memory_space<vmem>>, %arg5: memref<128x96xf32, #tpu.memory_space<vmem>>) attributes {dimension_semantics = [#tpu.dimension_semantics<parallel>], iteration_bounds = array<i64: 1>, scalar_prefetch = 0 : i64, scratch_operands = 0 : i64, tpu.core_type = #tpu.core_type<tc>, window_params = [{transform_indices = @transform_0, window_bounds = array<i64: 128, 32>}, {pipeline_mode = #tpu.pipeline_mode<synchronous>, transform_indices = @transform_1, window_bounds = array<i64: 1, 32>}, {pipeline_mode = #tpu.pipeline_mode<synchronous>, transform_indices = @transform_2, window_bounds = array<i64: 1, 32>}, {pipeline_mode = #tpu.pipeline_mode<synchronous>, transform_indices = @transform_3, window_bounds = array<i64: 32, 96>}, {transform_indices = @transform_4, window_bounds = array<i64: 128, 96>}]} {
    %c0 = arith.constant 0 : index
    %c0_0 = arith.constant 0 : index
    %0 = vector.load %arg1[%c0, %c0_0] : memref<128x32xf32, #tpu.memory_space<vmem>>, vector<128x32xf32>
    %cst = arith.constant dense<0.000000e+00> : vector<128xf32>
    %1 = vector.multi_reduction <add>, %0, %cst [1] : vector<128x32xf32> to vector<128xf32>
    %2 = vector.shape_cast %1 : vector<128xf32> to vector<128x1xf32>
    %cst_1 = arith.constant 3.200000e+01 : f32
    %3 = vector.broadcast %cst_1 : f32 to vector<128x1xf32>
    %4 = arith.divf %2, %3 : vector<128x1xf32>
    %5 = vector.broadcast %4 : vector<128x1xf32> to vector<128x32xf32>
    %6 = arith.subf %0, %5 : vector<128x32xf32>
    %7 = arith.mulf %6, %6 : vector<128x32xf32>
    %cst_2 = arith.constant dense<0.000000e+00> : vector<128xf32>
    %8 = vector.multi_reduction <add>, %7, %cst_2 [1] : vector<128x32xf32> to vector<128xf32>
    %9 = vector.shape_cast %8 : vector<128xf32> to vector<128x1xf32>
    %cst_3 = arith.constant 3.200000e+01 : f32
    %10 = vector.broadcast %cst_3 : f32 to vector<128x1xf32>
    %11 = arith.divf %9, %10 : vector<128x1xf32>
    %12 = vector.broadcast %4 : vector<128x1xf32> to vector<128x32xf32>
    %13 = arith.subf %0, %12 : vector<128x32xf32>
    %cst_4 = arith.constant 9.99999974E-6 : f32
    %14 = vector.broadcast %cst_4 : f32 to vector<128x1xf32>
    %15 = arith.addf %11, %14 : vector<128x1xf32>
    %16 = math.rsqrt %15 : vector<128x1xf32>
    %17 = vector.broadcast %16 : vector<128x1xf32> to vector<128x32xf32>
    %18 = arith.mulf %13, %17 : vector<128x32xf32>
    %c0_5 = arith.constant 0 : index
    %c0_6 = arith.constant 0 : index
    %19 = vector.load %arg2[%c0_5, %c0_6] : memref<1x32xf32, #tpu.memory_space<vmem>>, vector<1x32xf32>
    %20 = vector.broadcast %19 : vector<1x32xf32> to vector<128x32xf32>
    %21 = arith.mulf %18, %20 : vector<128x32xf32>
    %c0_7 = arith.constant 0 : index
    %c0_8 = arith.constant 0 : index
    %22 = vector.load %arg3[%c0_7, %c0_8] : memref<1x32xf32, #tpu.memory_space<vmem>>, vector<1x32xf32>
    %23 = vector.broadcast %22 : vector<1x32xf32> to vector<128x32xf32>
    %24 = arith.addf %21, %23 : vector<128x32xf32>
    %25 = arith.truncf %24 : vector<128x32xf32> to vector<128x32xbf16>
    %c0_9 = arith.constant 0 : index
    %c0_10 = arith.constant 0 : index
    %26 = vector.load %arg4[%c0_9, %c0_10] : memref<32x96xbf16, #tpu.memory_space<vmem>>, vector<32x96xbf16>
    %cst_11 = arith.constant dense<0.000000e+00> : vector<128x96xf32>
    %27 = tpu.matmul %25, %26, %cst_11 {dimension_numbers = #tpu.dot_dimension_numbers<[1], [0], [0], [1], [0, 0, 1, 1], [], []>} : vector<128x32xbf16>, vector<32x96xbf16>, vector<128x96xf32> -> vector<128x96xf32>
    %c0_12 = arith.constant 0 : index
    %c0_13 = arith.constant 0 : index
    %28 = vector.load %arg5[%c0_12, %c0_13] : memref<128x96xf32, #tpu.memory_space<vmem>>, vector<128x96xf32>
    tpu.vector_store %arg5[%c0_12, %c0_13], %27 {strides = array<i32>} : memref<128x96xf32, #tpu.memory_space<vmem>>, vector<128x96xf32>,
    return
  }
  func.func @transform_0(%arg0: i32) -> (i32, i32) {
    %c0_i32 = arith.constant 0 : i32
    %c0_i32_0 = arith.constant 0 : i32
    return %arg0, %c0_i32 : i32, i32
  }
  func.func @transform_1(%arg0: i32) -> (i32, i32) {
    %c0_i32 = arith.constant 0 : i32
    %c0_i32_0 = arith.constant 0 : i32
    %c0_i32_1 = arith.constant 0 : i32
    return %c0_i32, %c0_i32_0 : i32, i32
  }
  func.func @transform_2(%arg0: i32) -> (i32, i32) {
    %c0_i32 = arith.constant 0 : i32
    %c0_i32_0 = arith.constant 0 : i32
    %c0_i32_1 = arith.constant 0 : i32
    return %c0_i32, %c0_i32_0 : i32, i32
  }
  func.func @transform_3(%arg0: i32) -> (i32, i32) {
    %c0_i32 = arith.constant 0 : i32
    %c0_i32_0 = arith.constant 0 : i32
    %c0_i32_1 = arith.constant 0 : i32
    return %c0_i32, %c0_i32_0 : i32, i32
  }
  func.func @transform_4(%arg0: i32) -> (i32, i32) {
    %c0_i32 = arith.constant 0 : i32
    %c0_i32_0 = arith.constant 0 : i32
    return %arg0, %c0_i32 : i32, i32
  }
}

module attributes {stable_mosaic.version = 11 : i64} {
  func.func @_dwconv3x3_kernel(%arg0: i32, %arg1: i32, %arg2: memref<1x1x8x32xf32, #tpu.memory_space<vmem>>, %arg3: memref<1x8x8x32xf32, #tpu.memory_space<vmem>>, %arg4: memref<1x1x8x32xf32, #tpu.memory_space<vmem>>, %arg5: memref<9x32xf32, #tpu.memory_space<vmem>>, %arg6: memref<1x32xf32, #tpu.memory_space<vmem>>, %arg7: memref<1x8x8x32xf32, #tpu.memory_space<vmem>>) attributes {dimension_semantics = [#tpu.dimension_semantics<parallel>, #tpu.dimension_semantics<parallel>], iteration_bounds = array<i64: 2, 1>, scalar_prefetch = 0 : i64, scratch_operands = 0 : i64, tpu.core_type = #tpu.core_type<tc>, window_params = [{transform_indices = @transform_0, window_bounds = array<i64: 1, 1, 8, 32>}, {transform_indices = @transform_1, window_bounds = array<i64: 1, 8, 8, 32>}, {transform_indices = @transform_2, window_bounds = array<i64: 1, 1, 8, 32>}, {pipeline_mode = #tpu.pipeline_mode<synchronous>, transform_indices = @transform_3, window_bounds = array<i64: 9, 32>}, {pipeline_mode = #tpu.pipeline_mode<synchronous>, transform_indices = @transform_4, window_bounds = array<i64: 1, 32>}, {transform_indices = @transform_5, window_bounds = array<i64: 1, 8, 8, 32>}]} {
    %c0_i32 = arith.constant 0 : i32
    %0 = arith.cmpi sgt, %arg1, %c0_i32 : i32
    %cst = arith.constant 1.000000e+00 : f32
    %cst_0 = arith.constant 0.000000e+00 : f32
    %1 = arith.select %0, %cst, %cst_0 : f32
    %c0 = arith.constant 0 : index
    %c0_1 = arith.constant 0 : index
    %c0_2 = arith.constant 0 : index
    %c0_3 = arith.constant 0 : index
    %2 = vector.load %arg2[%c0, %c0_1, %c0_2, %c0_3] : memref<1x1x8x32xf32, #tpu.memory_space<vmem>>, vector<1x1x8x32xf32>
    %3 = vector.shape_cast %2 : vector<1x1x8x32xf32> to vector<8x32xf32>
    %4 = vector.broadcast %1 : f32 to vector<8x32xf32>
    %5 = arith.mulf %4, %3 : vector<8x32xf32>
    %c0_i32_4 = arith.constant 0 : i32
    %6 = arith.cmpi slt, %arg1, %c0_i32_4 : i32
    %cst_5 = arith.constant 1.000000e+00 : f32
    %cst_6 = arith.constant 0.000000e+00 : f32
    %7 = arith.select %6, %cst_5, %cst_6 : f32
    %c0_7 = arith.constant 0 : index
    %c0_8 = arith.constant 0 : index
    %c0_9 = arith.constant 0 : index
    %c0_10 = arith.constant 0 : index
    %8 = vector.load %arg4[%c0_7, %c0_8, %c0_9, %c0_10] : memref<1x1x8x32xf32, #tpu.memory_space<vmem>>, vector<1x1x8x32xf32>
    %9 = vector.shape_cast %8 : vector<1x1x8x32xf32> to vector<8x32xf32>
    %10 = vector.broadcast %7 : f32 to vector<8x32xf32>
    %11 = arith.mulf %10, %9 : vector<8x32xf32>
    %12 = vector.shape_cast %5 : vector<8x32xf32> to vector<1x8x32xf32>
    %c0_11 = arith.constant 0 : index
    %c0_12 = arith.constant 0 : index
    %c0_13 = arith.constant 0 : index
    %c0_14 = arith.constant 0 : index
    %13 = vector.load %arg3[%c0_11, %c0_12, %c0_13, %c0_14] : memref<1x8x8x32xf32, #tpu.memory_space<vmem>>, vector<1x8x8x32xf32>
    %14 = vector.shape_cast %13 : vector<1x8x8x32xf32> to vector<8x8x32xf32>
    %15 = vector.shape_cast %11 : vector<8x32xf32> to vector<1x8x32xf32>
    %16 = tpu.concatenate %12, %14, %15 in 0 : vector<1x8x32xf32>, vector<8x8x32xf32>, vector<1x8x32xf32> -> vector<10x8x32xf32>
    %cst_15 = arith.constant 0.000000e+00 : f32
    %17 = vector.broadcast %cst_15 : f32 to vector<10x1x32xf32>
    %18 = tpu.concatenate %17, %16, %17 in 1 : vector<10x1x32xf32>, vector<10x8x32xf32>, vector<10x1x32xf32> -> vector<10x10x32xf32>
    %c0_16 = arith.constant 0 : index
    %c0_17 = arith.constant 0 : index
    %19 = vector.load %arg5[%c0_16, %c0_17] : memref<9x32xf32, #tpu.memory_space<vmem>>, vector<9x32xf32>
    %cst_18 = arith.constant 0.000000e+00 : f32
    %20 = vector.broadcast %cst_18 : f32 to vector<8x8x32xf32>
    %21 = vector.extract_strided_slice %18 {offsets = [0, 0, 0], sizes = [8, 8, 32], strides = [1, 1, 1]} : vector<10x10x32xf32> to vector<8x8x32xf32>
    %22 = vector.extract_strided_slice %19 {offsets = [0, 0], sizes = [1, 32], strides = [1, 1]} : vector<9x32xf32> to vector<1x32xf32>
    %23 = vector.shape_cast %22 : vector<1x32xf32> to vector<32xf32>
    %24 = vector.shape_cast %23 : vector<32xf32> to vector<1x1x32xf32>
    %25 = vector.broadcast %24 : vector<1x1x32xf32> to vector<8x8x32xf32>
    %26 = arith.mulf %21, %25 : vector<8x8x32xf32>
    %27 = arith.addf %20, %26 : vector<8x8x32xf32>
    %28 = vector.extract_strided_slice %18 {offsets = [0, 1, 0], sizes = [8, 8, 32], strides = [1, 1, 1]} : vector<10x10x32xf32> to vector<8x8x32xf32>
    %29 = vector.extract_strided_slice %19 {offsets = [1, 0], sizes = [1, 32], strides = [1, 1]} : vector<9x32xf32> to vector<1x32xf32>
    %30 = vector.shape_cast %29 : vector<1x32xf32> to vector<32xf32>
    %31 = vector.shape_cast %30 : vector<32xf32> to vector<1x1x32xf32>
    %32 = vector.broadcast %31 : vector<1x1x32xf32> to vector<8x8x32xf32>
    %33 = arith.mulf %28, %32 : vector<8x8x32xf32>
    %34 = arith.addf %27, %33 : vector<8x8x32xf32>
    %35 = vector.extract_strided_slice %18 {offsets = [0, 2, 0], sizes = [8, 8, 32], strides = [1, 1, 1]} : vector<10x10x32xf32> to vector<8x8x32xf32>
    %36 = vector.extract_strided_slice %19 {offsets = [2, 0], sizes = [1, 32], strides = [1, 1]} : vector<9x32xf32> to vector<1x32xf32>
    %37 = vector.shape_cast %36 : vector<1x32xf32> to vector<32xf32>
    %38 = vector.shape_cast %37 : vector<32xf32> to vector<1x1x32xf32>
    %39 = vector.broadcast %38 : vector<1x1x32xf32> to vector<8x8x32xf32>
    %40 = arith.mulf %35, %39 : vector<8x8x32xf32>
    %41 = arith.addf %34, %40 : vector<8x8x32xf32>
    %42 = vector.extract_strided_slice %18 {offsets = [1, 0, 0], sizes = [8, 8, 32], strides = [1, 1, 1]} : vector<10x10x32xf32> to vector<8x8x32xf32>
    %43 = vector.extract_strided_slice %19 {offsets = [3, 0], sizes = [1, 32], strides = [1, 1]} : vector<9x32xf32> to vector<1x32xf32>
    %44 = vector.shape_cast %43 : vector<1x32xf32> to vector<32xf32>
    %45 = vector.shape_cast %44 : vector<32xf32> to vector<1x1x32xf32>
    %46 = vector.broadcast %45 : vector<1x1x32xf32> to vector<8x8x32xf32>
    %47 = arith.mulf %42, %46 : vector<8x8x32xf32>
    %48 = arith.addf %41, %47 : vector<8x8x32xf32>
    %49 = vector.extract_strided_slice %18 {offsets = [1, 1, 0], sizes = [8, 8, 32], strides = [1, 1, 1]} : vector<10x10x32xf32> to vector<8x8x32xf32>
    %50 = vector.extract_strided_slice %19 {offsets = [4, 0], sizes = [1, 32], strides = [1, 1]} : vector<9x32xf32> to vector<1x32xf32>
    %51 = vector.shape_cast %50 : vector<1x32xf32> to vector<32xf32>
    %52 = vector.shape_cast %51 : vector<32xf32> to vector<1x1x32xf32>
    %53 = vector.broadcast %52 : vector<1x1x32xf32> to vector<8x8x32xf32>
    %54 = arith.mulf %49, %53 : vector<8x8x32xf32>
    %55 = arith.addf %48, %54 : vector<8x8x32xf32>
    %56 = vector.extract_strided_slice %18 {offsets = [1, 2, 0], sizes = [8, 8, 32], strides = [1, 1, 1]} : vector<10x10x32xf32> to vector<8x8x32xf32>
    %57 = vector.extract_strided_slice %19 {offsets = [5, 0], sizes = [1, 32], strides = [1, 1]} : vector<9x32xf32> to vector<1x32xf32>
    %58 = vector.shape_cast %57 : vector<1x32xf32> to vector<32xf32>
    %59 = vector.shape_cast %58 : vector<32xf32> to vector<1x1x32xf32>
    %60 = vector.broadcast %59 : vector<1x1x32xf32> to vector<8x8x32xf32>
    %61 = arith.mulf %56, %60 : vector<8x8x32xf32>
    %62 = arith.addf %55, %61 : vector<8x8x32xf32>
    %63 = vector.extract_strided_slice %18 {offsets = [2, 0, 0], sizes = [8, 8, 32], strides = [1, 1, 1]} : vector<10x10x32xf32> to vector<8x8x32xf32>
    %64 = vector.extract_strided_slice %19 {offsets = [6, 0], sizes = [1, 32], strides = [1, 1]} : vector<9x32xf32> to vector<1x32xf32>
    %65 = vector.shape_cast %64 : vector<1x32xf32> to vector<32xf32>
    %66 = vector.shape_cast %65 : vector<32xf32> to vector<1x1x32xf32>
    %67 = vector.broadcast %66 : vector<1x1x32xf32> to vector<8x8x32xf32>
    %68 = arith.mulf %63, %67 : vector<8x8x32xf32>
    %69 = arith.addf %62, %68 : vector<8x8x32xf32>
    %70 = vector.extract_strided_slice %18 {offsets = [2, 1, 0], sizes = [8, 8, 32], strides = [1, 1, 1]} : vector<10x10x32xf32> to vector<8x8x32xf32>
    %71 = vector.extract_strided_slice %19 {offsets = [7, 0], sizes = [1, 32], strides = [1, 1]} : vector<9x32xf32> to vector<1x32xf32>
    %72 = vector.shape_cast %71 : vector<1x32xf32> to vector<32xf32>
    %73 = vector.shape_cast %72 : vector<32xf32> to vector<1x1x32xf32>
    %74 = vector.broadcast %73 : vector<1x1x32xf32> to vector<8x8x32xf32>
    %75 = arith.mulf %70, %74 : vector<8x8x32xf32>
    %76 = arith.addf %69, %75 : vector<8x8x32xf32>
    %77 = vector.extract_strided_slice %18 {offsets = [2, 2, 0], sizes = [8, 8, 32], strides = [1, 1, 1]} : vector<10x10x32xf32> to vector<8x8x32xf32>
    %78 = vector.extract_strided_slice %19 {offsets = [8, 0], sizes = [1, 32], strides = [1, 1]} : vector<9x32xf32> to vector<1x32xf32>
    %79 = vector.shape_cast %78 : vector<1x32xf32> to vector<32xf32>
    %80 = vector.shape_cast %79 : vector<32xf32> to vector<1x1x32xf32>
    %81 = vector.broadcast %80 : vector<1x1x32xf32> to vector<8x8x32xf32>
    %82 = arith.mulf %77, %81 : vector<8x8x32xf32>
    %83 = arith.addf %76, %82 : vector<8x8x32xf32>
    %c0_19 = arith.constant 0 : index
    %c0_20 = arith.constant 0 : index
    %84 = vector.load %arg6[%c0_19, %c0_20] : memref<1x32xf32, #tpu.memory_space<vmem>>, vector<1x32xf32>
    %85 = vector.shape_cast %84 : vector<1x32xf32> to vector<32xf32>
    %86 = vector.shape_cast %85 : vector<32xf32> to vector<1x1x32xf32>
    %87 = vector.broadcast %86 : vector<1x1x32xf32> to vector<8x8x32xf32>
    %88 = arith.addf %83, %87 : vector<8x8x32xf32>
    %c0_21 = arith.constant 0 : index
    %c0_22 = arith.constant 0 : index
    %c0_23 = arith.constant 0 : index
    %c0_24 = arith.constant 0 : index
    %89 = vector.load %arg7[%c0_21, %c0_22, %c0_23, %c0_24] : memref<1x8x8x32xf32, #tpu.memory_space<vmem>>, vector<1x8x8x32xf32>
    %90 = vector.shape_cast %89 : vector<1x8x8x32xf32> to vector<8x8x32xf32>
    %91 = vector.shape_cast %88 : vector<8x8x32xf32> to vector<1x8x8x32xf32>
    tpu.vector_store %arg7[%c0_21, %c0_22, %c0_23, %c0_24], %91 {strides = array<i32>} : memref<1x8x8x32xf32, #tpu.memory_space<vmem>>, vector<1x8x8x32xf32>,
    return
  }
  func.func @transform_0(%arg0: i32, %arg1: i32) -> (i32, i32, i32, i32) {
    %c8_i32 = arith.constant 8 : i32
    %0 = arith.muli %arg1, %c8_i32 : i32
    %c1_i32 = arith.constant 1 : i32
    %1 = arith.subi %0, %c1_i32 : i32
    %c0_i32 = arith.constant 0 : i32
    %2 = arith.maxsi %1, %c0_i32 : i32
    %c0_i32_0 = arith.constant 0 : i32
    %c0_i32_1 = arith.constant 0 : i32
    %c0_i32_2 = arith.constant 0 : i32
    return %arg0, %2, %c0_i32_0, %c0_i32_1 : i32, i32, i32, i32
  }
  func.func @transform_1(%arg0: i32, %arg1: i32) -> (i32, i32, i32, i32) {
    %c0_i32 = arith.constant 0 : i32
    %c0_i32_0 = arith.constant 0 : i32
    %c0_i32_1 = arith.constant 0 : i32
    return %arg0, %arg1, %c0_i32, %c0_i32_0 : i32, i32, i32, i32
  }
  func.func @transform_2(%arg0: i32, %arg1: i32) -> (i32, i32, i32, i32) {
    %c1_i32 = arith.constant 1 : i32
    %0 = arith.addi %arg1, %c1_i32 : i32
    %c8_i32 = arith.constant 8 : i32
    %1 = arith.muli %0, %c8_i32 : i32
    %c7_i32 = arith.constant 7 : i32
    %2 = arith.minsi %1, %c7_i32 : i32
    %c0_i32 = arith.constant 0 : i32
    %c0_i32_0 = arith.constant 0 : i32
    %c0_i32_1 = arith.constant 0 : i32
    return %arg0, %2, %c0_i32, %c0_i32_0 : i32, i32, i32, i32
  }
  func.func @transform_3(%arg0: i32, %arg1: i32) -> (i32, i32) {
    %c0_i32 = arith.constant 0 : i32
    %c0_i32_0 = arith.constant 0 : i32
    %c0_i32_1 = arith.constant 0 : i32
    return %c0_i32, %c0_i32_0 : i32, i32
  }
  func.func @transform_4(%arg0: i32, %arg1: i32) -> (i32, i32) {
    %c0_i32 = arith.constant 0 : i32
    %c0_i32_0 = arith.constant 0 : i32
    %c0_i32_1 = arith.constant 0 : i32
    return %c0_i32, %c0_i32_0 : i32, i32
  }
  func.func @transform_5(%arg0: i32, %arg1: i32) -> (i32, i32, i32, i32) {
    %c0_i32 = arith.constant 0 : i32
    %c0_i32_0 = arith.constant 0 : i32
    %c0_i32_1 = arith.constant 0 : i32
    return %arg0, %arg1, %c0_i32, %c0_i32_0 : i32, i32, i32, i32
  }
}

module attributes {stable_mosaic.version = 11 : i64} {
  func.func @_window_attn_kernel(%arg0: i32, %arg1: memref<8x4x16x8xbf16, #tpu.memory_space<vmem>>, %arg2: memref<8x4x16x8xbf16, #tpu.memory_space<vmem>>, %arg3: memref<8x4x16x8xbf16, #tpu.memory_space<vmem>>, %arg4: memref<8x16x32xf32, #tpu.memory_space<vmem>>) attributes {dimension_semantics = [#tpu.dimension_semantics<parallel>], iteration_bounds = array<i64: 1>, scalar_prefetch = 0 : i64, scratch_operands = 0 : i64, tpu.core_type = #tpu.core_type<tc>, window_params = [{transform_indices = @transform_0, window_bounds = array<i64: 8, 4, 16, 8>}, {transform_indices = @transform_1, window_bounds = array<i64: 8, 4, 16, 8>}, {transform_indices = @transform_2, window_bounds = array<i64: 8, 4, 16, 8>}, {transform_indices = @transform_3, window_bounds = array<i64: 8, 16, 32>}]} {
    %c0 = arith.constant 0 : index
    %c0_0 = arith.constant 0 : index
    %c0_1 = arith.constant 0 : index
    %c0_2 = arith.constant 0 : index
    %0 = vector.load %arg1[%c0, %c0_0, %c0_1, %c0_2] : memref<8x4x16x8xbf16, #tpu.memory_space<vmem>>, vector<8x1x16x8xbf16>
    %1 = vector.shape_cast %0 : vector<8x1x16x8xbf16> to vector<8x16x8xbf16>
    %c0_3 = arith.constant 0 : index
    %c0_4 = arith.constant 0 : index
    %c0_5 = arith.constant 0 : index
    %c0_6 = arith.constant 0 : index
    %2 = vector.load %arg2[%c0_3, %c0_4, %c0_5, %c0_6] : memref<8x4x16x8xbf16, #tpu.memory_space<vmem>>, vector<8x1x16x8xbf16>
    %3 = vector.shape_cast %2 : vector<8x1x16x8xbf16> to vector<8x16x8xbf16>
    %c0_7 = arith.constant 0 : index
    %c0_8 = arith.constant 0 : index
    %c0_9 = arith.constant 0 : index
    %c0_10 = arith.constant 0 : index
    %4 = vector.load %arg3[%c0_7, %c0_8, %c0_9, %c0_10] : memref<8x4x16x8xbf16, #tpu.memory_space<vmem>>, vector<8x1x16x8xbf16>
    %5 = vector.shape_cast %4 : vector<8x1x16x8xbf16> to vector<8x16x8xbf16>
    "tpu.trace_start"() <{level = 10 : i32, message = "gnd,gmd->gnm"}> : () -> ()
    %cst = arith.constant dense<0.000000e+00> : vector<8x16x16xf32>
    %6 = tpu.matmul %1, %3, %cst {dimension_numbers = #tpu.dot_dimension_numbers<[2], [2], [1], [1], [0, 0, 0, 1, 1, 1], [0], [0]>} : vector<8x16x8xbf16>, vector<8x16x8xbf16>, vector<8x16x16xf32> -> vector<8x16x16xf32>
    "tpu.trace_stop"() : () -> ()
    %cst_11 = arith.constant 0.353553385 : f32
    %7 = vector.broadcast %cst_11 : f32 to vector<8x16x16xf32>
    %8 = arith.mulf %6, %7 : vector<8x16x16xf32>
    %cst_12 = arith.constant dense<0xFF800000> : vector<8x16xf32>
    %9 = vector.multi_reduction <maximumf>, %8, %cst_12 [2] : vector<8x16x16xf32> to vector<8x16xf32>
    %10 = vector.shape_cast %9 : vector<8x16xf32> to vector<8x16x1xf32>
    %11 = vector.broadcast %10 : vector<8x16x1xf32> to vector<8x16x16xf32>
    %12 = arith.subf %8, %11 : vector<8x16x16xf32>
    %13 = math.exp %12 : vector<8x16x16xf32>
    %cst_13 = arith.constant dense<0.000000e+00> : vector<8x16xf32>
    %14 = vector.multi_reduction <add>, %13, %cst_13 [2] : vector<8x16x16xf32> to vector<8x16xf32>
    %15 = vector.shape_cast %14 : vector<8x16xf32> to vector<8x16x1xf32>
    %16 = tpu.reciprocal %15 {approx = true} : vector<8x16x1xf32> -> vector<8x16x1xf32>
    %17 = vector.broadcast %16 : vector<8x16x1xf32> to vector<8x16x16xf32>
    %18 = arith.mulf %13, %17 : vector<8x16x16xf32>
    %19 = arith.truncf %18 : vector<8x16x16xf32> to vector<8x16x16xbf16>
    "tpu.trace_start"() <{level = 10 : i32, message = "gnm,gmd->gnd"}> : () -> ()
    %cst_14 = arith.constant dense<0.000000e+00> : vector<8x16x8xf32>
    %20 = tpu.matmul %19, %5, %cst_14 {dimension_numbers = #tpu.dot_dimension_numbers<[2], [1], [1], [2], [0, 0, 0, 1, 1, 2], [0], [0]>} : vector<8x16x16xbf16>, vector<8x16x8xbf16>, vector<8x16x8xf32> -> vector<8x16x8xf32>
    "tpu.trace_stop"() : () -> ()
    %c0_15 = arith.constant 0 : index
    %c1 = arith.constant 1 : index
    %c0_16 = arith.constant 0 : index
    %c0_17 = arith.constant 0 : index
    %21 = vector.load %arg1[%c0_15, %c1, %c0_16, %c0_17] : memref<8x4x16x8xbf16, #tpu.memory_space<vmem>>, vector<8x1x16x8xbf16>
    %22 = vector.shape_cast %21 : vector<8x1x16x8xbf16> to vector<8x16x8xbf16>
    %c0_18 = arith.constant 0 : index
    %c1_19 = arith.constant 1 : index
    %c0_20 = arith.constant 0 : index
    %c0_21 = arith.constant 0 : index
    %23 = vector.load %arg2[%c0_18, %c1_19, %c0_20, %c0_21] : memref<8x4x16x8xbf16, #tpu.memory_space<vmem>>, vector<8x1x16x8xbf16>
    %24 = vector.shape_cast %23 : vector<8x1x16x8xbf16> to vector<8x16x8xbf16>
    %c0_22 = arith.constant 0 : index
    %c1_23 = arith.constant 1 : index
    %c0_24 = arith.constant 0 : index
    %c0_25 = arith.constant 0 : index
    %25 = vector.load %arg3[%c0_22, %c1_23, %c0_24, %c0_25] : memref<8x4x16x8xbf16, #tpu.memory_space<vmem>>, vector<8x1x16x8xbf16>
    %26 = vector.shape_cast %25 : vector<8x1x16x8xbf16> to vector<8x16x8xbf16>
    "tpu.trace_start"() <{level = 10 : i32, message = "gnd,gmd->gnm"}> : () -> ()
    %cst_26 = arith.constant dense<0.000000e+00> : vector<8x16x16xf32>
    %27 = tpu.matmul %22, %24, %cst_26 {dimension_numbers = #tpu.dot_dimension_numbers<[2], [2], [1], [1], [0, 0, 0, 1, 1, 1], [0], [0]>} : vector<8x16x8xbf16>, vector<8x16x8xbf16>, vector<8x16x16xf32> -> vector<8x16x16xf32>
    "tpu.trace_stop"() : () -> ()
    %cst_27 = arith.constant 0.353553385 : f32
    %28 = vector.broadcast %cst_27 : f32 to vector<8x16x16xf32>
    %29 = arith.mulf %27, %28 : vector<8x16x16xf32>
    %cst_28 = arith.constant dense<0xFF800000> : vector<8x16xf32>
    %30 = vector.multi_reduction <maximumf>, %29, %cst_28 [2] : vector<8x16x16xf32> to vector<8x16xf32>
    %31 = vector.shape_cast %30 : vector<8x16xf32> to vector<8x16x1xf32>
    %32 = vector.broadcast %31 : vector<8x16x1xf32> to vector<8x16x16xf32>
    %33 = arith.subf %29, %32 : vector<8x16x16xf32>
    %34 = math.exp %33 : vector<8x16x16xf32>
    %cst_29 = arith.constant dense<0.000000e+00> : vector<8x16xf32>
    %35 = vector.multi_reduction <add>, %34, %cst_29 [2] : vector<8x16x16xf32> to vector<8x16xf32>
    %36 = vector.shape_cast %35 : vector<8x16xf32> to vector<8x16x1xf32>
    %37 = tpu.reciprocal %36 {approx = true} : vector<8x16x1xf32> -> vector<8x16x1xf32>
    %38 = vector.broadcast %37 : vector<8x16x1xf32> to vector<8x16x16xf32>
    %39 = arith.mulf %34, %38 : vector<8x16x16xf32>
    %40 = arith.truncf %39 : vector<8x16x16xf32> to vector<8x16x16xbf16>
    "tpu.trace_start"() <{level = 10 : i32, message = "gnm,gmd->gnd"}> : () -> ()
    %cst_30 = arith.constant dense<0.000000e+00> : vector<8x16x8xf32>
    %41 = tpu.matmul %40, %26, %cst_30 {dimension_numbers = #tpu.dot_dimension_numbers<[2], [1], [1], [2], [0, 0, 0, 1, 1, 2], [0], [0]>} : vector<8x16x16xbf16>, vector<8x16x8xbf16>, vector<8x16x8xf32> -> vector<8x16x8xf32>
    "tpu.trace_stop"() : () -> ()
    %c0_31 = arith.constant 0 : index
    %c2 = arith.constant 2 : index
    %c0_32 = arith.constant 0 : index
    %c0_33 = arith.constant 0 : index
    %42 = vector.load %arg1[%c0_31, %c2, %c0_32, %c0_33] : memref<8x4x16x8xbf16, #tpu.memory_space<vmem>>, vector<8x1x16x8xbf16>
    %43 = vector.shape_cast %42 : vector<8x1x16x8xbf16> to vector<8x16x8xbf16>
    %c0_34 = arith.constant 0 : index
    %c2_35 = arith.constant 2 : index
    %c0_36 = arith.constant 0 : index
    %c0_37 = arith.constant 0 : index
    %44 = vector.load %arg2[%c0_34, %c2_35, %c0_36, %c0_37] : memref<8x4x16x8xbf16, #tpu.memory_space<vmem>>, vector<8x1x16x8xbf16>
    %45 = vector.shape_cast %44 : vector<8x1x16x8xbf16> to vector<8x16x8xbf16>
    %c0_38 = arith.constant 0 : index
    %c2_39 = arith.constant 2 : index
    %c0_40 = arith.constant 0 : index
    %c0_41 = arith.constant 0 : index
    %46 = vector.load %arg3[%c0_38, %c2_39, %c0_40, %c0_41] : memref<8x4x16x8xbf16, #tpu.memory_space<vmem>>, vector<8x1x16x8xbf16>
    %47 = vector.shape_cast %46 : vector<8x1x16x8xbf16> to vector<8x16x8xbf16>
    "tpu.trace_start"() <{level = 10 : i32, message = "gnd,gmd->gnm"}> : () -> ()
    %cst_42 = arith.constant dense<0.000000e+00> : vector<8x16x16xf32>
    %48 = tpu.matmul %43, %45, %cst_42 {dimension_numbers = #tpu.dot_dimension_numbers<[2], [2], [1], [1], [0, 0, 0, 1, 1, 1], [0], [0]>} : vector<8x16x8xbf16>, vector<8x16x8xbf16>, vector<8x16x16xf32> -> vector<8x16x16xf32>
    "tpu.trace_stop"() : () -> ()
    %cst_43 = arith.constant 0.353553385 : f32
    %49 = vector.broadcast %cst_43 : f32 to vector<8x16x16xf32>
    %50 = arith.mulf %48, %49 : vector<8x16x16xf32>
    %cst_44 = arith.constant dense<0xFF800000> : vector<8x16xf32>
    %51 = vector.multi_reduction <maximumf>, %50, %cst_44 [2] : vector<8x16x16xf32> to vector<8x16xf32>
    %52 = vector.shape_cast %51 : vector<8x16xf32> to vector<8x16x1xf32>
    %53 = vector.broadcast %52 : vector<8x16x1xf32> to vector<8x16x16xf32>
    %54 = arith.subf %50, %53 : vector<8x16x16xf32>
    %55 = math.exp %54 : vector<8x16x16xf32>
    %cst_45 = arith.constant dense<0.000000e+00> : vector<8x16xf32>
    %56 = vector.multi_reduction <add>, %55, %cst_45 [2] : vector<8x16x16xf32> to vector<8x16xf32>
    %57 = vector.shape_cast %56 : vector<8x16xf32> to vector<8x16x1xf32>
    %58 = tpu.reciprocal %57 {approx = true} : vector<8x16x1xf32> -> vector<8x16x1xf32>
    %59 = vector.broadcast %58 : vector<8x16x1xf32> to vector<8x16x16xf32>
    %60 = arith.mulf %55, %59 : vector<8x16x16xf32>
    %61 = arith.truncf %60 : vector<8x16x16xf32> to vector<8x16x16xbf16>
    "tpu.trace_start"() <{level = 10 : i32, message = "gnm,gmd->gnd"}> : () -> ()
    %cst_46 = arith.constant dense<0.000000e+00> : vector<8x16x8xf32>
    %62 = tpu.matmul %61, %47, %cst_46 {dimension_numbers = #tpu.dot_dimension_numbers<[2], [1], [1], [2], [0, 0, 0, 1, 1, 2], [0], [0]>} : vector<8x16x16xbf16>, vector<8x16x8xbf16>, vector<8x16x8xf32> -> vector<8x16x8xf32>
    "tpu.trace_stop"() : () -> ()
    %c0_47 = arith.constant 0 : index
    %c3 = arith.constant 3 : index
    %c0_48 = arith.constant 0 : index
    %c0_49 = arith.constant 0 : index
    %63 = vector.load %arg1[%c0_47, %c3, %c0_48, %c0_49] : memref<8x4x16x8xbf16, #tpu.memory_space<vmem>>, vector<8x1x16x8xbf16>
    %64 = vector.shape_cast %63 : vector<8x1x16x8xbf16> to vector<8x16x8xbf16>
    %c0_50 = arith.constant 0 : index
    %c3_51 = arith.constant 3 : index
    %c0_52 = arith.constant 0 : index
    %c0_53 = arith.constant 0 : index
    %65 = vector.load %arg2[%c0_50, %c3_51, %c0_52, %c0_53] : memref<8x4x16x8xbf16, #tpu.memory_space<vmem>>, vector<8x1x16x8xbf16>
    %66 = vector.shape_cast %65 : vector<8x1x16x8xbf16> to vector<8x16x8xbf16>
    %c0_54 = arith.constant 0 : index
    %c3_55 = arith.constant 3 : index
    %c0_56 = arith.constant 0 : index
    %c0_57 = arith.constant 0 : index
    %67 = vector.load %arg3[%c0_54, %c3_55, %c0_56, %c0_57] : memref<8x4x16x8xbf16, #tpu.memory_space<vmem>>, vector<8x1x16x8xbf16>
    %68 = vector.shape_cast %67 : vector<8x1x16x8xbf16> to vector<8x16x8xbf16>
    "tpu.trace_start"() <{level = 10 : i32, message = "gnd,gmd->gnm"}> : () -> ()
    %cst_58 = arith.constant dense<0.000000e+00> : vector<8x16x16xf32>
    %69 = tpu.matmul %64, %66, %cst_58 {dimension_numbers = #tpu.dot_dimension_numbers<[2], [2], [1], [1], [0, 0, 0, 1, 1, 1], [0], [0]>} : vector<8x16x8xbf16>, vector<8x16x8xbf16>, vector<8x16x16xf32> -> vector<8x16x16xf32>
    "tpu.trace_stop"() : () -> ()
    %cst_59 = arith.constant 0.353553385 : f32
    %70 = vector.broadcast %cst_59 : f32 to vector<8x16x16xf32>
    %71 = arith.mulf %69, %70 : vector<8x16x16xf32>
    %cst_60 = arith.constant dense<0xFF800000> : vector<8x16xf32>
    %72 = vector.multi_reduction <maximumf>, %71, %cst_60 [2] : vector<8x16x16xf32> to vector<8x16xf32>
    %73 = vector.shape_cast %72 : vector<8x16xf32> to vector<8x16x1xf32>
    %74 = vector.broadcast %73 : vector<8x16x1xf32> to vector<8x16x16xf32>
    %75 = arith.subf %71, %74 : vector<8x16x16xf32>
    %76 = math.exp %75 : vector<8x16x16xf32>
    %cst_61 = arith.constant dense<0.000000e+00> : vector<8x16xf32>
    %77 = vector.multi_reduction <add>, %76, %cst_61 [2] : vector<8x16x16xf32> to vector<8x16xf32>
    %78 = vector.shape_cast %77 : vector<8x16xf32> to vector<8x16x1xf32>
    %79 = tpu.reciprocal %78 {approx = true} : vector<8x16x1xf32> -> vector<8x16x1xf32>
    %80 = vector.broadcast %79 : vector<8x16x1xf32> to vector<8x16x16xf32>
    %81 = arith.mulf %76, %80 : vector<8x16x16xf32>
    %82 = arith.truncf %81 : vector<8x16x16xf32> to vector<8x16x16xbf16>
    "tpu.trace_start"() <{level = 10 : i32, message = "gnm,gmd->gnd"}> : () -> ()
    %cst_62 = arith.constant dense<0.000000e+00> : vector<8x16x8xf32>
    %83 = tpu.matmul %82, %68, %cst_62 {dimension_numbers = #tpu.dot_dimension_numbers<[2], [1], [1], [2], [0, 0, 0, 1, 1, 2], [0], [0]>} : vector<8x16x16xbf16>, vector<8x16x8xbf16>, vector<8x16x8xf32> -> vector<8x16x8xf32>
    "tpu.trace_stop"() : () -> ()
    %84 = tpu.concatenate %20, %41, %62, %83 in 2 : vector<8x16x8xf32>, vector<8x16x8xf32>, vector<8x16x8xf32>, vector<8x16x8xf32> -> vector<8x16x32xf32>
    %c0_63 = arith.constant 0 : index
    %c0_64 = arith.constant 0 : index
    %c0_65 = arith.constant 0 : index
    %85 = vector.load %arg4[%c0_63, %c0_64, %c0_65] : memref<8x16x32xf32, #tpu.memory_space<vmem>>, vector<8x16x32xf32>
    tpu.vector_store %arg4[%c0_63, %c0_64, %c0_65], %84 {strides = array<i32>} : memref<8x16x32xf32, #tpu.memory_space<vmem>>, vector<8x16x32xf32>,
    return
  }
  func.func @transform_0(%arg0: i32) -> (i32, i32, i32, i32) {
    %c0_i32 = arith.constant 0 : i32
    %c0_i32_0 = arith.constant 0 : i32
    %c0_i32_1 = arith.constant 0 : i32
    %c0_i32_2 = arith.constant 0 : i32
    return %arg0, %c0_i32, %c0_i32_0, %c0_i32_1 : i32, i32, i32, i32
  }
  func.func @transform_1(%arg0: i32) -> (i32, i32, i32, i32) {
    %c0_i32 = arith.constant 0 : i32
    %c0_i32_0 = arith.constant 0 : i32
    %c0_i32_1 = arith.constant 0 : i32
    %c0_i32_2 = arith.constant 0 : i32
    return %arg0, %c0_i32, %c0_i32_0, %c0_i32_1 : i32, i32, i32, i32
  }
  func.func @transform_2(%arg0: i32) -> (i32, i32, i32, i32) {
    %c0_i32 = arith.constant 0 : i32
    %c0_i32_0 = arith.constant 0 : i32
    %c0_i32_1 = arith.constant 0 : i32
    %c0_i32_2 = arith.constant 0 : i32
    return %arg0, %c0_i32, %c0_i32_0, %c0_i32_1 : i32, i32, i32, i32
  }
  func.func @transform_3(%arg0: i32) -> (i32, i32, i32) {
    %c0_i32 = arith.constant 0 : i32
    %c0_i32_0 = arith.constant 0 : i32
    %c0_i32_1 = arith.constant 0 : i32
    return %arg0, %c0_i32, %c0_i32_0 : i32, i32, i32
  }
}

module attributes {stable_mosaic.version = 11 : i64} {
  func.func @_add_linear_residual_kernel(%arg0: i32, %arg1: memref<128x32xf32, #tpu.memory_space<vmem>>, %arg2: memref<128x32xf32, #tpu.memory_space<vmem>>, %arg3: memref<128x32xf32, #tpu.memory_space<vmem>>, %arg4: memref<32x32xbf16, #tpu.memory_space<vmem>>, %arg5: memref<1x32xf32, #tpu.memory_space<vmem>>, %arg6: memref<128x32xf32, #tpu.memory_space<vmem>>) attributes {dimension_semantics = [#tpu.dimension_semantics<parallel>], iteration_bounds = array<i64: 1>, scalar_prefetch = 0 : i64, scratch_operands = 0 : i64, tpu.core_type = #tpu.core_type<tc>, window_params = [{transform_indices = @transform_0, window_bounds = array<i64: 128, 32>}, {transform_indices = @transform_1, window_bounds = array<i64: 128, 32>}, {transform_indices = @transform_2, window_bounds = array<i64: 128, 32>}, {pipeline_mode = #tpu.pipeline_mode<synchronous>, transform_indices = @transform_3, window_bounds = array<i64: 32, 32>}, {pipeline_mode = #tpu.pipeline_mode<synchronous>, transform_indices = @transform_4, window_bounds = array<i64: 1, 32>}, {transform_indices = @transform_5, window_bounds = array<i64: 128, 32>}]} {
    %c0 = arith.constant 0 : index
    %c0_0 = arith.constant 0 : index
    %0 = vector.load %arg1[%c0, %c0_0] : memref<128x32xf32, #tpu.memory_space<vmem>>, vector<128x32xf32>
    %c0_1 = arith.constant 0 : index
    %c0_2 = arith.constant 0 : index
    %1 = vector.load %arg2[%c0_1, %c0_2] : memref<128x32xf32, #tpu.memory_space<vmem>>, vector<128x32xf32>
    %2 = arith.addf %0, %1 : vector<128x32xf32>
    %3 = arith.truncf %2 : vector<128x32xf32> to vector<128x32xbf16>
    %c0_3 = arith.constant 0 : index
    %c0_4 = arith.constant 0 : index
    %4 = vector.load %arg4[%c0_3, %c0_4] : memref<32x32xbf16, #tpu.memory_space<vmem>>, vector<32x32xbf16>
    %cst = arith.constant dense<0.000000e+00> : vector<128x32xf32>
    %5 = tpu.matmul %3, %4, %cst {dimension_numbers = #tpu.dot_dimension_numbers<[1], [0], [0], [1], [0, 0, 1, 1], [], []>} : vector<128x32xbf16>, vector<32x32xbf16>, vector<128x32xf32> -> vector<128x32xf32>
    %c0_5 = arith.constant 0 : index
    %c0_6 = arith.constant 0 : index
    %6 = vector.load %arg3[%c0_5, %c0_6] : memref<128x32xf32, #tpu.memory_space<vmem>>, vector<128x32xf32>
    %7 = arith.addf %6, %5 : vector<128x32xf32>
    %c0_7 = arith.constant 0 : index
    %c0_8 = arith.constant 0 : index
    %8 = vector.load %arg5[%c0_7, %c0_8] : memref<1x32xf32, #tpu.memory_space<vmem>>, vector<1x32xf32>
    %9 = vector.broadcast %8 : vector<1x32xf32> to vector<128x32xf32>
    %10 = arith.addf %7, %9 : vector<128x32xf32>
    %c0_9 = arith.constant 0 : index
    %c0_10 = arith.constant 0 : index
    %11 = vector.load %arg6[%c0_9, %c0_10] : memref<128x32xf32, #tpu.memory_space<vmem>>, vector<128x32xf32>
    tpu.vector_store %arg6[%c0_9, %c0_10], %10 {strides = array<i32>} : memref<128x32xf32, #tpu.memory_space<vmem>>, vector<128x32xf32>,
    return
  }
  func.func @transform_0(%arg0: i32) -> (i32, i32) {
    %c0_i32 = arith.constant 0 : i32
    %c0_i32_0 = arith.constant 0 : i32
    return %arg0, %c0_i32 : i32, i32
  }
  func.func @transform_1(%arg0: i32) -> (i32, i32) {
    %c0_i32 = arith.constant 0 : i32
    %c0_i32_0 = arith.constant 0 : i32
    return %arg0, %c0_i32 : i32, i32
  }
  func.func @transform_2(%arg0: i32) -> (i32, i32) {
    %c0_i32 = arith.constant 0 : i32
    %c0_i32_0 = arith.constant 0 : i32
    return %arg0, %c0_i32 : i32, i32
  }
  func.func @transform_3(%arg0: i32) -> (i32, i32) {
    %c0_i32 = arith.constant 0 : i32
    %c0_i32_0 = arith.constant 0 : i32
    %c0_i32_1 = arith.constant 0 : i32
    return %c0_i32, %c0_i32_0 : i32, i32
  }
  func.func @transform_4(%arg0: i32) -> (i32, i32) {
    %c0_i32 = arith.constant 0 : i32
    %c0_i32_0 = arith.constant 0 : i32
    %c0_i32_1 = arith.constant 0 : i32
    return %c0_i32, %c0_i32_0 : i32, i32
  }
  func.func @transform_5(%arg0: i32) -> (i32, i32) {
    %c0_i32 = arith.constant 0 : i32
    %c0_i32_0 = arith.constant 0 : i32
    return %arg0, %c0_i32 : i32, i32
  }
}

module attributes {stable_mosaic.version = 11 : i64} {
  func.func @_ln_linear_kernel(%arg0: i32, %arg1: memref<128x32xf32, #tpu.memory_space<vmem>>, %arg2: memref<1x32xf32, #tpu.memory_space<vmem>>, %arg3: memref<1x32xf32, #tpu.memory_space<vmem>>, %arg4: memref<32x64xbf16, #tpu.memory_space<vmem>>, %arg5: memref<1x64xf32, #tpu.memory_space<vmem>>, %arg6: memref<128x64xf32, #tpu.memory_space<vmem>>) attributes {dimension_semantics = [#tpu.dimension_semantics<parallel>], iteration_bounds = array<i64: 1>, scalar_prefetch = 0 : i64, scratch_operands = 0 : i64, tpu.core_type = #tpu.core_type<tc>, window_params = [{transform_indices = @transform_0, window_bounds = array<i64: 128, 32>}, {pipeline_mode = #tpu.pipeline_mode<synchronous>, transform_indices = @transform_1, window_bounds = array<i64: 1, 32>}, {pipeline_mode = #tpu.pipeline_mode<synchronous>, transform_indices = @transform_2, window_bounds = array<i64: 1, 32>}, {pipeline_mode = #tpu.pipeline_mode<synchronous>, transform_indices = @transform_3, window_bounds = array<i64: 32, 64>}, {pipeline_mode = #tpu.pipeline_mode<synchronous>, transform_indices = @transform_4, window_bounds = array<i64: 1, 64>}, {transform_indices = @transform_5, window_bounds = array<i64: 128, 64>}]} {
    %c0 = arith.constant 0 : index
    %c0_0 = arith.constant 0 : index
    %0 = vector.load %arg1[%c0, %c0_0] : memref<128x32xf32, #tpu.memory_space<vmem>>, vector<128x32xf32>
    %cst = arith.constant dense<0.000000e+00> : vector<128xf32>
    %1 = vector.multi_reduction <add>, %0, %cst [1] : vector<128x32xf32> to vector<128xf32>
    %2 = vector.shape_cast %1 : vector<128xf32> to vector<128x1xf32>
    %cst_1 = arith.constant 3.200000e+01 : f32
    %3 = vector.broadcast %cst_1 : f32 to vector<128x1xf32>
    %4 = arith.divf %2, %3 : vector<128x1xf32>
    %5 = vector.broadcast %4 : vector<128x1xf32> to vector<128x32xf32>
    %6 = arith.subf %0, %5 : vector<128x32xf32>
    %7 = arith.mulf %6, %6 : vector<128x32xf32>
    %cst_2 = arith.constant dense<0.000000e+00> : vector<128xf32>
    %8 = vector.multi_reduction <add>, %7, %cst_2 [1] : vector<128x32xf32> to vector<128xf32>
    %9 = vector.shape_cast %8 : vector<128xf32> to vector<128x1xf32>
    %cst_3 = arith.constant 3.200000e+01 : f32
    %10 = vector.broadcast %cst_3 : f32 to vector<128x1xf32>
    %11 = arith.divf %9, %10 : vector<128x1xf32>
    %12 = vector.broadcast %4 : vector<128x1xf32> to vector<128x32xf32>
    %13 = arith.subf %0, %12 : vector<128x32xf32>
    %cst_4 = arith.constant 9.99999974E-6 : f32
    %14 = vector.broadcast %cst_4 : f32 to vector<128x1xf32>
    %15 = arith.addf %11, %14 : vector<128x1xf32>
    %16 = math.rsqrt %15 : vector<128x1xf32>
    %17 = vector.broadcast %16 : vector<128x1xf32> to vector<128x32xf32>
    %18 = arith.mulf %13, %17 : vector<128x32xf32>
    %c0_5 = arith.constant 0 : index
    %c0_6 = arith.constant 0 : index
    %19 = vector.load %arg2[%c0_5, %c0_6] : memref<1x32xf32, #tpu.memory_space<vmem>>, vector<1x32xf32>
    %20 = vector.broadcast %19 : vector<1x32xf32> to vector<128x32xf32>
    %21 = arith.mulf %18, %20 : vector<128x32xf32>
    %c0_7 = arith.constant 0 : index
    %c0_8 = arith.constant 0 : index
    %22 = vector.load %arg3[%c0_7, %c0_8] : memref<1x32xf32, #tpu.memory_space<vmem>>, vector<1x32xf32>
    %23 = vector.broadcast %22 : vector<1x32xf32> to vector<128x32xf32>
    %24 = arith.addf %21, %23 : vector<128x32xf32>
    %25 = arith.truncf %24 : vector<128x32xf32> to vector<128x32xbf16>
    %c0_9 = arith.constant 0 : index
    %c0_10 = arith.constant 0 : index
    %26 = vector.load %arg4[%c0_9, %c0_10] : memref<32x64xbf16, #tpu.memory_space<vmem>>, vector<32x64xbf16>
    %cst_11 = arith.constant dense<0.000000e+00> : vector<128x64xf32>
    %27 = tpu.matmul %25, %26, %cst_11 {dimension_numbers = #tpu.dot_dimension_numbers<[1], [0], [0], [1], [0, 0, 1, 1], [], []>} : vector<128x32xbf16>, vector<32x64xbf16>, vector<128x64xf32> -> vector<128x64xf32>
    %c0_12 = arith.constant 0 : index
    %c0_13 = arith.constant 0 : index
    %28 = vector.load %arg5[%c0_12, %c0_13] : memref<1x64xf32, #tpu.memory_space<vmem>>, vector<1x64xf32>
    %29 = vector.broadcast %28 : vector<1x64xf32> to vector<128x64xf32>
    %30 = arith.addf %27, %29 : vector<128x64xf32>
    %31 = arith.mulf %30, %30 : vector<128x64xf32>
    %32 = arith.mulf %30, %31 : vector<128x64xf32>
    %cst_14 = arith.constant 4.471500e-02 : f32
    %33 = vector.broadcast %cst_14 : f32 to vector<128x64xf32>
    %34 = arith.mulf %33, %32 : vector<128x64xf32>
    %35 = arith.addf %30, %34 : vector<128x64xf32>
    %cst_15 = arith.constant 0.797884583 : f32
    %36 = vector.broadcast %cst_15 : f32 to vector<128x64xf32>
    %37 = arith.mulf %36, %35 : vector<128x64xf32>
    %38 = math.tanh %37 : vector<128x64xf32>
    %cst_16 = arith.constant 1.000000e+00 : f32
    %39 = vector.broadcast %cst_16 : f32 to vector<128x64xf32>
    %40 = arith.addf %39, %38 : vector<128x64xf32>
    %cst_17 = arith.constant 5.000000e-01 : f32
    %41 = vector.broadcast %cst_17 : f32 to vector<128x64xf32>
    %42 = arith.mulf %41, %40 : vector<128x64xf32>
    %43 = arith.mulf %30, %42 : vector<128x64xf32>
    %c0_18 = arith.constant 0 : index
    %c0_19 = arith.constant 0 : index
    %44 = vector.load %arg6[%c0_18, %c0_19] : memref<128x64xf32, #tpu.memory_space<vmem>>, vector<128x64xf32>
    tpu.vector_store %arg6[%c0_18, %c0_19], %43 {strides = array<i32>} : memref<128x64xf32, #tpu.memory_space<vmem>>, vector<128x64xf32>,
    return
  }
  func.func @transform_0(%arg0: i32) -> (i32, i32) {
    %c0_i32 = arith.constant 0 : i32
    %c0_i32_0 = arith.constant 0 : i32
    return %arg0, %c0_i32 : i32, i32
  }
  func.func @transform_1(%arg0: i32) -> (i32, i32) {
    %c0_i32 = arith.constant 0 : i32
    %c0_i32_0 = arith.constant 0 : i32
    %c0_i32_1 = arith.constant 0 : i32
    return %c0_i32, %c0_i32_0 : i32, i32
  }
  func.func @transform_2(%arg0: i32) -> (i32, i32) {
    %c0_i32 = arith.constant 0 : i32
    %c0_i32_0 = arith.constant 0 : i32
    %c0_i32_1 = arith.constant 0 : i32
    return %c0_i32, %c0_i32_0 : i32, i32
  }
  func.func @transform_3(%arg0: i32) -> (i32, i32) {
    %c0_i32 = arith.constant 0 : i32
    %c0_i32_0 = arith.constant 0 : i32
    %c0_i32_1 = arith.constant 0 : i32
    return %c0_i32, %c0_i32_0 : i32, i32
  }
  func.func @transform_4(%arg0: i32) -> (i32, i32) {
    %c0_i32 = arith.constant 0 : i32
    %c0_i32_0 = arith.constant 0 : i32
    %c0_i32_1 = arith.constant 0 : i32
    return %c0_i32, %c0_i32_0 : i32, i32
  }
  func.func @transform_5(%arg0: i32) -> (i32, i32) {
    %c0_i32 = arith.constant 0 : i32
    %c0_i32_0 = arith.constant 0 : i32
    return %arg0, %c0_i32 : i32, i32
  }
}

module attributes {stable_mosaic.version = 11 : i64} {
  func.func @_dwconv3x3_kernel(%arg0: i32, %arg1: i32, %arg2: memref<1x1x8x64xf32, #tpu.memory_space<vmem>>, %arg3: memref<1x8x8x64xf32, #tpu.memory_space<vmem>>, %arg4: memref<1x1x8x64xf32, #tpu.memory_space<vmem>>, %arg5: memref<9x64xf32, #tpu.memory_space<vmem>>, %arg6: memref<1x64xf32, #tpu.memory_space<vmem>>, %arg7: memref<1x64xf32, #tpu.memory_space<vmem>>, %arg8: memref<1x64xf32, #tpu.memory_space<vmem>>, %arg9: memref<1x8x8x64xf32, #tpu.memory_space<vmem>>) attributes {dimension_semantics = [#tpu.dimension_semantics<parallel>, #tpu.dimension_semantics<parallel>], iteration_bounds = array<i64: 2, 1>, scalar_prefetch = 0 : i64, scratch_operands = 0 : i64, tpu.core_type = #tpu.core_type<tc>, window_params = [{transform_indices = @transform_0, window_bounds = array<i64: 1, 1, 8, 64>}, {transform_indices = @transform_1, window_bounds = array<i64: 1, 8, 8, 64>}, {transform_indices = @transform_2, window_bounds = array<i64: 1, 1, 8, 64>}, {pipeline_mode = #tpu.pipeline_mode<synchronous>, transform_indices = @transform_3, window_bounds = array<i64: 9, 64>}, {pipeline_mode = #tpu.pipeline_mode<synchronous>, transform_indices = @transform_4, window_bounds = array<i64: 1, 64>}, {pipeline_mode = #tpu.pipeline_mode<synchronous>, transform_indices = @transform_5, window_bounds = array<i64: 1, 64>}, {pipeline_mode = #tpu.pipeline_mode<synchronous>, transform_indices = @transform_6, window_bounds = array<i64: 1, 64>}, {transform_indices = @transform_7, window_bounds = array<i64: 1, 8, 8, 64>}]} {
    %c0_i32 = arith.constant 0 : i32
    %0 = arith.cmpi sgt, %arg1, %c0_i32 : i32
    %cst = arith.constant 1.000000e+00 : f32
    %cst_0 = arith.constant 0.000000e+00 : f32
    %1 = arith.select %0, %cst, %cst_0 : f32
    %c0 = arith.constant 0 : index
    %c0_1 = arith.constant 0 : index
    %c0_2 = arith.constant 0 : index
    %c0_3 = arith.constant 0 : index
    %2 = vector.load %arg2[%c0, %c0_1, %c0_2, %c0_3] : memref<1x1x8x64xf32, #tpu.memory_space<vmem>>, vector<1x1x8x64xf32>
    %3 = vector.shape_cast %2 : vector<1x1x8x64xf32> to vector<8x64xf32>
    %4 = vector.broadcast %1 : f32 to vector<8x64xf32>
    %5 = arith.mulf %4, %3 : vector<8x64xf32>
    %c0_i32_4 = arith.constant 0 : i32
    %6 = arith.cmpi slt, %arg1, %c0_i32_4 : i32
    %cst_5 = arith.constant 1.000000e+00 : f32
    %cst_6 = arith.constant 0.000000e+00 : f32
    %7 = arith.select %6, %cst_5, %cst_6 : f32
    %c0_7 = arith.constant 0 : index
    %c0_8 = arith.constant 0 : index
    %c0_9 = arith.constant 0 : index
    %c0_10 = arith.constant 0 : index
    %8 = vector.load %arg4[%c0_7, %c0_8, %c0_9, %c0_10] : memref<1x1x8x64xf32, #tpu.memory_space<vmem>>, vector<1x1x8x64xf32>
    %9 = vector.shape_cast %8 : vector<1x1x8x64xf32> to vector<8x64xf32>
    %10 = vector.broadcast %7 : f32 to vector<8x64xf32>
    %11 = arith.mulf %10, %9 : vector<8x64xf32>
    %12 = vector.shape_cast %5 : vector<8x64xf32> to vector<1x8x64xf32>
    %c0_11 = arith.constant 0 : index
    %c0_12 = arith.constant 0 : index
    %c0_13 = arith.constant 0 : index
    %c0_14 = arith.constant 0 : index
    %13 = vector.load %arg3[%c0_11, %c0_12, %c0_13, %c0_14] : memref<1x8x8x64xf32, #tpu.memory_space<vmem>>, vector<1x8x8x64xf32>
    %14 = vector.shape_cast %13 : vector<1x8x8x64xf32> to vector<8x8x64xf32>
    %15 = vector.shape_cast %11 : vector<8x64xf32> to vector<1x8x64xf32>
    %16 = tpu.concatenate %12, %14, %15 in 0 : vector<1x8x64xf32>, vector<8x8x64xf32>, vector<1x8x64xf32> -> vector<10x8x64xf32>
    %cst_15 = arith.constant 0.000000e+00 : f32
    %17 = vector.broadcast %cst_15 : f32 to vector<10x1x64xf32>
    %18 = tpu.concatenate %17, %16, %17 in 1 : vector<10x1x64xf32>, vector<10x8x64xf32>, vector<10x1x64xf32> -> vector<10x10x64xf32>
    %c0_16 = arith.constant 0 : index
    %c0_17 = arith.constant 0 : index
    %19 = vector.load %arg5[%c0_16, %c0_17] : memref<9x64xf32, #tpu.memory_space<vmem>>, vector<9x64xf32>
    %cst_18 = arith.constant 0.000000e+00 : f32
    %20 = vector.broadcast %cst_18 : f32 to vector<8x8x64xf32>
    %21 = vector.extract_strided_slice %18 {offsets = [0, 0, 0], sizes = [8, 8, 64], strides = [1, 1, 1]} : vector<10x10x64xf32> to vector<8x8x64xf32>
    %22 = vector.extract_strided_slice %19 {offsets = [0, 0], sizes = [1, 64], strides = [1, 1]} : vector<9x64xf32> to vector<1x64xf32>
    %23 = vector.shape_cast %22 : vector<1x64xf32> to vector<64xf32>
    %24 = vector.shape_cast %23 : vector<64xf32> to vector<1x1x64xf32>
    %25 = vector.broadcast %24 : vector<1x1x64xf32> to vector<8x8x64xf32>
    %26 = arith.mulf %21, %25 : vector<8x8x64xf32>
    %27 = arith.addf %20, %26 : vector<8x8x64xf32>
    %28 = vector.extract_strided_slice %18 {offsets = [0, 1, 0], sizes = [8, 8, 64], strides = [1, 1, 1]} : vector<10x10x64xf32> to vector<8x8x64xf32>
    %29 = vector.extract_strided_slice %19 {offsets = [1, 0], sizes = [1, 64], strides = [1, 1]} : vector<9x64xf32> to vector<1x64xf32>
    %30 = vector.shape_cast %29 : vector<1x64xf32> to vector<64xf32>
    %31 = vector.shape_cast %30 : vector<64xf32> to vector<1x1x64xf32>
    %32 = vector.broadcast %31 : vector<1x1x64xf32> to vector<8x8x64xf32>
    %33 = arith.mulf %28, %32 : vector<8x8x64xf32>
    %34 = arith.addf %27, %33 : vector<8x8x64xf32>
    %35 = vector.extract_strided_slice %18 {offsets = [0, 2, 0], sizes = [8, 8, 64], strides = [1, 1, 1]} : vector<10x10x64xf32> to vector<8x8x64xf32>
    %36 = vector.extract_strided_slice %19 {offsets = [2, 0], sizes = [1, 64], strides = [1, 1]} : vector<9x64xf32> to vector<1x64xf32>
    %37 = vector.shape_cast %36 : vector<1x64xf32> to vector<64xf32>
    %38 = vector.shape_cast %37 : vector<64xf32> to vector<1x1x64xf32>
    %39 = vector.broadcast %38 : vector<1x1x64xf32> to vector<8x8x64xf32>
    %40 = arith.mulf %35, %39 : vector<8x8x64xf32>
    %41 = arith.addf %34, %40 : vector<8x8x64xf32>
    %42 = vector.extract_strided_slice %18 {offsets = [1, 0, 0], sizes = [8, 8, 64], strides = [1, 1, 1]} : vector<10x10x64xf32> to vector<8x8x64xf32>
    %43 = vector.extract_strided_slice %19 {offsets = [3, 0], sizes = [1, 64], strides = [1, 1]} : vector<9x64xf32> to vector<1x64xf32>
    %44 = vector.shape_cast %43 : vector<1x64xf32> to vector<64xf32>
    %45 = vector.shape_cast %44 : vector<64xf32> to vector<1x1x64xf32>
    %46 = vector.broadcast %45 : vector<1x1x64xf32> to vector<8x8x64xf32>
    %47 = arith.mulf %42, %46 : vector<8x8x64xf32>
    %48 = arith.addf %41, %47 : vector<8x8x64xf32>
    %49 = vector.extract_strided_slice %18 {offsets = [1, 1, 0], sizes = [8, 8, 64], strides = [1, 1, 1]} : vector<10x10x64xf32> to vector<8x8x64xf32>
    %50 = vector.extract_strided_slice %19 {offsets = [4, 0], sizes = [1, 64], strides = [1, 1]} : vector<9x64xf32> to vector<1x64xf32>
    %51 = vector.shape_cast %50 : vector<1x64xf32> to vector<64xf32>
    %52 = vector.shape_cast %51 : vector<64xf32> to vector<1x1x64xf32>
    %53 = vector.broadcast %52 : vector<1x1x64xf32> to vector<8x8x64xf32>
    %54 = arith.mulf %49, %53 : vector<8x8x64xf32>
    %55 = arith.addf %48, %54 : vector<8x8x64xf32>
    %56 = vector.extract_strided_slice %18 {offsets = [1, 2, 0], sizes = [8, 8, 64], strides = [1, 1, 1]} : vector<10x10x64xf32> to vector<8x8x64xf32>
    %57 = vector.extract_strided_slice %19 {offsets = [5, 0], sizes = [1, 64], strides = [1, 1]} : vector<9x64xf32> to vector<1x64xf32>
    %58 = vector.shape_cast %57 : vector<1x64xf32> to vector<64xf32>
    %59 = vector.shape_cast %58 : vector<64xf32> to vector<1x1x64xf32>
    %60 = vector.broadcast %59 : vector<1x1x64xf32> to vector<8x8x64xf32>
    %61 = arith.mulf %56, %60 : vector<8x8x64xf32>
    %62 = arith.addf %55, %61 : vector<8x8x64xf32>
    %63 = vector.extract_strided_slice %18 {offsets = [2, 0, 0], sizes = [8, 8, 64], strides = [1, 1, 1]} : vector<10x10x64xf32> to vector<8x8x64xf32>
    %64 = vector.extract_strided_slice %19 {offsets = [6, 0], sizes = [1, 64], strides = [1, 1]} : vector<9x64xf32> to vector<1x64xf32>
    %65 = vector.shape_cast %64 : vector<1x64xf32> to vector<64xf32>
    %66 = vector.shape_cast %65 : vector<64xf32> to vector<1x1x64xf32>
    %67 = vector.broadcast %66 : vector<1x1x64xf32> to vector<8x8x64xf32>
    %68 = arith.mulf %63, %67 : vector<8x8x64xf32>
    %69 = arith.addf %62, %68 : vector<8x8x64xf32>
    %70 = vector.extract_strided_slice %18 {offsets = [2, 1, 0], sizes = [8, 8, 64], strides = [1, 1, 1]} : vector<10x10x64xf32> to vector<8x8x64xf32>
    %71 = vector.extract_strided_slice %19 {offsets = [7, 0], sizes = [1, 64], strides = [1, 1]} : vector<9x64xf32> to vector<1x64xf32>
    %72 = vector.shape_cast %71 : vector<1x64xf32> to vector<64xf32>
    %73 = vector.shape_cast %72 : vector<64xf32> to vector<1x1x64xf32>
    %74 = vector.broadcast %73 : vector<1x1x64xf32> to vector<8x8x64xf32>
    %75 = arith.mulf %70, %74 : vector<8x8x64xf32>
    %76 = arith.addf %69, %75 : vector<8x8x64xf32>
    %77 = vector.extract_strided_slice %18 {offsets = [2, 2, 0], sizes = [8, 8, 64], strides = [1, 1, 1]} : vector<10x10x64xf32> to vector<8x8x64xf32>
    %78 = vector.extract_strided_slice %19 {offsets = [8, 0], sizes = [1, 64], strides = [1, 1]} : vector<9x64xf32> to vector<1x64xf32>
    %79 = vector.shape_cast %78 : vector<1x64xf32> to vector<64xf32>
    %80 = vector.shape_cast %79 : vector<64xf32> to vector<1x1x64xf32>
    %81 = vector.broadcast %80 : vector<1x1x64xf32> to vector<8x8x64xf32>
    %82 = arith.mulf %77, %81 : vector<8x8x64xf32>
    %83 = arith.addf %76, %82 : vector<8x8x64xf32>
    %c0_19 = arith.constant 0 : index
    %c0_20 = arith.constant 0 : index
    %84 = vector.load %arg6[%c0_19, %c0_20] : memref<1x64xf32, #tpu.memory_space<vmem>>, vector<1x64xf32>
    %85 = vector.shape_cast %84 : vector<1x64xf32> to vector<64xf32>
    %86 = vector.shape_cast %85 : vector<64xf32> to vector<1x1x64xf32>
    %87 = vector.broadcast %86 : vector<1x1x64xf32> to vector<8x8x64xf32>
    %88 = arith.addf %83, %87 : vector<8x8x64xf32>
    %cst_21 = arith.constant dense<0.000000e+00> : vector<8x8xf32>
    %89 = vector.multi_reduction <add>, %88, %cst_21 [2] : vector<8x8x64xf32> to vector<8x8xf32>
    %90 = vector.shape_cast %89 : vector<8x8xf32> to vector<8x8x1xf32>
    %cst_22 = arith.constant 6.400000e+01 : f32
    %91 = vector.broadcast %cst_22 : f32 to vector<8x8x1xf32>
    %92 = arith.divf %90, %91 : vector<8x8x1xf32>
    %93 = vector.broadcast %92 : vector<8x8x1xf32> to vector<8x8x64xf32>
    %94 = arith.subf %88, %93 : vector<8x8x64xf32>
    %95 = arith.mulf %94, %94 : vector<8x8x64xf32>
    %cst_23 = arith.constant dense<0.000000e+00> : vector<8x8xf32>
    %96 = vector.multi_reduction <add>, %95, %cst_23 [2] : vector<8x8x64xf32> to vector<8x8xf32>
    %97 = vector.shape_cast %96 : vector<8x8xf32> to vector<8x8x1xf32>
    %cst_24 = arith.constant 6.400000e+01 : f32
    %98 = vector.broadcast %cst_24 : f32 to vector<8x8x1xf32>
    %99 = arith.divf %97, %98 : vector<8x8x1xf32>
    %100 = vector.broadcast %92 : vector<8x8x1xf32> to vector<8x8x64xf32>
    %101 = arith.subf %88, %100 : vector<8x8x64xf32>
    %cst_25 = arith.constant 9.99999974E-6 : f32
    %102 = vector.broadcast %cst_25 : f32 to vector<8x8x1xf32>
    %103 = arith.addf %99, %102 : vector<8x8x1xf32>
    %104 = math.rsqrt %103 : vector<8x8x1xf32>
    %105 = vector.broadcast %104 : vector<8x8x1xf32> to vector<8x8x64xf32>
    %106 = arith.mulf %101, %105 : vector<8x8x64xf32>
    %c0_26 = arith.constant 0 : index
    %c0_27 = arith.constant 0 : index
    %107 = vector.load %arg7[%c0_26, %c0_27] : memref<1x64xf32, #tpu.memory_space<vmem>>, vector<1x64xf32>
    %108 = vector.shape_cast %107 : vector<1x64xf32> to vector<64xf32>
    %109 = vector.shape_cast %108 : vector<64xf32> to vector<1x1x64xf32>
    %110 = vector.broadcast %109 : vector<1x1x64xf32> to vector<8x8x64xf32>
    %111 = arith.mulf %106, %110 : vector<8x8x64xf32>
    %c0_28 = arith.constant 0 : index
    %c0_29 = arith.constant 0 : index
    %112 = vector.load %arg8[%c0_28, %c0_29] : memref<1x64xf32, #tpu.memory_space<vmem>>, vector<1x64xf32>
    %113 = vector.shape_cast %112 : vector<1x64xf32> to vector<64xf32>
    %114 = vector.shape_cast %113 : vector<64xf32> to vector<1x1x64xf32>
    %115 = vector.broadcast %114 : vector<1x1x64xf32> to vector<8x8x64xf32>
    %116 = arith.addf %111, %115 : vector<8x8x64xf32>
    %117 = arith.mulf %116, %116 : vector<8x8x64xf32>
    %118 = arith.mulf %116, %117 : vector<8x8x64xf32>
    %cst_30 = arith.constant 4.471500e-02 : f32
    %119 = vector.broadcast %cst_30 : f32 to vector<8x8x64xf32>
    %120 = arith.mulf %119, %118 : vector<8x8x64xf32>
    %121 = arith.addf %116, %120 : vector<8x8x64xf32>
    %cst_31 = arith.constant 0.797884583 : f32
    %122 = vector.broadcast %cst_31 : f32 to vector<8x8x64xf32>
    %123 = arith.mulf %122, %121 : vector<8x8x64xf32>
    %124 = math.tanh %123 : vector<8x8x64xf32>
    %cst_32 = arith.constant 1.000000e+00 : f32
    %125 = vector.broadcast %cst_32 : f32 to vector<8x8x64xf32>
    %126 = arith.addf %125, %124 : vector<8x8x64xf32>
    %cst_33 = arith.constant 5.000000e-01 : f32
    %127 = vector.broadcast %cst_33 : f32 to vector<8x8x64xf32>
    %128 = arith.mulf %127, %126 : vector<8x8x64xf32>
    %129 = arith.mulf %116, %128 : vector<8x8x64xf32>
    %c0_34 = arith.constant 0 : index
    %c0_35 = arith.constant 0 : index
    %c0_36 = arith.constant 0 : index
    %c0_37 = arith.constant 0 : index
    %130 = vector.load %arg9[%c0_34, %c0_35, %c0_36, %c0_37] : memref<1x8x8x64xf32, #tpu.memory_space<vmem>>, vector<1x8x8x64xf32>
    %131 = vector.shape_cast %130 : vector<1x8x8x64xf32> to vector<8x8x64xf32>
    %132 = vector.shape_cast %129 : vector<8x8x64xf32> to vector<1x8x8x64xf32>
    tpu.vector_store %arg9[%c0_34, %c0_35, %c0_36, %c0_37], %132 {strides = array<i32>} : memref<1x8x8x64xf32, #tpu.memory_space<vmem>>, vector<1x8x8x64xf32>,
    return
  }
  func.func @transform_0(%arg0: i32, %arg1: i32) -> (i32, i32, i32, i32) {
    %c8_i32 = arith.constant 8 : i32
    %0 = arith.muli %arg1, %c8_i32 : i32
    %c1_i32 = arith.constant 1 : i32
    %1 = arith.subi %0, %c1_i32 : i32
    %c0_i32 = arith.constant 0 : i32
    %2 = arith.maxsi %1, %c0_i32 : i32
    %c0_i32_0 = arith.constant 0 : i32
    %c0_i32_1 = arith.constant 0 : i32
    %c0_i32_2 = arith.constant 0 : i32
    return %arg0, %2, %c0_i32_0, %c0_i32_1 : i32, i32, i32, i32
  }
  func.func @transform_1(%arg0: i32, %arg1: i32) -> (i32, i32, i32, i32) {
    %c0_i32 = arith.constant 0 : i32
    %c0_i32_0 = arith.constant 0 : i32
    %c0_i32_1 = arith.constant 0 : i32
    return %arg0, %arg1, %c0_i32, %c0_i32_0 : i32, i32, i32, i32
  }
  func.func @transform_2(%arg0: i32, %arg1: i32) -> (i32, i32, i32, i32) {
    %c1_i32 = arith.constant 1 : i32
    %0 = arith.addi %arg1, %c1_i32 : i32
    %c8_i32 = arith.constant 8 : i32
    %1 = arith.muli %0, %c8_i32 : i32
    %c7_i32 = arith.constant 7 : i32
    %2 = arith.minsi %1, %c7_i32 : i32
    %c0_i32 = arith.constant 0 : i32
    %c0_i32_0 = arith.constant 0 : i32
    %c0_i32_1 = arith.constant 0 : i32
    return %arg0, %2, %c0_i32, %c0_i32_0 : i32, i32, i32, i32
  }
  func.func @transform_3(%arg0: i32, %arg1: i32) -> (i32, i32) {
    %c0_i32 = arith.constant 0 : i32
    %c0_i32_0 = arith.constant 0 : i32
    %c0_i32_1 = arith.constant 0 : i32
    return %c0_i32, %c0_i32_0 : i32, i32
  }
  func.func @transform_4(%arg0: i32, %arg1: i32) -> (i32, i32) {
    %c0_i32 = arith.constant 0 : i32
    %c0_i32_0 = arith.constant 0 : i32
    %c0_i32_1 = arith.constant 0 : i32
    return %c0_i32, %c0_i32_0 : i32, i32
  }
  func.func @transform_5(%arg0: i32, %arg1: i32) -> (i32, i32) {
    %c0_i32 = arith.constant 0 : i32
    %c0_i32_0 = arith.constant 0 : i32
    %c0_i32_1 = arith.constant 0 : i32
    return %c0_i32, %c0_i32_0 : i32, i32
  }
  func.func @transform_6(%arg0: i32, %arg1: i32) -> (i32, i32) {
    %c0_i32 = arith.constant 0 : i32
    %c0_i32_0 = arith.constant 0 : i32
    %c0_i32_1 = arith.constant 0 : i32
    return %c0_i32, %c0_i32_0 : i32, i32
  }
  func.func @transform_7(%arg0: i32, %arg1: i32) -> (i32, i32, i32, i32) {
    %c0_i32 = arith.constant 0 : i32
    %c0_i32_0 = arith.constant 0 : i32
    %c0_i32_1 = arith.constant 0 : i32
    return %arg0, %arg1, %c0_i32, %c0_i32_0 : i32, i32, i32, i32
  }
}

module attributes {stable_mosaic.version = 11 : i64} {
  func.func @_add_linear_residual_kernel(%arg0: i32, %arg1: memref<128x64xf32, #tpu.memory_space<vmem>>, %arg2: memref<128x64xf32, #tpu.memory_space<vmem>>, %arg3: memref<128x32xf32, #tpu.memory_space<vmem>>, %arg4: memref<64x32xbf16, #tpu.memory_space<vmem>>, %arg5: memref<1x32xf32, #tpu.memory_space<vmem>>, %arg6: memref<128x32xf32, #tpu.memory_space<vmem>>) attributes {dimension_semantics = [#tpu.dimension_semantics<parallel>], iteration_bounds = array<i64: 1>, scalar_prefetch = 0 : i64, scratch_operands = 0 : i64, tpu.core_type = #tpu.core_type<tc>, window_params = [{transform_indices = @transform_0, window_bounds = array<i64: 128, 64>}, {transform_indices = @transform_1, window_bounds = array<i64: 128, 64>}, {transform_indices = @transform_2, window_bounds = array<i64: 128, 32>}, {pipeline_mode = #tpu.pipeline_mode<synchronous>, transform_indices = @transform_3, window_bounds = array<i64: 64, 32>}, {pipeline_mode = #tpu.pipeline_mode<synchronous>, transform_indices = @transform_4, window_bounds = array<i64: 1, 32>}, {transform_indices = @transform_5, window_bounds = array<i64: 128, 32>}]} {
    %c0 = arith.constant 0 : index
    %c0_0 = arith.constant 0 : index
    %0 = vector.load %arg1[%c0, %c0_0] : memref<128x64xf32, #tpu.memory_space<vmem>>, vector<128x64xf32>
    %c0_1 = arith.constant 0 : index
    %c0_2 = arith.constant 0 : index
    %1 = vector.load %arg2[%c0_1, %c0_2] : memref<128x64xf32, #tpu.memory_space<vmem>>, vector<128x64xf32>
    %2 = arith.addf %0, %1 : vector<128x64xf32>
    %3 = arith.truncf %2 : vector<128x64xf32> to vector<128x64xbf16>
    %c0_3 = arith.constant 0 : index
    %c0_4 = arith.constant 0 : index
    %4 = vector.load %arg4[%c0_3, %c0_4] : memref<64x32xbf16, #tpu.memory_space<vmem>>, vector<64x32xbf16>
    %cst = arith.constant dense<0.000000e+00> : vector<128x32xf32>
    %5 = tpu.matmul %3, %4, %cst {dimension_numbers = #tpu.dot_dimension_numbers<[1], [0], [0], [1], [0, 0, 1, 1], [], []>} : vector<128x64xbf16>, vector<64x32xbf16>, vector<128x32xf32> -> vector<128x32xf32>
    %c0_5 = arith.constant 0 : index
    %c0_6 = arith.constant 0 : index
    %6 = vector.load %arg3[%c0_5, %c0_6] : memref<128x32xf32, #tpu.memory_space<vmem>>, vector<128x32xf32>
    %7 = arith.addf %6, %5 : vector<128x32xf32>
    %c0_7 = arith.constant 0 : index
    %c0_8 = arith.constant 0 : index
    %8 = vector.load %arg5[%c0_7, %c0_8] : memref<1x32xf32, #tpu.memory_space<vmem>>, vector<1x32xf32>
    %9 = vector.broadcast %8 : vector<1x32xf32> to vector<128x32xf32>
    %10 = arith.addf %7, %9 : vector<128x32xf32>
    %c0_9 = arith.constant 0 : index
    %c0_10 = arith.constant 0 : index
    %11 = vector.load %arg6[%c0_9, %c0_10] : memref<128x32xf32, #tpu.memory_space<vmem>>, vector<128x32xf32>
    tpu.vector_store %arg6[%c0_9, %c0_10], %10 {strides = array<i32>} : memref<128x32xf32, #tpu.memory_space<vmem>>, vector<128x32xf32>,
    return
  }
  func.func @transform_0(%arg0: i32) -> (i32, i32) {
    %c0_i32 = arith.constant 0 : i32
    %c0_i32_0 = arith.constant 0 : i32
    return %arg0, %c0_i32 : i32, i32
  }
  func.func @transform_1(%arg0: i32) -> (i32, i32) {
    %c0_i32 = arith.constant 0 : i32
    %c0_i32_0 = arith.constant 0 : i32
    return %arg0, %c0_i32 : i32, i32
  }
  func.func @transform_2(%arg0: i32) -> (i32, i32) {
    %c0_i32 = arith.constant 0 : i32
    %c0_i32_0 = arith.constant 0 : i32
    return %arg0, %c0_i32 : i32, i32
  }
  func.func @transform_3(%arg0: i32) -> (i32, i32) {
    %c0_i32 = arith.constant 0 : i32
    %c0_i32_0 = arith.constant 0 : i32
    %c0_i32_1 = arith.constant 0 : i32
    return %c0_i32, %c0_i32_0 : i32, i32
  }
  func.func @transform_4(%arg0: i32) -> (i32, i32) {
    %c0_i32 = arith.constant 0 : i32
    %c0_i32_0 = arith.constant 0 : i32
    %c0_i32_1 = arith.constant 0 : i32
    return %c0_i32, %c0_i32_0 : i32, i32
  }
  func.func @transform_5(%arg0: i32) -> (i32, i32) {
    %c0_i32 = arith.constant 0 : i32
    %c0_i32_0 = arith.constant 0 : i32
    return %arg0, %c0_i32 : i32, i32
  }
}

</mosaic_0001>

<llo_original>
// kernel: _lambda_.7
$region0: #{_lambda_.7}
  #allocation0 [shape = 'u32[]', space=smem, size = 0x4, offset = 0x4, fixed_abs, tag = 'smem constant byte address 0x4 - core index']
  #allocation1 [shape = 'u32[72,128]{1,0:T(1,128)}', space=vmem, size = 0x9000, scoped, tag = 'internal scratch']
  %s0 = inlined_call_operand.vmem [shape: f32[128,32], index: 0, kind: input, shape index: {}]
  %s1 = inlined_call_operand.vmem [shape: f32[1,32], index: 1, kind: input, shape index: {}]
  %s2 = inlined_call_operand.vmem [shape: f32[1,32], index: 2, kind: input, shape index: {}]
  %s3 = inlined_call_operand.vmem [shape: bf16[32,96], index: 3, kind: input, shape index: {}]
  %s4 = inlined_call_operand.vmem [shape: f32[128,96], index: 4, kind: output, shape index: {}]
  %s5 = sld [smem:[#allocation0]]
  $region26: #{_lambda_.7} parent=0
    _
  %s7 = ssub.s32 1, %s5
  %s8 = scalar_select 0, %s7, %s5
  // Predicated region
  $region2: #{_lambda_.7} parent=0 // pred_check
    _
  $region3: #{_lambda_.7} parent=0 // pred_check_branch
    %10 = sbr.rel (0) target = $region5
  $region4: #{_lambda_.7} parent=0 // pred_region
    _
  $region5: #{_lambda_.7} parent=0 // pred_fallthru
    _
  // Predicated region
  $region6: #{_lambda_.7} parent=0 // pred_check
    _
  $region7: #{_lambda_.7} parent=0 // pred_check_branch
    %12 = sbr.rel (0) target = $region9
  $region8: #{_lambda_.7} parent=0 // pred_region
    _
  $region9: #{_lambda_.7} parent=0 // pred_fallthru
    _
  // Predicated region
  $region10: #{_lambda_.7} parent=0 // pred_check
    _
  $region11: #{_lambda_.7} parent=0 // pred_check_branch
    %14 = sbr.rel (0) target = $region13
  $region12: #{_lambda_.7} parent=0 // pred_region
    _
  $region13: #{_lambda_.7} parent=0 // pred_fallthru
    _
  // Predicated region
  $region14: #{_lambda_.7} parent=0 // pred_check
    _
  $region15: #{_lambda_.7} parent=0 // pred_check_branch
    %16 = sbr.rel (0) target = $region17
  $region16: #{_lambda_.7} parent=0 // pred_region
    _
  $region17: #{_lambda_.7} parent=0 // pred_fallthru
    _
  %v18 = vld [vmem:[%s0] sm:$0xff]
  %v19 = vld [vmem:[%s0 + $0x8] sm:$0xff]
  %v20 = vld [vmem:[%s0 + $0x10] sm:$0xff]
  %v21 = vld [vmem:[%s0 + $0x18] sm:$0xff]
  %v22 = vld [vmem:[%s0 + $0x20] sm:$0xff]
  %v23 = vld [vmem:[%s0 + $0x28] sm:$0xff]
  %v24 = vld [vmem:[%s0 + $0x30] sm:$0xff]
  %v25 = vld [vmem:[%s0 + $0x38] sm:$0xff]
  %v26 = vld [vmem:[%s0 + $0x40] sm:$0xff]
  %v27 = vld [vmem:[%s0 + $0x48] sm:$0xff]
  %v28 = vld [vmem:[%s0 + $0x50] sm:$0xff]
  %v29 = vld [vmem:[%s0 + $0x58] sm:$0xff]
  %v30 = vld [vmem:[%s0 + $0x60] sm:$0xff]
  %v31 = vld [vmem:[%s0 + $0x68] sm:$0xff]
  %v32 = vld [vmem:[%s0 + $0x70] sm:$0xff]
  %v33 = vld [vmem:[%s0 + $0x78] sm:$0xff]
  %vm34 = vcmask 261120
  %v35 = vsel %vm34, %v18, 0.0
  %36 = vadd.xlane.f32.xlu0 %v35
  %v37 = vpop.xlane.xlu0 %36
  %v38 = vsel %vm34, %v19, 0.0
  %39 = vadd.xlane.f32.xlu0 %v38
  %v40 = vpop.xlane.xlu0 %39
  %v41 = vsel %vm34, %v20, 0.0
  %42 = vadd.xlane.f32.xlu0 %v41
  %v43 = vpop.xlane.xlu0 %42
  %v44 = vsel %vm34, %v21, 0.0
  %45 = vadd.xlane.f32.xlu0 %v44
  %v46 = vpop.xlane.xlu0 %45
  %v47 = vsel %vm34, %v22, 0.0
  %48 = vadd.xlane.f32.xlu0 %v47
  %v49 = vpop.xlane.xlu0 %48
  %v50 = vsel %vm34, %v23, 0.0
  %51 = vadd.xlane.f32.xlu0 %v50
  %v52 = vpop.xlane.xlu0 %51
  %v53 = vsel %vm34, %v24, 0.0
  %54 = vadd.xlane.f32.xlu0 %v53
  %v55 = vpop.xlane.xlu0 %54
  %v56 = vsel %vm34, %v25, 0.0
  %57 = vadd.xlane.f32.xlu0 %v56
  %v58 = vpop.xlane.xlu0 %57
  %v59 = vsel %vm34, %v26, 0.0
  %60 = vadd.xlane.f32.xlu0 %v59
  %v61 = vpop.xlane.xlu0 %60
  %v62 = vsel %vm34, %v27, 0.0
  %63 = vadd.xlane.f32.xlu0 %v62
  %v64 = vpop.xlane.xlu0 %63
  %v65 = vsel %vm34, %v28, 0.0
  %66 = vadd.xlane.f32.xlu0 %v65
  %v67 = vpop.xlane.xlu0 %66
  %v68 = vsel %vm34, %v29, 0.0
  %69 = vadd.xlane.f32.xlu0 %v68
  %v70 = vpop.xlane.xlu0 %69
  %v71 = vsel %vm34, %v30, 0.0
  %72 = vadd.xlane.f32.xlu0 %v71
  %v73 = vpop.xlane.xlu0 %72
  %v74 = vsel %vm34, %v31, 0.0
  %75 = vadd.xlane.f32.xlu0 %v74
  %v76 = vpop.xlane.xlu0 %75
  %v77 = vsel %vm34, %v32, 0.0
  %78 = vadd.xlane.f32.xlu0 %v77
  %v79 = vpop.xlane.xlu0 %78
  %v80 = vsel %vm34, %v33, 0.0
  %81 = vadd.xlane.f32.xlu0 %v80
  %v82 = vpop.xlane.xlu0 %81
  %v83 = vrcp.pop 32.0
  %v84 = vmul.f32 32.0, %v83
  %v85 = vsub.f32 1.0, %v84
  %v86 = vmul.f32 %v83, %v85
  %v87 = vadd.f32 %v83, %v86
  %vm88 = vweird.f32 %v83
  %v89 = vsel %vm88, %v83, %v87
  %v90 = vmul.f32 %v37, %v89
  %v91 = vmul.f32 %v40, %v89
  %v92 = vmul.f32 %v43, %v89
  %v93 = vmul.f32 %v46, %v89
  %v94 = vmul.f32 %v49, %v89
  %v95 = vmul.f32 %v52, %v89
  %v96 = vmul.f32 %v55, %v89
  %v97 = vmul.f32 %v58, %v89
  %v98 = vmul.f32 %v61, %v89
  %v99 = vmul.f32 %v64, %v89
  %v100 = vmul.f32 %v67, %v89
  %v101 = vmul.f32 %v70, %v89
  %v102 = vmul.f32 %v73, %v89
  %v103 = vmul.f32 %v76, %v89
  %v104 = vmul.f32 %v79, %v89
  %v105 = vmul.f32 %v82, %v89
  %v106 = vsub.f32 %v18, %v90
  %v107 = vsub.f32 %v19, %v91
  %v108 = vsub.f32 %v20, %v92
  %v109 = vsub.f32 %v21, %v93
  %v110 = vsub.f32 %v22, %v94
  %v111 = vsub.f32 %v23, %v95
  %v112 = vsub.f32 %v24, %v96
  %v113 = vsub.f32 %v25, %v97
  %v114 = vsub.f32 %v26, %v98
  %v115 = vsub.f32 %v27, %v99
  %v116 = vsub.f32 %v28, %v100
  %v117 = vsub.f32 %v29, %v101
  %v118 = vsub.f32 %v30, %v102
  %v119 = vsub.f32 %v31, %v103
  %v120 = vsub.f32 %v32, %v104
  %v121 = vsub.f32 %v33, %v105
  %v122 = vmul.f32 %v106, %v106
  %v123 = vmul.f32 %v107, %v107
  %v124 = vmul.f32 %v108, %v108
  %v125 = vmul.f32 %v109, %v109
  %v126 = vmul.f32 %v110, %v110
  %v127 = vmul.f32 %v111, %v111
  %v128 = vmul.f32 %v112, %v112
  %v129 = vmul.f32 %v113, %v113
  %v130 = vmul.f32 %v114, %v114
  %v131 = vmul.f32 %v115, %v115
  %v132 = vmul.f32 %v116, %v116
  %v133 = vmul.f32 %v117, %v117
  %v134 = vmul.f32 %v118, %v118
  %v135 = vmul.f32 %v119, %v119
  %v136 = vmul.f32 %v120, %v120
  %v137 = vmul.f32 %v121, %v121
  %v138 = vsel %vm34, %v122, 0.0
  %139 = vadd.xlane.f32.xlu0 %v138
  %v140 = vpop.xlane.xlu0 %139
  %v141 = vsel %vm34, %v123, 0.0
  %142 = vadd.xlane.f32.xlu0 %v141
  %v143 = vpop.xlane.xlu0 %142
  %v144 = vsel %vm34, %v124, 0.0
  %145 = vadd.xlane.f32.xlu0 %v144
  %v146 = vpop.xlane.xlu0 %145
  %v147 = vsel %vm34, %v125, 0.0
  %148 = vadd.xlane.f32.xlu0 %v147
  %v149 = vpop.xlane.xlu0 %148
  %v150 = vsel %vm34, %v126, 0.0
  %151 = vadd.xlane.f32.xlu0 %v150
  %v152 = vpop.xlane.xlu0 %151
  %v153 = vsel %vm34, %v127, 0.0
  %154 = vadd.xlane.f32.xlu0 %v153
  %v155 = vpop.xlane.xlu0 %154
  %v156 = vsel %vm34, %v128, 0.0
  %157 = vadd.xlane.f32.xlu0 %v156
  %v158 = vpop.xlane.xlu0 %157
  %v159 = vsel %vm34, %v129, 0.0
  %160 = vadd.xlane.f32.xlu0 %v159
  %v161 = vpop.xlane.xlu0 %160
  %v162 = vsel %vm34, %v130, 0.0
  %163 = vadd.xlane.f32.xlu0 %v162
  %v164 = vpop.xlane.xlu0 %163
  %v165 = vsel %vm34, %v131, 0.0
  %166 = vadd.xlane.f32.xlu0 %v165
  %v167 = vpop.xlane.xlu0 %166
  %v168 = vsel %vm34, %v132, 0.0
  %169 = vadd.xlane.f32.xlu0 %v168
  %v170 = vpop.xlane.xlu0 %169
  %v171 = vsel %vm34, %v133, 0.0
  %172 = vadd.xlane.f32.xlu0 %v171
  %v173 = vpop.xlane.xlu0 %172
  %v174 = vsel %vm34, %v134, 0.0
  %175 = vadd.xlane.f32.xlu0 %v174
  %v176 = vpop.xlane.xlu0 %175
  %v177 = vsel %vm34, %v135, 0.0
  %178 = vadd.xlane.f32.xlu0 %v177
  %v179 = vpop.xlane.xlu0 %178
  %v180 = vsel %vm34, %v136, 0.0
  %181 = vadd.xlane.f32.xlu0 %v180
  %v182 = vpop.xlane.xlu0 %181
  %v183 = vsel %vm34, %v137, 0.0
  %184 = vadd.xlane.f32.xlu0 %v183
  %v185 = vpop.xlane.xlu0 %184
  %v186 = vmul.f32 %v140, %v89
  %v187 = vmul.f32 %v143, %v89
  %v188 = vmul.f32 %v146, %v89
  %v189 = vmul.f32 %v149, %v89
  %v190 = vmul.f32 %v152, %v89
  %v191 = vmul.f32 %v155, %v89
  %v192 = vmul.f32 %v158, %v89
  %v193 = vmul.f32 %v161, %v89
  %v194 = vmul.f32 %v164, %v89
  %v195 = vmul.f32 %v167, %v89
  %v196 = vmul.f32 %v170, %v89
  %v197 = vmul.f32 %v173, %v89
  %v198 = vmul.f32 %v176, %v89
  %v199 = vmul.f32 %v179, %v89
  %v200 = vmul.f32 %v182, %v89
  %v201 = vmul.f32 %v185, %v89
  %v202 = vadd.f32 %v186, 1e-05
  %v203 = vadd.f32 %v187, 1e-05
  %v204 = vadd.f32 %v188, 1e-05
  %v205 = vadd.f32 %v189, 1e-05
  %v206 = vadd.f32 %v190, 1e-05
  %v207 = vadd.f32 %v191, 1e-05
  %v208 = vadd.f32 %v192, 1e-05
  %v209 = vadd.f32 %v193, 1e-05
  %v210 = vadd.f32 %v194, 1e-05
  %v211 = vadd.f32 %v195, 1e-05
  %v212 = vadd.f32 %v196, 1e-05
  %v213 = vadd.f32 %v197, 1e-05
  %v214 = vadd.f32 %v198, 1e-05
  %v215 = vadd.f32 %v199, 1e-05
  %v216 = vadd.f32 %v200, 1e-05
  %v217 = vadd.f32 %v201, 1e-05
  %v218 = vrsqrt.pop %v202
  %v219 = vmul.f32 %v218, %v202
  %v220 = vmul.f32 %v219, %v218
  %v221 = vmul.f32 0.5, %v220
  %v222 = vsub.f32 1.5, %v221
  %v223 = vmul.f32 %v218, %v222
  %vm224 = vweird.f32 %v202
  %vm225 = vweird.f32 %v218
  %vm226 = vmor %vm224, %vm225
  %v227 = vsel %vm226, %v218, %v223
  %v228 = vrsqrt.pop %v203
  %v229 = vmul.f32 %v228, %v203
  %v230 = vmul.f32 %v229, %v228
  %v231 = vmul.f32 0.5, %v230
  %v232 = vsub.f32 1.5, %v231
  %v233 = vmul.f32 %v228, %v232
  %vm234 = vweird.f32 %v203
  %vm235 = vweird.f32 %v228
  %vm236 = vmor %vm234, %vm235
  %v237 = vsel %vm236, %v228, %v233
  %v238 = vrsqrt.pop %v204
  %v239 = vmul.f32 %v238, %v204
  %v240 = vmul.f32 %v239, %v238
  %v241 = vmul.f32 0.5, %v240
  %v242 = vsub.f32 1.5, %v241
  %v243 = vmul.f32 %v238, %v242
  %vm244 = vweird.f32 %v204
  %vm245 = vweird.f32 %v238
  %vm246 = vmor %vm244, %vm245
  %v247 = vsel %vm246, %v238, %v243
  %v248 = vrsqrt.pop %v205
  %v249 = vmul.f32 %v248, %v205
  %v250 = vmul.f32 %v249, %v248
  %v251 = vmul.f32 0.5, %v250
  %v252 = vsub.f32 1.5, %v251
  %v253 = vmul.f32 %v248, %v252
  %vm254 = vweird.f32 %v205
  %vm255 = vweird.f32 %v248
  %vm256 = vmor %vm254, %vm255
  %v257 = vsel %vm256, %v248, %v253
  %v258 = vrsqrt.pop %v206
  %v259 = vmul.f32 %v258, %v206
  %v260 = vmul.f32 %v259, %v258
  %v261 = vmul.f32 0.5, %v260
  %v262 = vsub.f32 1.5, %v261
  %v263 = vmul.f32 %v258, %v262
  %vm264 = vweird.f32 %v206
  %vm265 = vweird.f32 %v258
  %vm266 = vmor %vm264, %vm265
  %v267 = vsel %vm266, %v258, %v263
  %v268 = vrsqrt.pop %v207
  %v269 = vmul.f32 %v268, %v207
  %v270 = vmul.f32 %v269, %v268
  %v271 = vmul.f32 0.5, %v270
  %v272 = vsub.f32 1.5, %v271
  %v273 = vmul.f32 %v268, %v272
  %vm274 = vweird.f32 %v207
  %vm275 = vweird.f32 %v268
  %vm276 = vmor %vm274, %vm275
  %v277 = vsel %vm276, %v268, %v273
  %v278 = vrsqrt.pop %v208
  %v279 = vmul.f32 %v278, %v208
  %v280 = vmul.f32 %v279, %v278
  %v281 = vmul.f32 0.5, %v280
  %v282 = vsub.f32 1.5, %v281
  %v283 = vmul.f32 %v278, %v282
  %vm284 = vweird.f32 %v208
  %vm285 = vweird.f32 %v278
  %vm286 = vmor %vm284, %vm285
  %v287 = vsel %vm286, %v278, %v283
  %v288 = vrsqrt.pop %v209
  %v289 = vmul.f32 %v288, %v209
  %v290 = vmul.f32 %v289, %v288
  %v291 = vmul.f32 0.5, %v290
  %v292 = vsub.f32 1.5, %v291
  %v293 = vmul.f32 %v288, %v292
  %vm294 = vweird.f32 %v209
  %vm295 = vweird.f32 %v288
  %vm296 = vmor %vm294, %vm295
  %v297 = vsel %vm296, %v288, %v293
  %v298 = vrsqrt.pop %v210
  %v299 = vmul.f32 %v298, %v210
  %v300 = vmul.f32 %v299, %v298
  %v301 = vmul.f32 0.5, %v300
  %v302 = vsub.f32 1.5, %v301
  %v303 = vmul.f32 %v298, %v302
  %vm304 = vweird.f32 %v210
  %vm305 = vweird.f32 %v298
  %vm306 = vmor %vm304, %vm305
  %v307 = vsel %vm306, %v298, %v303
  %v308 = vrsqrt.pop %v211
  %v309 = vmul.f32 %v308, %v211
  %v310 = vmul.f32 %v309, %v308
  %v311 = vmul.f32 0.5, %v310
  %v312 = vsub.f32 1.5, %v311
  %v313 = vmul.f32 %v308, %v312
  %vm314 = vweird.f32 %v211
  %vm315 = vweird.f32 %v308
  %vm316 = vmor %vm314, %vm315
  %v317 = vsel %vm316, %v308, %v313
  %v318 = vrsqrt.pop %v212
  %v319 = vmul.f32 %v318, %v212
  %v320 = vmul.f32 %v319, %v318
  %v321 = vmul.f32 0.5, %v320
  %v322 = vsub.f32 1.5, %v321
  %v323 = vmul.f32 %v318, %v322
  %vm324 = vweird.f32 %v212
  %vm325 = vweird.f32 %v318
  %vm326 = vmor %vm324, %vm325
  %v327 = vsel %vm326, %v318, %v323
  %v328 = vrsqrt.pop %v213
  %v329 = vmul.f32 %v328, %v213
  %v330 = vmul.f32 %v329, %v328
  %v331 = vmul.f32 0.5, %v330
  %v332 = vsub.f32 1.5, %v331
  %v333 = vmul.f32 %v328, %v332
  %vm334 = vweird.f32 %v213
  %vm335 = vweird.f32 %v328
  %vm336 = vmor %vm334, %vm335
  %v337 = vsel %vm336, %v328, %v333
  %v338 = vrsqrt.pop %v214
  %v339 = vmul.f32 %v338, %v214
  %v340 = vmul.f32 %v339, %v338
  %v341 = vmul.f32 0.5, %v340
  %v342 = vsub.f32 1.5, %v341
  %v343 = vmul.f32 %v338, %v342
  %vm344 = vweird.f32 %v214
  %vm345 = vweird.f32 %v338
  %vm346 = vmor %vm344, %vm345
  %v347 = vsel %vm346, %v338, %v343
  %v348 = vrsqrt.pop %v215
  %v349 = vmul.f32 %v348, %v215
  %v350 = vmul.f32 %v349, %v348
  %v351 = vmul.f32 0.5, %v350
  %v352 = vsub.f32 1.5, %v351
  %v353 = vmul.f32 %v348, %v352
  %vm354 = vweird.f32 %v215
  %vm355 = vweird.f32 %v348
  %vm356 = vmor %vm354, %vm355
  %v357 = vsel %vm356, %v348, %v353
  %v358 = vrsqrt.pop %v216
  %v359 = vmul.f32 %v358, %v216
  %v360 = vmul.f32 %v359, %v358
  %v361 = vmul.f32 0.5, %v360
  %v362 = vsub.f32 1.5, %v361
  %v363 = vmul.f32 %v358, %v362
  %vm364 = vweird.f32 %v216
  %vm365 = vweird.f32 %v358
  %vm366 = vmor %vm364, %vm365
  %v367 = vsel %vm366, %v358, %v363
  %v368 = vrsqrt.pop %v217
  %v369 = vmul.f32 %v368, %v217
  %v370 = vmul.f32 %v369, %v368
  %v371 = vmul.f32 0.5, %v370
  %v372 = vsub.f32 1.5, %v371
  %v373 = vmul.f32 %v368, %v372
  %vm374 = vweird.f32 %v217
  %vm375 = vweird.f32 %v368
  %vm376 = vmor %vm374, %vm375
  %v377 = vsel %vm376, %v368, %v373
  %v378 = vmul.f32 %v106, %v227
  %v379 = vmul.f32 %v107, %v237
  %v380 = vmul.f32 %v108, %v247
  %v381 = vmul.f32 %v109, %v257
  %v382 = vmul.f32 %v110, %v267
  %v383 = vmul.f32 %v111, %v277
  %v384 = vmul.f32 %v112, %v287
  %v385 = vmul.f32 %v113, %v297
  %v386 = vmul.f32 %v114, %v307
  %v387 = vmul.f32 %v115, %v317
  %v388 = vmul.f32 %v116, %v327
  %v389 = vmul.f32 %v117, %v337
  %v390 = vmul.f32 %v118, %v347
  %v391 = vmul.f32 %v119, %v357
  %v392 = vmul.f32 %v120, %v367
  %v393 = vmul.f32 %v121, %v377
  %v394 = vld [vmem:[%s1] sm:$0x1]
  %v396 = vperm.slane %v394, 0
  %v398 = vmul.f32 %v378, %v396
  %v399 = vmul.f32 %v379, %v396
  %v400 = vmul.f32 %v380, %v396
  %v401 = vmul.f32 %v381, %v396
  %v402 = vmul.f32 %v382, %v396
  %v403 = vmul.f32 %v383, %v396
  %v404 = vmul.f32 %v384, %v396
  %v405 = vmul.f32 %v385, %v396
  %v406 = vmul.f32 %v386, %v396
  %v407 = vmul.f32 %v387, %v396
  %v408 = vmul.f32 %v388, %v396
  %v409 = vmul.f32 %v389, %v396
  %v410 = vmul.f32 %v390, %v396
  %v411 = vmul.f32 %v391, %v396
  %v412 = vmul.f32 %v392, %v396
  %v413 = vmul.f32 %v393, %v396
  %v414 = vld [vmem:[%s2] sm:$0x1]
  %v416 = vperm.slane %v414, 0
  %v418 = vadd.f32 %v398, %v416
  %v419 = vadd.f32 %v399, %v416
  %v420 = vadd.f32 %v400, %v416
  %v421 = vadd.f32 %v401, %v416
  %v422 = vadd.f32 %v402, %v416
  %v423 = vadd.f32 %v403, %v416
  %v424 = vadd.f32 %v404, %v416
  %v425 = vadd.f32 %v405, %v416
  %v426 = vadd.f32 %v406, %v416
  %v427 = vadd.f32 %v407, %v416
  %v428 = vadd.f32 %v408, %v416
  %v429 = vadd.f32 %v409, %v416
  %v430 = vadd.f32 %v410, %v416
  %v431 = vadd.f32 %v411, %v416
  %v432 = vadd.f32 %v412, %v416
  %v433 = vadd.f32 %v413, %v416
  %v434 = vpack.c.bf16 %v419, %v418
  %v435 = vpack.c.bf16 %v421, %v420
  %v436 = vpack.c.bf16 %v423, %v422
  %v437 = vpack.c.bf16 %v425, %v424
  %v438 = vpack.c.bf16 %v427, %v426
  %v439 = vpack.c.bf16 %v429, %v428
  %v440 = vpack.c.bf16 %v431, %v430
  %v441 = vpack.c.bf16 %v433, %v432
  %v442 = vld [vmem:[%s3] sm:$0xf]
  %v443 = vld [vmem:[%s3 + $0x4] sm:$0xf]
  %v444 = vld [vmem:[%s3 + $0x8] sm:$0xf]
  %v445 = vld [vmem:[%s3 + $0xc] sm:$0xf]
  %v450 = vunpack.c.l.b16 %v442
  %v451 = vunpack.c.l.b16 %v443
  %v452 = vunpack.c.l.b16 %v444
  %v453 = vunpack.c.l.b16 %v445
  %v454 = vpack.c.b16 %v451, %v450
  %v455 = vpack.c.b16 %v453, %v452
  %v459 = vsel %vm34, %v434, 0
  %v462 = vsel %vm34, %v435, 0
  %v465 = vsel %vm34, %v436, 0
  %v468 = vsel %vm34, %v437, 0
  %v471 = vsel %vm34, %v438, 0
  %v474 = vsel %vm34, %v439, 0
  %v477 = vsel %vm34, %v440, 0
  %v480 = vsel %vm34, %v441, 0
  %482 = vmatpush.bf16.msra.mxu0 0
  %483 = vmatpush.bf16.msra.mxu0 0
  %484 = vmatpush.bf16.msra.mxu0 0
  %485 = vmatpush.bf16.msra.mxu0 0
  %486 = vmatpush.bf16.msra.mxu0 0
  %487 = vmatpush.bf16.msra.mxu0 0
  %488 = vmatpush.bf16.msra.mxu0 %v455
  %489 = vmatpush.bf16.msra.mxu0 %v454
  %490 = vmatmul.bf16.gmra.mxu0 %v459
  %v491 = vpop.f32.mrf.mxu0
  %v492 = vadd.f32 0.0, %v491
  %v493 = vpop.f32.mrf.mxu0
  %v494 = vadd.f32 0.0, %v493
  %495 = vmatmul.bf16.gmra.mxu0 %v462
  %v496 = vpop.f32.mrf.mxu0
  %v497 = vadd.f32 0.0, %v496
  %v498 = vpop.f32.mrf.mxu0
  %v499 = vadd.f32 0.0, %v498
  %500 = vmatmul.bf16.gmra.mxu0 %v465
  %v501 = vpop.f32.mrf.mxu0
  %v502 = vadd.f32 0.0, %v501
  %v503 = vpop.f32.mrf.mxu0
  %v504 = vadd.f32 0.0, %v503
  %505 = vmatmul.bf16.gmra.mxu0 %v468
  %v506 = vpop.f32.mrf.mxu0
  %v507 = vadd.f32 0.0, %v506
  %v508 = vpop.f32.mrf.mxu0
  %v509 = vadd.f32 0.0, %v508
  %510 = vmatmul.bf16.gmra.mxu0 %v471
  %v511 = vpop.f32.mrf.mxu0
  %v512 = vadd.f32 0.0, %v511
  %v513 = vpop.f32.mrf.mxu0
  %v514 = vadd.f32 0.0, %v513
  %515 = vmatmul.bf16.gmra.mxu0 %v474
  %v516 = vpop.f32.mrf.mxu0
  %v517 = vadd.f32 0.0, %v516
  %v518 = vpop.f32.mrf.mxu0
  %v519 = vadd.f32 0.0, %v518
  %520 = vmatmul.bf16.gmra.mxu0 %v477
  %v521 = vpop.f32.mrf.mxu0
  %v522 = vadd.f32 0.0, %v521
  %v523 = vpop.f32.mrf.mxu0
  %v524 = vadd.f32 0.0, %v523
  %525 = vmatmul.bf16.gmra.mxu0 %v480
  %v526 = vpop.f32.mrf.mxu0
  %v527 = vadd.f32 0.0, %v526
  %v528 = vpop.f32.mrf.mxu0
  %v529 = vadd.f32 0.0, %v528
  %530 = vdwg.mxu0
  %vm531 = vcmask 785408
  %532 = vst.msk [vmem:[%s4] sm:$0xff] %vm531, %v492
  %533 = vst.msk [vmem:[%s4 + $0x8] sm:$0xff] %vm531, %v494
  %534 = vst.msk [vmem:[%s4 + $0x10] sm:$0xff] %vm531, %v497
  %535 = vst.msk [vmem:[%s4 + $0x18] sm:$0xff] %vm531, %v499
  %536 = vst.msk [vmem:[%s4 + $0x20] sm:$0xff] %vm531, %v502
  %537 = vst.msk [vmem:[%s4 + $0x28] sm:$0xff] %vm531, %v504
  %538 = vst.msk [vmem:[%s4 + $0x30] sm:$0xff] %vm531, %v507
  %539 = vst.msk [vmem:[%s4 + $0x38] sm:$0xff] %vm531, %v509
  %540 = vst.msk [vmem:[%s4 + $0x40] sm:$0xff] %vm531, %v512
  %541 = vst.msk [vmem:[%s4 + $0x48] sm:$0xff] %vm531, %v514
  %542 = vst.msk [vmem:[%s4 + $0x50] sm:$0xff] %vm531, %v517
  %543 = vst.msk [vmem:[%s4 + $0x58] sm:$0xff] %vm531, %v519
  %544 = vst.msk [vmem:[%s4 + $0x60] sm:$0xff] %vm531, %v522
  %545 = vst.msk [vmem:[%s4 + $0x68] sm:$0xff] %vm531, %v524
  %546 = vst.msk [vmem:[%s4 + $0x70] sm:$0xff] %vm531, %v527
  %547 = vst.msk [vmem:[%s4 + $0x78] sm:$0xff] %vm531, %v529
  // Predicated region
  $region18: #{_lambda_.7} parent=0 // pred_check
    _
  $region19: #{_lambda_.7} parent=0 // pred_check_branch
    %549 = sbr.rel (0) target = $region21
  $region20: #{_lambda_.7} parent=0 // pred_region
    _
  $region21: #{_lambda_.7} parent=0 // pred_fallthru
    _
  // Predicated region
  $region22: #{_lambda_.7} parent=0 // pred_check
    _
  $region23: #{_lambda_.7} parent=0 // pred_check_branch
    %551 = sbr.rel (0) target = $region25
  $region24: #{_lambda_.7} parent=0 // pred_region
    _
  $region25: #{_lambda_.7} parent=0 // pred_fallthru
    _

// kernel: _lambda_.8
$region0: #{_lambda_.8}
  #allocation0 [shape = 'u32[]', space=smem, size = 0x4, offset = 0x4, fixed_abs, tag = 'smem constant byte address 0x4 - core index']
  #allocation1 [shape = 'u32[72,128]{1,0:T(1,128)}', space=vmem, size = 0x9000, scoped, tag = 'internal scratch']
  %s0 = inlined_call_operand.vmem [shape: f32[2,8,8,32], index: 0, kind: input, shape index: {}, may-alias: {0,1,2}]
  %s1 = inlined_call_operand.vmem [shape: f32[2,8,8,32], index: 1, kind: input, shape index: {}, may-alias: {0,1,2}]
  %s2 = inlined_call_operand.vmem [shape: f32[2,8,8,32], index: 2, kind: input, shape index: {}, may-alias: {0,1,2}]
  %s3 = inlined_call_operand.vmem [shape: f32[9,32], index: 3, kind: input, shape index: {}]
  %s4 = inlined_call_operand.vmem [shape: f32[1,32], index: 4, kind: input, shape index: {}]
  %s5 = inlined_call_operand.vmem [shape: f32[2,8,8,32], index: 5, kind: output, shape index: {}]
  %s6 = sld [smem:[#allocation0]]
  $region53: #{_lambda_.8} parent=0
    _
  %s8 = ssub.s32 1, %s6
  %s9 = scalar_select 0, %s8, %s6
  loop: start=0, step=1, limit=4
  $region2: #{_lambda_.8} parent=0 // loop_pre_header
    _
  $region3: #{_lambda_.8} parent=0 // loop_header
    %s11 = sphi 0, %s15
    %p12 = scmp.ge.s32.totalorder %s11, 4
    %s18 = sphi 0, %s30
    %s19 = sphi 0, %s26
    %s20 = sphi 0, %s18
    %s21 = sphi 0, %s19
    %s22 = sphi 0, %s20
    %s23 = sphi 0, %s21
    %s43 = sphi 0, %s45
    %s46 = sphi 0, %s43
    %s47 = sphi 0, %s46
    %s63 = sphi 0, %s47
    %s71 = sphi 0, %s73
    %s74 = sphi 0, %s71
    %s75 = sphi 0, %s74
    %s91 = sphi 0, %s75
    %s107 = sphi 0, %s109
    %s110 = sphi 0, %s107
    %s111 = sphi 0, %s110
    %s127 = sphi 0, %s111
    %s131 = sphi 0, %s131
    %s133 = sphi 0, %s131
    %s134 = sphi 0, %s133
    %s148 = sphi 0, %s134
    %s152 = sphi 0, %s152
    %s154 = sphi 0, %s152
    %s155 = sphi 0, %s154
    %s169 = sphi 0, %s155
    %s177 = sphi 0, %s179
    %s180 = sphi 0, %s177
    %s181 = sphi 0, %s180
    %s197 = sphi 0, %s181
  $region4: #{_lambda_.8} parent=0 // loop_header_branch
    %14 = sbr.rel (%p12) target = $region8
  $region5: #{_lambda_.8} parent=0 // loop_body
    %s16 = ssub.s32 %s11, 1
    %s17 = ssub.s32 %s11, 2
    %s24 = sadd.s32 1, %s19
    %p25 = scmp.ge.s32.totalorder %s24, 1
    %s26 = scalar_select %p25, 0, %s24
    %s27 = sadd.s32 1, %s18
    %s28 = scalar_select %p25, %s27, %s18
    %p29 = scmp.ge.s32.totalorder %s28, 2
    %s30 = scalar_select %p29, 0, %s28
    %s31 = smul.u32 %s19, 8
    %s32 = ssub.s32 %s31, 1
    %p33 = scmp.gt.s32.totalorder %s32, 0
    %s34 = scalar_select %p33, %s32, 0
    %s35 = smul.u32 %s26, 8
    %s36 = ssub.s32 %s35, 1
    %p37 = scmp.gt.s32.totalorder %s36, 0
    %s38 = scalar_select %p37, %s36, 0
    %s39 = ssub.s32 %s18, %s30
    %s40 = ssub.s32 %s34, %s38
    %s41 = sor.u32 %s39, %s40
    %p42 = scmp.eq.s32.totalorder %s41, 0
    %s44 = sadd.s32 %s43, 1
    %s45 = scalar_select %p42, %s43, %s44
    %p48 = pneg %p42
    %p49 = scmp.eq.s32.totalorder %s11, 1
    %p50 = por %p48, %p49
    %p51 = scmp.ne.s32.totalorder %s43, %s46
    %p52 = scmp.eq.s32.totalorder %s11, 0
    %p53 = por %p51, %p52
    %p54 = scmp.ne.s32.totalorder %s43, %s46
    %p55 = scmp.eq.s32.totalorder %s16, 1
    %p56 = por %p54, %p55
    %p57 = scmp.ne.s32.totalorder %s46, %s47
    %p58 = scmp.eq.s32.totalorder %s16, 0
    %p59 = por %p57, %p58
    %p60 = scmp.ne.s32.totalorder %s46, %s47
    %p61 = scmp.eq.s32.totalorder %s17, 1
    %p62 = por %p60, %p61
    %p64 = scmp.ne.s32.totalorder %s47, %s63
    %p65 = scmp.eq.s32.totalorder %s17, 0
    %p66 = por %p64, %p65
    %s67 = ssub.s32 %s18, %s30
    %s68 = ssub.s32 %s19, %s26
    %s69 = sor.u32 %s67, %s68
    %p70 = scmp.eq.s32.totalorder %s69, 0
    %s72 = sadd.s32 %s71, 1
    %s73 = scalar_select %p70, %s71, %s72
    %p76 = pneg %p70
    %p77 = scmp.eq.s32.totalorder %s11, 1
    %p78 = por %p76, %p77
    %p79 = scmp.ne.s32.totalorder %s71, %s74
    %p80 = scmp.eq.s32.totalorder %s11, 0
    %p81 = por %p79, %p80
    %p82 = scmp.ne.s32.totalorder %s71, %s74
    %p83 = scmp.eq.s32.totalorder %s16, 1
    %p84 = por %p82, %p83
    %p85 = scmp.ne.s32.totalorder %s74, %s75
    %p86 = scmp.eq.s32.totalorder %s16, 0
    %p87 = por %p85, %p86
    %p88 = scmp.ne.s32.totalorder %s74, %s75
    %p89 = scmp.eq.s32.totalorder %s17, 1
    %p90 = por %p88, %p89
    %p92 = scmp.ne.s32.totalorder %s75, %s91
    %p93 = scmp.eq.s32.totalorder %s17, 0
    %p94 = por %p92, %p93
    %s95 = sadd.s32 %s19, 1
    %s96 = smul.u32 %s95, 8
    %p97 = scmp.lt.s32.totalorder %s96, 7
    %s98 = scalar_select %p97, %s96, 7
    %s99 = sadd.s32 %s26, 1
    %s100 = smul.u32 %s99, 8
    %p101 = scmp.lt.s32.totalorder %s100, 7
    %s102 = scalar_select %p101, %s100, 7
    %s103 = ssub.s32 %s18, %s30
    %s104 = ssub.s32 %s98, %s102
    %s105 = sor.u32 %s103, %s104
    %p106 = scmp.eq.s32.totalorder %s105, 0
    %s108 = sadd.s32 %s107, 1
    %s109 = scalar_select %p106, %s107, %s108
    %p112 = pneg %p106
    %p113 = scmp.eq.s32.totalorder %s11, 1
    %p114 = por %p112, %p113
    %p115 = scmp.ne.s32.totalorder %s107, %s110
    %p116 = scmp.eq.s32.totalorder %s11, 0
    %p117 = por %p115, %p116
    %p118 = scmp.ne.s32.totalorder %s107, %s110
    %p119 = scmp.eq.s32.totalorder %s16, 1
    %p120 = por %p118, %p119
    %p121 = scmp.ne.s32.totalorder %s110, %s111
    %p122 = scmp.eq.s32.totalorder %s16, 0
    %p123 = por %p121, %p122
    %p124 = scmp.ne.s32.totalorder %s110, %s111
    %p125 = scmp.eq.s32.totalorder %s17, 1
    %p126 = por %p124, %p125
    %p128 = scmp.ne.s32.totalorder %s111, %s127
    %p129 = scmp.eq.s32.totalorder %s17, 0
    %p130 = por %p128, %p129
    %s132 = sadd.s32 %s131, 1
    %p135 = scmp.eq.s32.totalorder %s11, 1
    %p136 = scmp.ne.s32.totalorder %s131, %s133
    %p137 = scmp.eq.s32.totalorder %s11, 0
    %p138 = por %p136, %p137
    %p139 = scmp.ne.s32.totalorder %s131, %s133
    %p140 = scmp.eq.s32.totalorder %s16, 1
    %p141 = por %p139, %p140
    %p142 = scmp.ne.s32.totalorder %s133, %s134
    %p143 = scmp.eq.s32.totalorder %s16, 0
    %p144 = por %p142, %p143
    %p145 = scmp.ne.s32.totalorder %s133, %s134
    %p146 = scmp.eq.s32.totalorder %s17, 1
    %p147 = por %p145, %p146
    %p149 = scmp.ne.s32.totalorder %s134, %s148
    %p150 = scmp.eq.s32.totalorder %s17, 0
    %p151 = por %p149, %p150
    %s153 = sadd.s32 %s152, 1
    %p156 = scmp.eq.s32.totalorder %s11, 1
    %p157 = scmp.ne.s32.totalorder %s152, %s154
    %p158 = scmp.eq.s32.totalorder %s11, 0
    %p159 = por %p157, %p158
    %p160 = scmp.ne.s32.totalorder %s152, %s154
    %p161 = scmp.eq.s32.totalorder %s16, 1
    %p162 = por %p160, %p161
    %p163 = scmp.ne.s32.totalorder %s154, %s155
    %p164 = scmp.eq.s32.totalorder %s16, 0
    %p165 = por %p163, %p164
    %p166 = scmp.ne.s32.totalorder %s154, %s155
    %p167 = scmp.eq.s32.totalorder %s17, 1
    %p168 = por %p166, %p167
    %p170 = scmp.ne.s32.totalorder %s155, %s169
    %p171 = scmp.eq.s32.totalorder %s17, 0
    %p172 = por %p170, %p171
    %s173 = ssub.s32 %s18, %s30
    %s174 = ssub.s32 %s19, %s26
    %s175 = sor.u32 %s173, %s174
    %p176 = scmp.eq.s32.totalorder %s175, 0
    %s178 = sadd.s32 %s177, 1
    %s179 = scalar_select %p176, %s177, %s178
    %p182 = pneg %p176
    %p183 = scmp.eq.s32.totalorder %s11, 1
    %p184 = por %p182, %p183
    %p185 = scmp.ne.s32.totalorder %s177, %s180
    %p186 = scmp.eq.s32.totalorder %s11, 0
    %p187 = por %p185, %p186
    %p188 = scmp.ne.s32.totalorder %s177, %s180
    %p189 = scmp.eq.s32.totalorder %s16, 1
    %p190 = por %p188, %p189
    %p191 = scmp.ne.s32.totalorder %s180, %s181
    %p192 = scmp.eq.s32.totalorder %s16, 0
    %p193 = por %p191, %p192
    %p194 = scmp.ne.s32.totalorder %s180, %s181
    %p195 = scmp.eq.s32.totalorder %s17, 1
    %p196 = por %p194, %p195
    %p198 = scmp.ne.s32.totalorder %s181, %s197
    %p199 = scmp.eq.s32.totalorder %s17, 0
    %p200 = por %p198, %p199
    %p201 = scmp.le.s32.totalorder 1, %s11
    %p202 = scmp.lt.s32.totalorder %s11, 3
    %p203 = pnand %p201, %p202
    %p204 = pneg %p203
    // Predicated region
    $region9: #{_lambda_.8} parent=5 // pred_check
      _
    $region10: #{_lambda_.8} parent=5 // pred_check_branch
      %206 = sbr.rel (%p203) target = $region12
    $region11: #{_lambda_.8} parent=5 // pred_region
      %s207 = ssub.s32 %s11, 1
      // Predicated region
      $region13: #{_lambda_.8} parent=11 // pred_check
        %p208 = pneg %p144
      $region14: #{_lambda_.8} parent=11 // pred_check_branch
        %210 = sbr.rel (%p208) target = $region16
      $region15: #{_lambda_.8} parent=11 // pred_region
        _
      $region16: #{_lambda_.8} parent=11 // pred_fallthru
        _
      // Predicated region
      $region17: #{_lambda_.8} parent=11 // pred_check
        %p211 = pneg %p165
      $region18: #{_lambda_.8} parent=11 // pred_check_branch
        %213 = sbr.rel (%p211) target = $region20
      $region19: #{_lambda_.8} parent=11 // pred_region
        _
      $region20: #{_lambda_.8} parent=11 // pred_fallthru
        _
    $region12: #{_lambda_.8} parent=5 // pred_fallthru
      _
    %p214 = scmp.lt.s32.totalorder %s11, 2
    // Predicated region
    $region21: #{_lambda_.8} parent=5 // pred_check
      %p215 = pneg %p214
    $region22: #{_lambda_.8} parent=5 // pred_check_branch
      %217 = sbr.rel (%p215) target = $region24
    $region23: #{_lambda_.8} parent=5 // pred_region
      // Predicated region
      $region25: #{_lambda_.8} parent=23 // pred_check
        %p218 = pneg %p53
      $region26: #{_lambda_.8} parent=23 // pred_check_branch
        %220 = sbr.rel (%p218) target = $region28
      $region27: #{_lambda_.8} parent=23 // pred_region
        %s221 = smul.u32 %s19, 8
        %s222 = ssub.s32 %s221, 1
        %p223 = scmp.gt.s32.totalorder %s222, 0
        %s224 = scalar_select %p223, %s222, 0
        %p225 = scmp.lt.s32.totalorder %s18, 1
        %s226 = scalar_select %p225, %s18, 1
        %p227 = scmp.lt.s32.totalorder %s224, 7
        %s228 = scalar_select %p227, %s224, 7
        %s229 = smul.addr %s226, 8
        %s230 = sadd.s32 %s228, %s229
        %s231 = smul.addr %s230, 8
        %s232 = scalar_lea.vmem %s0, %s231
        %s233 = smul.u32 %s19, 8
        %s234 = ssub.s32 %s233, 1
        %p235 = scmp.gt.s32.totalorder %s234, 0
        %s236 = scalar_select %p235, %s234, 0
      $region28: #{_lambda_.8} parent=23 // pred_fallthru
        _
      // Predicated region
      $region29: #{_lambda_.8} parent=23 // pred_check
        %p237 = pneg %p81
      $region30: #{_lambda_.8} parent=23 // pred_check_branch
        %239 = sbr.rel (%p237) target = $region32
      $region31: #{_lambda_.8} parent=23 // pred_region
        %s240 = smul.u32 8, %s19
        %p241 = scmp.lt.s32.totalorder %s18, 1
        %s242 = scalar_select %p241, %s18, 1
        %p243 = scmp.lt.s32.totalorder %s240, 7
        %s244 = scalar_select %p243, %s240, 7
        %s245 = smul.addr %s242, 8
        %s246 = sadd.s32 %s244, %s245
        %s247 = smul.addr %s246, 8
        %s248 = scalar_lea.vmem %s1, %s247
        %s249 = smul.u32 8, %s19
      $region32: #{_lambda_.8} parent=23 // pred_fallthru
        _
      // Predicated region
      $region33: #{_lambda_.8} parent=23 // pred_check
        %p250 = pneg %p117
      $region34: #{_lambda_.8} parent=23 // pred_check_branch
        %252 = sbr.rel (%p250) target = $region36
      $region35: #{_lambda_.8} parent=23 // pred_region
        %s253 = sadd.s32 %s19, 1
        %s254 = smul.u32 %s253, 8
        %p255 = scmp.lt.s32.totalorder %s254, 7
        %s256 = scalar_select %p255, %s254, 7
        %p257 = scmp.lt.s32.totalorder %s18, 1
        %s258 = scalar_select %p257, %s18, 1
        %p259 = scmp.lt.s32.totalorder %s256, 7
        %s260 = scalar_select %p259, %s256, 7
        %s261 = smul.addr %s258, 8
        %s262 = sadd.s32 %s260, %s261
        %s263 = smul.addr %s262, 8
        %s264 = scalar_lea.vmem %s2, %s263
        %s265 = sadd.s32 %s19, 1
        %s266 = smul.u32 %s265, 8
        %p267 = scmp.lt.s32.totalorder %s266, 7
        %s268 = scalar_select %p267, %s266, 7
      $region36: #{_lambda_.8} parent=23 // pred_fallthru
        _
    $region24: #{_lambda_.8} parent=5 // pred_fallthru
      _
    %p269 = scmp.le.s32.totalorder 1, %s11
    %p270 = scmp.lt.s32.totalorder %s11, 3
    %p271 = pnand %p269, %p270
    %p272 = pneg %p271
    // Predicated region
    $region37: #{_lambda_.8} parent=5 // pred_check
      _
    $region38: #{_lambda_.8} parent=5 // pred_check_branch
      %274 = sbr.rel (%p271) target = $region40
    $region39: #{_lambda_.8} parent=5 // pred_region
      %s275 = ssub.s32 %s11, 1
      %s276 = smul.u32 %s21, 8
      %s277 = ssub.s32 %s276, 1
      %p278 = scmp.gt.s32.totalorder %s277, 0
      %s279 = scalar_select %p278, %s277, 0
      %p280 = scmp.lt.s32.totalorder %s20, 1
      %s281 = scalar_select %p280, %s20, 1
      %p282 = scmp.lt.s32.totalorder %s279, 7
      %s283 = scalar_select %p282, %s279, 7
      %s284 = smul.addr %s281, 8
      %s285 = sadd.s32 %s283, %s284
      %s286 = smul.addr %s285, 8
      %s287 = scalar_lea.vmem %s0, %s286
      %p288 = pneg %p59
      %p289 = pneg %p56
      %s290 = smul.u32 8, %s21
      %p291 = scmp.lt.s32.totalorder %s20, 1
      %s292 = scalar_select %p291, %s20, 1
      %p293 = scmp.lt.s32.totalorder %s290, 7
      %s294 = scalar_select %p293, %s290, 7
      %s295 = smul.addr %s292, 8
      %s296 = sadd.s32 %s294, %s295
      %s297 = smul.addr %s296, 8
      %s298 = scalar_lea.vmem %s1, %s297
      %p299 = pneg %p87
      %p300 = pneg %p84
      %s301 = sadd.s32 %s21, 1
      %s302 = smul.u32 %s301, 8
      %p303 = scmp.lt.s32.totalorder %s302, 7
      %s304 = scalar_select %p303, %s302, 7
      %p305 = scmp.lt.s32.totalorder %s20, 1
      %s306 = scalar_select %p305, %s20, 1
      %p307 = scmp.lt.s32.totalorder %s304, 7
      %s308 = scalar_select %p307, %s304, 7
      %s309 = smul.addr %s306, 8
      %s310 = sadd.s32 %s308, %s309
      %s311 = smul.addr %s310, 8
      %s312 = scalar_lea.vmem %s2, %s311
      %p313 = pneg %p123
      %p314 = pneg %p120
      %p315 = pneg %p144
      %p316 = pneg %p141
      %p317 = pneg %p165
      %p318 = pneg %p162
      %p319 = pneg %p193
      %p320 = pneg %p190
      %s321 = smul.u32 8, %s21
      %p322 = scmp.lt.s32.totalorder %s20, 1
      %s323 = scalar_select %p322, %s20, 1
      %p324 = scmp.lt.s32.totalorder %s321, 7
      %s325 = scalar_select %p324, %s321, 7
      %s326 = smul.addr %s323, 8
      %s327 = sadd.s32 %s325, %s326
      %s328 = smul.addr %s327, 8
      %s329 = scalar_lea.vmem %s5, %s328
      %s330 = smul.u32 %s21, 8
      %s331 = ssub.s32 %s330, 1
      %p332 = scmp.gt.s32.totalorder %s331, 0
      %s333 = scalar_select %p332, %s331, 0
      %p334 = scmp.lt.s32.totalorder %s20, 1
      %s335 = scalar_select %p334, %s20, 1
      %p336 = scmp.lt.s32.totalorder %s333, 7
      %s337 = scalar_select %p336, %s333, 7
      %s338 = smul.addr %s335, 8
      %s339 = sadd.s32 %s337, %s338
      %s340 = smul.addr %s339, 8
      %s341 = scalar_lea.vmem %s0, %s340
      %s342 = smul.u32 %s21, 8
      %s343 = ssub.s32 %s342, 1
      %p344 = scmp.gt.s32.totalorder %s343, 0
      %s345 = scalar_select %p344, %s343, 0
      %s346 = smul.u32 8, %s21
      %p347 = scmp.lt.s32.totalorder %s20, 1
      %s348 = scalar_select %p347, %s20, 1
      %p349 = scmp.lt.s32.totalorder %s346, 7
      %s350 = scalar_select %p349, %s346, 7
      %s351 = smul.addr %s348, 8
      %s352 = sadd.s32 %s350, %s351
      %s353 = smul.addr %s352, 8
      %s354 = scalar_lea.vmem %s1, %s353
      %s355 = smul.u32 8, %s21
      %s356 = sadd.s32 %s21, 1
      %s357 = smul.u32 %s356, 8
      %p358 = scmp.lt.s32.totalorder %s357, 7
      %s359 = scalar_select %p358, %s357, 7
      %p360 = scmp.lt.s32.totalorder %s20, 1
      %s361 = scalar_select %p360, %s20, 1
      %p362 = scmp.lt.s32.totalorder %s359, 7
      %s363 = scalar_select %p362, %s359, 7
      %s364 = smul.addr %s361, 8
      %s365 = sadd.s32 %s363, %s364
      %s366 = smul.addr %s365, 8
      %s367 = scalar_lea.vmem %s2, %s366
      %s368 = sadd.s32 %s21, 1
      %s369 = smul.u32 %s368, 8
      %p370 = scmp.lt.s32.totalorder %s369, 7
      %s371 = scalar_select %p370, %s369, 7
      %s372 = smul.u32 8, %s21
      %p373 = scmp.lt.s32.totalorder %s20, 1
      %s374 = scalar_select %p373, %s20, 1
      %p375 = scmp.lt.s32.totalorder %s372, 7
      %s376 = scalar_select %p375, %s372, 7
      %s377 = smul.addr %s374, 8
      %s378 = sadd.s32 %s376, %s377
      %s379 = smul.addr %s378, 8
      %s380 = scalar_lea.vmem %s5, %s379
      %s381 = smul.u32 8, %s21
      %p382 = scmp.gt.s32.totalorder %s21, 0
      %s383 = scalar_select %p382, 1.0, 0.0
      %v384 = vld [vmem:[%s341] sm:$0xff]
      %v385 = vstv %s383
      %v386 = vmul.f32 %v385, %v384
      %p387 = scmp.lt.s32.totalorder %s21, 0
      %s388 = scalar_select %p387, 1.0, 0.0
      %v389 = vld [vmem:[%s367] sm:$0xff]
      %v390 = vstv %s388
      %v391 = vmul.f32 %v390, %v389
      %v392 = vld [vmem:[%s354] sm:$0xff]
      %v393 = vld [vmem:[%s354 + $0x8] sm:$0xff]
      %v394 = vld [vmem:[%s354 + $0x10] sm:$0xff]
      %v395 = vld [vmem:[%s354 + $0x18] sm:$0xff]
      %v396 = vld [vmem:[%s354 + $0x20] sm:$0xff]
      %v397 = vld [vmem:[%s354 + $0x28] sm:$0xff]
      %v398 = vld [vmem:[%s354 + $0x30] sm:$0xff]
      %v399 = vld [vmem:[%s354 + $0x38] sm:$0xff]
      %v410 = vrot.slane %v386, 7
      %v411 = vrot.slane %v392, 7
      %v412 = vrot.slane %v393, 7
      %v413 = vrot.slane %v394, 7
      %v414 = vrot.slane %v395, 7
      %v415 = vrot.slane %v396, 7
      %v416 = vrot.slane %v397, 7
      %v417 = vrot.slane %v398, 7
      %v418 = vrot.slane %v399, 7
      %v419 = vrot.slane %v391, 7
      %vm430 = vcmask 1040384
      %v431 = vsel %vm430, 0.0, %v410
      %v432 = vsel %vm430, 0.0, %v411
      %v433 = vsel %vm430, 0.0, %v412
      %v434 = vsel %vm430, 0.0, %v413
      %v435 = vsel %vm430, 0.0, %v414
      %v436 = vsel %vm430, 0.0, %v415
      %v437 = vsel %vm430, 0.0, %v416
      %v438 = vsel %vm430, 0.0, %v417
      %v439 = vsel %vm430, 0.0, %v418
      %v440 = vsel %vm430, 0.0, %v419
      %v441 = vsel %vm430, %v410, 0.0
      %v442 = vsel %vm430, %v411, 0.0
      %v443 = vsel %vm430, %v412, 0.0
      %v444 = vsel %vm430, %v413, 0.0
      %v445 = vsel %vm430, %v414, 0.0
      %v446 = vsel %vm430, %v415, 0.0
      %v447 = vsel %vm430, %v416, 0.0
      %v448 = vsel %vm430, %v417, 0.0
      %v449 = vsel %vm430, %v418, 0.0
      %v450 = vsel %vm430, %v419, 0.0
      %v451 = vld [vmem:[%s3] sm:$0xff]
      %v452 = vld [vmem:[%s3 + $0x8] sm:$0x1]
      %v453 = vperm.slane %v451, 0
      %v454 = vmul.f32 %v431, %v453
      %v455 = vmul.f32 %v432, %v453
      %v456 = vmul.f32 %v433, %v453
      %v457 = vmul.f32 %v434, %v453
      %v458 = vmul.f32 %v435, %v453
      %v459 = vmul.f32 %v436, %v453
      %v460 = vmul.f32 %v437, %v453
      %v461 = vmul.f32 %v438, %v453
      %v462 = vadd.f32 %v454, 0.0
      %v463 = vadd.f32 %v455, 0.0
      %v464 = vadd.f32 %v456, 0.0
      %v465 = vadd.f32 %v457, 0.0
      %v466 = vadd.f32 %v458, 0.0
      %v467 = vadd.f32 %v459, 0.0
      %v468 = vadd.f32 %v460, 0.0
      %v469 = vadd.f32 %v461, 0.0
      %v470 = vperm.slane %v451, 1
      %v471 = vmul.f32 %v431, %v470
      %v472 = vmul.f32 %v441, %v470
      %v473 = vmul.f32 %v432, %v470
      %v474 = vmul.f32 %v442, %v470
      %v475 = vmul.f32 %v433, %v470
      %v476 = vmul.f32 %v443, %v470
      %v477 = vmul.f32 %v434, %v470
      %v478 = vmul.f32 %v444, %v470
      %v479 = vmul.f32 %v435, %v470
      %v480 = vmul.f32 %v445, %v470
      %v481 = vmul.f32 %v436, %v470
      %v482 = vmul.f32 %v446, %v470
      %v483 = vmul.f32 %v437, %v470
      %v484 = vmul.f32 %v447, %v470
      %v485 = vmul.f32 %v438, %v470
      %v486 = vmul.f32 %v448, %v470
      %vm503 = vcmask 1046528
      %v504 = vrot.slane %v471, 1
      %v505 = vrot.slane %v472, 1
      %v506 = vsel %vm503, %v504, %v505
      %v507 = vrot.slane %v473, 1
      %v508 = vrot.slane %v474, 1
      %v509 = vsel %vm503, %v507, %v508
      %v510 = vrot.slane %v475, 1
      %v511 = vrot.slane %v476, 1
      %v512 = vsel %vm503, %v510, %v511
      %v513 = vrot.slane %v477, 1
      %v514 = vrot.slane %v478, 1
      %v515 = vsel %vm503, %v513, %v514
      %v516 = vrot.slane %v479, 1
      %v517 = vrot.slane %v480, 1
      %v518 = vsel %vm503, %v516, %v517
      %v519 = vrot.slane %v481, 1
      %v520 = vrot.slane %v482, 1
      %v521 = vsel %vm503, %v519, %v520
      %v522 = vrot.slane %v483, 1
      %v523 = vrot.slane %v484, 1
      %v524 = vsel %vm503, %v522, %v523
      %v525 = vrot.slane %v485, 1
      %v526 = vrot.slane %v486, 1
      %v527 = vsel %vm503, %v525, %v526
      %v536 = vadd.f32 %v462, %v506
      %v537 = vadd.f32 %v463, %v509
      %v538 = vadd.f32 %v464, %v512
      %v539 = vadd.f32 %v465, %v515
      %v540 = vadd.f32 %v466, %v518
      %v541 = vadd.f32 %v467, %v521
      %v542 = vadd.f32 %v468, %v524
      %v543 = vadd.f32 %v469, %v527
      %v544 = vperm.slane %v451, 2
      %v545 = vmul.f32 %v431, %v544
      %v546 = vmul.f32 %v441, %v544
      %v547 = vmul.f32 %v432, %v544
      %v548 = vmul.f32 %v442, %v544
      %v549 = vmul.f32 %v433, %v544
      %v550 = vmul.f32 %v443, %v544
      %v551 = vmul.f32 %v434, %v544
      %v552 = vmul.f32 %v444, %v544
      %v553 = vmul.f32 %v435, %v544
      %v554 = vmul.f32 %v445, %v544
      %v555 = vmul.f32 %v436, %v544
      %v556 = vmul.f32 %v446, %v544
      %v557 = vmul.f32 %v437, %v544
      %v558 = vmul.f32 %v447, %v544
      %v559 = vmul.f32 %v438, %v544
      %v560 = vmul.f32 %v448, %v544
      %vm577 = vcmask 1045504
      %v578 = vrot.slane %v545, 2
      %v579 = vrot.slane %v546, 2
      %v580 = vsel %vm577, %v578, %v579
      %v581 = vrot.slane %v547, 2
      %v582 = vrot.slane %v548, 2
      %v583 = vsel %vm577, %v581, %v582
      %v584 = vrot.slane %v549, 2
      %v585 = vrot.slane %v550, 2
      %v586 = vsel %vm577, %v584, %v585
      %v587 = vrot.slane %v551, 2
      %v588 = vrot.slane %v552, 2
      %v589 = vsel %vm577, %v587, %v588
      %v590 = vrot.slane %v553, 2
      %v591 = vrot.slane %v554, 2
      %v592 = vsel %vm577, %v590, %v591
      %v593 = vrot.slane %v555, 2
      %v594 = vrot.slane %v556, 2
      %v595 = vsel %vm577, %v593, %v594
      %v596 = vrot.slane %v557, 2
      %v597 = vrot.slane %v558, 2
      %v598 = vsel %vm577, %v596, %v597
      %v599 = vrot.slane %v559, 2
      %v600 = vrot.slane %v560, 2
      %v601 = vsel %vm577, %v599, %v600
      %v610 = vadd.f32 %v536, %v580
      %v611 = vadd.f32 %v537, %v583
      %v612 = vadd.f32 %v538, %v586
      %v613 = vadd.f32 %v539, %v589
      %v614 = vadd.f32 %v540, %v592
      %v615 = vadd.f32 %v541, %v595
      %v616 = vadd.f32 %v542, %v598
      %v617 = vadd.f32 %v543, %v601
      %v618 = vperm.slane %v451, 3
      %v619 = vmul.f32 %v432, %v618
      %v620 = vmul.f32 %v433, %v618
      %v621 = vmul.f32 %v434, %v618
      %v622 = vmul.f32 %v435, %v618
      %v623 = vmul.f32 %v436, %v618
      %v624 = vmul.f32 %v437, %v618
      %v625 = vmul.f32 %v438, %v618
      %v626 = vmul.f32 %v439, %v618
      %v627 = vadd.f32 %v610, %v619
      %v628 = vadd.f32 %v611, %v620
      %v629 = vadd.f32 %v612, %v621
      %v630 = vadd.f32 %v613, %v622
      %v631 = vadd.f32 %v614, %v623
      %v632 = vadd.f32 %v615, %v624
      %v633 = vadd.f32 %v616, %v625
      %v634 = vadd.f32 %v617, %v626
      %v635 = vperm.slane %v451, 4
      %v636 = vmul.f32 %v432, %v635
      %v637 = vmul.f32 %v442, %v635
      %v638 = vmul.f32 %v433, %v635
      %v639 = vmul.f32 %v443, %v635
      %v640 = vmul.f32 %v434, %v635
      %v641 = vmul.f32 %v444, %v635
      %v642 = vmul.f32 %v435, %v635
      %v643 = vmul.f32 %v445, %v635
      %v644 = vmul.f32 %v436, %v635
      %v645 = vmul.f32 %v446, %v635
      %v646 = vmul.f32 %v437, %v635
      %v647 = vmul.f32 %v447, %v635
      %v648 = vmul.f32 %v438, %v635
      %v649 = vmul.f32 %v448, %v635
      %v650 = vmul.f32 %v439, %v635
      %v651 = vmul.f32 %v449, %v635
      %v668 = vrot.slane %v636, 1
      %v669 = vrot.slane %v637, 1
      %v670 = vsel %vm503, %v668, %v669
      %v671 = vrot.slane %v638, 1
      %v672 = vrot.slane %v639, 1
      %v673 = vsel %vm503, %v671, %v672
      %v674 = vrot.slane %v640, 1
      %v675 = vrot.slane %v641, 1
      %v676 = vsel %vm503, %v674, %v675
      %v677 = vrot.slane %v642, 1
      %v678 = vrot.slane %v643, 1
      %v679 = vsel %vm503, %v677, %v678
      %v680 = vrot.slane %v644, 1
      %v681 = vrot.slane %v645, 1
      %v682 = vsel %vm503, %v680, %v681
      %v683 = vrot.slane %v646, 1
      %v684 = vrot.slane %v647, 1
      %v685 = vsel %vm503, %v683, %v684
      %v686 = vrot.slane %v648, 1
      %v687 = vrot.slane %v649, 1
      %v688 = vsel %vm503, %v686, %v687
      %v689 = vrot.slane %v650, 1
      %v690 = vrot.slane %v651, 1
      %v691 = vsel %vm503, %v689, %v690
      %v700 = vadd.f32 %v627, %v670
      %v701 = vadd.f32 %v628, %v673
      %v702 = vadd.f32 %v629, %v676
      %v703 = vadd.f32 %v630, %v679
      %v704 = vadd.f32 %v631, %v682
      %v705 = vadd.f32 %v632, %v685
      %v706 = vadd.f32 %v633, %v688
      %v707 = vadd.f32 %v634, %v691
      %v708 = vperm.slane %v451, 5
      %v709 = vmul.f32 %v432, %v708
      %v710 = vmul.f32 %v442, %v708
      %v711 = vmul.f32 %v433, %v708
      %v712 = vmul.f32 %v443, %v708
      %v713 = vmul.f32 %v434, %v708
      %v714 = vmul.f32 %v444, %v708
      %v715 = vmul.f32 %v435, %v708
      %v716 = vmul.f32 %v445, %v708
      %v717 = vmul.f32 %v436, %v708
      %v718 = vmul.f32 %v446, %v708
      %v719 = vmul.f32 %v437, %v708
      %v720 = vmul.f32 %v447, %v708
      %v721 = vmul.f32 %v438, %v708
      %v722 = vmul.f32 %v448, %v708
      %v723 = vmul.f32 %v439, %v708
      %v724 = vmul.f32 %v449, %v708
      %v741 = vrot.slane %v709, 2
      %v742 = vrot.slane %v710, 2
      %v743 = vsel %vm577, %v741, %v742
      %v744 = vrot.slane %v711, 2
      %v745 = vrot.slane %v712, 2
      %v746 = vsel %vm577, %v744, %v745
      %v747 = vrot.slane %v713, 2
      %v748 = vrot.slane %v714, 2
      %v749 = vsel %vm577, %v747, %v748
      %v750 = vrot.slane %v715, 2
      %v751 = vrot.slane %v716, 2
      %v752 = vsel %vm577, %v750, %v751
      %v753 = vrot.slane %v717, 2
      %v754 = vrot.slane %v718, 2
      %v755 = vsel %vm577, %v753, %v754
      %v756 = vrot.slane %v719, 2
      %v757 = vrot.slane %v720, 2
      %v758 = vsel %vm577, %v756, %v757
      %v759 = vrot.slane %v721, 2
      %v760 = vrot.slane %v722, 2
      %v761 = vsel %vm577, %v759, %v760
      %v762 = vrot.slane %v723, 2
      %v763 = vrot.slane %v724, 2
      %v764 = vsel %vm577, %v762, %v763
      %v773 = vadd.f32 %v700, %v743
      %v774 = vadd.f32 %v701, %v746
      %v775 = vadd.f32 %v702, %v749
      %v776 = vadd.f32 %v703, %v752
      %v777 = vadd.f32 %v704, %v755
      %v778 = vadd.f32 %v705, %v758
      %v779 = vadd.f32 %v706, %v761
      %v780 = vadd.f32 %v707, %v764
      %v781 = vperm.slane %v451, 6
      %v782 = vmul.f32 %v433, %v781
      %v783 = vmul.f32 %v434, %v781
      %v784 = vmul.f32 %v435, %v781
      %v785 = vmul.f32 %v436, %v781
      %v786 = vmul.f32 %v437, %v781
      %v787 = vmul.f32 %v438, %v781
      %v788 = vmul.f32 %v439, %v781
      %v789 = vmul.f32 %v440, %v781
      %v790 = vadd.f32 %v773, %v782
      %v791 = vadd.f32 %v774, %v783
      %v792 = vadd.f32 %v775, %v784
      %v793 = vadd.f32 %v776, %v785
      %v794 = vadd.f32 %v777, %v786
      %v795 = vadd.f32 %v778, %v787
      %v796 = vadd.f32 %v779, %v788
      %v797 = vadd.f32 %v780, %v789
      %v798 = vperm.slane %v451, 7
      %v799 = vmul.f32 %v433, %v798
      %v800 = vmul.f32 %v443, %v798
      %v801 = vmul.f32 %v434, %v798
      %v802 = vmul.f32 %v444, %v798
      %v803 = vmul.f32 %v435, %v798
      %v804 = vmul.f32 %v445, %v798
      %v805 = vmul.f32 %v436, %v798
      %v806 = vmul.f32 %v446, %v798
      %v807 = vmul.f32 %v437, %v798
      %v808 = vmul.f32 %v447, %v798
      %v809 = vmul.f32 %v438, %v798
      %v810 = vmul.f32 %v448, %v798
      %v811 = vmul.f32 %v439, %v798
      %v812 = vmul.f32 %v449, %v798
      %v813 = vmul.f32 %v440, %v798
      %v814 = vmul.f32 %v450, %v798
      %v831 = vrot.slane %v799, 1
      %v832 = vrot.slane %v800, 1
      %v833 = vsel %vm503, %v831, %v832
      %v834 = vrot.slane %v801, 1
      %v835 = vrot.slane %v802, 1
      %v836 = vsel %vm503, %v834, %v835
      %v837 = vrot.slane %v803, 1
      %v838 = vrot.slane %v804, 1
      %v839 = vsel %vm503, %v837, %v838
      %v840 = vrot.slane %v805, 1
      %v841 = vrot.slane %v806, 1
      %v842 = vsel %vm503, %v840, %v841
      %v843 = vrot.slane %v807, 1
      %v844 = vrot.slane %v808, 1
      %v845 = vsel %vm503, %v843, %v844
      %v846 = vrot.slane %v809, 1
      %v847 = vrot.slane %v810, 1
      %v848 = vsel %vm503, %v846, %v847
      %v849 = vrot.slane %v811, 1
      %v850 = vrot.slane %v812, 1
      %v851 = vsel %vm503, %v849, %v850
      %v852 = vrot.slane %v813, 1
      %v853 = vrot.slane %v814, 1
      %v854 = vsel %vm503, %v852, %v853
      %v863 = vadd.f32 %v790, %v833
      %v864 = vadd.f32 %v791, %v836
      %v865 = vadd.f32 %v792, %v839
      %v866 = vadd.f32 %v793, %v842
      %v867 = vadd.f32 %v794, %v845
      %v868 = vadd.f32 %v795, %v848
      %v869 = vadd.f32 %v796, %v851
      %v870 = vadd.f32 %v797, %v854
      %v871 = vperm.slane %v452, 0
      %v872 = vmul.f32 %v433, %v871
      %v873 = vmul.f32 %v443, %v871
      %v874 = vmul.f32 %v434, %v871
      %v875 = vmul.f32 %v444, %v871
      %v876 = vmul.f32 %v435, %v871
      %v877 = vmul.f32 %v445, %v871
      %v878 = vmul.f32 %v436, %v871
      %v879 = vmul.f32 %v446, %v871
      %v880 = vmul.f32 %v437, %v871
      %v881 = vmul.f32 %v447, %v871
      %v882 = vmul.f32 %v438, %v871
      %v883 = vmul.f32 %v448, %v871
      %v884 = vmul.f32 %v439, %v871
      %v885 = vmul.f32 %v449, %v871
      %v886 = vmul.f32 %v440, %v871
      %v887 = vmul.f32 %v450, %v871
      %v904 = vrot.slane %v872, 2
      %v905 = vrot.slane %v873, 2
      %v906 = vsel %vm577, %v904, %v905
      %v907 = vrot.slane %v874, 2
      %v908 = vrot.slane %v875, 2
      %v909 = vsel %vm577, %v907, %v908
      %v910 = vrot.slane %v876, 2
      %v911 = vrot.slane %v877, 2
      %v912 = vsel %vm577, %v910, %v911
      %v913 = vrot.slane %v878, 2
      %v914 = vrot.slane %v879, 2
      %v915 = vsel %vm577, %v913, %v914
      %v916 = vrot.slane %v880, 2
      %v917 = vrot.slane %v881, 2
      %v918 = vsel %vm577, %v916, %v917
      %v919 = vrot.slane %v882, 2
      %v920 = vrot.slane %v883, 2
      %v921 = vsel %vm577, %v919, %v920
      %v922 = vrot.slane %v884, 2
      %v923 = vrot.slane %v885, 2
      %v924 = vsel %vm577, %v922, %v923
      %v925 = vrot.slane %v886, 2
      %v926 = vrot.slane %v887, 2
      %v927 = vsel %vm577, %v925, %v926
      %v936 = vadd.f32 %v863, %v906
      %v937 = vadd.f32 %v864, %v909
      %v938 = vadd.f32 %v865, %v912
      %v939 = vadd.f32 %v866, %v915
      %v940 = vadd.f32 %v867, %v918
      %v941 = vadd.f32 %v868, %v921
      %v942 = vadd.f32 %v869, %v924
      %v943 = vadd.f32 %v870, %v927
      %v944 = vld [vmem:[%s4] sm:$0x1]
      %v946 = vperm.slane %v944, 0
      %v948 = vadd.f32 %v936, %v946
      %v949 = vadd.f32 %v937, %v946
      %v950 = vadd.f32 %v938, %v946
      %v951 = vadd.f32 %v939, %v946
      %v952 = vadd.f32 %v940, %v946
      %v953 = vadd.f32 %v941, %v946
      %v954 = vadd.f32 %v942, %v946
      %v955 = vadd.f32 %v943, %v946
      %vm956 = vcmask 261120
      %957 = vst.msk [vmem:[%s380] sm:$0xff] %vm956, %v948
      %958 = vst.msk [vmem:[%s380 + $0x8] sm:$0xff] %vm956, %v949
      %959 = vst.msk [vmem:[%s380 + $0x10] sm:$0xff] %vm956, %v950
      %960 = vst.msk [vmem:[%s380 + $0x18] sm:$0xff] %vm956, %v951
      %961 = vst.msk [vmem:[%s380 + $0x20] sm:$0xff] %vm956, %v952
      %962 = vst.msk [vmem:[%s380 + $0x28] sm:$0xff] %vm956, %v953
      %963 = vst.msk [vmem:[%s380 + $0x30] sm:$0xff] %vm956, %v954
      %964 = vst.msk [vmem:[%s380 + $0x38] sm:$0xff] %vm956, %v955
      %s965 = smul.u32 8, %s21
      %p966 = scmp.lt.s32.totalorder %s20, 1
      %s967 = scalar_select %p966, %s20, 1
      %p968 = scmp.lt.s32.totalorder %s965, 7
      %s969 = scalar_select %p968, %s965, 7
      %s970 = smul.addr %s967, 8
      %s971 = sadd.s32 %s969, %s970
      %s972 = smul.addr %s971, 8
      %s973 = scalar_lea.vmem %s5, %s972
      // Predicated region
      $region41: #{_lambda_.8} parent=39 // pred_check
        %p974 = pneg %p190
      $region42: #{_lambda_.8} parent=39 // pred_check_branch
        %976 = sbr.rel (%p974) target = $region44
      $region43: #{_lambda_.8} parent=39 // pred_region
        %s977 = smul.u32 8, %s21
      $region44: #{_lambda_.8} parent=39 // pred_fallthru
        _
    $region40: #{_lambda_.8} parent=5 // pred_fallthru
      _
    %p978 = scmp.le.s32.totalorder 2, %s11
    // Predicated region
    $region45: #{_lambda_.8} parent=5 // pred_check
      %p979 = pneg %p978
    $region46: #{_lambda_.8} parent=5 // pred_check_branch
      %981 = sbr.rel (%p979) target = $region48
    $region47: #{_lambda_.8} parent=5 // pred_region
      %s982 = ssub.s32 %s11, 2
      // Predicated region
      $region49: #{_lambda_.8} parent=47 // pred_check
        %p983 = pneg %p196
      $region50: #{_lambda_.8} parent=47 // pred_check_branch
        %985 = sbr.rel (%p983) target = $region52
      $region51: #{_lambda_.8} parent=47 // pred_region
        %s986 = smul.u32 8, %s23
        %p987 = scmp.lt.s32.totalorder %s22, 1
        %s988 = scalar_select %p987, %s22, 1
        %p989 = scmp.lt.s32.totalorder %s986, 7
        %s990 = scalar_select %p989, %s986, 7
        %s991 = smul.addr %s988, 8
        %s992 = sadd.s32 %s990, %s991
        %s993 = smul.addr %s992, 8
        %s994 = scalar_lea.vmem %s5, %s993
      $region52: #{_lambda_.8} parent=47 // pred_fallthru
        _
    $region48: #{_lambda_.8} parent=5 // pred_fallthru
      _
  $region6: #{_lambda_.8} parent=0 // loop_footer
    %s15 = sadd.s32 1, %s11
  $region7: #{_lambda_.8} parent=0 // loop_footer_branch
    %10 = sbr.rel target = $region3
  $region8: #{_lambda_.8} parent=0 // loop_exit
    _

// kernel: _lambda_.10
$region0: #{_lambda_.10}
  #allocation0 [shape = 'u32[]', space=smem, size = 0x4, offset = 0x4, fixed_abs, tag = 'smem constant byte address 0x4 - core index']
  #allocation1 [shape = 'u32[72,128]{1,0:T(1,128)}', space=vmem, size = 0x9000, scoped, tag = 'internal scratch']
  %s0 = inlined_call_operand.vmem [shape: f32[128,32], index: 0, kind: input, shape index: {}]
  %s1 = inlined_call_operand.vmem [shape: f32[128,32], index: 1, kind: input, shape index: {}]
  %s2 = inlined_call_operand.vmem [shape: f32[128,32], index: 2, kind: input, shape index: {}]
  %s3 = inlined_call_operand.vmem [shape: bf16[32,32], index: 3, kind: input, shape index: {}]
  %s4 = inlined_call_operand.vmem [shape: f32[1,32], index: 4, kind: input, shape index: {}]
  %s5 = inlined_call_operand.vmem [shape: f32[128,32], index: 5, kind: output, shape index: {}]
  %s6 = sld [smem:[#allocation0]]
  $region30: #{_lambda_.10} parent=0
    _
  %s8 = ssub.s32 1, %s6
  %s9 = scalar_select 0, %s8, %s6
  // Predicated region
  $region2: #{_lambda_.10} parent=0 // pred_check
    _
  $region3: #{_lambda_.10} parent=0 // pred_check_branch
    %11 = sbr.rel (0) target = $region5
  $region4: #{_lambda_.10} parent=0 // pred_region
    _
  $region5: #{_lambda_.10} parent=0 // pred_fallthru
    _
  // Predicated region
  $region6: #{_lambda_.10} parent=0 // pred_check
    _
  $region7: #{_lambda_.10} parent=0 // pred_check_branch
    %13 = sbr.rel (0) target = $region9
  $region8: #{_lambda_.10} parent=0 // pred_region
    _
  $region9: #{_lambda_.10} parent=0 // pred_fallthru
    _
  // Predicated region
  $region10: #{_lambda_.10} parent=0 // pred_check
    _
  $region11: #{_lambda_.10} parent=0 // pred_check_branch
    %15 = sbr.rel (0) target = $region13
  $region12: #{_lambda_.10} parent=0 // pred_region
    _
  $region13: #{_lambda_.10} parent=0 // pred_fallthru
    _
  // Predicated region
  $region14: #{_lambda_.10} parent=0 // pred_check
    _
  $region15: #{_lambda_.10} parent=0 // pred_check_branch
    %17 = sbr.rel (0) target = $region17
  $region16: #{_lambda_.10} parent=0 // pred_region
    _
  $region17: #{_lambda_.10} parent=0 // pred_fallthru
    _
  // Predicated region
  $region18: #{_lambda_.10} parent=0 // pred_check
    _
  $region19: #{_lambda_.10} parent=0 // pred_check_branch
    %19 = sbr.rel (0) target = $region21
  $region20: #{_lambda_.10} parent=0 // pred_region
    _
  $region21: #{_lambda_.10} parent=0 // pred_fallthru
    _
  %v21 = vld [vmem:[%s0] sm:$0xff]
  %v22 = vld [vmem:[%s0 + $0x8] sm:$0xff]
  %v23 = vld [vmem:[%s0 + $0x10] sm:$0xff]
  %v24 = vld [vmem:[%s0 + $0x18] sm:$0xff]
  %v25 = vld [vmem:[%s0 + $0x20] sm:$0xff]
  %v26 = vld [vmem:[%s0 + $0x28] sm:$0xff]
  %v27 = vld [vmem:[%s0 + $0x30] sm:$0xff]
  %v28 = vld [vmem:[%s0 + $0x38] sm:$0xff]
  %v29 = vld [vmem:[%s0 + $0x40] sm:$0xff]
  %v30 = vld [vmem:[%s0 + $0x48] sm:$0xff]
  %v31 = vld [vmem:[%s0 + $0x50] sm:$0xff]
  %v32 = vld [vmem:[%s0 + $0x58] sm:$0xff]
  %v33 = vld [vmem:[%s0 + $0x60] sm:$0xff]
  %v34 = vld [vmem:[%s0 + $0x68] sm:$0xff]
  %v35 = vld [vmem:[%s0 + $0x70] sm:$0xff]
  %v36 = vld [vmem:[%s0 + $0x78] sm:$0xff]
  %v37 = vld [vmem:[%s1] sm:$0xff]
  %v38 = vld [vmem:[%s1 + $0x8] sm:$0xff]
  %v39 = vld [vmem:[%s1 + $0x10] sm:$0xff]
  %v40 = vld [vmem:[%s1 + $0x18] sm:$0xff]
  %v41 = vld [vmem:[%s1 + $0x20] sm:$0xff]
  %v42 = vld [vmem:[%s1 + $0x28] sm:$0xff]
  %v43 = vld [vmem:[%s1 + $0x30] sm:$0xff]
  %v44 = vld [vmem:[%s1 + $0x38] sm:$0xff]
  %v45 = vld [vmem:[%s1 + $0x40] sm:$0xff]
  %v46 = vld [vmem:[%s1 + $0x48] sm:$0xff]
  %v47 = vld [vmem:[%s1 + $0x50] sm:$0xff]
  %v48 = vld [vmem:[%s1 + $0x58] sm:$0xff]
  %v49 = vld [vmem:[%s1 + $0x60] sm:$0xff]
  %v50 = vld [vmem:[%s1 + $0x68] sm:$0xff]
  %v51 = vld [vmem:[%s1 + $0x70] sm:$0xff]
  %v52 = vld [vmem:[%s1 + $0x78] sm:$0xff]
  %v53 = vadd.f32 %v21, %v37
  %v54 = vadd.f32 %v22, %v38
  %v55 = vadd.f32 %v23, %v39
  %v56 = vadd.f32 %v24, %v40
  %v57 = vadd.f32 %v25, %v41
  %v58 = vadd.f32 %v26, %v42
  %v59 = vadd.f32 %v27, %v43
  %v60 = vadd.f32 %v28, %v44
  %v61 = vadd.f32 %v29, %v45
  %v62 = vadd.f32 %v30, %v46
  %v63 = vadd.f32 %v31, %v47
  %v64 = vadd.f32 %v32, %v48
  %v65 = vadd.f32 %v33, %v49
  %v66 = vadd.f32 %v34, %v50
  %v67 = vadd.f32 %v35, %v51
  %v68 = vadd.f32 %v36, %v52
  %v69 = vpack.c.bf16 %v54, %v53
  %v70 = vpack.c.bf16 %v56, %v55
  %v71 = vpack.c.bf16 %v58, %v57
  %v72 = vpack.c.bf16 %v60, %v59
  %v73 = vpack.c.bf16 %v62, %v61
  %v74 = vpack.c.bf16 %v64, %v63
  %v75 = vpack.c.bf16 %v66, %v65
  %v76 = vpack.c.bf16 %v68, %v67
  %v77 = vld [vmem:[%s3] sm:$0xf]
  %v78 = vld [vmem:[%s3 + $0x4] sm:$0xf]
  %v79 = vld [vmem:[%s3 + $0x8] sm:$0xf]
  %v80 = vld [vmem:[%s3 + $0xc] sm:$0xf]
  %v85 = vunpack.c.l.b16 %v77
  %v86 = vunpack.c.l.b16 %v78
  %v87 = vunpack.c.l.b16 %v79
  %v88 = vunpack.c.l.b16 %v80
  %v89 = vpack.c.b16 %v86, %v85
  %v90 = vpack.c.b16 %v88, %v87
  %vm93 = vcmask 261120
  %v95 = vsel %vm93, %v69, 0
  %v98 = vsel %vm93, %v70, 0
  %v101 = vsel %vm93, %v71, 0
  %v104 = vsel %vm93, %v72, 0
  %v107 = vsel %vm93, %v73, 0
  %v110 = vsel %vm93, %v74, 0
  %v113 = vsel %vm93, %v75, 0
  %v116 = vsel %vm93, %v76, 0
  %118 = vmatpush.bf16.msra.mxu0 0
  %119 = vmatpush.bf16.msra.mxu0 0
  %120 = vmatpush.bf16.msra.mxu0 0
  %121 = vmatpush.bf16.msra.mxu0 0
  %122 = vmatpush.bf16.msra.mxu0 0
  %123 = vmatpush.bf16.msra.mxu0 0
  %124 = vmatpush.bf16.msra.mxu0 %v90
  %125 = vmatpush.bf16.msra.mxu0 %v89
  %126 = vmatmul.bf16.gmra.mxu0 %v95
  %v127 = vpop.f32.mrf.mxu0
  %v128 = vadd.f32 0.0, %v127
  %v129 = vpop.f32.mrf.mxu0
  %v130 = vadd.f32 0.0, %v129
  %131 = vmatmul.bf16.gmra.mxu0 %v98
  %v132 = vpop.f32.mrf.mxu0
  %v133 = vadd.f32 0.0, %v132
  %v134 = vpop.f32.mrf.mxu0
  %v135 = vadd.f32 0.0, %v134
  %136 = vmatmul.bf16.gmra.mxu0 %v101
  %v137 = vpop.f32.mrf.mxu0
  %v138 = vadd.f32 0.0, %v137
  %v139 = vpop.f32.mrf.mxu0
  %v140 = vadd.f32 0.0, %v139
  %141 = vmatmul.bf16.gmra.mxu0 %v104
  %v142 = vpop.f32.mrf.mxu0
  %v143 = vadd.f32 0.0, %v142
  %v144 = vpop.f32.mrf.mxu0
  %v145 = vadd.f32 0.0, %v144
  %146 = vmatmul.bf16.gmra.mxu0 %v107
  %v147 = vpop.f32.mrf.mxu0
  %v148 = vadd.f32 0.0, %v147
  %v149 = vpop.f32.mrf.mxu0
  %v150 = vadd.f32 0.0, %v149
  %151 = vmatmul.bf16.gmra.mxu0 %v110
  %v152 = vpop.f32.mrf.mxu0
  %v153 = vadd.f32 0.0, %v152
  %v154 = vpop.f32.mrf.mxu0
  %v155 = vadd.f32 0.0, %v154
  %156 = vmatmul.bf16.gmra.mxu0 %v113
  %v157 = vpop.f32.mrf.mxu0
  %v158 = vadd.f32 0.0, %v157
  %v159 = vpop.f32.mrf.mxu0
  %v160 = vadd.f32 0.0, %v159
  %161 = vmatmul.bf16.gmra.mxu0 %v116
  %v162 = vpop.f32.mrf.mxu0
  %v163 = vadd.f32 0.0, %v162
  %v164 = vpop.f32.mrf.mxu0
  %v165 = vadd.f32 0.0, %v164
  %166 = vdwg.mxu0
  %v167 = vld [vmem:[%s2] sm:$0xff]
  %v168 = vld [vmem:[%s2 + $0x8] sm:$0xff]
  %v169 = vld [vmem:[%s2 + $0x10] sm:$0xff]
  %v170 = vld [vmem:[%s2 + $0x18] sm:$0xff]
  %v171 = vld [vmem:[%s2 + $0x20] sm:$0xff]
  %v172 = vld [vmem:[%s2 + $0x28] sm:$0xff]
  %v173 = vld [vmem:[%s2 + $0x30] sm:$0xff]
  %v174 = vld [vmem:[%s2 + $0x38] sm:$0xff]
  %v175 = vld [vmem:[%s2 + $0x40] sm:$0xff]
  %v176 = vld [vmem:[%s2 + $0x48] sm:$0xff]
  %v177 = vld [vmem:[%s2 + $0x50] sm:$0xff]
  %v178 = vld [vmem:[%s2 + $0x58] sm:$0xff]
  %v179 = vld [vmem:[%s2 + $0x60] sm:$0xff]
  %v180 = vld [vmem:[%s2 + $0x68] sm:$0xff]
  %v181 = vld [vmem:[%s2 + $0x70] sm:$0xff]
  %v182 = vld [vmem:[%s2 + $0x78] sm:$0xff]
  %v183 = vadd.f32 %v167, %v128
  %v184 = vadd.f32 %v168, %v130
  %v185 = vadd.f32 %v169, %v133
  %v186 = vadd.f32 %v170, %v135
  %v187 = vadd.f32 %v171, %v138
  %v188 = vadd.f32 %v172, %v140
  %v189 = vadd.f32 %v173, %v143
  %v190 = vadd.f32 %v174, %v145
  %v191 = vadd.f32 %v175, %v148
  %v192 = vadd.f32 %v176, %v150
  %v193 = vadd.f32 %v177, %v153
  %v194 = vadd.f32 %v178, %v155
  %v195 = vadd.f32 %v179, %v158
  %v196 = vadd.f32 %v180, %v160
  %v197 = vadd.f32 %v181, %v163
  %v198 = vadd.f32 %v182, %v165
  %v199 = vld [vmem:[%s4] sm:$0x1]
  %v201 = vperm.slane %v199, 0
  %v203 = vadd.f32 %v183, %v201
  %v204 = vadd.f32 %v184, %v201
  %v205 = vadd.f32 %v185, %v201
  %v206 = vadd.f32 %v186, %v201
  %v207 = vadd.f32 %v187, %v201
  %v208 = vadd.f32 %v188, %v201
  %v209 = vadd.f32 %v189, %v201
  %v210 = vadd.f32 %v190, %v201
  %v211 = vadd.f32 %v191, %v201
  %v212 = vadd.f32 %v192, %v201
  %v213 = vadd.f32 %v193, %v201
  %v214 = vadd.f32 %v194, %v201
  %v215 = vadd.f32 %v195, %v201
  %v216 = vadd.f32 %v196, %v201
  %v217 = vadd.f32 %v197, %v201
  %v218 = vadd.f32 %v198, %v201
  %219 = vst.msk [vmem:[%s5] sm:$0xff] %vm93, %v203
  %220 = vst.msk [vmem:[%s5 + $0x8] sm:$0xff] %vm93, %v204
  %221 = vst.msk [vmem:[%s5 + $0x10] sm:$0xff] %vm93, %v205
  %222 = vst.msk [vmem:[%s5 + $0x18] sm:$0xff] %vm93, %v206
  %223 = vst.msk [vmem:[%s5 + $0x20] sm:$0xff] %vm93, %v207
  %224 = vst.msk [vmem:[%s5 + $0x28] sm:$0xff] %vm93, %v208
  %225 = vst.msk [vmem:[%s5 + $0x30] sm:$0xff] %vm93, %v209
  %226 = vst.msk [vmem:[%s5 + $0x38] sm:$0xff] %vm93, %v210
  %227 = vst.msk [vmem:[%s5 + $0x40] sm:$0xff] %vm93, %v211
  %228 = vst.msk [vmem:[%s5 + $0x48] sm:$0xff] %vm93, %v212
  %229 = vst.msk [vmem:[%s5 + $0x50] sm:$0xff] %vm93, %v213
  %230 = vst.msk [vmem:[%s5 + $0x58] sm:$0xff] %vm93, %v214
  %231 = vst.msk [vmem:[%s5 + $0x60] sm:$0xff] %vm93, %v215
  %232 = vst.msk [vmem:[%s5 + $0x68] sm:$0xff] %vm93, %v216
  %233 = vst.msk [vmem:[%s5 + $0x70] sm:$0xff] %vm93, %v217
  %234 = vst.msk [vmem:[%s5 + $0x78] sm:$0xff] %vm93, %v218
  // Predicated region
  $region22: #{_lambda_.10} parent=0 // pred_check
    _
  $region23: #{_lambda_.10} parent=0 // pred_check_branch
    %236 = sbr.rel (0) target = $region25
  $region24: #{_lambda_.10} parent=0 // pred_region
    _
  $region25: #{_lambda_.10} parent=0 // pred_fallthru
    _
  // Predicated region
  $region26: #{_lambda_.10} parent=0 // pred_check
    _
  $region27: #{_lambda_.10} parent=0 // pred_check_branch
    %238 = sbr.rel (0) target = $region29
  $region28: #{_lambda_.10} parent=0 // pred_region
    _
  $region29: #{_lambda_.10} parent=0 // pred_fallthru
    _

// kernel: _lambda_.11
$region0: #{_lambda_.11}
  #allocation0 [shape = 'u32[]', space=smem, size = 0x4, offset = 0x4, fixed_abs, tag = 'smem constant byte address 0x4 - core index']
  #allocation1 [shape = 'u32[72,128]{1,0:T(1,128)}', space=vmem, size = 0x9000, scoped, tag = 'internal scratch']
  %s0 = inlined_call_operand.vmem [shape: f32[128,32], index: 0, kind: input, shape index: {}]
  %s1 = inlined_call_operand.vmem [shape: f32[1,32], index: 1, kind: input, shape index: {}]
  %s2 = inlined_call_operand.vmem [shape: f32[1,32], index: 2, kind: input, shape index: {}]
  %s3 = inlined_call_operand.vmem [shape: bf16[32,64], index: 3, kind: input, shape index: {}]
  %s4 = inlined_call_operand.vmem [shape: f32[1,64], index: 4, kind: input, shape index: {}]
  %s5 = inlined_call_operand.vmem [shape: f32[128,64], index: 5, kind: output, shape index: {}]
  %s6 = sld [smem:[#allocation0]]
  $region30: #{_lambda_.11} parent=0
    _
  %s8 = ssub.s32 1, %s6
  %s9 = scalar_select 0, %s8, %s6
  // Predicated region
  $region2: #{_lambda_.11} parent=0 // pred_check
    _
  $region3: #{_lambda_.11} parent=0 // pred_check_branch
    %11 = sbr.rel (0) target = $region5
  $region4: #{_lambda_.11} parent=0 // pred_region
    _
  $region5: #{_lambda_.11} parent=0 // pred_fallthru
    _
  // Predicated region
  $region6: #{_lambda_.11} parent=0 // pred_check
    _
  $region7: #{_lambda_.11} parent=0 // pred_check_branch
    %13 = sbr.rel (0) target = $region9
  $region8: #{_lambda_.11} parent=0 // pred_region
    _
  $region9: #{_lambda_.11} parent=0 // pred_fallthru
    _
  // Predicated region
  $region10: #{_lambda_.11} parent=0 // pred_check
    _
  $region11: #{_lambda_.11} parent=0 // pred_check_branch
    %15 = sbr.rel (0) target = $region13
  $region12: #{_lambda_.11} parent=0 // pred_region
    _
  $region13: #{_lambda_.11} parent=0 // pred_fallthru
    _
  // Predicated region
  $region14: #{_lambda_.11} parent=0 // pred_check
    _
  $region15: #{_lambda_.11} parent=0 // pred_check_branch
    %17 = sbr.rel (0) target = $region17
  $region16: #{_lambda_.11} parent=0 // pred_region
    _
  $region17: #{_lambda_.11} parent=0 // pred_fallthru
    _
  // Predicated region
  $region18: #{_lambda_.11} parent=0 // pred_check
    _
  $region19: #{_lambda_.11} parent=0 // pred_check_branch
    %19 = sbr.rel (0) target = $region21
  $region20: #{_lambda_.11} parent=0 // pred_region
    _
  $region21: #{_lambda_.11} parent=0 // pred_fallthru
    _
  %v21 = vld [vmem:[%s0] sm:$0xff]
  %v22 = vld [vmem:[%s0 + $0x8] sm:$0xff]
  %v23 = vld [vmem:[%s0 + $0x10] sm:$0xff]
  %v24 = vld [vmem:[%s0 + $0x18] sm:$0xff]
  %v25 = vld [vmem:[%s0 + $0x20] sm:$0xff]
  %v26 = vld [vmem:[%s0 + $0x28] sm:$0xff]
  %v27 = vld [vmem:[%s0 + $0x30] sm:$0xff]
  %v28 = vld [vmem:[%s0 + $0x38] sm:$0xff]
  %v29 = vld [vmem:[%s0 + $0x40] sm:$0xff]
  %v30 = vld [vmem:[%s0 + $0x48] sm:$0xff]
  %v31 = vld [vmem:[%s0 + $0x50] sm:$0xff]
  %v32 = vld [vmem:[%s0 + $0x58] sm:$0xff]
  %v33 = vld [vmem:[%s0 + $0x60] sm:$0xff]
  %v34 = vld [vmem:[%s0 + $0x68] sm:$0xff]
  %v35 = vld [vmem:[%s0 + $0x70] sm:$0xff]
  %v36 = vld [vmem:[%s0 + $0x78] sm:$0xff]
  %vm37 = vcmask 261120
  %v38 = vsel %vm37, %v21, 0.0
  %39 = vadd.xlane.f32.xlu0 %v38
  %v40 = vpop.xlane.xlu0 %39
  %v41 = vsel %vm37, %v22, 0.0
  %42 = vadd.xlane.f32.xlu0 %v41
  %v43 = vpop.xlane.xlu0 %42
  %v44 = vsel %vm37, %v23, 0.0
  %45 = vadd.xlane.f32.xlu0 %v44
  %v46 = vpop.xlane.xlu0 %45
  %v47 = vsel %vm37, %v24, 0.0
  %48 = vadd.xlane.f32.xlu0 %v47
  %v49 = vpop.xlane.xlu0 %48
  %v50 = vsel %vm37, %v25, 0.0
  %51 = vadd.xlane.f32.xlu0 %v50
  %v52 = vpop.xlane.xlu0 %51
  %v53 = vsel %vm37, %v26, 0.0
  %54 = vadd.xlane.f32.xlu0 %v53
  %v55 = vpop.xlane.xlu0 %54
  %v56 = vsel %vm37, %v27, 0.0
  %57 = vadd.xlane.f32.xlu0 %v56
  %v58 = vpop.xlane.xlu0 %57
  %v59 = vsel %vm37, %v28, 0.0
  %60 = vadd.xlane.f32.xlu0 %v59
  %v61 = vpop.xlane.xlu0 %60
  %v62 = vsel %vm37, %v29, 0.0
  %63 = vadd.xlane.f32.xlu0 %v62
  %v64 = vpop.xlane.xlu0 %63
  %v65 = vsel %vm37, %v30, 0.0
  %66 = vadd.xlane.f32.xlu0 %v65
  %v67 = vpop.xlane.xlu0 %66
  %v68 = vsel %vm37, %v31, 0.0
  %69 = vadd.xlane.f32.xlu0 %v68
  %v70 = vpop.xlane.xlu0 %69
  %v71 = vsel %vm37, %v32, 0.0
  %72 = vadd.xlane.f32.xlu0 %v71
  %v73 = vpop.xlane.xlu0 %72
  %v74 = vsel %vm37, %v33, 0.0
  %75 = vadd.xlane.f32.xlu0 %v74
  %v76 = vpop.xlane.xlu0 %75
  %v77 = vsel %vm37, %v34, 0.0
  %78 = vadd.xlane.f32.xlu0 %v77
  %v79 = vpop.xlane.xlu0 %78
  %v80 = vsel %vm37, %v35, 0.0
  %81 = vadd.xlane.f32.xlu0 %v80
  %v82 = vpop.xlane.xlu0 %81
  %v83 = vsel %vm37, %v36, 0.0
  %84 = vadd.xlane.f32.xlu0 %v83
  %v85 = vpop.xlane.xlu0 %84
  %v86 = vrcp.pop 32.0
  %v87 = vmul.f32 32.0, %v86
  %v88 = vsub.f32 1.0, %v87
  %v89 = vmul.f32 %v86, %v88
  %v90 = vadd.f32 %v86, %v89
  %vm91 = vweird.f32 %v86
  %v92 = vsel %vm91, %v86, %v90
  %v93 = vmul.f32 %v40, %v92
  %v94 = vmul.f32 %v43, %v92
  %v95 = vmul.f32 %v46, %v92
  %v96 = vmul.f32 %v49, %v92
  %v97 = vmul.f32 %v52, %v92
  %v98 = vmul.f32 %v55, %v92
  %v99 = vmul.f32 %v58, %v92
  %v100 = vmul.f32 %v61, %v92
  %v101 = vmul.f32 %v64, %v92
  %v102 = vmul.f32 %v67, %v92
  %v103 = vmul.f32 %v70, %v92
  %v104 = vmul.f32 %v73, %v92
  %v105 = vmul.f32 %v76, %v92
  %v106 = vmul.f32 %v79, %v92
  %v107 = vmul.f32 %v82, %v92
  %v108 = vmul.f32 %v85, %v92
  %v109 = vsub.f32 %v21, %v93
  %v110 = vsub.f32 %v22, %v94
  %v111 = vsub.f32 %v23, %v95
  %v112 = vsub.f32 %v24, %v96
  %v113 = vsub.f32 %v25, %v97
  %v114 = vsub.f32 %v26, %v98
  %v115 = vsub.f32 %v27, %v99
  %v116 = vsub.f32 %v28, %v100
  %v117 = vsub.f32 %v29, %v101
  %v118 = vsub.f32 %v30, %v102
  %v119 = vsub.f32 %v31, %v103
  %v120 = vsub.f32 %v32, %v104
  %v121 = vsub.f32 %v33, %v105
  %v122 = vsub.f32 %v34, %v106
  %v123 = vsub.f32 %v35, %v107
  %v124 = vsub.f32 %v36, %v108
  %v125 = vmul.f32 %v109, %v109
  %v126 = vmul.f32 %v110, %v110
  %v127 = vmul.f32 %v111, %v111
  %v128 = vmul.f32 %v112, %v112
  %v129 = vmul.f32 %v113, %v113
  %v130 = vmul.f32 %v114, %v114
  %v131 = vmul.f32 %v115, %v115
  %v132 = vmul.f32 %v116, %v116
  %v133 = vmul.f32 %v117, %v117
  %v134 = vmul.f32 %v118, %v118
  %v135 = vmul.f32 %v119, %v119
  %v136 = vmul.f32 %v120, %v120
  %v137 = vmul.f32 %v121, %v121
  %v138 = vmul.f32 %v122, %v122
  %v139 = vmul.f32 %v123, %v123
  %v140 = vmul.f32 %v124, %v124
  %v141 = vsel %vm37, %v125, 0.0
  %142 = vadd.xlane.f32.xlu0 %v141
  %v143 = vpop.xlane.xlu0 %142
  %v144 = vsel %vm37, %v126, 0.0
  %145 = vadd.xlane.f32.xlu0 %v144
  %v146 = vpop.xlane.xlu0 %145
  %v147 = vsel %vm37, %v127, 0.0
  %148 = vadd.xlane.f32.xlu0 %v147
  %v149 = vpop.xlane.xlu0 %148
  %v150 = vsel %vm37, %v128, 0.0
  %151 = vadd.xlane.f32.xlu0 %v150
  %v152 = vpop.xlane.xlu0 %151
  %v153 = vsel %vm37, %v129, 0.0
  %154 = vadd.xlane.f32.xlu0 %v153
  %v155 = vpop.xlane.xlu0 %154
  %v156 = vsel %vm37, %v130, 0.0
  %157 = vadd.xlane.f32.xlu0 %v156
  %v158 = vpop.xlane.xlu0 %157
  %v159 = vsel %vm37, %v131, 0.0
  %160 = vadd.xlane.f32.xlu0 %v159
  %v161 = vpop.xlane.xlu0 %160
  %v162 = vsel %vm37, %v132, 0.0
  %163 = vadd.xlane.f32.xlu0 %v162
  %v164 = vpop.xlane.xlu0 %163
  %v165 = vsel %vm37, %v133, 0.0
  %166 = vadd.xlane.f32.xlu0 %v165
  %v167 = vpop.xlane.xlu0 %166
  %v168 = vsel %vm37, %v134, 0.0
  %169 = vadd.xlane.f32.xlu0 %v168
  %v170 = vpop.xlane.xlu0 %169
  %v171 = vsel %vm37, %v135, 0.0
  %172 = vadd.xlane.f32.xlu0 %v171
  %v173 = vpop.xlane.xlu0 %172
  %v174 = vsel %vm37, %v136, 0.0
  %175 = vadd.xlane.f32.xlu0 %v174
  %v176 = vpop.xlane.xlu0 %175
  %v177 = vsel %vm37, %v137, 0.0
  %178 = vadd.xlane.f32.xlu0 %v177
  %v179 = vpop.xlane.xlu0 %178
  %v180 = vsel %vm37, %v138, 0.0
  %181 = vadd.xlane.f32.xlu0 %v180
  %v182 = vpop.xlane.xlu0 %181
  %v183 = vsel %vm37, %v139, 0.0
  %184 = vadd.xlane.f32.xlu0 %v183
  %v185 = vpop.xlane.xlu0 %184
  %v186 = vsel %vm37, %v140, 0.0
  %187 = vadd.xlane.f32.xlu0 %v186
  %v188 = vpop.xlane.xlu0 %187
  %v189 = vmul.f32 %v143, %v92
  %v190 = vmul.f32 %v146, %v92
  %v191 = vmul.f32 %v149, %v92
  %v192 = vmul.f32 %v152, %v92
  %v193 = vmul.f32 %v155, %v92
  %v194 = vmul.f32 %v158, %v92
  %v195 = vmul.f32 %v161, %v92
  %v196 = vmul.f32 %v164, %v92
  %v197 = vmul.f32 %v167, %v92
  %v198 = vmul.f32 %v170, %v92
  %v199 = vmul.f32 %v173, %v92
  %v200 = vmul.f32 %v176, %v92
  %v201 = vmul.f32 %v179, %v92
  %v202 = vmul.f32 %v182, %v92
  %v203 = vmul.f32 %v185, %v92
  %v204 = vmul.f32 %v188, %v92
  %v205 = vadd.f32 %v189, 1e-05
  %v206 = vadd.f32 %v190, 1e-05
  %v207 = vadd.f32 %v191, 1e-05
  %v208 = vadd.f32 %v192, 1e-05
  %v209 = vadd.f32 %v193, 1e-05
  %v210 = vadd.f32 %v194, 1e-05
  %v211 = vadd.f32 %v195, 1e-05
  %v212 = vadd.f32 %v196, 1e-05
  %v213 = vadd.f32 %v197, 1e-05
  %v214 = vadd.f32 %v198, 1e-05
  %v215 = vadd.f32 %v199, 1e-05
  %v216 = vadd.f32 %v200, 1e-05
  %v217 = vadd.f32 %v201, 1e-05
  %v218 = vadd.f32 %v202, 1e-05
  %v219 = vadd.f32 %v203, 1e-05
  %v220 = vadd.f32 %v204, 1e-05
  %v221 = vrsqrt.pop %v205
  %v222 = vmul.f32 %v221, %v205
  %v223 = vmul.f32 %v222, %v221
  %v224 = vmul.f32 0.5, %v223
  %v225 = vsub.f32 1.5, %v224
  %v226 = vmul.f32 %v221, %v225
  %vm227 = vweird.f32 %v205
  %vm228 = vweird.f32 %v221
  %vm229 = vmor %vm227, %vm228
  %v230 = vsel %vm229, %v221, %v226
  %v231 = vrsqrt.pop %v206
  %v232 = vmul.f32 %v231, %v206
  %v233 = vmul.f32 %v232, %v231
  %v234 = vmul.f32 0.5, %v233
  %v235 = vsub.f32 1.5, %v234
  %v236 = vmul.f32 %v231, %v235
  %vm237 = vweird.f32 %v206
  %vm238 = vweird.f32 %v231
  %vm239 = vmor %vm237, %vm238
  %v240 = vsel %vm239, %v231, %v236
  %v241 = vrsqrt.pop %v207
  %v242 = vmul.f32 %v241, %v207
  %v243 = vmul.f32 %v242, %v241
  %v244 = vmul.f32 0.5, %v243
  %v245 = vsub.f32 1.5, %v244
  %v246 = vmul.f32 %v241, %v245
  %vm247 = vweird.f32 %v207
  %vm248 = vweird.f32 %v241
  %vm249 = vmor %vm247, %vm248
  %v250 = vsel %vm249, %v241, %v246
  %v251 = vrsqrt.pop %v208
  %v252 = vmul.f32 %v251, %v208
  %v253 = vmul.f32 %v252, %v251
  %v254 = vmul.f32 0.5, %v253
  %v255 = vsub.f32 1.5, %v254
  %v256 = vmul.f32 %v251, %v255
  %vm257 = vweird.f32 %v208
  %vm258 = vweird.f32 %v251
  %vm259 = vmor %vm257, %vm258
  %v260 = vsel %vm259, %v251, %v256
  %v261 = vrsqrt.pop %v209
  %v262 = vmul.f32 %v261, %v209
  %v263 = vmul.f32 %v262, %v261
  %v264 = vmul.f32 0.5, %v263
  %v265 = vsub.f32 1.5, %v264
  %v266 = vmul.f32 %v261, %v265
  %vm267 = vweird.f32 %v209
  %vm268 = vweird.f32 %v261
  %vm269 = vmor %vm267, %vm268
  %v270 = vsel %vm269, %v261, %v266
  %v271 = vrsqrt.pop %v210
  %v272 = vmul.f32 %v271, %v210
  %v273 = vmul.f32 %v272, %v271
  %v274 = vmul.f32 0.5, %v273
  %v275 = vsub.f32 1.5, %v274
  %v276 = vmul.f32 %v271, %v275
  %vm277 = vweird.f32 %v210
  %vm278 = vweird.f32 %v271
  %vm279 = vmor %vm277, %vm278
  %v280 = vsel %vm279, %v271, %v276
  %v281 = vrsqrt.pop %v211
  %v282 = vmul.f32 %v281, %v211
  %v283 = vmul.f32 %v282, %v281
  %v284 = vmul.f32 0.5, %v283
  %v285 = vsub.f32 1.5, %v284
  %v286 = vmul.f32 %v281, %v285
  %vm287 = vweird.f32 %v211
  %vm288 = vweird.f32 %v281
  %vm289 = vmor %vm287, %vm288
  %v290 = vsel %vm289, %v281, %v286
  %v291 = vrsqrt.pop %v212
  %v292 = vmul.f32 %v291, %v212
  %v293 = vmul.f32 %v292, %v291
  %v294 = vmul.f32 0.5, %v293
  %v295 = vsub.f32 1.5, %v294
  %v296 = vmul.f32 %v291, %v295
  %vm297 = vweird.f32 %v212
  %vm298 = vweird.f32 %v291
  %vm299 = vmor %vm297, %vm298
  %v300 = vsel %vm299, %v291, %v296
  %v301 = vrsqrt.pop %v213
  %v302 = vmul.f32 %v301, %v213
  %v303 = vmul.f32 %v302, %v301
  %v304 = vmul.f32 0.5, %v303
  %v305 = vsub.f32 1.5, %v304
  %v306 = vmul.f32 %v301, %v305
  %vm307 = vweird.f32 %v213
  %vm308 = vweird.f32 %v301
  %vm309 = vmor %vm307, %vm308
  %v310 = vsel %vm309, %v301, %v306
  %v311 = vrsqrt.pop %v214
  %v312 = vmul.f32 %v311, %v214
  %v313 = vmul.f32 %v312, %v311
  %v314 = vmul.f32 0.5, %v313
  %v315 = vsub.f32 1.5, %v314
  %v316 = vmul.f32 %v311, %v315
  %vm317 = vweird.f32 %v214
  %vm318 = vweird.f32 %v311
  %vm319 = vmor %vm317, %vm318
  %v320 = vsel %vm319, %v311, %v316
  %v321 = vrsqrt.pop %v215
  %v322 = vmul.f32 %v321, %v215
  %v323 = vmul.f32 %v322, %v321
  %v324 = vmul.f32 0.5, %v323
  %v325 = vsub.f32 1.5, %v324
  %v326 = vmul.f32 %v321, %v325
  %vm327 = vweird.f32 %v215
  %vm328 = vweird.f32 %v321
  %vm329 = vmor %vm327, %vm328
  %v330 = vsel %vm329, %v321, %v326
  %v331 = vrsqrt.pop %v216
  %v332 = vmul.f32 %v331, %v216
  %v333 = vmul.f32 %v332, %v331
  %v334 = vmul.f32 0.5, %v333
  %v335 = vsub.f32 1.5, %v334
  %v336 = vmul.f32 %v331, %v335
  %vm337 = vweird.f32 %v216
  %vm338 = vweird.f32 %v331
  %vm339 = vmor %vm337, %vm338
  %v340 = vsel %vm339, %v331, %v336
  %v341 = vrsqrt.pop %v217
  %v342 = vmul.f32 %v341, %v217
  %v343 = vmul.f32 %v342, %v341
  %v344 = vmul.f32 0.5, %v343
  %v345 = vsub.f32 1.5, %v344
  %v346 = vmul.f32 %v341, %v345
  %vm347 = vweird.f32 %v217
  %vm348 = vweird.f32 %v341
  %vm349 = vmor %vm347, %vm348
  %v350 = vsel %vm349, %v341, %v346
  %v351 = vrsqrt.pop %v218
  %v352 = vmul.f32 %v351, %v218
  %v353 = vmul.f32 %v352, %v351
  %v354 = vmul.f32 0.5, %v353
  %v355 = vsub.f32 1.5, %v354
  %v356 = vmul.f32 %v351, %v355
  %vm357 = vweird.f32 %v218
  %vm358 = vweird.f32 %v351
  %vm359 = vmor %vm357, %vm358
  %v360 = vsel %vm359, %v351, %v356
  %v361 = vrsqrt.pop %v219
  %v362 = vmul.f32 %v361, %v219
  %v363 = vmul.f32 %v362, %v361
  %v364 = vmul.f32 0.5, %v363
  %v365 = vsub.f32 1.5, %v364
  %v366 = vmul.f32 %v361, %v365
  %vm367 = vweird.f32 %v219
  %vm368 = vweird.f32 %v361
  %vm369 = vmor %vm367, %vm368
  %v370 = vsel %vm369, %v361, %v366
  %v371 = vrsqrt.pop %v220
  %v372 = vmul.f32 %v371, %v220
  %v373 = vmul.f32 %v372, %v371
  %v374 = vmul.f32 0.5, %v373
  %v375 = vsub.f32 1.5, %v374
  %v376 = vmul.f32 %v371, %v375
  %vm377 = vweird.f32 %v220
  %vm378 = vweird.f32 %v371
  %vm379 = vmor %vm377, %vm378
  %v380 = vsel %vm379, %v371, %v376
  %v381 = vmul.f32 %v109, %v230
  %v382 = vmul.f32 %v110, %v240
  %v383 = vmul.f32 %v111, %v250
  %v384 = vmul.f32 %v112, %v260
  %v385 = vmul.f32 %v113, %v270
  %v386 = vmul.f32 %v114, %v280
  %v387 = vmul.f32 %v115, %v290
  %v388 = vmul.f32 %v116, %v300
  %v389 = vmul.f32 %v117, %v310
  %v390 = vmul.f32 %v118, %v320
  %v391 = vmul.f32 %v119, %v330
  %v392 = vmul.f32 %v120, %v340
  %v393 = vmul.f32 %v121, %v350
  %v394 = vmul.f32 %v122, %v360
  %v395 = vmul.f32 %v123, %v370
  %v396 = vmul.f32 %v124, %v380
  %v397 = vld [vmem:[%s1] sm:$0x1]
  %v399 = vperm.slane %v397, 0
  %v401 = vmul.f32 %v381, %v399
  %v402 = vmul.f32 %v382, %v399
  %v403 = vmul.f32 %v383, %v399
  %v404 = vmul.f32 %v384, %v399
  %v405 = vmul.f32 %v385, %v399
  %v406 = vmul.f32 %v386, %v399
  %v407 = vmul.f32 %v387, %v399
  %v408 = vmul.f32 %v388, %v399
  %v409 = vmul.f32 %v389, %v399
  %v410 = vmul.f32 %v390, %v399
  %v411 = vmul.f32 %v391, %v399
  %v412 = vmul.f32 %v392, %v399
  %v413 = vmul.f32 %v393, %v399
  %v414 = vmul.f32 %v394, %v399
  %v415 = vmul.f32 %v395, %v399
  %v416 = vmul.f32 %v396, %v399
  %v417 = vld [vmem:[%s2] sm:$0x1]
  %v419 = vperm.slane %v417, 0
  %v421 = vadd.f32 %v401, %v419
  %v422 = vadd.f32 %v402, %v419
  %v423 = vadd.f32 %v403, %v419
  %v424 = vadd.f32 %v404, %v419
  %v425 = vadd.f32 %v405, %v419
  %v426 = vadd.f32 %v406, %v419
  %v427 = vadd.f32 %v407, %v419
  %v428 = vadd.f32 %v408, %v419
  %v429 = vadd.f32 %v409, %v419
  %v430 = vadd.f32 %v410, %v419
  %v431 = vadd.f32 %v411, %v419
  %v432 = vadd.f32 %v412, %v419
  %v433 = vadd.f32 %v413, %v419
  %v434 = vadd.f32 %v414, %v419
  %v435 = vadd.f32 %v415, %v419
  %v436 = vadd.f32 %v416, %v419
  %v437 = vpack.c.bf16 %v422, %v421
  %v438 = vpack.c.bf16 %v424, %v423
  %v439 = vpack.c.bf16 %v426, %v425
  %v440 = vpack.c.bf16 %v428, %v427
  %v441 = vpack.c.bf16 %v430, %v429
  %v442 = vpack.c.bf16 %v432, %v431
  %v443 = vpack.c.bf16 %v434, %v433
  %v444 = vpack.c.bf16 %v436, %v435
  %v445 = vld [vmem:[%s3] sm:$0xf]
  %v446 = vld [vmem:[%s3 + $0x4] sm:$0xf]
  %v447 = vld [vmem:[%s3 + $0x8] sm:$0xf]
  %v448 = vld [vmem:[%s3 + $0xc] sm:$0xf]
  %v449 = vld [vmem:[%s4] sm:$0x1]
  %v451 = vperm.slane %v449, 0
  %v457 = vunpack.c.l.b16 %v445
  %v458 = vunpack.c.l.b16 %v446
  %v459 = vunpack.c.l.b16 %v447
  %v460 = vunpack.c.l.b16 %v448
  %v461 = vpack.c.b16 %v458, %v457
  %v462 = vpack.c.b16 %v460, %v459
  %v466 = vsel %vm37, %v437, 0
  %v469 = vsel %vm37, %v438, 0
  %v472 = vsel %vm37, %v439, 0
  %v475 = vsel %vm37, %v440, 0
  %v478 = vsel %vm37, %v441, 0
  %v481 = vsel %vm37, %v442, 0
  %v484 = vsel %vm37, %v443, 0
  %v487 = vsel %vm37, %v444, 0
  %489 = vmatpush.bf16.msra.mxu0 0
  %490 = vmatpush.bf16.msra.mxu0 0
  %491 = vmatpush.bf16.msra.mxu0 0
  %492 = vmatpush.bf16.msra.mxu0 0
  %493 = vmatpush.bf16.msra.mxu0 0
  %494 = vmatpush.bf16.msra.mxu0 0
  %495 = vmatpush.bf16.msra.mxu0 %v462
  %496 = vmatpush.bf16.msra.mxu0 %v461
  %497 = vmatmul.bf16.gmra.mxu0 %v466
  %v498 = vpop.f32.mrf.mxu0
  %v499 = vadd.f32 %v451, %v498
  %v500 = vpop.f32.mrf.mxu0
  %v501 = vadd.f32 %v451, %v500
  %502 = vmatmul.bf16.gmra.mxu0 %v469
  %v503 = vpop.f32.mrf.mxu0
  %v504 = vadd.f32 %v451, %v503
  %v505 = vpop.f32.mrf.mxu0
  %v506 = vadd.f32 %v451, %v505
  %507 = vmatmul.bf16.gmra.mxu0 %v472
  %v508 = vpop.f32.mrf.mxu0
  %v509 = vadd.f32 %v451, %v508
  %v510 = vpop.f32.mrf.mxu0
  %v511 = vadd.f32 %v451, %v510
  %512 = vmatmul.bf16.gmra.mxu0 %v475
  %v513 = vpop.f32.mrf.mxu0
  %v514 = vadd.f32 %v451, %v513
  %v515 = vpop.f32.mrf.mxu0
  %v516 = vadd.f32 %v451, %v515
  %517 = vmatmul.bf16.gmra.mxu0 %v478
  %v518 = vpop.f32.mrf.mxu0
  %v519 = vadd.f32 %v451, %v518
  %v520 = vpop.f32.mrf.mxu0
  %v521 = vadd.f32 %v451, %v520
  %522 = vmatmul.bf16.gmra.mxu0 %v481
  %v523 = vpop.f32.mrf.mxu0
  %v524 = vadd.f32 %v451, %v523
  %v525 = vpop.f32.mrf.mxu0
  %v526 = vadd.f32 %v451, %v525
  %527 = vmatmul.bf16.gmra.mxu0 %v484
  %v528 = vpop.f32.mrf.mxu0
  %v529 = vadd.f32 %v451, %v528
  %v530 = vpop.f32.mrf.mxu0
  %v531 = vadd.f32 %v451, %v530
  %532 = vmatmul.bf16.gmra.mxu0 %v487
  %v533 = vpop.f32.mrf.mxu0
  %v534 = vadd.f32 %v451, %v533
  %v535 = vpop.f32.mrf.mxu0
  %v536 = vadd.f32 %v451, %v535
  %537 = vdwg.mxu0
  %v538 = vmul.f32 %v499, %v499
  %v539 = vmul.f32 %v501, %v501
  %v540 = vmul.f32 %v504, %v504
  %v541 = vmul.f32 %v506, %v506
  %v542 = vmul.f32 %v509, %v509
  %v543 = vmul.f32 %v511, %v511
  %v544 = vmul.f32 %v514, %v514
  %v545 = vmul.f32 %v516, %v516
  %v546 = vmul.f32 %v519, %v519
  %v547 = vmul.f32 %v521, %v521
  %v548 = vmul.f32 %v524, %v524
  %v549 = vmul.f32 %v526, %v526
  %v550 = vmul.f32 %v529, %v529
  %v551 = vmul.f32 %v531, %v531
  %v552 = vmul.f32 %v534, %v534
  %v553 = vmul.f32 %v536, %v536
  %v554 = vmul.f32 %v499, %v538
  %v555 = vmul.f32 %v501, %v539
  %v556 = vmul.f32 %v504, %v540
  %v557 = vmul.f32 %v506, %v541
  %v558 = vmul.f32 %v509, %v542
  %v559 = vmul.f32 %v511, %v543
  %v560 = vmul.f32 %v514, %v544
  %v561 = vmul.f32 %v516, %v545
  %v562 = vmul.f32 %v519, %v546
  %v563 = vmul.f32 %v521, %v547
  %v564 = vmul.f32 %v524, %v548
  %v565 = vmul.f32 %v526, %v549
  %v566 = vmul.f32 %v529, %v550
  %v567 = vmul.f32 %v531, %v551
  %v568 = vmul.f32 %v534, %v552
  %v569 = vmul.f32 %v536, %v553
  %v570 = vmul.f32 %v554, 0.044715
  %v571 = vmul.f32 %v555, 0.044715
  %v572 = vmul.f32 %v556, 0.044715
  %v573 = vmul.f32 %v557, 0.044715
  %v574 = vmul.f32 %v558, 0.044715
  %v575 = vmul.f32 %v559, 0.044715
  %v576 = vmul.f32 %v560, 0.044715
  %v577 = vmul.f32 %v561, 0.044715
  %v578 = vmul.f32 %v562, 0.044715
  %v579 = vmul.f32 %v563, 0.044715
  %v580 = vmul.f32 %v564, 0.044715
  %v581 = vmul.f32 %v565, 0.044715
  %v582 = vmul.f32 %v566, 0.044715
  %v583 = vmul.f32 %v567, 0.044715
  %v584 = vmul.f32 %v568, 0.044715
  %v585 = vmul.f32 %v569, 0.044715
  %v586 = vadd.f32 %v499, %v570
  %v587 = vadd.f32 %v501, %v571
  %v588 = vadd.f32 %v504, %v572
  %v589 = vadd.f32 %v506, %v573
  %v590 = vadd.f32 %v509, %v574
  %v591 = vadd.f32 %v511, %v575
  %v592 = vadd.f32 %v514, %v576
  %v593 = vadd.f32 %v516, %v577
  %v594 = vadd.f32 %v519, %v578
  %v595 = vadd.f32 %v521, %v579
  %v596 = vadd.f32 %v524, %v580
  %v597 = vadd.f32 %v526, %v581
  %v598 = vadd.f32 %v529, %v582
  %v599 = vadd.f32 %v531, %v583
  %v600 = vadd.f32 %v534, %v584
  %v601 = vadd.f32 %v536, %v585
  %v602 = vmul.f32 %v586, 0.7978846
  %v603 = vmul.f32 %v587, 0.7978846
  %v604 = vmul.f32 %v588, 0.7978846
  %v605 = vmul.f32 %v589, 0.7978846
  %v606 = vmul.f32 %v590, 0.7978846
  %v607 = vmul.f32 %v591, 0.7978846
  %v608 = vmul.f32 %v592, 0.7978846
  %v609 = vmul.f32 %v593, 0.7978846
  %v610 = vmul.f32 %v594, 0.7978846
  %v611 = vmul.f32 %v595, 0.7978846
  %v612 = vmul.f32 %v596, 0.7978846
  %v613 = vmul.f32 %v597, 0.7978846
  %v614 = vmul.f32 %v598, 0.7978846
  %v615 = vmul.f32 %v599, 0.7978846
  %v616 = vmul.f32 %v600, 0.7978846
  %v617 = vmul.f32 %v601, 0.7978846
  %v618 = vtanh.pop %v602
  %v619 = vtanh.pop %v603
  %v620 = vtanh.pop %v604
  %v621 = vtanh.pop %v605
  %v622 = vtanh.pop %v606
  %v623 = vtanh.pop %v607
  %v624 = vtanh.pop %v608
  %v625 = vtanh.pop %v609
  %v626 = vtanh.pop %v610
  %v627 = vtanh.pop %v611
  %v628 = vtanh.pop %v612
  %v629 = vtanh.pop %v613
  %v630 = vtanh.pop %v614
  %v631 = vtanh.pop %v615
  %v632 = vtanh.pop %v616
  %v633 = vtanh.pop %v617
  %v634 = vadd.f32 %v618, 1.0
  %v635 = vadd.f32 %v619, 1.0
  %v636 = vadd.f32 %v620, 1.0
  %v637 = vadd.f32 %v621, 1.0
  %v638 = vadd.f32 %v622, 1.0
  %v639 = vadd.f32 %v623, 1.0
  %v640 = vadd.f32 %v624, 1.0
  %v641 = vadd.f32 %v625, 1.0
  %v642 = vadd.f32 %v626, 1.0
  %v643 = vadd.f32 %v627, 1.0
  %v644 = vadd.f32 %v628, 1.0
  %v645 = vadd.f32 %v629, 1.0
  %v646 = vadd.f32 %v630, 1.0
  %v647 = vadd.f32 %v631, 1.0
  %v648 = vadd.f32 %v632, 1.0
  %v649 = vadd.f32 %v633, 1.0
  %v650 = vmul.f32 %v634, 0.5
  %v651 = vmul.f32 %v635, 0.5
  %v652 = vmul.f32 %v636, 0.5
  %v653 = vmul.f32 %v637, 0.5
  %v654 = vmul.f32 %v638, 0.5
  %v655 = vmul.f32 %v639, 0.5
  %v656 = vmul.f32 %v640, 0.5
  %v657 = vmul.f32 %v641, 0.5
  %v658 = vmul.f32 %v642, 0.5
  %v659 = vmul.f32 %v643, 0.5
  %v660 = vmul.f32 %v644, 0.5
  %v661 = vmul.f32 %v645, 0.5
  %v662 = vmul.f32 %v646, 0.5
  %v663 = vmul.f32 %v647, 0.5
  %v664 = vmul.f32 %v648, 0.5
  %v665 = vmul.f32 %v649, 0.5
  %v666 = vmul.f32 %v499, %v650
  %v667 = vmul.f32 %v501, %v651
  %v668 = vmul.f32 %v504, %v652
  %v669 = vmul.f32 %v506, %v653
  %v670 = vmul.f32 %v509, %v654
  %v671 = vmul.f32 %v511, %v655
  %v672 = vmul.f32 %v514, %v656
  %v673 = vmul.f32 %v516, %v657
  %v674 = vmul.f32 %v519, %v658
  %v675 = vmul.f32 %v521, %v659
  %v676 = vmul.f32 %v524, %v660
  %v677 = vmul.f32 %v526, %v661
  %v678 = vmul.f32 %v529, %v662
  %v679 = vmul.f32 %v531, %v663
  %v680 = vmul.f32 %v534, %v664
  %v681 = vmul.f32 %v536, %v665
  %vm682 = vcmask 523264
  %683 = vst.msk [vmem:[%s5] sm:$0xff] %vm682, %v666
  %684 = vst.msk [vmem:[%s5 + $0x8] sm:$0xff] %vm682, %v667
  %685 = vst.msk [vmem:[%s5 + $0x10] sm:$0xff] %vm682, %v668
  %686 = vst.msk [vmem:[%s5 + $0x18] sm:$0xff] %vm682, %v669
  %687 = vst.msk [vmem:[%s5 + $0x20] sm:$0xff] %vm682, %v670
  %688 = vst.msk [vmem:[%s5 + $0x28] sm:$0xff] %vm682, %v671
  %689 = vst.msk [vmem:[%s5 + $0x30] sm:$0xff] %vm682, %v672
  %690 = vst.msk [vmem:[%s5 + $0x38] sm:$0xff] %vm682, %v673
  %691 = vst.msk [vmem:[%s5 + $0x40] sm:$0xff] %vm682, %v674
  %692 = vst.msk [vmem:[%s5 + $0x48] sm:$0xff] %vm682, %v675
  %693 = vst.msk [vmem:[%s5 + $0x50] sm:$0xff] %vm682, %v676
  %694 = vst.msk [vmem:[%s5 + $0x58] sm:$0xff] %vm682, %v677
  %695 = vst.msk [vmem:[%s5 + $0x60] sm:$0xff] %vm682, %v678
  %696 = vst.msk [vmem:[%s5 + $0x68] sm:$0xff] %vm682, %v679
  %697 = vst.msk [vmem:[%s5 + $0x70] sm:$0xff] %vm682, %v680
  %698 = vst.msk [vmem:[%s5 + $0x78] sm:$0xff] %vm682, %v681
  // Predicated region
  $region22: #{_lambda_.11} parent=0 // pred_check
    _
  $region23: #{_lambda_.11} parent=0 // pred_check_branch
    %700 = sbr.rel (0) target = $region25
  $region24: #{_lambda_.11} parent=0 // pred_region
    _
  $region25: #{_lambda_.11} parent=0 // pred_fallthru
    _
  // Predicated region
  $region26: #{_lambda_.11} parent=0 // pred_check
    _
  $region27: #{_lambda_.11} parent=0 // pred_check_branch
    %702 = sbr.rel (0) target = $region29
  $region28: #{_lambda_.11} parent=0 // pred_region
    _
  $region29: #{_lambda_.11} parent=0 // pred_fallthru
    _

// kernel: _lambda_.13
$region0: #{_lambda_.13}
  #allocation0 [shape = 'u32[]', space=smem, size = 0x4, offset = 0x4, fixed_abs, tag = 'smem constant byte address 0x4 - core index']
  #allocation1 [shape = 'u32[72,128]{1,0:T(1,128)}', space=vmem, size = 0x9000, scoped, tag = 'internal scratch']
  %s0 = inlined_call_operand.vmem [shape: f32[128,64], index: 0, kind: input, shape index: {}]
  %s1 = inlined_call_operand.vmem [shape: f32[128,64], index: 1, kind: input, shape index: {}]
  %s2 = inlined_call_operand.vmem [shape: f32[128,32], index: 2, kind: input, shape index: {}]
  %s3 = inlined_call_operand.vmem [shape: bf16[64,32], index: 3, kind: input, shape index: {}]
  %s4 = inlined_call_operand.vmem [shape: f32[1,32], index: 4, kind: input, shape index: {}]
  %s5 = inlined_call_operand.vmem [shape: f32[128,32], index: 5, kind: output, shape index: {}]
  %s6 = sld [smem:[#allocation0]]
  $region30: #{_lambda_.13} parent=0
    _
  %s8 = ssub.s32 1, %s6
  %s9 = scalar_select 0, %s8, %s6
  // Predicated region
  $region2: #{_lambda_.13} parent=0 // pred_check
    _
  $region3: #{_lambda_.13} parent=0 // pred_check_branch
    %11 = sbr.rel (0) target = $region5
  $region4: #{_lambda_.13} parent=0 // pred_region
    _
  $region5: #{_lambda_.13} parent=0 // pred_fallthru
    _
  // Predicated region
  $region6: #{_lambda_.13} parent=0 // pred_check
    _
  $region7: #{_lambda_.13} parent=0 // pred_check_branch
    %13 = sbr.rel (0) target = $region9
  $region8: #{_lambda_.13} parent=0 // pred_region
    _
  $region9: #{_lambda_.13} parent=0 // pred_fallthru
    _
  // Predicated region
  $region10: #{_lambda_.13} parent=0 // pred_check
    _
  $region11: #{_lambda_.13} parent=0 // pred_check_branch
    %15 = sbr.rel (0) target = $region13
  $region12: #{_lambda_.13} parent=0 // pred_region
    _
  $region13: #{_lambda_.13} parent=0 // pred_fallthru
    _
  // Predicated region
  $region14: #{_lambda_.13} parent=0 // pred_check
    _
  $region15: #{_lambda_.13} parent=0 // pred_check_branch
    %17 = sbr.rel (0) target = $region17
  $region16: #{_lambda_.13} parent=0 // pred_region
    _
  $region17: #{_lambda_.13} parent=0 // pred_fallthru
    _
  // Predicated region
  $region18: #{_lambda_.13} parent=0 // pred_check
    _
  $region19: #{_lambda_.13} parent=0 // pred_check_branch
    %19 = sbr.rel (0) target = $region21
  $region20: #{_lambda_.13} parent=0 // pred_region
    _
  $region21: #{_lambda_.13} parent=0 // pred_fallthru
    _
  %v21 = vld [vmem:[%s0] sm:$0xff]
  %v22 = vld [vmem:[%s0 + $0x8] sm:$0xff]
  %v23 = vld [vmem:[%s0 + $0x10] sm:$0xff]
  %v24 = vld [vmem:[%s0 + $0x18] sm:$0xff]
  %v25 = vld [vmem:[%s0 + $0x20] sm:$0xff]
  %v26 = vld [vmem:[%s0 + $0x28] sm:$0xff]
  %v27 = vld [vmem:[%s0 + $0x30] sm:$0xff]
  %v28 = vld [vmem:[%s0 + $0x38] sm:$0xff]
  %v29 = vld [vmem:[%s0 + $0x40] sm:$0xff]
  %v30 = vld [vmem:[%s0 + $0x48] sm:$0xff]
  %v31 = vld [vmem:[%s0 + $0x50] sm:$0xff]
  %v32 = vld [vmem:[%s0 + $0x58] sm:$0xff]
  %v33 = vld [vmem:[%s0 + $0x60] sm:$0xff]
  %v34 = vld [vmem:[%s0 + $0x68] sm:$0xff]
  %v35 = vld [vmem:[%s0 + $0x70] sm:$0xff]
  %v36 = vld [vmem:[%s0 + $0x78] sm:$0xff]
  %v37 = vld [vmem:[%s1] sm:$0xff]
  %v38 = vld [vmem:[%s1 + $0x8] sm:$0xff]
  %v39 = vld [vmem:[%s1 + $0x10] sm:$0xff]
  %v40 = vld [vmem:[%s1 + $0x18] sm:$0xff]
  %v41 = vld [vmem:[%s1 + $0x20] sm:$0xff]
  %v42 = vld [vmem:[%s1 + $0x28] sm:$0xff]
  %v43 = vld [vmem:[%s1 + $0x30] sm:$0xff]
  %v44 = vld [vmem:[%s1 + $0x38] sm:$0xff]
  %v45 = vld [vmem:[%s1 + $0x40] sm:$0xff]
  %v46 = vld [vmem:[%s1 + $0x48] sm:$0xff]
  %v47 = vld [vmem:[%s1 + $0x50] sm:$0xff]
  %v48 = vld [vmem:[%s1 + $0x58] sm:$0xff]
  %v49 = vld [vmem:[%s1 + $0x60] sm:$0xff]
  %v50 = vld [vmem:[%s1 + $0x68] sm:$0xff]
  %v51 = vld [vmem:[%s1 + $0x70] sm:$0xff]
  %v52 = vld [vmem:[%s1 + $0x78] sm:$0xff]
  %v53 = vadd.f32 %v21, %v37
  %v54 = vadd.f32 %v22, %v38
  %v55 = vadd.f32 %v23, %v39
  %v56 = vadd.f32 %v24, %v40
  %v57 = vadd.f32 %v25, %v41
  %v58 = vadd.f32 %v26, %v42
  %v59 = vadd.f32 %v27, %v43
  %v60 = vadd.f32 %v28, %v44
  %v61 = vadd.f32 %v29, %v45
  %v62 = vadd.f32 %v30, %v46
  %v63 = vadd.f32 %v31, %v47
  %v64 = vadd.f32 %v32, %v48
  %v65 = vadd.f32 %v33, %v49
  %v66 = vadd.f32 %v34, %v50
  %v67 = vadd.f32 %v35, %v51
  %v68 = vadd.f32 %v36, %v52
  %v69 = vpack.c.bf16 %v54, %v53
  %v70 = vpack.c.bf16 %v56, %v55
  %v71 = vpack.c.bf16 %v58, %v57
  %v72 = vpack.c.bf16 %v60, %v59
  %v73 = vpack.c.bf16 %v62, %v61
  %v74 = vpack.c.bf16 %v64, %v63
  %v75 = vpack.c.bf16 %v66, %v65
  %v76 = vpack.c.bf16 %v68, %v67
  %v77 = vld [vmem:[%s3] sm:$0xf]
  %v78 = vld [vmem:[%s3 + $0x4] sm:$0xf]
  %v79 = vld [vmem:[%s3 + $0x8] sm:$0xf]
  %v80 = vld [vmem:[%s3 + $0xc] sm:$0xf]
  %v81 = vld [vmem:[%s3 + $0x10] sm:$0xf]
  %v82 = vld [vmem:[%s3 + $0x14] sm:$0xf]
  %v83 = vld [vmem:[%s3 + $0x18] sm:$0xf]
  %v84 = vld [vmem:[%s3 + $0x1c] sm:$0xf]
  %v93 = vunpack.c.l.b16 %v77
  %v94 = vunpack.c.l.b16 %v78
  %v95 = vunpack.c.l.b16 %v79
  %v96 = vunpack.c.l.b16 %v80
  %v97 = vunpack.c.l.b16 %v81
  %v98 = vunpack.c.l.b16 %v82
  %v99 = vunpack.c.l.b16 %v83
  %v100 = vunpack.c.l.b16 %v84
  %v101 = vpack.c.b16 %v94, %v93
  %v102 = vpack.c.b16 %v96, %v95
  %v103 = vpack.c.b16 %v98, %v97
  %v104 = vpack.c.b16 %v100, %v99
  %vm109 = vcmask 523264
  %v111 = vsel %vm109, %v69, 0
  %v114 = vsel %vm109, %v70, 0
  %v117 = vsel %vm109, %v71, 0
  %v120 = vsel %vm109, %v72, 0
  %v123 = vsel %vm109, %v73, 0
  %v126 = vsel %vm109, %v74, 0
  %v129 = vsel %vm109, %v75, 0
  %v132 = vsel %vm109, %v76, 0
  %134 = vmatpush.bf16.msra.mxu0 0
  %135 = vmatpush.bf16.msra.mxu0 0
  %136 = vmatpush.bf16.msra.mxu0 0
  %137 = vmatpush.bf16.msra.mxu0 0
  %138 = vmatpush.bf16.msra.mxu0 %v104
  %139 = vmatpush.bf16.msra.mxu0 %v103
  %140 = vmatpush.bf16.msra.mxu0 %v102
  %141 = vmatpush.bf16.msra.mxu0 %v101
  %142 = vmatmul.bf16.gmra.mxu0 %v111
  %v143 = vpop.f32.mrf.mxu0
  %v144 = vadd.f32 0.0, %v143
  %v145 = vpop.f32.mrf.mxu0
  %v146 = vadd.f32 0.0, %v145
  %147 = vmatmul.bf16.gmra.mxu0 %v114
  %v148 = vpop.f32.mrf.mxu0
  %v149 = vadd.f32 0.0, %v148
  %v150 = vpop.f32.mrf.mxu0
  %v151 = vadd.f32 0.0, %v150
  %152 = vmatmul.bf16.gmra.mxu0 %v117
  %v153 = vpop.f32.mrf.mxu0
  %v154 = vadd.f32 0.0, %v153
  %v155 = vpop.f32.mrf.mxu0
  %v156 = vadd.f32 0.0, %v155
  %157 = vmatmul.bf16.gmra.mxu0 %v120
  %v158 = vpop.f32.mrf.mxu0
  %v159 = vadd.f32 0.0, %v158
  %v160 = vpop.f32.mrf.mxu0
  %v161 = vadd.f32 0.0, %v160
  %162 = vmatmul.bf16.gmra.mxu0 %v123
  %v163 = vpop.f32.mrf.mxu0
  %v164 = vadd.f32 0.0, %v163
  %v165 = vpop.f32.mrf.mxu0
  %v166 = vadd.f32 0.0, %v165
  %167 = vmatmul.bf16.gmra.mxu0 %v126
  %v168 = vpop.f32.mrf.mxu0
  %v169 = vadd.f32 0.0, %v168
  %v170 = vpop.f32.mrf.mxu0
  %v171 = vadd.f32 0.0, %v170
  %172 = vmatmul.bf16.gmra.mxu0 %v129
  %v173 = vpop.f32.mrf.mxu0
  %v174 = vadd.f32 0.0, %v173
  %v175 = vpop.f32.mrf.mxu0
  %v176 = vadd.f32 0.0, %v175
  %177 = vmatmul.bf16.gmra.mxu0 %v132
  %v178 = vpop.f32.mrf.mxu0
  %v179 = vadd.f32 0.0, %v178
  %v180 = vpop.f32.mrf.mxu0
  %v181 = vadd.f32 0.0, %v180
  %182 = vdwg.mxu0
  %v183 = vld [vmem:[%s2] sm:$0xff]
  %v184 = vld [vmem:[%s2 + $0x8] sm:$0xff]
  %v185 = vld [vmem:[%s2 + $0x10] sm:$0xff]
  %v186 = vld [vmem:[%s2 + $0x18] sm:$0xff]
  %v187 = vld [vmem:[%s2 + $0x20] sm:$0xff]
  %v188 = vld [vmem:[%s2 + $0x28] sm:$0xff]
  %v189 = vld [vmem:[%s2 + $0x30] sm:$0xff]
  %v190 = vld [vmem:[%s2 + $0x38] sm:$0xff]
  %v191 = vld [vmem:[%s2 + $0x40] sm:$0xff]
  %v192 = vld [vmem:[%s2 + $0x48] sm:$0xff]
  %v193 = vld [vmem:[%s2 + $0x50] sm:$0xff]
  %v194 = vld [vmem:[%s2 + $0x58] sm:$0xff]
  %v195 = vld [vmem:[%s2 + $0x60] sm:$0xff]
  %v196 = vld [vmem:[%s2 + $0x68] sm:$0xff]
  %v197 = vld [vmem:[%s2 + $0x70] sm:$0xff]
  %v198 = vld [vmem:[%s2 + $0x78] sm:$0xff]
  %v199 = vadd.f32 %v183, %v144
  %v200 = vadd.f32 %v184, %v146
  %v201 = vadd.f32 %v185, %v149
  %v202 = vadd.f32 %v186, %v151
  %v203 = vadd.f32 %v187, %v154
  %v204 = vadd.f32 %v188, %v156
  %v205 = vadd.f32 %v189, %v159
  %v206 = vadd.f32 %v190, %v161
  %v207 = vadd.f32 %v191, %v164
  %v208 = vadd.f32 %v192, %v166
  %v209 = vadd.f32 %v193, %v169
  %v210 = vadd.f32 %v194, %v171
  %v211 = vadd.f32 %v195, %v174
  %v212 = vadd.f32 %v196, %v176
  %v213 = vadd.f32 %v197, %v179
  %v214 = vadd.f32 %v198, %v181
  %v215 = vld [vmem:[%s4] sm:$0x1]
  %v217 = vperm.slane %v215, 0
  %v219 = vadd.f32 %v199, %v217
  %v220 = vadd.f32 %v200, %v217
  %v221 = vadd.f32 %v201, %v217
  %v222 = vadd.f32 %v202, %v217
  %v223 = vadd.f32 %v203, %v217
  %v224 = vadd.f32 %v204, %v217
  %v225 = vadd.f32 %v205, %v217
  %v226 = vadd.f32 %v206, %v217
  %v227 = vadd.f32 %v207, %v217
  %v228 = vadd.f32 %v208, %v217
  %v229 = vadd.f32 %v209, %v217
  %v230 = vadd.f32 %v210, %v217
  %v231 = vadd.f32 %v211, %v217
  %v232 = vadd.f32 %v212, %v217
  %v233 = vadd.f32 %v213, %v217
  %v234 = vadd.f32 %v214, %v217
  %vm235 = vcmask 261120
  %236 = vst.msk [vmem:[%s5] sm:$0xff] %vm235, %v219
  %237 = vst.msk [vmem:[%s5 + $0x8] sm:$0xff] %vm235, %v220
  %238 = vst.msk [vmem:[%s5 + $0x10] sm:$0xff] %vm235, %v221
  %239 = vst.msk [vmem:[%s5 + $0x18] sm:$0xff] %vm235, %v222
  %240 = vst.msk [vmem:[%s5 + $0x20] sm:$0xff] %vm235, %v223
  %241 = vst.msk [vmem:[%s5 + $0x28] sm:$0xff] %vm235, %v224
  %242 = vst.msk [vmem:[%s5 + $0x30] sm:$0xff] %vm235, %v225
  %243 = vst.msk [vmem:[%s5 + $0x38] sm:$0xff] %vm235, %v226
  %244 = vst.msk [vmem:[%s5 + $0x40] sm:$0xff] %vm235, %v227
  %245 = vst.msk [vmem:[%s5 + $0x48] sm:$0xff] %vm235, %v228
  %246 = vst.msk [vmem:[%s5 + $0x50] sm:$0xff] %vm235, %v229
  %247 = vst.msk [vmem:[%s5 + $0x58] sm:$0xff] %vm235, %v230
  %248 = vst.msk [vmem:[%s5 + $0x60] sm:$0xff] %vm235, %v231
  %249 = vst.msk [vmem:[%s5 + $0x68] sm:$0xff] %vm235, %v232
  %250 = vst.msk [vmem:[%s5 + $0x70] sm:$0xff] %vm235, %v233
  %251 = vst.msk [vmem:[%s5 + $0x78] sm:$0xff] %vm235, %v234
  // Predicated region
  $region22: #{_lambda_.13} parent=0 // pred_check
    _
  $region23: #{_lambda_.13} parent=0 // pred_check_branch
    %253 = sbr.rel (0) target = $region25
  $region24: #{_lambda_.13} parent=0 // pred_region
    _
  $region25: #{_lambda_.13} parent=0 // pred_fallthru
    _
  // Predicated region
  $region26: #{_lambda_.13} parent=0 // pred_check
    _
  $region27: #{_lambda_.13} parent=0 // pred_check_branch
    %255 = sbr.rel (0) target = $region29
  $region28: #{_lambda_.13} parent=0 // pred_region
    _
  $region29: #{_lambda_.13} parent=0 // pred_fallthru
    _

// kernel: _lambda_.12
$region0: #{_lambda_.12}
  #allocation0 [shape = 'u32[]', space=smem, size = 0x4, offset = 0x4, fixed_abs, tag = 'smem constant byte address 0x4 - core index']
  #allocation1 [shape = 'u32[72,128]{1,0:T(1,128)}', space=vmem, size = 0x9000, scoped, tag = 'internal scratch']
  %s0 = inlined_call_operand.vmem [shape: f32[2,8,8,64], index: 0, kind: input, shape index: {}, may-alias: {0,1,2}]
  %s1 = inlined_call_operand.vmem [shape: f32[2,8,8,64], index: 1, kind: input, shape index: {}, may-alias: {0,1,2}]
  %s2 = inlined_call_operand.vmem [shape: f32[2,8,8,64], index: 2, kind: input, shape index: {}, may-alias: {0,1,2}]
  %s3 = inlined_call_operand.vmem [shape: f32[9,64], index: 3, kind: input, shape index: {}]
  %s4 = inlined_call_operand.vmem [shape: f32[1,64], index: 4, kind: input, shape index: {}]
  %s5 = inlined_call_operand.vmem [shape: f32[1,64], index: 5, kind: input, shape index: {}]
  %s6 = inlined_call_operand.vmem [shape: f32[1,64], index: 6, kind: input, shape index: {}]
  %s7 = inlined_call_operand.vmem [shape: f32[2,8,8,64], index: 7, kind: output, shape index: {}]
  %s8 = sld [smem:[#allocation0]]
  $region61: #{_lambda_.12} parent=0
    _
  %s10 = ssub.s32 1, %s8
  %s11 = scalar_select 0, %s10, %s8
  loop: start=0, step=1, limit=4
  $region2: #{_lambda_.12} parent=0 // loop_pre_header
    _
  $region3: #{_lambda_.12} parent=0 // loop_header
    %s13 = sphi 0, %s17
    %p14 = scmp.ge.s32.totalorder %s13, 4
    %s20 = sphi 0, %s32
    %s21 = sphi 0, %s28
    %s22 = sphi 0, %s20
    %s23 = sphi 0, %s21
    %s24 = sphi 0, %s22
    %s25 = sphi 0, %s23
    %s45 = sphi 0, %s47
    %s48 = sphi 0, %s45
    %s49 = sphi 0, %s48
    %s65 = sphi 0, %s49
    %s73 = sphi 0, %s75
    %s76 = sphi 0, %s73
    %s77 = sphi 0, %s76
    %s93 = sphi 0, %s77
    %s109 = sphi 0, %s111
    %s112 = sphi 0, %s109
    %s113 = sphi 0, %s112
    %s129 = sphi 0, %s113
    %s133 = sphi 0, %s133
    %s135 = sphi 0, %s133
    %s136 = sphi 0, %s135
    %s150 = sphi 0, %s136
    %s154 = sphi 0, %s154
    %s156 = sphi 0, %s154
    %s157 = sphi 0, %s156
    %s171 = sphi 0, %s157
    %s175 = sphi 0, %s175
    %s177 = sphi 0, %s175
    %s178 = sphi 0, %s177
    %s192 = sphi 0, %s178
    %s196 = sphi 0, %s196
    %s198 = sphi 0, %s196
    %s199 = sphi 0, %s198
    %s213 = sphi 0, %s199
    %s221 = sphi 0, %s223
    %s224 = sphi 0, %s221
    %s225 = sphi 0, %s224
    %s241 = sphi 0, %s225
  $region4: #{_lambda_.12} parent=0 // loop_header_branch
    %16 = sbr.rel (%p14) target = $region8
  $region5: #{_lambda_.12} parent=0 // loop_body
    %s18 = ssub.s32 %s13, 1
    %s19 = ssub.s32 %s13, 2
    %s26 = sadd.s32 1, %s21
    %p27 = scmp.ge.s32.totalorder %s26, 1
    %s28 = scalar_select %p27, 0, %s26
    %s29 = sadd.s32 1, %s20
    %s30 = scalar_select %p27, %s29, %s20
    %p31 = scmp.ge.s32.totalorder %s30, 2
    %s32 = scalar_select %p31, 0, %s30
    %s33 = smul.u32 %s21, 8
    %s34 = ssub.s32 %s33, 1
    %p35 = scmp.gt.s32.totalorder %s34, 0
    %s36 = scalar_select %p35, %s34, 0
    %s37 = smul.u32 %s28, 8
    %s38 = ssub.s32 %s37, 1
    %p39 = scmp.gt.s32.totalorder %s38, 0
    %s40 = scalar_select %p39, %s38, 0
    %s41 = ssub.s32 %s20, %s32
    %s42 = ssub.s32 %s36, %s40
    %s43 = sor.u32 %s41, %s42
    %p44 = scmp.eq.s32.totalorder %s43, 0
    %s46 = sadd.s32 %s45, 1
    %s47 = scalar_select %p44, %s45, %s46
    %p50 = pneg %p44
    %p51 = scmp.eq.s32.totalorder %s13, 1
    %p52 = por %p50, %p51
    %p53 = scmp.ne.s32.totalorder %s45, %s48
    %p54 = scmp.eq.s32.totalorder %s13, 0
    %p55 = por %p53, %p54
    %p56 = scmp.ne.s32.totalorder %s45, %s48
    %p57 = scmp.eq.s32.totalorder %s18, 1
    %p58 = por %p56, %p57
    %p59 = scmp.ne.s32.totalorder %s48, %s49
    %p60 = scmp.eq.s32.totalorder %s18, 0
    %p61 = por %p59, %p60
    %p62 = scmp.ne.s32.totalorder %s48, %s49
    %p63 = scmp.eq.s32.totalorder %s19, 1
    %p64 = por %p62, %p63
    %p66 = scmp.ne.s32.totalorder %s49, %s65
    %p67 = scmp.eq.s32.totalorder %s19, 0
    %p68 = por %p66, %p67
    %s69 = ssub.s32 %s20, %s32
    %s70 = ssub.s32 %s21, %s28
    %s71 = sor.u32 %s69, %s70
    %p72 = scmp.eq.s32.totalorder %s71, 0
    %s74 = sadd.s32 %s73, 1
    %s75 = scalar_select %p72, %s73, %s74
    %p78 = pneg %p72
    %p79 = scmp.eq.s32.totalorder %s13, 1
    %p80 = por %p78, %p79
    %p81 = scmp.ne.s32.totalorder %s73, %s76
    %p82 = scmp.eq.s32.totalorder %s13, 0
    %p83 = por %p81, %p82
    %p84 = scmp.ne.s32.totalorder %s73, %s76
    %p85 = scmp.eq.s32.totalorder %s18, 1
    %p86 = por %p84, %p85
    %p87 = scmp.ne.s32.totalorder %s76, %s77
    %p88 = scmp.eq.s32.totalorder %s18, 0
    %p89 = por %p87, %p88
    %p90 = scmp.ne.s32.totalorder %s76, %s77
    %p91 = scmp.eq.s32.totalorder %s19, 1
    %p92 = por %p90, %p91
    %p94 = scmp.ne.s32.totalorder %s77, %s93
    %p95 = scmp.eq.s32.totalorder %s19, 0
    %p96 = por %p94, %p95
    %s97 = sadd.s32 %s21, 1
    %s98 = smul.u32 %s97, 8
    %p99 = scmp.lt.s32.totalorder %s98, 7
    %s100 = scalar_select %p99, %s98, 7
    %s101 = sadd.s32 %s28, 1
    %s102 = smul.u32 %s101, 8
    %p103 = scmp.lt.s32.totalorder %s102, 7
    %s104 = scalar_select %p103, %s102, 7
    %s105 = ssub.s32 %s20, %s32
    %s106 = ssub.s32 %s100, %s104
    %s107 = sor.u32 %s105, %s106
    %p108 = scmp.eq.s32.totalorder %s107, 0
    %s110 = sadd.s32 %s109, 1
    %s111 = scalar_select %p108, %s109, %s110
    %p114 = pneg %p108
    %p115 = scmp.eq.s32.totalorder %s13, 1
    %p116 = por %p114, %p115
    %p117 = scmp.ne.s32.totalorder %s109, %s112
    %p118 = scmp.eq.s32.totalorder %s13, 0
    %p119 = por %p117, %p118
    %p120 = scmp.ne.s32.totalorder %s109, %s112
    %p121 = scmp.eq.s32.totalorder %s18, 1
    %p122 = por %p120, %p121
    %p123 = scmp.ne.s32.totalorder %s112, %s113
    %p124 = scmp.eq.s32.totalorder %s18, 0
    %p125 = por %p123, %p124
    %p126 = scmp.ne.s32.totalorder %s112, %s113
    %p127 = scmp.eq.s32.totalorder %s19, 1
    %p128 = por %p126, %p127
    %p130 = scmp.ne.s32.totalorder %s113, %s129
    %p131 = scmp.eq.s32.totalorder %s19, 0
    %p132 = por %p130, %p131
    %s134 = sadd.s32 %s133, 1
    %p137 = scmp.eq.s32.totalorder %s13, 1
    %p138 = scmp.ne.s32.totalorder %s133, %s135
    %p139 = scmp.eq.s32.totalorder %s13, 0
    %p140 = por %p138, %p139
    %p141 = scmp.ne.s32.totalorder %s133, %s135
    %p142 = scmp.eq.s32.totalorder %s18, 1
    %p143 = por %p141, %p142
    %p144 = scmp.ne.s32.totalorder %s135, %s136
    %p145 = scmp.eq.s32.totalorder %s18, 0
    %p146 = por %p144, %p145
    %p147 = scmp.ne.s32.totalorder %s135, %s136
    %p148 = scmp.eq.s32.totalorder %s19, 1
    %p149 = por %p147, %p148
    %p151 = scmp.ne.s32.totalorder %s136, %s150
    %p152 = scmp.eq.s32.totalorder %s19, 0
    %p153 = por %p151, %p152
    %s155 = sadd.s32 %s154, 1
    %p158 = scmp.eq.s32.totalorder %s13, 1
    %p159 = scmp.ne.s32.totalorder %s154, %s156
    %p160 = scmp.eq.s32.totalorder %s13, 0
    %p161 = por %p159, %p160
    %p162 = scmp.ne.s32.totalorder %s154, %s156
    %p163 = scmp.eq.s32.totalorder %s18, 1
    %p164 = por %p162, %p163
    %p165 = scmp.ne.s32.totalorder %s156, %s157
    %p166 = scmp.eq.s32.totalorder %s18, 0
    %p167 = por %p165, %p166
    %p168 = scmp.ne.s32.totalorder %s156, %s157
    %p169 = scmp.eq.s32.totalorder %s19, 1
    %p170 = por %p168, %p169
    %p172 = scmp.ne.s32.totalorder %s157, %s171
    %p173 = scmp.eq.s32.totalorder %s19, 0
    %p174 = por %p172, %p173
    %s176 = sadd.s32 %s175, 1
    %p179 = scmp.eq.s32.totalorder %s13, 1
    %p180 = scmp.ne.s32.totalorder %s175, %s177
    %p181 = scmp.eq.s32.totalorder %s13, 0
    %p182 = por %p180, %p181
    %p183 = scmp.ne.s32.totalorder %s175, %s177
    %p184 = scmp.eq.s32.totalorder %s18, 1
    %p185 = por %p183, %p184
    %p186 = scmp.ne.s32.totalorder %s177, %s178
    %p187 = scmp.eq.s32.totalorder %s18, 0
    %p188 = por %p186, %p187
    %p189 = scmp.ne.s32.totalorder %s177, %s178
    %p190 = scmp.eq.s32.totalorder %s19, 1
    %p191 = por %p189, %p190
    %p193 = scmp.ne.s32.totalorder %s178, %s192
    %p194 = scmp.eq.s32.totalorder %s19, 0
    %p195 = por %p193, %p194
    %s197 = sadd.s32 %s196, 1
    %p200 = scmp.eq.s32.totalorder %s13, 1
    %p201 = scmp.ne.s32.totalorder %s196, %s198
    %p202 = scmp.eq.s32.totalorder %s13, 0
    %p203 = por %p201, %p202
    %p204 = scmp.ne.s32.totalorder %s196, %s198
    %p205 = scmp.eq.s32.totalorder %s18, 1
    %p206 = por %p204, %p205
    %p207 = scmp.ne.s32.totalorder %s198, %s199
    %p208 = scmp.eq.s32.totalorder %s18, 0
    %p209 = por %p207, %p208
    %p210 = scmp.ne.s32.totalorder %s198, %s199
    %p211 = scmp.eq.s32.totalorder %s19, 1
    %p212 = por %p210, %p211
    %p214 = scmp.ne.s32.totalorder %s199, %s213
    %p215 = scmp.eq.s32.totalorder %s19, 0
    %p216 = por %p214, %p215
    %s217 = ssub.s32 %s20, %s32
    %s218 = ssub.s32 %s21, %s28
    %s219 = sor.u32 %s217, %s218
    %p220 = scmp.eq.s32.totalorder %s219, 0
    %s222 = sadd.s32 %s221, 1
    %s223 = scalar_select %p220, %s221, %s222
    %p226 = pneg %p220
    %p227 = scmp.eq.s32.totalorder %s13, 1
    %p228 = por %p226, %p227
    %p229 = scmp.ne.s32.totalorder %s221, %s224
    %p230 = scmp.eq.s32.totalorder %s13, 0
    %p231 = por %p229, %p230
    %p232 = scmp.ne.s32.totalorder %s221, %s224
    %p233 = scmp.eq.s32.totalorder %s18, 1
    %p234 = por %p232, %p233
    %p235 = scmp.ne.s32.totalorder %s224, %s225
    %p236 = scmp.eq.s32.totalorder %s18, 0
    %p237 = por %p235, %p236
    %p238 = scmp.ne.s32.totalorder %s224, %s225
    %p239 = scmp.eq.s32.totalorder %s19, 1
    %p240 = por %p238, %p239
    %p242 = scmp.ne.s32.totalorder %s225, %s241
    %p243 = scmp.eq.s32.totalorder %s19, 0
    %p244 = por %p242, %p243
    %p245 = scmp.le.s32.totalorder 1, %s13
    %p246 = scmp.lt.s32.totalorder %s13, 3
    %p247 = pnand %p245, %p246
    %p248 = pneg %p247
    // Predicated region
    $region9: #{_lambda_.12} parent=5 // pred_check
      _
    $region10: #{_lambda_.12} parent=5 // pred_check_branch
      %250 = sbr.rel (%p247) target = $region12
    $region11: #{_lambda_.12} parent=5 // pred_region
      %s251 = ssub.s32 %s13, 1
      // Predicated region
      $region13: #{_lambda_.12} parent=11 // pred_check
        %p252 = pneg %p146
      $region14: #{_lambda_.12} parent=11 // pred_check_branch
        %254 = sbr.rel (%p252) target = $region16
      $region15: #{_lambda_.12} parent=11 // pred_region
        _
      $region16: #{_lambda_.12} parent=11 // pred_fallthru
        _
      // Predicated region
      $region17: #{_lambda_.12} parent=11 // pred_check
        %p255 = pneg %p167
      $region18: #{_lambda_.12} parent=11 // pred_check_branch
        %257 = sbr.rel (%p255) target = $region20
      $region19: #{_lambda_.12} parent=11 // pred_region
        _
      $region20: #{_lambda_.12} parent=11 // pred_fallthru
        _
      // Predicated region
      $region21: #{_lambda_.12} parent=11 // pred_check
        %p258 = pneg %p188
      $region22: #{_lambda_.12} parent=11 // pred_check_branch
        %260 = sbr.rel (%p258) target = $region24
      $region23: #{_lambda_.12} parent=11 // pred_region
        _
      $region24: #{_lambda_.12} parent=11 // pred_fallthru
        _
      // Predicated region
      $region25: #{_lambda_.12} parent=11 // pred_check
        %p261 = pneg %p209
      $region26: #{_lambda_.12} parent=11 // pred_check_branch
        %263 = sbr.rel (%p261) target = $region28
      $region27: #{_lambda_.12} parent=11 // pred_region
        _
      $region28: #{_lambda_.12} parent=11 // pred_fallthru
        _
    $region12: #{_lambda_.12} parent=5 // pred_fallthru
      _
    %p264 = scmp.lt.s32.totalorder %s13, 2
    // Predicated region
    $region29: #{_lambda_.12} parent=5 // pred_check
      %p265 = pneg %p264
    $region30: #{_lambda_.12} parent=5 // pred_check_branch
      %267 = sbr.rel (%p265) target = $region32
    $region31: #{_lambda_.12} parent=5 // pred_region
      // Predicated region
      $region33: #{_lambda_.12} parent=31 // pred_check
        %p268 = pneg %p55
      $region34: #{_lambda_.12} parent=31 // pred_check_branch
        %270 = sbr.rel (%p268) target = $region36
      $region35: #{_lambda_.12} parent=31 // pred_region
        %s271 = smul.u32 %s21, 8
        %s272 = ssub.s32 %s271, 1
        %p273 = scmp.gt.s32.totalorder %s272, 0
        %s274 = scalar_select %p273, %s272, 0
        %p275 = scmp.lt.s32.totalorder %s20, 1
        %s276 = scalar_select %p275, %s20, 1
        %p277 = scmp.lt.s32.totalorder %s274, 7
        %s278 = scalar_select %p277, %s274, 7
        %s279 = smul.addr %s276, 8
        %s280 = sadd.s32 %s278, %s279
        %s281 = smul.addr %s280, 8
        %s282 = scalar_lea.vmem %s0, %s281
        %s283 = smul.u32 %s21, 8
        %s284 = ssub.s32 %s283, 1
        %p285 = scmp.gt.s32.totalorder %s284, 0
        %s286 = scalar_select %p285, %s284, 0
      $region36: #{_lambda_.12} parent=31 // pred_fallthru
        _
      // Predicated region
      $region37: #{_lambda_.12} parent=31 // pred_check
        %p287 = pneg %p83
      $region38: #{_lambda_.12} parent=31 // pred_check_branch
        %289 = sbr.rel (%p287) target = $region40
      $region39: #{_lambda_.12} parent=31 // pred_region
        %s290 = smul.u32 8, %s21
        %p291 = scmp.lt.s32.totalorder %s20, 1
        %s292 = scalar_select %p291, %s20, 1
        %p293 = scmp.lt.s32.totalorder %s290, 7
        %s294 = scalar_select %p293, %s290, 7
        %s295 = smul.addr %s292, 8
        %s296 = sadd.s32 %s294, %s295
        %s297 = smul.addr %s296, 8
        %s298 = scalar_lea.vmem %s1, %s297
        %s299 = smul.u32 8, %s21
      $region40: #{_lambda_.12} parent=31 // pred_fallthru
        _
      // Predicated region
      $region41: #{_lambda_.12} parent=31 // pred_check
        %p300 = pneg %p119
      $region42: #{_lambda_.12} parent=31 // pred_check_branch
        %302 = sbr.rel (%p300) target = $region44
      $region43: #{_lambda_.12} parent=31 // pred_region
        %s303 = sadd.s32 %s21, 1
        %s304 = smul.u32 %s303, 8
        %p305 = scmp.lt.s32.totalorder %s304, 7
        %s306 = scalar_select %p305, %s304, 7
        %p307 = scmp.lt.s32.totalorder %s20, 1
        %s308 = scalar_select %p307, %s20, 1
        %p309 = scmp.lt.s32.totalorder %s306, 7
        %s310 = scalar_select %p309, %s306, 7
        %s311 = smul.addr %s308, 8
        %s312 = sadd.s32 %s310, %s311
        %s313 = smul.addr %s312, 8
        %s314 = scalar_lea.vmem %s2, %s313
        %s315 = sadd.s32 %s21, 1
        %s316 = smul.u32 %s315, 8
        %p317 = scmp.lt.s32.totalorder %s316, 7
        %s318 = scalar_select %p317, %s316, 7
      $region44: #{_lambda_.12} parent=31 // pred_fallthru
        _
    $region32: #{_lambda_.12} parent=5 // pred_fallthru
      _
    %p319 = scmp.le.s32.totalorder 1, %s13
    %p320 = scmp.lt.s32.totalorder %s13, 3
    %p321 = pnand %p319, %p320
    %p322 = pneg %p321
    // Predicated region
    $region45: #{_lambda_.12} parent=5 // pred_check
      _
    $region46: #{_lambda_.12} parent=5 // pred_check_branch
      %324 = sbr.rel (%p321) target = $region48
    $region47: #{_lambda_.12} parent=5 // pred_region
      %s325 = ssub.s32 %s13, 1
      %s326 = smul.u32 %s23, 8
      %s327 = ssub.s32 %s326, 1
      %p328 = scmp.gt.s32.totalorder %s327, 0
      %s329 = scalar_select %p328, %s327, 0
      %p330 = scmp.lt.s32.totalorder %s22, 1
      %s331 = scalar_select %p330, %s22, 1
      %p332 = scmp.lt.s32.totalorder %s329, 7
      %s333 = scalar_select %p332, %s329, 7
      %s334 = smul.addr %s331, 8
      %s335 = sadd.s32 %s333, %s334
      %s336 = smul.addr %s335, 8
      %s337 = scalar_lea.vmem %s0, %s336
      %p338 = pneg %p61
      %p339 = pneg %p58
      %s340 = smul.u32 8, %s23
      %p341 = scmp.lt.s32.totalorder %s22, 1
      %s342 = scalar_select %p341, %s22, 1
      %p343 = scmp.lt.s32.totalorder %s340, 7
      %s344 = scalar_select %p343, %s340, 7
      %s345 = smul.addr %s342, 8
      %s346 = sadd.s32 %s344, %s345
      %s347 = smul.addr %s346, 8
      %s348 = scalar_lea.vmem %s1, %s347
      %p349 = pneg %p89
      %p350 = pneg %p86
      %s351 = sadd.s32 %s23, 1
      %s352 = smul.u32 %s351, 8
      %p353 = scmp.lt.s32.totalorder %s352, 7
      %s354 = scalar_select %p353, %s352, 7
      %p355 = scmp.lt.s32.totalorder %s22, 1
      %s356 = scalar_select %p355, %s22, 1
      %p357 = scmp.lt.s32.totalorder %s354, 7
      %s358 = scalar_select %p357, %s354, 7
      %s359 = smul.addr %s356, 8
      %s360 = sadd.s32 %s358, %s359
      %s361 = smul.addr %s360, 8
      %s362 = scalar_lea.vmem %s2, %s361
      %p363 = pneg %p125
      %p364 = pneg %p122
      %p365 = pneg %p146
      %p366 = pneg %p143
      %p367 = pneg %p167
      %p368 = pneg %p164
      %p369 = pneg %p188
      %p370 = pneg %p185
      %p371 = pneg %p209
      %p372 = pneg %p206
      %p373 = pneg %p237
      %p374 = pneg %p234
      %s375 = smul.u32 8, %s23
      %p376 = scmp.lt.s32.totalorder %s22, 1
      %s377 = scalar_select %p376, %s22, 1
      %p378 = scmp.lt.s32.totalorder %s375, 7
      %s379 = scalar_select %p378, %s375, 7
      %s380 = smul.addr %s377, 8
      %s381 = sadd.s32 %s379, %s380
      %s382 = smul.addr %s381, 8
      %s383 = scalar_lea.vmem %s7, %s382
      %s384 = smul.u32 %s23, 8
      %s385 = ssub.s32 %s384, 1
      %p386 = scmp.gt.s32.totalorder %s385, 0
      %s387 = scalar_select %p386, %s385, 0
      %p388 = scmp.lt.s32.totalorder %s22, 1
      %s389 = scalar_select %p388, %s22, 1
      %p390 = scmp.lt.s32.totalorder %s387, 7
      %s391 = scalar_select %p390, %s387, 7
      %s392 = smul.addr %s389, 8
      %s393 = sadd.s32 %s391, %s392
      %s394 = smul.addr %s393, 8
      %s395 = scalar_lea.vmem %s0, %s394
      %s396 = smul.u32 %s23, 8
      %s397 = ssub.s32 %s396, 1
      %p398 = scmp.gt.s32.totalorder %s397, 0
      %s399 = scalar_select %p398, %s397, 0
      %s400 = smul.u32 8, %s23
      %p401 = scmp.lt.s32.totalorder %s22, 1
      %s402 = scalar_select %p401, %s22, 1
      %p403 = scmp.lt.s32.totalorder %s400, 7
      %s404 = scalar_select %p403, %s400, 7
      %s405 = smul.addr %s402, 8
      %s406 = sadd.s32 %s404, %s405
      %s407 = smul.addr %s406, 8
      %s408 = scalar_lea.vmem %s1, %s407
      %s409 = smul.u32 8, %s23
      %s410 = sadd.s32 %s23, 1
      %s411 = smul.u32 %s410, 8
      %p412 = scmp.lt.s32.totalorder %s411, 7
      %s413 = scalar_select %p412, %s411, 7
      %p414 = scmp.lt.s32.totalorder %s22, 1
      %s415 = scalar_select %p414, %s22, 1
      %p416 = scmp.lt.s32.totalorder %s413, 7
      %s417 = scalar_select %p416, %s413, 7
      %s418 = smul.addr %s415, 8
      %s419 = sadd.s32 %s417, %s418
      %s420 = smul.addr %s419, 8
      %s421 = scalar_lea.vmem %s2, %s420
      %s422 = sadd.s32 %s23, 1
      %s423 = smul.u32 %s422, 8
      %p424 = scmp.lt.s32.totalorder %s423, 7
      %s425 = scalar_select %p424, %s423, 7
      %s426 = smul.u32 8, %s23
      %p427 = scmp.lt.s32.totalorder %s22, 1
      %s428 = scalar_select %p427, %s22, 1
      %p429 = scmp.lt.s32.totalorder %s426, 7
      %s430 = scalar_select %p429, %s426, 7
      %s431 = smul.addr %s428, 8
      %s432 = sadd.s32 %s430, %s431
      %s433 = smul.addr %s432, 8
      %s434 = scalar_lea.vmem %s7, %s433
      %s435 = smul.u32 8, %s23
      %p436 = scmp.gt.s32.totalorder %s23, 0
      %s437 = scalar_select %p436, 1.0, 0.0
      %v438 = vld [vmem:[%s395] sm:$0xff]
      %v439 = vstv %s437
      %v440 = vmul.f32 %v439, %v438
      %p441 = scmp.lt.s32.totalorder %s23, 0
      %s442 = scalar_select %p441, 1.0, 0.0
      %v443 = vld [vmem:[%s421] sm:$0xff]
      %v444 = vstv %s442
      %v445 = vmul.f32 %v444, %v443
      %v446 = vld [vmem:[%s408] sm:$0xff]
      %v447 = vld [vmem:[%s408 + $0x8] sm:$0xff]
      %v448 = vld [vmem:[%s408 + $0x10] sm:$0xff]
      %v449 = vld [vmem:[%s408 + $0x18] sm:$0xff]
      %v450 = vld [vmem:[%s408 + $0x20] sm:$0xff]
      %v451 = vld [vmem:[%s408 + $0x28] sm:$0xff]
      %v452 = vld [vmem:[%s408 + $0x30] sm:$0xff]
      %v453 = vld [vmem:[%s408 + $0x38] sm:$0xff]
      %v464 = vrot.slane %v440, 7
      %v465 = vrot.slane %v446, 7
      %v466 = vrot.slane %v447, 7
      %v467 = vrot.slane %v448, 7
      %v468 = vrot.slane %v449, 7
      %v469 = vrot.slane %v450, 7
      %v470 = vrot.slane %v451, 7
      %v471 = vrot.slane %v452, 7
      %v472 = vrot.slane %v453, 7
      %v473 = vrot.slane %v445, 7
      %vm484 = vcmask 1040384
      %v485 = vsel %vm484, 0.0, %v464
      %v486 = vsel %vm484, 0.0, %v465
      %v487 = vsel %vm484, 0.0, %v466
      %v488 = vsel %vm484, 0.0, %v467
      %v489 = vsel %vm484, 0.0, %v468
      %v490 = vsel %vm484, 0.0, %v469
      %v491 = vsel %vm484, 0.0, %v470
      %v492 = vsel %vm484, 0.0, %v471
      %v493 = vsel %vm484, 0.0, %v472
      %v494 = vsel %vm484, 0.0, %v473
      %v495 = vsel %vm484, %v464, 0.0
      %v496 = vsel %vm484, %v465, 0.0
      %v497 = vsel %vm484, %v466, 0.0
      %v498 = vsel %vm484, %v467, 0.0
      %v499 = vsel %vm484, %v468, 0.0
      %v500 = vsel %vm484, %v469, 0.0
      %v501 = vsel %vm484, %v470, 0.0
      %v502 = vsel %vm484, %v471, 0.0
      %v503 = vsel %vm484, %v472, 0.0
      %v504 = vsel %vm484, %v473, 0.0
      %v505 = vld [vmem:[%s3] sm:$0xff]
      %v506 = vld [vmem:[%s3 + $0x8] sm:$0x1]
      %v507 = vperm.slane %v505, 0
      %v508 = vmul.f32 %v485, %v507
      %v509 = vmul.f32 %v486, %v507
      %v510 = vmul.f32 %v487, %v507
      %v511 = vmul.f32 %v488, %v507
      %v512 = vmul.f32 %v489, %v507
      %v513 = vmul.f32 %v490, %v507
      %v514 = vmul.f32 %v491, %v507
      %v515 = vmul.f32 %v492, %v507
      %v516 = vadd.f32 %v508, 0.0
      %v517 = vadd.f32 %v509, 0.0
      %v518 = vadd.f32 %v510, 0.0
      %v519 = vadd.f32 %v511, 0.0
      %v520 = vadd.f32 %v512, 0.0
      %v521 = vadd.f32 %v513, 0.0
      %v522 = vadd.f32 %v514, 0.0
      %v523 = vadd.f32 %v515, 0.0
      %v524 = vperm.slane %v505, 1
      %v525 = vmul.f32 %v485, %v524
      %v526 = vmul.f32 %v495, %v524
      %v527 = vmul.f32 %v486, %v524
      %v528 = vmul.f32 %v496, %v524
      %v529 = vmul.f32 %v487, %v524
      %v530 = vmul.f32 %v497, %v524
      %v531 = vmul.f32 %v488, %v524
      %v532 = vmul.f32 %v498, %v524
      %v533 = vmul.f32 %v489, %v524
      %v534 = vmul.f32 %v499, %v524
      %v535 = vmul.f32 %v490, %v524
      %v536 = vmul.f32 %v500, %v524
      %v537 = vmul.f32 %v491, %v524
      %v538 = vmul.f32 %v501, %v524
      %v539 = vmul.f32 %v492, %v524
      %v540 = vmul.f32 %v502, %v524
      %vm557 = vcmask 1046528
      %v558 = vrot.slane %v525, 1
      %v559 = vrot.slane %v526, 1
      %v560 = vsel %vm557, %v558, %v559
      %v561 = vrot.slane %v527, 1
      %v562 = vrot.slane %v528, 1
      %v563 = vsel %vm557, %v561, %v562
      %v564 = vrot.slane %v529, 1
      %v565 = vrot.slane %v530, 1
      %v566 = vsel %vm557, %v564, %v565
      %v567 = vrot.slane %v531, 1
      %v568 = vrot.slane %v532, 1
      %v569 = vsel %vm557, %v567, %v568
      %v570 = vrot.slane %v533, 1
      %v571 = vrot.slane %v534, 1
      %v572 = vsel %vm557, %v570, %v571
      %v573 = vrot.slane %v535, 1
      %v574 = vrot.slane %v536, 1
      %v575 = vsel %vm557, %v573, %v574
      %v576 = vrot.slane %v537, 1
      %v577 = vrot.slane %v538, 1
      %v578 = vsel %vm557, %v576, %v577
      %v579 = vrot.slane %v539, 1
      %v580 = vrot.slane %v540, 1
      %v581 = vsel %vm557, %v579, %v580
      %v590 = vadd.f32 %v516, %v560
      %v591 = vadd.f32 %v517, %v563
      %v592 = vadd.f32 %v518, %v566
      %v593 = vadd.f32 %v519, %v569
      %v594 = vadd.f32 %v520, %v572
      %v595 = vadd.f32 %v521, %v575
      %v596 = vadd.f32 %v522, %v578
      %v597 = vadd.f32 %v523, %v581
      %v598 = vperm.slane %v505, 2
      %v599 = vmul.f32 %v485, %v598
      %v600 = vmul.f32 %v495, %v598
      %v601 = vmul.f32 %v486, %v598
      %v602 = vmul.f32 %v496, %v598
      %v603 = vmul.f32 %v487, %v598
      %v604 = vmul.f32 %v497, %v598
      %v605 = vmul.f32 %v488, %v598
      %v606 = vmul.f32 %v498, %v598
      %v607 = vmul.f32 %v489, %v598
      %v608 = vmul.f32 %v499, %v598
      %v609 = vmul.f32 %v490, %v598
      %v610 = vmul.f32 %v500, %v598
      %v611 = vmul.f32 %v491, %v598
      %v612 = vmul.f32 %v501, %v598
      %v613 = vmul.f32 %v492, %v598
      %v614 = vmul.f32 %v502, %v598
      %vm631 = vcmask 1045504
      %v632 = vrot.slane %v599, 2
      %v633 = vrot.slane %v600, 2
      %v634 = vsel %vm631, %v632, %v633
      %v635 = vrot.slane %v601, 2
      %v636 = vrot.slane %v602, 2
      %v637 = vsel %vm631, %v635, %v636
      %v638 = vrot.slane %v603, 2
      %v639 = vrot.slane %v604, 2
      %v640 = vsel %vm631, %v638, %v639
      %v641 = vrot.slane %v605, 2
      %v642 = vrot.slane %v606, 2
      %v643 = vsel %vm631, %v641, %v642
      %v644 = vrot.slane %v607, 2
      %v645 = vrot.slane %v608, 2
      %v646 = vsel %vm631, %v644, %v645
      %v647 = vrot.slane %v609, 2
      %v648 = vrot.slane %v610, 2
      %v649 = vsel %vm631, %v647, %v648
      %v650 = vrot.slane %v611, 2
      %v651 = vrot.slane %v612, 2
      %v652 = vsel %vm631, %v650, %v651
      %v653 = vrot.slane %v613, 2
      %v654 = vrot.slane %v614, 2
      %v655 = vsel %vm631, %v653, %v654
      %v664 = vadd.f32 %v590, %v634
      %v665 = vadd.f32 %v591, %v637
      %v666 = vadd.f32 %v592, %v640
      %v667 = vadd.f32 %v593, %v643
      %v668 = vadd.f32 %v594, %v646
      %v669 = vadd.f32 %v595, %v649
      %v670 = vadd.f32 %v596, %v652
      %v671 = vadd.f32 %v597, %v655
      %v672 = vperm.slane %v505, 3
      %v673 = vmul.f32 %v486, %v672
      %v674 = vmul.f32 %v487, %v672
      %v675 = vmul.f32 %v488, %v672
      %v676 = vmul.f32 %v489, %v672
      %v677 = vmul.f32 %v490, %v672
      %v678 = vmul.f32 %v491, %v672
      %v679 = vmul.f32 %v492, %v672
      %v680 = vmul.f32 %v493, %v672
      %v681 = vadd.f32 %v664, %v673
      %v682 = vadd.f32 %v665, %v674
      %v683 = vadd.f32 %v666, %v675
      %v684 = vadd.f32 %v667, %v676
      %v685 = vadd.f32 %v668, %v677
      %v686 = vadd.f32 %v669, %v678
      %v687 = vadd.f32 %v670, %v679
      %v688 = vadd.f32 %v671, %v680
      %v689 = vperm.slane %v505, 4
      %v690 = vmul.f32 %v486, %v689
      %v691 = vmul.f32 %v496, %v689
      %v692 = vmul.f32 %v487, %v689
      %v693 = vmul.f32 %v497, %v689
      %v694 = vmul.f32 %v488, %v689
      %v695 = vmul.f32 %v498, %v689
      %v696 = vmul.f32 %v489, %v689
      %v697 = vmul.f32 %v499, %v689
      %v698 = vmul.f32 %v490, %v689
      %v699 = vmul.f32 %v500, %v689
      %v700 = vmul.f32 %v491, %v689
      %v701 = vmul.f32 %v501, %v689
      %v702 = vmul.f32 %v492, %v689
      %v703 = vmul.f32 %v502, %v689
      %v704 = vmul.f32 %v493, %v689
      %v705 = vmul.f32 %v503, %v689
      %v722 = vrot.slane %v690, 1
      %v723 = vrot.slane %v691, 1
      %v724 = vsel %vm557, %v722, %v723
      %v725 = vrot.slane %v692, 1
      %v726 = vrot.slane %v693, 1
      %v727 = vsel %vm557, %v725, %v726
      %v728 = vrot.slane %v694, 1
      %v729 = vrot.slane %v695, 1
      %v730 = vsel %vm557, %v728, %v729
      %v731 = vrot.slane %v696, 1
      %v732 = vrot.slane %v697, 1
      %v733 = vsel %vm557, %v731, %v732
      %v734 = vrot.slane %v698, 1
      %v735 = vrot.slane %v699, 1
      %v736 = vsel %vm557, %v734, %v735
      %v737 = vrot.slane %v700, 1
      %v738 = vrot.slane %v701, 1
      %v739 = vsel %vm557, %v737, %v738
      %v740 = vrot.slane %v702, 1
      %v741 = vrot.slane %v703, 1
      %v742 = vsel %vm557, %v740, %v741
      %v743 = vrot.slane %v704, 1
      %v744 = vrot.slane %v705, 1
      %v745 = vsel %vm557, %v743, %v744
      %v754 = vadd.f32 %v681, %v724
      %v755 = vadd.f32 %v682, %v727
      %v756 = vadd.f32 %v683, %v730
      %v757 = vadd.f32 %v684, %v733
      %v758 = vadd.f32 %v685, %v736
      %v759 = vadd.f32 %v686, %v739
      %v760 = vadd.f32 %v687, %v742
      %v761 = vadd.f32 %v688, %v745
      %v762 = vperm.slane %v505, 5
      %v763 = vmul.f32 %v486, %v762
      %v764 = vmul.f32 %v496, %v762
      %v765 = vmul.f32 %v487, %v762
      %v766 = vmul.f32 %v497, %v762
      %v767 = vmul.f32 %v488, %v762
      %v768 = vmul.f32 %v498, %v762
      %v769 = vmul.f32 %v489, %v762
      %v770 = vmul.f32 %v499, %v762
      %v771 = vmul.f32 %v490, %v762
      %v772 = vmul.f32 %v500, %v762
      %v773 = vmul.f32 %v491, %v762
      %v774 = vmul.f32 %v501, %v762
      %v775 = vmul.f32 %v492, %v762
      %v776 = vmul.f32 %v502, %v762
      %v777 = vmul.f32 %v493, %v762
      %v778 = vmul.f32 %v503, %v762
      %v795 = vrot.slane %v763, 2
      %v796 = vrot.slane %v764, 2
      %v797 = vsel %vm631, %v795, %v796
      %v798 = vrot.slane %v765, 2
      %v799 = vrot.slane %v766, 2
      %v800 = vsel %vm631, %v798, %v799
      %v801 = vrot.slane %v767, 2
      %v802 = vrot.slane %v768, 2
      %v803 = vsel %vm631, %v801, %v802
      %v804 = vrot.slane %v769, 2
      %v805 = vrot.slane %v770, 2
      %v806 = vsel %vm631, %v804, %v805
      %v807 = vrot.slane %v771, 2
      %v808 = vrot.slane %v772, 2
      %v809 = vsel %vm631, %v807, %v808
      %v810 = vrot.slane %v773, 2
      %v811 = vrot.slane %v774, 2
      %v812 = vsel %vm631, %v810, %v811
      %v813 = vrot.slane %v775, 2
      %v814 = vrot.slane %v776, 2
      %v815 = vsel %vm631, %v813, %v814
      %v816 = vrot.slane %v777, 2
      %v817 = vrot.slane %v778, 2
      %v818 = vsel %vm631, %v816, %v817
      %v827 = vadd.f32 %v754, %v797
      %v828 = vadd.f32 %v755, %v800
      %v829 = vadd.f32 %v756, %v803
      %v830 = vadd.f32 %v757, %v806
      %v831 = vadd.f32 %v758, %v809
      %v832 = vadd.f32 %v759, %v812
      %v833 = vadd.f32 %v760, %v815
      %v834 = vadd.f32 %v761, %v818
      %v835 = vperm.slane %v505, 6
      %v836 = vmul.f32 %v487, %v835
      %v837 = vmul.f32 %v488, %v835
      %v838 = vmul.f32 %v489, %v835
      %v839 = vmul.f32 %v490, %v835
      %v840 = vmul.f32 %v491, %v835
      %v841 = vmul.f32 %v492, %v835
      %v842 = vmul.f32 %v493, %v835
      %v843 = vmul.f32 %v494, %v835
      %v844 = vadd.f32 %v827, %v836
      %v845 = vadd.f32 %v828, %v837
      %v846 = vadd.f32 %v829, %v838
      %v847 = vadd.f32 %v830, %v839
      %v848 = vadd.f32 %v831, %v840
      %v849 = vadd.f32 %v832, %v841
      %v850 = vadd.f32 %v833, %v842
      %v851 = vadd.f32 %v834, %v843
      %v852 = vperm.slane %v505, 7
      %v853 = vmul.f32 %v487, %v852
      %v854 = vmul.f32 %v497, %v852
      %v855 = vmul.f32 %v488, %v852
      %v856 = vmul.f32 %v498, %v852
      %v857 = vmul.f32 %v489, %v852
      %v858 = vmul.f32 %v499, %v852
      %v859 = vmul.f32 %v490, %v852
      %v860 = vmul.f32 %v500, %v852
      %v861 = vmul.f32 %v491, %v852
      %v862 = vmul.f32 %v501, %v852
      %v863 = vmul.f32 %v492, %v852
      %v864 = vmul.f32 %v502, %v852
      %v865 = vmul.f32 %v493, %v852
      %v866 = vmul.f32 %v503, %v852
      %v867 = vmul.f32 %v494, %v852
      %v868 = vmul.f32 %v504, %v852
      %v885 = vrot.slane %v853, 1
      %v886 = vrot.slane %v854, 1
      %v887 = vsel %vm557, %v885, %v886
      %v888 = vrot.slane %v855, 1
      %v889 = vrot.slane %v856, 1
      %v890 = vsel %vm557, %v888, %v889
      %v891 = vrot.slane %v857, 1
      %v892 = vrot.slane %v858, 1
      %v893 = vsel %vm557, %v891, %v892
      %v894 = vrot.slane %v859, 1
      %v895 = vrot.slane %v860, 1
      %v896 = vsel %vm557, %v894, %v895
      %v897 = vrot.slane %v861, 1
      %v898 = vrot.slane %v862, 1
      %v899 = vsel %vm557, %v897, %v898
      %v900 = vrot.slane %v863, 1
      %v901 = vrot.slane %v864, 1
      %v902 = vsel %vm557, %v900, %v901
      %v903 = vrot.slane %v865, 1
      %v904 = vrot.slane %v866, 1
      %v905 = vsel %vm557, %v903, %v904
      %v906 = vrot.slane %v867, 1
      %v907 = vrot.slane %v868, 1
      %v908 = vsel %vm557, %v906, %v907
      %v917 = vadd.f32 %v844, %v887
      %v918 = vadd.f32 %v845, %v890
      %v919 = vadd.f32 %v846, %v893
      %v920 = vadd.f32 %v847, %v896
      %v921 = vadd.f32 %v848, %v899
      %v922 = vadd.f32 %v849, %v902
      %v923 = vadd.f32 %v850, %v905
      %v924 = vadd.f32 %v851, %v908
      %v925 = vperm.slane %v506, 0
      %v926 = vmul.f32 %v487, %v925
      %v927 = vmul.f32 %v497, %v925
      %v928 = vmul.f32 %v488, %v925
      %v929 = vmul.f32 %v498, %v925
      %v930 = vmul.f32 %v489, %v925
      %v931 = vmul.f32 %v499, %v925
      %v932 = vmul.f32 %v490, %v925
      %v933 = vmul.f32 %v500, %v925
      %v934 = vmul.f32 %v491, %v925
      %v935 = vmul.f32 %v501, %v925
      %v936 = vmul.f32 %v492, %v925
      %v937 = vmul.f32 %v502, %v925
      %v938 = vmul.f32 %v493, %v925
      %v939 = vmul.f32 %v503, %v925
      %v940 = vmul.f32 %v494, %v925
      %v941 = vmul.f32 %v504, %v925
      %v958 = vrot.slane %v926, 2
      %v959 = vrot.slane %v927, 2
      %v960 = vsel %vm631, %v958, %v959
      %v961 = vrot.slane %v928, 2
      %v962 = vrot.slane %v929, 2
      %v963 = vsel %vm631, %v961, %v962
      %v964 = vrot.slane %v930, 2
      %v965 = vrot.slane %v931, 2
      %v966 = vsel %vm631, %v964, %v965
      %v967 = vrot.slane %v932, 2
      %v968 = vrot.slane %v933, 2
      %v969 = vsel %vm631, %v967, %v968
      %v970 = vrot.slane %v934, 2
      %v971 = vrot.slane %v935, 2
      %v972 = vsel %vm631, %v970, %v971
      %v973 = vrot.slane %v936, 2
      %v974 = vrot.slane %v937, 2
      %v975 = vsel %vm631, %v973, %v974
      %v976 = vrot.slane %v938, 2
      %v977 = vrot.slane %v939, 2
      %v978 = vsel %vm631, %v976, %v977
      %v979 = vrot.slane %v940, 2
      %v980 = vrot.slane %v941, 2
      %v981 = vsel %vm631, %v979, %v980
      %v990 = vadd.f32 %v917, %v960
      %v991 = vadd.f32 %v918, %v963
      %v992 = vadd.f32 %v919, %v966
      %v993 = vadd.f32 %v920, %v969
      %v994 = vadd.f32 %v921, %v972
      %v995 = vadd.f32 %v922, %v975
      %v996 = vadd.f32 %v923, %v978
      %v997 = vadd.f32 %v924, %v981
      %v998 = vld [vmem:[%s4] sm:$0x1]
      %v1000 = vperm.slane %v998, 0
      %v1002 = vadd.f32 %v990, %v1000
      %v1003 = vadd.f32 %v991, %v1000
      %v1004 = vadd.f32 %v992, %v1000
      %v1005 = vadd.f32 %v993, %v1000
      %v1006 = vadd.f32 %v994, %v1000
      %v1007 = vadd.f32 %v995, %v1000
      %v1008 = vadd.f32 %v996, %v1000
      %v1009 = vadd.f32 %v997, %v1000
      %vm1010 = vcmask 523264
      %v1011 = vsel %vm1010, %v1002, 0.0
      %1012 = vadd.xlane.f32.xlu0 %v1011
      %v1013 = vpop.xlane.xlu0 %1012
      %v1014 = vsel %vm1010, %v1003, 0.0
      %1015 = vadd.xlane.f32.xlu0 %v1014
      %v1016 = vpop.xlane.xlu0 %1015
      %v1017 = vsel %vm1010, %v1004, 0.0
      %1018 = vadd.xlane.f32.xlu0 %v1017
      %v1019 = vpop.xlane.xlu0 %1018
      %v1020 = vsel %vm1010, %v1005, 0.0
      %1021 = vadd.xlane.f32.xlu0 %v1020
      %v1022 = vpop.xlane.xlu0 %1021
      %v1023 = vsel %vm1010, %v1006, 0.0
      %1024 = vadd.xlane.f32.xlu0 %v1023
      %v1025 = vpop.xlane.xlu0 %1024
      %v1026 = vsel %vm1010, %v1007, 0.0
      %1027 = vadd.xlane.f32.xlu0 %v1026
      %v1028 = vpop.xlane.xlu0 %1027
      %v1029 = vsel %vm1010, %v1008, 0.0
      %1030 = vadd.xlane.f32.xlu0 %v1029
      %v1031 = vpop.xlane.xlu0 %1030
      %v1032 = vsel %vm1010, %v1009, 0.0
      %1033 = vadd.xlane.f32.xlu0 %v1032
      %v1034 = vpop.xlane.xlu0 %1033
      %v1035 = vrcp.pop 64.0
      %v1036 = vmul.f32 64.0, %v1035
      %v1037 = vsub.f32 1.0, %v1036
      %v1038 = vmul.f32 %v1035, %v1037
      %v1039 = vadd.f32 %v1035, %v1038
      %vm1040 = vweird.f32 %v1035
      %v1041 = vsel %vm1040, %v1035, %v1039
      %v1042 = vmul.f32 %v1013, %v1041
      %v1043 = vmul.f32 %v1016, %v1041
      %v1044 = vmul.f32 %v1019, %v1041
      %v1045 = vmul.f32 %v1022, %v1041
      %v1046 = vmul.f32 %v1025, %v1041
      %v1047 = vmul.f32 %v1028, %v1041
      %v1048 = vmul.f32 %v1031, %v1041
      %v1049 = vmul.f32 %v1034, %v1041
      %v1050 = vsub.f32 %v1002, %v1042
      %v1051 = vsub.f32 %v1003, %v1043
      %v1052 = vsub.f32 %v1004, %v1044
      %v1053 = vsub.f32 %v1005, %v1045
      %v1054 = vsub.f32 %v1006, %v1046
      %v1055 = vsub.f32 %v1007, %v1047
      %v1056 = vsub.f32 %v1008, %v1048
      %v1057 = vsub.f32 %v1009, %v1049
      %v1058 = vmul.f32 %v1050, %v1050
      %v1059 = vmul.f32 %v1051, %v1051
      %v1060 = vmul.f32 %v1052, %v1052
      %v1061 = vmul.f32 %v1053, %v1053
      %v1062 = vmul.f32 %v1054, %v1054
      %v1063 = vmul.f32 %v1055, %v1055
      %v1064 = vmul.f32 %v1056, %v1056
      %v1065 = vmul.f32 %v1057, %v1057
      %v1066 = vsel %vm1010, %v1058, 0.0
      %1067 = vadd.xlane.f32.xlu0 %v1066
      %v1068 = vpop.xlane.xlu0 %1067
      %v1069 = vsel %vm1010, %v1059, 0.0
      %1070 = vadd.xlane.f32.xlu0 %v1069
      %v1071 = vpop.xlane.xlu0 %1070
      %v1072 = vsel %vm1010, %v1060, 0.0
      %1073 = vadd.xlane.f32.xlu0 %v1072
      %v1074 = vpop.xlane.xlu0 %1073
      %v1075 = vsel %vm1010, %v1061, 0.0
      %1076 = vadd.xlane.f32.xlu0 %v1075
      %v1077 = vpop.xlane.xlu0 %1076
      %v1078 = vsel %vm1010, %v1062, 0.0
      %1079 = vadd.xlane.f32.xlu0 %v1078
      %v1080 = vpop.xlane.xlu0 %1079
      %v1081 = vsel %vm1010, %v1063, 0.0
      %1082 = vadd.xlane.f32.xlu0 %v1081
      %v1083 = vpop.xlane.xlu0 %1082
      %v1084 = vsel %vm1010, %v1064, 0.0
      %1085 = vadd.xlane.f32.xlu0 %v1084
      %v1086 = vpop.xlane.xlu0 %1085
      %v1087 = vsel %vm1010, %v1065, 0.0
      %1088 = vadd.xlane.f32.xlu0 %v1087
      %v1089 = vpop.xlane.xlu0 %1088
      %v1090 = vmul.f32 %v1068, %v1041
      %v1091 = vmul.f32 %v1071, %v1041
      %v1092 = vmul.f32 %v1074, %v1041
      %v1093 = vmul.f32 %v1077, %v1041
      %v1094 = vmul.f32 %v1080, %v1041
      %v1095 = vmul.f32 %v1083, %v1041
      %v1096 = vmul.f32 %v1086, %v1041
      %v1097 = vmul.f32 %v1089, %v1041
      %v1098 = vadd.f32 %v1090, 1e-05
      %v1099 = vadd.f32 %v1091, 1e-05
      %v1100 = vadd.f32 %v1092, 1e-05
      %v1101 = vadd.f32 %v1093, 1e-05
      %v1102 = vadd.f32 %v1094, 1e-05
      %v1103 = vadd.f32 %v1095, 1e-05
      %v1104 = vadd.f32 %v1096, 1e-05
      %v1105 = vadd.f32 %v1097, 1e-05
      %v1106 = vrsqrt.pop %v1098
      %v1107 = vmul.f32 %v1106, %v1098
      %v1108 = vmul.f32 %v1107, %v1106
      %v1109 = vmul.f32 0.5, %v1108
      %v1110 = vsub.f32 1.5, %v1109
      %v1111 = vmul.f32 %v1106, %v1110
      %vm1112 = vweird.f32 %v1098
      %vm1113 = vweird.f32 %v1106
      %vm1114 = vmor %vm1112, %vm1113
      %v1115 = vsel %vm1114, %v1106, %v1111
      %v1116 = vrsqrt.pop %v1099
      %v1117 = vmul.f32 %v1116, %v1099
      %v1118 = vmul.f32 %v1117, %v1116
      %v1119 = vmul.f32 0.5, %v1118
      %v1120 = vsub.f32 1.5, %v1119
      %v1121 = vmul.f32 %v1116, %v1120
      %vm1122 = vweird.f32 %v1099
      %vm1123 = vweird.f32 %v1116
      %vm1124 = vmor %vm1122, %vm1123
      %v1125 = vsel %vm1124, %v1116, %v1121
      %v1126 = vrsqrt.pop %v1100
      %v1127 = vmul.f32 %v1126, %v1100
      %v1128 = vmul.f32 %v1127, %v1126
      %v1129 = vmul.f32 0.5, %v1128
      %v1130 = vsub.f32 1.5, %v1129
      %v1131 = vmul.f32 %v1126, %v1130
      %vm1132 = vweird.f32 %v1100
      %vm1133 = vweird.f32 %v1126
      %vm1134 = vmor %vm1132, %vm1133
      %v1135 = vsel %vm1134, %v1126, %v1131
      %v1136 = vrsqrt.pop %v1101
      %v1137 = vmul.f32 %v1136, %v1101
      %v1138 = vmul.f32 %v1137, %v1136
      %v1139 = vmul.f32 0.5, %v1138
      %v1140 = vsub.f32 1.5, %v1139
      %v1141 = vmul.f32 %v1136, %v1140
      %vm1142 = vweird.f32 %v1101
      %vm1143 = vweird.f32 %v1136
      %vm1144 = vmor %vm1142, %vm1143
      %v1145 = vsel %vm1144, %v1136, %v1141
      %v1146 = vrsqrt.pop %v1102
      %v1147 = vmul.f32 %v1146, %v1102
      %v1148 = vmul.f32 %v1147, %v1146
      %v1149 = vmul.f32 0.5, %v1148
      %v1150 = vsub.f32 1.5, %v1149
      %v1151 = vmul.f32 %v1146, %v1150
      %vm1152 = vweird.f32 %v1102
      %vm1153 = vweird.f32 %v1146
      %vm1154 = vmor %vm1152, %vm1153
      %v1155 = vsel %vm1154, %v1146, %v1151
      %v1156 = vrsqrt.pop %v1103
      %v1157 = vmul.f32 %v1156, %v1103
      %v1158 = vmul.f32 %v1157, %v1156
      %v1159 = vmul.f32 0.5, %v1158
      %v1160 = vsub.f32 1.5, %v1159
      %v1161 = vmul.f32 %v1156, %v1160
      %vm1162 = vweird.f32 %v1103
      %vm1163 = vweird.f32 %v1156
      %vm1164 = vmor %vm1162, %vm1163
      %v1165 = vsel %vm1164, %v1156, %v1161
      %v1166 = vrsqrt.pop %v1104
      %v1167 = vmul.f32 %v1166, %v1104
      %v1168 = vmul.f32 %v1167, %v1166
      %v1169 = vmul.f32 0.5, %v1168
      %v1170 = vsub.f32 1.5, %v1169
      %v1171 = vmul.f32 %v1166, %v1170
      %vm1172 = vweird.f32 %v1104
      %vm1173 = vweird.f32 %v1166
      %vm1174 = vmor %vm1172, %vm1173
      %v1175 = vsel %vm1174, %v1166, %v1171
      %v1176 = vrsqrt.pop %v1105
      %v1177 = vmul.f32 %v1176, %v1105
      %v1178 = vmul.f32 %v1177, %v1176
      %v1179 = vmul.f32 0.5, %v1178
      %v1180 = vsub.f32 1.5, %v1179
      %v1181 = vmul.f32 %v1176, %v1180
      %vm1182 = vweird.f32 %v1105
      %vm1183 = vweird.f32 %v1176
      %vm1184 = vmor %vm1182, %vm1183
      %v1185 = vsel %vm1184, %v1176, %v1181
      %v1186 = vmul.f32 %v1050, %v1115
      %v1187 = vmul.f32 %v1051, %v1125
      %v1188 = vmul.f32 %v1052, %v1135
      %v1189 = vmul.f32 %v1053, %v1145
      %v1190 = vmul.f32 %v1054, %v1155
      %v1191 = vmul.f32 %v1055, %v1165
      %v1192 = vmul.f32 %v1056, %v1175
      %v1193 = vmul.f32 %v1057, %v1185
      %v1194 = vld [vmem:[%s5] sm:$0x1]
      %v1196 = vperm.slane %v1194, 0
      %v1198 = vmul.f32 %v1186, %v1196
      %v1199 = vmul.f32 %v1187, %v1196
      %v1200 = vmul.f32 %v1188, %v1196
      %v1201 = vmul.f32 %v1189, %v1196
      %v1202 = vmul.f32 %v1190, %v1196
      %v1203 = vmul.f32 %v1191, %v1196
      %v1204 = vmul.f32 %v1192, %v1196
      %v1205 = vmul.f32 %v1193, %v1196
      %v1206 = vld [vmem:[%s6] sm:$0x1]
      %v1208 = vperm.slane %v1206, 0
      %v1210 = vadd.f32 %v1198, %v1208
      %v1211 = vadd.f32 %v1199, %v1208
      %v1212 = vadd.f32 %v1200, %v1208
      %v1213 = vadd.f32 %v1201, %v1208
      %v1214 = vadd.f32 %v1202, %v1208
      %v1215 = vadd.f32 %v1203, %v1208
      %v1216 = vadd.f32 %v1204, %v1208
      %v1217 = vadd.f32 %v1205, %v1208
      %v1218 = vmul.f32 %v1210, %v1210
      %v1219 = vmul.f32 %v1211, %v1211
      %v1220 = vmul.f32 %v1212, %v1212
      %v1221 = vmul.f32 %v1213, %v1213
      %v1222 = vmul.f32 %v1214, %v1214
      %v1223 = vmul.f32 %v1215, %v1215
      %v1224 = vmul.f32 %v1216, %v1216
      %v1225 = vmul.f32 %v1217, %v1217
      %v1226 = vmul.f32 %v1210, %v1218
      %v1227 = vmul.f32 %v1211, %v1219
      %v1228 = vmul.f32 %v1212, %v1220
      %v1229 = vmul.f32 %v1213, %v1221
      %v1230 = vmul.f32 %v1214, %v1222
      %v1231 = vmul.f32 %v1215, %v1223
      %v1232 = vmul.f32 %v1216, %v1224
      %v1233 = vmul.f32 %v1217, %v1225
      %v1234 = vmul.f32 %v1226, 0.044715
      %v1235 = vmul.f32 %v1227, 0.044715
      %v1236 = vmul.f32 %v1228, 0.044715
      %v1237 = vmul.f32 %v1229, 0.044715
      %v1238 = vmul.f32 %v1230, 0.044715
      %v1239 = vmul.f32 %v1231, 0.044715
      %v1240 = vmul.f32 %v1232, 0.044715
      %v1241 = vmul.f32 %v1233, 0.044715
      %v1242 = vadd.f32 %v1210, %v1234
      %v1243 = vadd.f32 %v1211, %v1235
      %v1244 = vadd.f32 %v1212, %v1236
      %v1245 = vadd.f32 %v1213, %v1237
      %v1246 = vadd.f32 %v1214, %v1238
      %v1247 = vadd.f32 %v1215, %v1239
      %v1248 = vadd.f32 %v1216, %v1240
      %v1249 = vadd.f32 %v1217, %v1241
      %v1250 = vmul.f32 %v1242, 0.7978846
      %v1251 = vmul.f32 %v1243, 0.7978846
      %v1252 = vmul.f32 %v1244, 0.7978846
      %v1253 = vmul.f32 %v1245, 0.7978846
      %v1254 = vmul.f32 %v1246, 0.7978846
      %v1255 = vmul.f32 %v1247, 0.7978846
      %v1256 = vmul.f32 %v1248, 0.7978846
      %v1257 = vmul.f32 %v1249, 0.7978846
      %v1258 = vtanh.pop %v1250
      %v1259 = vtanh.pop %v1251
      %v1260 = vtanh.pop %v1252
      %v1261 = vtanh.pop %v1253
      %v1262 = vtanh.pop %v1254
      %v1263 = vtanh.pop %v1255
      %v1264 = vtanh.pop %v1256
      %v1265 = vtanh.pop %v1257
      %v1266 = vadd.f32 %v1258, 1.0
      %v1267 = vadd.f32 %v1259, 1.0
      %v1268 = vadd.f32 %v1260, 1.0
      %v1269 = vadd.f32 %v1261, 1.0
      %v1270 = vadd.f32 %v1262, 1.0
      %v1271 = vadd.f32 %v1263, 1.0
      %v1272 = vadd.f32 %v1264, 1.0
      %v1273 = vadd.f32 %v1265, 1.0
      %v1274 = vmul.f32 %v1266, 0.5
      %v1275 = vmul.f32 %v1267, 0.5
      %v1276 = vmul.f32 %v1268, 0.5
      %v1277 = vmul.f32 %v1269, 0.5
      %v1278 = vmul.f32 %v1270, 0.5
      %v1279 = vmul.f32 %v1271, 0.5
      %v1280 = vmul.f32 %v1272, 0.5
      %v1281 = vmul.f32 %v1273, 0.5
      %v1282 = vmul.f32 %v1210, %v1274
      %v1283 = vmul.f32 %v1211, %v1275
      %v1284 = vmul.f32 %v1212, %v1276
      %v1285 = vmul.f32 %v1213, %v1277
      %v1286 = vmul.f32 %v1214, %v1278
      %v1287 = vmul.f32 %v1215, %v1279
      %v1288 = vmul.f32 %v1216, %v1280
      %v1289 = vmul.f32 %v1217, %v1281
      %1290 = vst.msk [vmem:[%s434] sm:$0xff] %vm1010, %v1282
      %1291 = vst.msk [vmem:[%s434 + $0x8] sm:$0xff] %vm1010, %v1283
      %1292 = vst.msk [vmem:[%s434 + $0x10] sm:$0xff] %vm1010, %v1284
      %1293 = vst.msk [vmem:[%s434 + $0x18] sm:$0xff] %vm1010, %v1285
      %1294 = vst.msk [vmem:[%s434 + $0x20] sm:$0xff] %vm1010, %v1286
      %1295 = vst.msk [vmem:[%s434 + $0x28] sm:$0xff] %vm1010, %v1287
      %1296 = vst.msk [vmem:[%s434 + $0x30] sm:$0xff] %vm1010, %v1288
      %1297 = vst.msk [vmem:[%s434 + $0x38] sm:$0xff] %vm1010, %v1289
      %s1298 = smul.u32 8, %s23
      %p1299 = scmp.lt.s32.totalorder %s22, 1
      %s1300 = scalar_select %p1299, %s22, 1
      %p1301 = scmp.lt.s32.totalorder %s1298, 7
      %s1302 = scalar_select %p1301, %s1298, 7
      %s1303 = smul.addr %s1300, 8
      %s1304 = sadd.s32 %s1302, %s1303
      %s1305 = smul.addr %s1304, 8
      %s1306 = scalar_lea.vmem %s7, %s1305
      // Predicated region
      $region49: #{_lambda_.12} parent=47 // pred_check
        %p1307 = pneg %p234
      $region50: #{_lambda_.12} parent=47 // pred_check_branch
        %1309 = sbr.rel (%p1307) target = $region52
      $region51: #{_lambda_.12} parent=47 // pred_region
        %s1310 = smul.u32 8, %s23
      $region52: #{_lambda_.12} parent=47 // pred_fallthru
        _
    $region48: #{_lambda_.12} parent=5 // pred_fallthru
      _
    %p1311 = scmp.le.s32.totalorder 2, %s13
    // Predicated region
    $region53: #{_lambda_.12} parent=5 // pred_check
      %p1312 = pneg %p1311
    $region54: #{_lambda_.12} parent=5 // pred_check_branch
      %1314 = sbr.rel (%p1312) target = $region56
    $region55: #{_lambda_.12} parent=5 // pred_region
      %s1315 = ssub.s32 %s13, 2
      // Predicated region
      $region57: #{_lambda_.12} parent=55 // pred_check
        %p1316 = pneg %p240
      $region58: #{_lambda_.12} parent=55 // pred_check_branch
        %1318 = sbr.rel (%p1316) target = $region60
      $region59: #{_lambda_.12} parent=55 // pred_region
        %s1319 = smul.u32 8, %s25
        %p1320 = scmp.lt.s32.totalorder %s24, 1
        %s1321 = scalar_select %p1320, %s24, 1
        %p1322 = scmp.lt.s32.totalorder %s1319, 7
        %s1323 = scalar_select %p1322, %s1319, 7
        %s1324 = smul.addr %s1321, 8
        %s1325 = sadd.s32 %s1323, %s1324
        %s1326 = smul.addr %s1325, 8
        %s1327 = scalar_lea.vmem %s7, %s1326
      $region60: #{_lambda_.12} parent=55 // pred_fallthru
        _
    $region56: #{_lambda_.12} parent=5 // pred_fallthru
      _
  $region6: #{_lambda_.12} parent=0 // loop_footer
    %s17 = sadd.s32 1, %s13
  $region7: #{_lambda_.12} parent=0 // loop_footer_branch
    %12 = sbr.rel target = $region3
  $region8: #{_lambda_.12} parent=0 // loop_exit
    _

// kernel: _lambda_.9
$region0: #{_lambda_.9}
  #allocation0 [shape = 'u32[]', space=smem, size = 0x4, offset = 0x4, fixed_abs, tag = 'smem constant byte address 0x4 - core index']
  #allocation1 [shape = 'u32[72,128]{1,0:T(1,128)}', space=vmem, size = 0x9000, scoped, tag = 'internal scratch']
  %s0 = inlined_call_operand.vmem [shape: bf16[8,4,16,8], index: 0, kind: input, shape index: {}]
  %s1 = inlined_call_operand.vmem [shape: bf16[8,4,16,8], index: 1, kind: input, shape index: {}]
  %s2 = inlined_call_operand.vmem [shape: bf16[8,4,16,8], index: 2, kind: input, shape index: {}]
  %s3 = inlined_call_operand.vmem [shape: f32[8,16,32], index: 3, kind: output, shape index: {}]
  %s4 = sld [smem:[#allocation0]]
  $region22: #{_lambda_.9} parent=0
    _
  %s6 = ssub.s32 1, %s4
  %s7 = scalar_select 0, %s6, %s4
  // Predicated region
  $region2: #{_lambda_.9} parent=0 // pred_check
    _
  $region3: #{_lambda_.9} parent=0 // pred_check_branch
    %9 = sbr.rel (0) target = $region5
  $region4: #{_lambda_.9} parent=0 // pred_region
    _
  $region5: #{_lambda_.9} parent=0 // pred_fallthru
    _
  // Predicated region
  $region6: #{_lambda_.9} parent=0 // pred_check
    _
  $region7: #{_lambda_.9} parent=0 // pred_check_branch
    %11 = sbr.rel (0) target = $region9
  $region8: #{_lambda_.9} parent=0 // pred_region
    _
  $region9: #{_lambda_.9} parent=0 // pred_fallthru
    _
  // Predicated region
  $region10: #{_lambda_.9} parent=0 // pred_check
    _
  $region11: #{_lambda_.9} parent=0 // pred_check_branch
    %13 = sbr.rel (0) target = $region13
  $region12: #{_lambda_.9} parent=0 // pred_region
    _
  $region13: #{_lambda_.9} parent=0 // pred_fallthru
    _
  %v15 = vld [vmem:[%s0] sm:$0xf]
  %v16 = vld [vmem:[%s0 + $0x4] sm:$0xf]
  %v17 = vld [vmem:[%s0 + $0x20] sm:$0xf]
  %v18 = vld [vmem:[%s0 + $0x24] sm:$0xf]
  %v19 = vld [vmem:[%s0 + $0x40] sm:$0xf]
  %v20 = vld [vmem:[%s0 + $0x44] sm:$0xf]
  %v21 = vld [vmem:[%s0 + $0x60] sm:$0xf]
  %v22 = vld [vmem:[%s0 + $0x64] sm:$0xf]
  %v23 = vld [vmem:[%s0 + $0x80] sm:$0xf]
  %v24 = vld [vmem:[%s0 + $0x84] sm:$0xf]
  %v25 = vld [vmem:[%s0 + $0xa0] sm:$0xf]
  %v26 = vld [vmem:[%s0 + $0xa4] sm:$0xf]
  %v27 = vld [vmem:[%s0 + $0xc0] sm:$0xf]
  %v28 = vld [vmem:[%s0 + $0xc4] sm:$0xf]
  %v29 = vld [vmem:[%s0 + $0xe0] sm:$0xf]
  %v30 = vld [vmem:[%s0 + $0xe4] sm:$0xf]
  %v31 = vld [vmem:[%s1] sm:$0xf]
  %v32 = vld [vmem:[%s1 + $0x4] sm:$0xf]
  %v33 = vld [vmem:[%s1 + $0x20] sm:$0xf]
  %v34 = vld [vmem:[%s1 + $0x24] sm:$0xf]
  %v35 = vld [vmem:[%s1 + $0x40] sm:$0xf]
  %v36 = vld [vmem:[%s1 + $0x44] sm:$0xf]
  %v37 = vld [vmem:[%s1 + $0x60] sm:$0xf]
  %v38 = vld [vmem:[%s1 + $0x64] sm:$0xf]
  %v39 = vld [vmem:[%s1 + $0x80] sm:$0xf]
  %v40 = vld [vmem:[%s1 + $0x84] sm:$0xf]
  %v41 = vld [vmem:[%s1 + $0xa0] sm:$0xf]
  %v42 = vld [vmem:[%s1 + $0xa4] sm:$0xf]
  %v43 = vld [vmem:[%s1 + $0xc0] sm:$0xf]
  %v44 = vld [vmem:[%s1 + $0xc4] sm:$0xf]
  %v45 = vld [vmem:[%s1 + $0xe0] sm:$0xf]
  %v46 = vld [vmem:[%s1 + $0xe4] sm:$0xf]
  %v47 = vld [vmem:[%s2] sm:$0xf]
  %v48 = vld [vmem:[%s2 + $0x4] sm:$0xf]
  %v49 = vld [vmem:[%s2 + $0x20] sm:$0xf]
  %v50 = vld [vmem:[%s2 + $0x24] sm:$0xf]
  %v51 = vld [vmem:[%s2 + $0x40] sm:$0xf]
  %v52 = vld [vmem:[%s2 + $0x44] sm:$0xf]
  %v53 = vld [vmem:[%s2 + $0x60] sm:$0xf]
  %v54 = vld [vmem:[%s2 + $0x64] sm:$0xf]
  %v55 = vld [vmem:[%s2 + $0x80] sm:$0xf]
  %v56 = vld [vmem:[%s2 + $0x84] sm:$0xf]
  %v57 = vld [vmem:[%s2 + $0xa0] sm:$0xf]
  %v58 = vld [vmem:[%s2 + $0xa4] sm:$0xf]
  %v59 = vld [vmem:[%s2 + $0xc0] sm:$0xf]
  %v60 = vld [vmem:[%s2 + $0xc4] sm:$0xf]
  %v61 = vld [vmem:[%s2 + $0xe0] sm:$0xf]
  %v62 = vld [vmem:[%s2 + $0xe4] sm:$0xf]
  %v65 = vunpack.c.l.b16 %v15
  %v66 = vunpack.c.l.b16 %v16
  %v67 = vpack.c.b16 %v66, %v65
  %v70 = vunpack.c.l.b16 %v31
  %v71 = vunpack.c.l.b16 %v32
  %v72 = vpack.c.b16 %v71, %v70
  %vm73 = vcmask 64512
  %v75 = vsel %vm73, %v67, 0
  %v78 = vsel %vm73, %v72, 0
  %80 = vmatpush.bf16.xpose.msra.mxu0 0
  %81 = vmatpush.bf16.xpose.msra.mxu0 0
  %82 = vmatpush.bf16.xpose.msra.mxu0 0
  %83 = vmatpush.bf16.xpose.msra.mxu0 0
  %84 = vmatpush.bf16.xpose.msra.mxu0 0
  %85 = vmatpush.bf16.xpose.msra.mxu0 0
  %86 = vmatpush.bf16.xpose.msra.mxu0 0
  %87 = vmatpush.bf16.xpose.msra.mxu0 %v78
  %88 = vmatmul.bf16.gmra.mxu0 %v75
  %v89 = vpop.f32.mrf.mxu0
  %v90 = vadd.f32 0.0, %v89
  %v91 = vpop.f32.mrf.mxu0
  %v92 = vadd.f32 0.0, %v91
  %93 = vdwg.mxu0
  %v96 = vunpack.c.l.b16 %v17
  %v97 = vunpack.c.l.b16 %v18
  %v98 = vpack.c.b16 %v97, %v96
  %v101 = vunpack.c.l.b16 %v33
  %v102 = vunpack.c.l.b16 %v34
  %v103 = vpack.c.b16 %v102, %v101
  %v105 = vsel %vm73, %v98, 0
  %v108 = vsel %vm73, %v103, 0
  %110 = vmatpush.bf16.xpose.msra.mxu0 0
  %111 = vmatpush.bf16.xpose.msra.mxu0 0
  %112 = vmatpush.bf16.xpose.msra.mxu0 0
  %113 = vmatpush.bf16.xpose.msra.mxu0 0
  %114 = vmatpush.bf16.xpose.msra.mxu0 0
  %115 = vmatpush.bf16.xpose.msra.mxu0 0
  %116 = vmatpush.bf16.xpose.msra.mxu0 0
  %117 = vmatpush.bf16.xpose.msra.mxu0 %v108
  %118 = vmatmul.bf16.gmra.mxu0 %v105
  %v119 = vpop.f32.mrf.mxu0
  %v120 = vadd.f32 0.0, %v119
  %v121 = vpop.f32.mrf.mxu0
  %v122 = vadd.f32 0.0, %v121
  %123 = vdwg.mxu0
  %v126 = vunpack.c.l.b16 %v19
  %v127 = vunpack.c.l.b16 %v20
  %v128 = vpack.c.b16 %v127, %v126
  %v131 = vunpack.c.l.b16 %v35
  %v132 = vunpack.c.l.b16 %v36
  %v133 = vpack.c.b16 %v132, %v131
  %v135 = vsel %vm73, %v128, 0
  %v138 = vsel %vm73, %v133, 0
  %140 = vmatpush.bf16.xpose.msra.mxu0 0
  %141 = vmatpush.bf16.xpose.msra.mxu0 0
  %142 = vmatpush.bf16.xpose.msra.mxu0 0
  %143 = vmatpush.bf16.xpose.msra.mxu0 0
  %144 = vmatpush.bf16.xpose.msra.mxu0 0
  %145 = vmatpush.bf16.xpose.msra.mxu0 0
  %146 = vmatpush.bf16.xpose.msra.mxu0 0
  %147 = vmatpush.bf16.xpose.msra.mxu0 %v138
  %148 = vmatmul.bf16.gmra.mxu0 %v135
  %v149 = vpop.f32.mrf.mxu0
  %v150 = vadd.f32 0.0, %v149
  %v151 = vpop.f32.mrf.mxu0
  %v152 = vadd.f32 0.0, %v151
  %153 = vdwg.mxu0
  %v156 = vunpack.c.l.b16 %v21
  %v157 = vunpack.c.l.b16 %v22
  %v158 = vpack.c.b16 %v157, %v156
  %v161 = vunpack.c.l.b16 %v37
  %v162 = vunpack.c.l.b16 %v38
  %v163 = vpack.c.b16 %v162, %v161
  %v165 = vsel %vm73, %v158, 0
  %v168 = vsel %vm73, %v163, 0
  %170 = vmatpush.bf16.xpose.msra.mxu0 0
  %171 = vmatpush.bf16.xpose.msra.mxu0 0
  %172 = vmatpush.bf16.xpose.msra.mxu0 0
  %173 = vmatpush.bf16.xpose.msra.mxu0 0
  %174 = vmatpush.bf16.xpose.msra.mxu0 0
  %175 = vmatpush.bf16.xpose.msra.mxu0 0
  %176 = vmatpush.bf16.xpose.msra.mxu0 0
  %177 = vmatpush.bf16.xpose.msra.mxu0 %v168
  %178 = vmatmul.bf16.gmra.mxu0 %v165
  %v179 = vpop.f32.mrf.mxu0
  %v180 = vadd.f32 0.0, %v179
  %v181 = vpop.f32.mrf.mxu0
  %v182 = vadd.f32 0.0, %v181
  %183 = vdwg.mxu0
  %v186 = vunpack.c.l.b16 %v23
  %v187 = vunpack.c.l.b16 %v24
  %v188 = vpack.c.b16 %v187, %v186
  %v191 = vunpack.c.l.b16 %v39
  %v192 = vunpack.c.l.b16 %v40
  %v193 = vpack.c.b16 %v192, %v191
  %v195 = vsel %vm73, %v188, 0
  %v198 = vsel %vm73, %v193, 0
  %200 = vmatpush.bf16.xpose.msra.mxu0 0
  %201 = vmatpush.bf16.xpose.msra.mxu0 0
  %202 = vmatpush.bf16.xpose.msra.mxu0 0
  %203 = vmatpush.bf16.xpose.msra.mxu0 0
  %204 = vmatpush.bf16.xpose.msra.mxu0 0
  %205 = vmatpush.bf16.xpose.msra.mxu0 0
  %206 = vmatpush.bf16.xpose.msra.mxu0 0
  %207 = vmatpush.bf16.xpose.msra.mxu0 %v198
  %208 = vmatmul.bf16.gmra.mxu0 %v195
  %v209 = vpop.f32.mrf.mxu0
  %v210 = vadd.f32 0.0, %v209
  %v211 = vpop.f32.mrf.mxu0
  %v212 = vadd.f32 0.0, %v211
  %213 = vdwg.mxu0
  %v216 = vunpack.c.l.b16 %v25
  %v217 = vunpack.c.l.b16 %v26
  %v218 = vpack.c.b16 %v217, %v216
  %v221 = vunpack.c.l.b16 %v41
  %v222 = vunpack.c.l.b16 %v42
  %v223 = vpack.c.b16 %v222, %v221
  %v225 = vsel %vm73, %v218, 0
  %v228 = vsel %vm73, %v223, 0
  %230 = vmatpush.bf16.xpose.msra.mxu0 0
  %231 = vmatpush.bf16.xpose.msra.mxu0 0
  %232 = vmatpush.bf16.xpose.msra.mxu0 0
  %233 = vmatpush.bf16.xpose.msra.mxu0 0
  %234 = vmatpush.bf16.xpose.msra.mxu0 0
  %235 = vmatpush.bf16.xpose.msra.mxu0 0
  %236 = vmatpush.bf16.xpose.msra.mxu0 0
  %237 = vmatpush.bf16.xpose.msra.mxu0 %v228
  %238 = vmatmul.bf16.gmra.mxu0 %v225
  %v239 = vpop.f32.mrf.mxu0
  %v240 = vadd.f32 0.0, %v239
  %v241 = vpop.f32.mrf.mxu0
  %v242 = vadd.f32 0.0, %v241
  %243 = vdwg.mxu0
  %v246 = vunpack.c.l.b16 %v27
  %v247 = vunpack.c.l.b16 %v28
  %v248 = vpack.c.b16 %v247, %v246
  %v251 = vunpack.c.l.b16 %v43
  %v252 = vunpack.c.l.b16 %v44
  %v253 = vpack.c.b16 %v252, %v251
  %v255 = vsel %vm73, %v248, 0
  %v258 = vsel %vm73, %v253, 0
  %260 = vmatpush.bf16.xpose.msra.mxu0 0
  %261 = vmatpush.bf16.xpose.msra.mxu0 0
  %262 = vmatpush.bf16.xpose.msra.mxu0 0
  %263 = vmatpush.bf16.xpose.msra.mxu0 0
  %264 = vmatpush.bf16.xpose.msra.mxu0 0
  %265 = vmatpush.bf16.xpose.msra.mxu0 0
  %266 = vmatpush.bf16.xpose.msra.mxu0 0
  %267 = vmatpush.bf16.xpose.msra.mxu0 %v258
  %268 = vmatmul.bf16.gmra.mxu0 %v255
  %v269 = vpop.f32.mrf.mxu0
  %v270 = vadd.f32 0.0, %v269
  %v271 = vpop.f32.mrf.mxu0
  %v272 = vadd.f32 0.0, %v271
  %273 = vdwg.mxu0
  %v276 = vunpack.c.l.b16 %v29
  %v277 = vunpack.c.l.b16 %v30
  %v278 = vpack.c.b16 %v277, %v276
  %v281 = vunpack.c.l.b16 %v45
  %v282 = vunpack.c.l.b16 %v46
  %v283 = vpack.c.b16 %v282, %v281
  %v285 = vsel %vm73, %v278, 0
  %v288 = vsel %vm73, %v283, 0
  %290 = vmatpush.bf16.xpose.msra.mxu0 0
  %291 = vmatpush.bf16.xpose.msra.mxu0 0
  %292 = vmatpush.bf16.xpose.msra.mxu0 0
  %293 = vmatpush.bf16.xpose.msra.mxu0 0
  %294 = vmatpush.bf16.xpose.msra.mxu0 0
  %295 = vmatpush.bf16.xpose.msra.mxu0 0
  %296 = vmatpush.bf16.xpose.msra.mxu0 0
  %297 = vmatpush.bf16.xpose.msra.mxu0 %v288
  %298 = vmatmul.bf16.gmra.mxu0 %v285
  %v299 = vpop.f32.mrf.mxu0
  %v300 = vadd.f32 0.0, %v299
  %v301 = vpop.f32.mrf.mxu0
  %v302 = vadd.f32 0.0, %v301
  %303 = vdwg.mxu0
  %v304 = vmul.f32 %v90, 0.35355338
  %v305 = vmul.f32 %v92, 0.35355338
  %v306 = vmul.f32 %v120, 0.35355338
  %v307 = vmul.f32 %v122, 0.35355338
  %v308 = vmul.f32 %v150, 0.35355338
  %v309 = vmul.f32 %v152, 0.35355338
  %v310 = vmul.f32 %v180, 0.35355338
  %v311 = vmul.f32 %v182, 0.35355338
  %v312 = vmul.f32 %v210, 0.35355338
  %v313 = vmul.f32 %v212, 0.35355338
  %v314 = vmul.f32 %v240, 0.35355338
  %v315 = vmul.f32 %v242, 0.35355338
  %v316 = vmul.f32 %v270, 0.35355338
  %v317 = vmul.f32 %v272, 0.35355338
  %v318 = vmul.f32 %v300, 0.35355338
  %v319 = vmul.f32 %v302, 0.35355338
  %vm320 = vcmask 130048
  %v321 = vsel %vm320, %v304, -inf
  %322 = vmax.xlane.f32.xlu0 %v321
  %v323 = vpop.xlane.xlu0 %322
  %v324 = vsel %vm320, %v305, -inf
  %325 = vmax.xlane.f32.xlu0 %v324
  %v326 = vpop.xlane.xlu0 %325
  %v327 = vsel %vm320, %v306, -inf
  %328 = vmax.xlane.f32.xlu0 %v327
  %v329 = vpop.xlane.xlu0 %328
  %v330 = vsel %vm320, %v307, -inf
  %331 = vmax.xlane.f32.xlu0 %v330
  %v332 = vpop.xlane.xlu0 %331
  %v333 = vsel %vm320, %v308, -inf
  %334 = vmax.xlane.f32.xlu0 %v333
  %v335 = vpop.xlane.xlu0 %334
  %v336 = vsel %vm320, %v309, -inf
  %337 = vmax.xlane.f32.xlu0 %v336
  %v338 = vpop.xlane.xlu0 %337
  %v339 = vsel %vm320, %v310, -inf
  %340 = vmax.xlane.f32.xlu0 %v339
  %v341 = vpop.xlane.xlu0 %340
  %v342 = vsel %vm320, %v311, -inf
  %343 = vmax.xlane.f32.xlu0 %v342
  %v344 = vpop.xlane.xlu0 %343
  %v345 = vsel %vm320, %v312, -inf
  %346 = vmax.xlane.f32.xlu0 %v345
  %v347 = vpop.xlane.xlu0 %346
  %v348 = vsel %vm320, %v313, -inf
  %349 = vmax.xlane.f32.xlu0 %v348
  %v350 = vpop.xlane.xlu0 %349
  %v351 = vsel %vm320, %v314, -inf
  %352 = vmax.xlane.f32.xlu0 %v351
  %v353 = vpop.xlane.xlu0 %352
  %v354 = vsel %vm320, %v315, -inf
  %355 = vmax.xlane.f32.xlu0 %v354
  %v356 = vpop.xlane.xlu0 %355
  %v357 = vsel %vm320, %v316, -inf
  %358 = vmax.xlane.f32.xlu0 %v357
  %v359 = vpop.xlane.xlu0 %358
  %v360 = vsel %vm320, %v317, -inf
  %361 = vmax.xlane.f32.xlu0 %v360
  %v362 = vpop.xlane.xlu0 %361
  %v363 = vsel %vm320, %v318, -inf
  %364 = vmax.xlane.f32.xlu0 %v363
  %v365 = vpop.xlane.xlu0 %364
  %v366 = vsel %vm320, %v319, -inf
  %367 = vmax.xlane.f32.xlu0 %v366
  %v368 = vpop.xlane.xlu0 %367
  %v369 = vsub.f32 %v304, %v323
  %v370 = vsub.f32 %v305, %v326
  %v371 = vsub.f32 %v306, %v329
  %v372 = vsub.f32 %v307, %v332
  %v373 = vsub.f32 %v308, %v335
  %v374 = vsub.f32 %v309, %v338
  %v375 = vsub.f32 %v310, %v341
  %v376 = vsub.f32 %v311, %v344
  %v377 = vsub.f32 %v312, %v347
  %v378 = vsub.f32 %v313, %v350
  %v379 = vsub.f32 %v314, %v353
  %v380 = vsub.f32 %v315, %v356
  %v381 = vsub.f32 %v316, %v359
  %v382 = vsub.f32 %v317, %v362
  %v383 = vsub.f32 %v318, %v365
  %v384 = vsub.f32 %v319, %v368
  %v385 = vmul.f32 %v369, 1.442695
  %v386 = vpow.pop %v385
  %v387 = vmul.f32 %v370, 1.442695
  %v388 = vpow.pop %v387
  %v389 = vmul.f32 %v371, 1.442695
  %v390 = vpow.pop %v389
  %v391 = vmul.f32 %v372, 1.442695
  %v392 = vpow.pop %v391
  %v393 = vmul.f32 %v373, 1.442695
  %v394 = vpow.pop %v393
  %v395 = vmul.f32 %v374, 1.442695
  %v396 = vpow.pop %v395
  %v397 = vmul.f32 %v375, 1.442695
  %v398 = vpow.pop %v397
  %v399 = vmul.f32 %v376, 1.442695
  %v400 = vpow.pop %v399
  %v401 = vmul.f32 %v377, 1.442695
  %v402 = vpow.pop %v401
  %v403 = vmul.f32 %v378, 1.442695
  %v404 = vpow.pop %v403
  %v405 = vmul.f32 %v379, 1.442695
  %v406 = vpow.pop %v405
  %v407 = vmul.f32 %v380, 1.442695
  %v408 = vpow.pop %v407
  %v409 = vmul.f32 %v381, 1.442695
  %v410 = vpow.pop %v409
  %v411 = vmul.f32 %v382, 1.442695
  %v412 = vpow.pop %v411
  %v413 = vmul.f32 %v383, 1.442695
  %v414 = vpow.pop %v413
  %v415 = vmul.f32 %v384, 1.442695
  %v416 = vpow.pop %v415
  %v417 = vsel %vm320, %v386, 0.0
  %418 = vadd.xlane.f32.xlu0 %v417
  %v419 = vpop.xlane.xlu0 %418
  %v420 = vsel %vm320, %v388, 0.0
  %421 = vadd.xlane.f32.xlu0 %v420
  %v422 = vpop.xlane.xlu0 %421
  %v423 = vsel %vm320, %v390, 0.0
  %424 = vadd.xlane.f32.xlu0 %v423
  %v425 = vpop.xlane.xlu0 %424
  %v426 = vsel %vm320, %v392, 0.0
  %427 = vadd.xlane.f32.xlu0 %v426
  %v428 = vpop.xlane.xlu0 %427
  %v429 = vsel %vm320, %v394, 0.0
  %430 = vadd.xlane.f32.xlu0 %v429
  %v431 = vpop.xlane.xlu0 %430
  %v432 = vsel %vm320, %v396, 0.0
  %433 = vadd.xlane.f32.xlu0 %v432
  %v434 = vpop.xlane.xlu0 %433
  %v435 = vsel %vm320, %v398, 0.0
  %436 = vadd.xlane.f32.xlu0 %v435
  %v437 = vpop.xlane.xlu0 %436
  %v438 = vsel %vm320, %v400, 0.0
  %439 = vadd.xlane.f32.xlu0 %v438
  %v440 = vpop.xlane.xlu0 %439
  %v441 = vsel %vm320, %v402, 0.0
  %442 = vadd.xlane.f32.xlu0 %v441
  %v443 = vpop.xlane.xlu0 %442
  %v444 = vsel %vm320, %v404, 0.0
  %445 = vadd.xlane.f32.xlu0 %v444
  %v446 = vpop.xlane.xlu0 %445
  %v447 = vsel %vm320, %v406, 0.0
  %448 = vadd.xlane.f32.xlu0 %v447
  %v449 = vpop.xlane.xlu0 %448
  %v450 = vsel %vm320, %v408, 0.0
  %451 = vadd.xlane.f32.xlu0 %v450
  %v452 = vpop.xlane.xlu0 %451
  %v453 = vsel %vm320, %v410, 0.0
  %454 = vadd.xlane.f32.xlu0 %v453
  %v455 = vpop.xlane.xlu0 %454
  %v456 = vsel %vm320, %v412, 0.0
  %457 = vadd.xlane.f32.xlu0 %v456
  %v458 = vpop.xlane.xlu0 %457
  %v459 = vsel %vm320, %v414, 0.0
  %460 = vadd.xlane.f32.xlu0 %v459
  %v461 = vpop.xlane.xlu0 %460
  %v462 = vsel %vm320, %v416, 0.0
  %463 = vadd.xlane.f32.xlu0 %v462
  %v464 = vpop.xlane.xlu0 %463
  %v465 = vrcp.pop %v419
  %v466 = vrcp.pop %v422
  %v467 = vrcp.pop %v425
  %v468 = vrcp.pop %v428
  %v469 = vrcp.pop %v431
  %v470 = vrcp.pop %v434
  %v471 = vrcp.pop %v437
  %v472 = vrcp.pop %v440
  %v473 = vrcp.pop %v443
  %v474 = vrcp.pop %v446
  %v475 = vrcp.pop %v449
  %v476 = vrcp.pop %v452
  %v477 = vrcp.pop %v455
  %v478 = vrcp.pop %v458
  %v479 = vrcp.pop %v461
  %v480 = vrcp.pop %v464
  %v481 = vmul.f32 %v386, %v465
  %v482 = vmul.f32 %v388, %v466
  %v483 = vmul.f32 %v390, %v467
  %v484 = vmul.f32 %v392, %v468
  %v485 = vmul.f32 %v394, %v469
  %v486 = vmul.f32 %v396, %v470
  %v487 = vmul.f32 %v398, %v471
  %v488 = vmul.f32 %v400, %v472
  %v489 = vmul.f32 %v402, %v473
  %v490 = vmul.f32 %v404, %v474
  %v491 = vmul.f32 %v406, %v475
  %v492 = vmul.f32 %v408, %v476
  %v493 = vmul.f32 %v410, %v477
  %v494 = vmul.f32 %v412, %v478
  %v495 = vmul.f32 %v414, %v479
  %v496 = vmul.f32 %v416, %v480
  %v497 = vpack.c.bf16 %v481, %v481
  %v498 = vpack.c.bf16 %v482, %v482
  %v499 = vpack.c.bf16 %v483, %v483
  %v500 = vpack.c.bf16 %v484, %v484
  %v501 = vpack.c.bf16 %v485, %v485
  %v502 = vpack.c.bf16 %v486, %v486
  %v503 = vpack.c.bf16 %v487, %v487
  %v504 = vpack.c.bf16 %v488, %v488
  %v505 = vpack.c.bf16 %v489, %v489
  %v506 = vpack.c.bf16 %v490, %v490
  %v507 = vpack.c.bf16 %v491, %v491
  %v508 = vpack.c.bf16 %v492, %v492
  %v509 = vpack.c.bf16 %v493, %v493
  %v510 = vpack.c.bf16 %v494, %v494
  %v511 = vpack.c.bf16 %v495, %v495
  %v512 = vpack.c.bf16 %v496, %v496
  %v515 = vunpack.c.l.b16 %v497
  %v516 = vunpack.c.l.b16 %v498
  %v517 = vpack.c.b16 %v516, %v515
  %v520 = vunpack.c.l.b16 %v47
  %v521 = vunpack.c.l.b16 %v48
  %v522 = vpack.c.b16 %v521, %v520
  %v525 = vsel %vm320, %v517, 0
  %527 = vmatpush.bf16.msra.mxu0 0
  %528 = vmatpush.bf16.msra.mxu0 0
  %529 = vmatpush.bf16.msra.mxu0 0
  %530 = vmatpush.bf16.msra.mxu0 0
  %531 = vmatpush.bf16.msra.mxu0 0
  %532 = vmatpush.bf16.msra.mxu0 0
  %533 = vmatpush.bf16.msra.mxu0 0
  %534 = vmatpush.bf16.msra.mxu0 %v522
  %535 = vmatmul.bf16.gmra.mxu0 %v525
  %v536 = vpop.f32.mrf.mxu0
  %v537 = vadd.f32 0.0, %v536
  %v538 = vpop.f32.mrf.mxu0
  %v539 = vadd.f32 0.0, %v538
  %540 = vdwg.mxu0
  %v543 = vunpack.c.l.b16 %v499
  %v544 = vunpack.c.l.b16 %v500
  %v545 = vpack.c.b16 %v544, %v543
  %v548 = vunpack.c.l.b16 %v49
  %v549 = vunpack.c.l.b16 %v50
  %v550 = vpack.c.b16 %v549, %v548
  %v553 = vsel %vm320, %v545, 0
  %555 = vmatpush.bf16.msra.mxu0 0
  %556 = vmatpush.bf16.msra.mxu0 0
  %557 = vmatpush.bf16.msra.mxu0 0
  %558 = vmatpush.bf16.msra.mxu0 0
  %559 = vmatpush.bf16.msra.mxu0 0
  %560 = vmatpush.bf16.msra.mxu0 0
  %561 = vmatpush.bf16.msra.mxu0 0
  %562 = vmatpush.bf16.msra.mxu0 %v550
  %563 = vmatmul.bf16.gmra.mxu0 %v553
  %v564 = vpop.f32.mrf.mxu0
  %v565 = vadd.f32 0.0, %v564
  %v566 = vpop.f32.mrf.mxu0
  %v567 = vadd.f32 0.0, %v566
  %568 = vdwg.mxu0
  %v571 = vunpack.c.l.b16 %v501
  %v572 = vunpack.c.l.b16 %v502
  %v573 = vpack.c.b16 %v572, %v571
  %v576 = vunpack.c.l.b16 %v51
  %v577 = vunpack.c.l.b16 %v52
  %v578 = vpack.c.b16 %v577, %v576
  %v581 = vsel %vm320, %v573, 0
  %583 = vmatpush.bf16.msra.mxu0 0
  %584 = vmatpush.bf16.msra.mxu0 0
  %585 = vmatpush.bf16.msra.mxu0 0
  %586 = vmatpush.bf16.msra.mxu0 0
  %587 = vmatpush.bf16.msra.mxu0 0
  %588 = vmatpush.bf16.msra.mxu0 0
  %589 = vmatpush.bf16.msra.mxu0 0
  %590 = vmatpush.bf16.msra.mxu0 %v578
  %591 = vmatmul.bf16.gmra.mxu0 %v581
  %v592 = vpop.f32.mrf.mxu0
  %v593 = vadd.f32 0.0, %v592
  %v594 = vpop.f32.mrf.mxu0
  %v595 = vadd.f32 0.0, %v594
  %596 = vdwg.mxu0
  %v599 = vunpack.c.l.b16 %v503
  %v600 = vunpack.c.l.b16 %v504
  %v601 = vpack.c.b16 %v600, %v599
  %v604 = vunpack.c.l.b16 %v53
  %v605 = vunpack.c.l.b16 %v54
  %v606 = vpack.c.b16 %v605, %v604
  %v609 = vsel %vm320, %v601, 0
  %611 = vmatpush.bf16.msra.mxu0 0
  %612 = vmatpush.bf16.msra.mxu0 0
  %613 = vmatpush.bf16.msra.mxu0 0
  %614 = vmatpush.bf16.msra.mxu0 0
  %615 = vmatpush.bf16.msra.mxu0 0
  %616 = vmatpush.bf16.msra.mxu0 0
  %617 = vmatpush.bf16.msra.mxu0 0
  %618 = vmatpush.bf16.msra.mxu0 %v606
  %619 = vmatmul.bf16.gmra.mxu0 %v609
  %v620 = vpop.f32.mrf.mxu0
  %v621 = vadd.f32 0.0, %v620
  %v622 = vpop.f32.mrf.mxu0
  %v623 = vadd.f32 0.0, %v622
  %624 = vdwg.mxu0
  %v627 = vunpack.c.l.b16 %v505
  %v628 = vunpack.c.l.b16 %v506
  %v629 = vpack.c.b16 %v628, %v627
  %v632 = vunpack.c.l.b16 %v55
  %v633 = vunpack.c.l.b16 %v56
  %v634 = vpack.c.b16 %v633, %v632
  %v637 = vsel %vm320, %v629, 0
  %639 = vmatpush.bf16.msra.mxu0 0
  %640 = vmatpush.bf16.msra.mxu0 0
  %641 = vmatpush.bf16.msra.mxu0 0
  %642 = vmatpush.bf16.msra.mxu0 0
  %643 = vmatpush.bf16.msra.mxu0 0
  %644 = vmatpush.bf16.msra.mxu0 0
  %645 = vmatpush.bf16.msra.mxu0 0
  %646 = vmatpush.bf16.msra.mxu0 %v634
  %647 = vmatmul.bf16.gmra.mxu0 %v637
  %v648 = vpop.f32.mrf.mxu0
  %v649 = vadd.f32 0.0, %v648
  %v650 = vpop.f32.mrf.mxu0
  %v651 = vadd.f32 0.0, %v650
  %652 = vdwg.mxu0
  %v655 = vunpack.c.l.b16 %v507
  %v656 = vunpack.c.l.b16 %v508
  %v657 = vpack.c.b16 %v656, %v655
  %v660 = vunpack.c.l.b16 %v57
  %v661 = vunpack.c.l.b16 %v58
  %v662 = vpack.c.b16 %v661, %v660
  %v665 = vsel %vm320, %v657, 0
  %667 = vmatpush.bf16.msra.mxu0 0
  %668 = vmatpush.bf16.msra.mxu0 0
  %669 = vmatpush.bf16.msra.mxu0 0
  %670 = vmatpush.bf16.msra.mxu0 0
  %671 = vmatpush.bf16.msra.mxu0 0
  %672 = vmatpush.bf16.msra.mxu0 0
  %673 = vmatpush.bf16.msra.mxu0 0
  %674 = vmatpush.bf16.msra.mxu0 %v662
  %675 = vmatmul.bf16.gmra.mxu0 %v665
  %v676 = vpop.f32.mrf.mxu0
  %v677 = vadd.f32 0.0, %v676
  %v678 = vpop.f32.mrf.mxu0
  %v679 = vadd.f32 0.0, %v678
  %680 = vdwg.mxu0
  %v683 = vunpack.c.l.b16 %v509
  %v684 = vunpack.c.l.b16 %v510
  %v685 = vpack.c.b16 %v684, %v683
  %v688 = vunpack.c.l.b16 %v59
  %v689 = vunpack.c.l.b16 %v60
  %v690 = vpack.c.b16 %v689, %v688
  %v693 = vsel %vm320, %v685, 0
  %695 = vmatpush.bf16.msra.mxu0 0
  %696 = vmatpush.bf16.msra.mxu0 0
  %697 = vmatpush.bf16.msra.mxu0 0
  %698 = vmatpush.bf16.msra.mxu0 0
  %699 = vmatpush.bf16.msra.mxu0 0
  %700 = vmatpush.bf16.msra.mxu0 0
  %701 = vmatpush.bf16.msra.mxu0 0
  %702 = vmatpush.bf16.msra.mxu0 %v690
  %703 = vmatmul.bf16.gmra.mxu0 %v693
  %v704 = vpop.f32.mrf.mxu0
  %v705 = vadd.f32 0.0, %v704
  %v706 = vpop.f32.mrf.mxu0
  %v707 = vadd.f32 0.0, %v706
  %708 = vdwg.mxu0
  %v711 = vunpack.c.l.b16 %v511
  %v712 = vunpack.c.l.b16 %v512
  %v713 = vpack.c.b16 %v712, %v711
  %v716 = vunpack.c.l.b16 %v61
  %v717 = vunpack.c.l.b16 %v62
  %v718 = vpack.c.b16 %v717, %v716
  %v721 = vsel %vm320, %v713, 0
  %723 = vmatpush.bf16.msra.mxu0 0
  %724 = vmatpush.bf16.msra.mxu0 0
  %725 = vmatpush.bf16.msra.mxu0 0
  %726 = vmatpush.bf16.msra.mxu0 0
  %727 = vmatpush.bf16.msra.mxu0 0
  %728 = vmatpush.bf16.msra.mxu0 0
  %729 = vmatpush.bf16.msra.mxu0 0
  %730 = vmatpush.bf16.msra.mxu0 %v718
  %731 = vmatmul.bf16.gmra.mxu0 %v721
  %v732 = vpop.f32.mrf.mxu0
  %v733 = vadd.f32 0.0, %v732
  %v734 = vpop.f32.mrf.mxu0
  %v735 = vadd.f32 0.0, %v734
  %736 = vdwg.mxu0
  %s737 = scalar_lea.vmem %s0, 8
  %v738 = vld [vmem:[%s737] sm:$0xf]
  %v739 = vld [vmem:[%s737 + $0x4] sm:$0xf]
  %v740 = vld [vmem:[%s737 + $0x20] sm:$0xf]
  %v741 = vld [vmem:[%s737 + $0x24] sm:$0xf]
  %v742 = vld [vmem:[%s737 + $0x40] sm:$0xf]
  %v743 = vld [vmem:[%s737 + $0x44] sm:$0xf]
  %v744 = vld [vmem:[%s737 + $0x60] sm:$0xf]
  %v745 = vld [vmem:[%s737 + $0x64] sm:$0xf]
  %v746 = vld [vmem:[%s737 + $0x80] sm:$0xf]
  %v747 = vld [vmem:[%s737 + $0x84] sm:$0xf]
  %v748 = vld [vmem:[%s737 + $0xa0] sm:$0xf]
  %v749 = vld [vmem:[%s737 + $0xa4] sm:$0xf]
  %v750 = vld [vmem:[%s737 + $0xc0] sm:$0xf]
  %v751 = vld [vmem:[%s737 + $0xc4] sm:$0xf]
  %v752 = vld [vmem:[%s737 + $0xe0] sm:$0xf]
  %v753 = vld [vmem:[%s737 + $0xe4] sm:$0xf]
  %s754 = scalar_lea.vmem %s1, 8
  %v755 = vld [vmem:[%s754] sm:$0xf]
  %v756 = vld [vmem:[%s754 + $0x4] sm:$0xf]
  %v757 = vld [vmem:[%s754 + $0x20] sm:$0xf]
  %v758 = vld [vmem:[%s754 + $0x24] sm:$0xf]
  %v759 = vld [vmem:[%s754 + $0x40] sm:$0xf]
  %v760 = vld [vmem:[%s754 + $0x44] sm:$0xf]
  %v761 = vld [vmem:[%s754 + $0x60] sm:$0xf]
  %v762 = vld [vmem:[%s754 + $0x64] sm:$0xf]
  %v763 = vld [vmem:[%s754 + $0x80] sm:$0xf]
  %v764 = vld [vmem:[%s754 + $0x84] sm:$0xf]
  %v765 = vld [vmem:[%s754 + $0xa0] sm:$0xf]
  %v766 = vld [vmem:[%s754 + $0xa4] sm:$0xf]
  %v767 = vld [vmem:[%s754 + $0xc0] sm:$0xf]
  %v768 = vld [vmem:[%s754 + $0xc4] sm:$0xf]
  %v769 = vld [vmem:[%s754 + $0xe0] sm:$0xf]
  %v770 = vld [vmem:[%s754 + $0xe4] sm:$0xf]
  %s771 = scalar_lea.vmem %s2, 8
  %v772 = vld [vmem:[%s771] sm:$0xf]
  %v773 = vld [vmem:[%s771 + $0x4] sm:$0xf]
  %v774 = vld [vmem:[%s771 + $0x20] sm:$0xf]
  %v775 = vld [vmem:[%s771 + $0x24] sm:$0xf]
  %v776 = vld [vmem:[%s771 + $0x40] sm:$0xf]
  %v777 = vld [vmem:[%s771 + $0x44] sm:$0xf]
  %v778 = vld [vmem:[%s771 + $0x60] sm:$0xf]
  %v779 = vld [vmem:[%s771 + $0x64] sm:$0xf]
  %v780 = vld [vmem:[%s771 + $0x80] sm:$0xf]
  %v781 = vld [vmem:[%s771 + $0x84] sm:$0xf]
  %v782 = vld [vmem:[%s771 + $0xa0] sm:$0xf]
  %v783 = vld [vmem:[%s771 + $0xa4] sm:$0xf]
  %v784 = vld [vmem:[%s771 + $0xc0] sm:$0xf]
  %v785 = vld [vmem:[%s771 + $0xc4] sm:$0xf]
  %v786 = vld [vmem:[%s771 + $0xe0] sm:$0xf]
  %v787 = vld [vmem:[%s771 + $0xe4] sm:$0xf]
  %v790 = vunpack.c.l.b16 %v738
  %v791 = vunpack.c.l.b16 %v739
  %v792 = vpack.c.b16 %v791, %v790
  %v795 = vunpack.c.l.b16 %v755
  %v796 = vunpack.c.l.b16 %v756
  %v797 = vpack.c.b16 %v796, %v795
  %v799 = vsel %vm73, %v792, 0
  %v802 = vsel %vm73, %v797, 0
  %804 = vmatpush.bf16.xpose.msra.mxu0 0
  %805 = vmatpush.bf16.xpose.msra.mxu0 0
  %806 = vmatpush.bf16.xpose.msra.mxu0 0
  %807 = vmatpush.bf16.xpose.msra.mxu0 0
  %808 = vmatpush.bf16.xpose.msra.mxu0 0
  %809 = vmatpush.bf16.xpose.msra.mxu0 0
  %810 = vmatpush.bf16.xpose.msra.mxu0 0
  %811 = vmatpush.bf16.xpose.msra.mxu0 %v802
  %812 = vmatmul.bf16.gmra.mxu0 %v799
  %v813 = vpop.f32.mrf.mxu0
  %v814 = vadd.f32 0.0, %v813
  %v815 = vpop.f32.mrf.mxu0
  %v816 = vadd.f32 0.0, %v815
  %817 = vdwg.mxu0
  %v820 = vunpack.c.l.b16 %v740
  %v821 = vunpack.c.l.b16 %v741
  %v822 = vpack.c.b16 %v821, %v820
  %v825 = vunpack.c.l.b16 %v757
  %v826 = vunpack.c.l.b16 %v758
  %v827 = vpack.c.b16 %v826, %v825
  %v829 = vsel %vm73, %v822, 0
  %v832 = vsel %vm73, %v827, 0
  %834 = vmatpush.bf16.xpose.msra.mxu0 0
  %835 = vmatpush.bf16.xpose.msra.mxu0 0
  %836 = vmatpush.bf16.xpose.msra.mxu0 0
  %837 = vmatpush.bf16.xpose.msra.mxu0 0
  %838 = vmatpush.bf16.xpose.msra.mxu0 0
  %839 = vmatpush.bf16.xpose.msra.mxu0 0
  %840 = vmatpush.bf16.xpose.msra.mxu0 0
  %841 = vmatpush.bf16.xpose.msra.mxu0 %v832
  %842 = vmatmul.bf16.gmra.mxu0 %v829
  %v843 = vpop.f32.mrf.mxu0
  %v844 = vadd.f32 0.0, %v843
  %v845 = vpop.f32.mrf.mxu0
  %v846 = vadd.f32 0.0, %v845
  %847 = vdwg.mxu0
  %v850 = vunpack.c.l.b16 %v742
  %v851 = vunpack.c.l.b16 %v743
  %v852 = vpack.c.b16 %v851, %v850
  %v855 = vunpack.c.l.b16 %v759
  %v856 = vunpack.c.l.b16 %v760
  %v857 = vpack.c.b16 %v856, %v855
  %v859 = vsel %vm73, %v852, 0
  %v862 = vsel %vm73, %v857, 0
  %864 = vmatpush.bf16.xpose.msra.mxu0 0
  %865 = vmatpush.bf16.xpose.msra.mxu0 0
  %866 = vmatpush.bf16.xpose.msra.mxu0 0
  %867 = vmatpush.bf16.xpose.msra.mxu0 0
  %868 = vmatpush.bf16.xpose.msra.mxu0 0
  %869 = vmatpush.bf16.xpose.msra.mxu0 0
  %870 = vmatpush.bf16.xpose.msra.mxu0 0
  %871 = vmatpush.bf16.xpose.msra.mxu0 %v862
  %872 = vmatmul.bf16.gmra.mxu0 %v859
  %v873 = vpop.f32.mrf.mxu0
  %v874 = vadd.f32 0.0, %v873
  %v875 = vpop.f32.mrf.mxu0
  %v876 = vadd.f32 0.0, %v875
  %877 = vdwg.mxu0
  %v880 = vunpack.c.l.b16 %v744
  %v881 = vunpack.c.l.b16 %v745
  %v882 = vpack.c.b16 %v881, %v880
  %v885 = vunpack.c.l.b16 %v761
  %v886 = vunpack.c.l.b16 %v762
  %v887 = vpack.c.b16 %v886, %v885
  %v889 = vsel %vm73, %v882, 0
  %v892 = vsel %vm73, %v887, 0
  %894 = vmatpush.bf16.xpose.msra.mxu0 0
  %895 = vmatpush.bf16.xpose.msra.mxu0 0
  %896 = vmatpush.bf16.xpose.msra.mxu0 0
  %897 = vmatpush.bf16.xpose.msra.mxu0 0
  %898 = vmatpush.bf16.xpose.msra.mxu0 0
  %899 = vmatpush.bf16.xpose.msra.mxu0 0
  %900 = vmatpush.bf16.xpose.msra.mxu0 0
  %901 = vmatpush.bf16.xpose.msra.mxu0 %v892
  %902 = vmatmul.bf16.gmra.mxu0 %v889
  %v903 = vpop.f32.mrf.mxu0
  %v904 = vadd.f32 0.0, %v903
  %v905 = vpop.f32.mrf.mxu0
  %v906 = vadd.f32 0.0, %v905
  %907 = vdwg.mxu0
  %v910 = vunpack.c.l.b16 %v746
  %v911 = vunpack.c.l.b16 %v747
  %v912 = vpack.c.b16 %v911, %v910
  %v915 = vunpack.c.l.b16 %v763
  %v916 = vunpack.c.l.b16 %v764
  %v917 = vpack.c.b16 %v916, %v915
  %v919 = vsel %vm73, %v912, 0
  %v922 = vsel %vm73, %v917, 0
  %924 = vmatpush.bf16.xpose.msra.mxu0 0
  %925 = vmatpush.bf16.xpose.msra.mxu0 0
  %926 = vmatpush.bf16.xpose.msra.mxu0 0
  %927 = vmatpush.bf16.xpose.msra.mxu0 0
  %928 = vmatpush.bf16.xpose.msra.mxu0 0
  %929 = vmatpush.bf16.xpose.msra.mxu0 0
  %930 = vmatpush.bf16.xpose.msra.mxu0 0
  %931 = vmatpush.bf16.xpose.msra.mxu0 %v922
  %932 = vmatmul.bf16.gmra.mxu0 %v919
  %v933 = vpop.f32.mrf.mxu0
  %v934 = vadd.f32 0.0, %v933
  %v935 = vpop.f32.mrf.mxu0
  %v936 = vadd.f32 0.0, %v935
  %937 = vdwg.mxu0
  %v940 = vunpack.c.l.b16 %v748
  %v941 = vunpack.c.l.b16 %v749
  %v942 = vpack.c.b16 %v941, %v940
  %v945 = vunpack.c.l.b16 %v765
  %v946 = vunpack.c.l.b16 %v766
  %v947 = vpack.c.b16 %v946, %v945
  %v949 = vsel %vm73, %v942, 0
  %v952 = vsel %vm73, %v947, 0
  %954 = vmatpush.bf16.xpose.msra.mxu0 0
  %955 = vmatpush.bf16.xpose.msra.mxu0 0
  %956 = vmatpush.bf16.xpose.msra.mxu0 0
  %957 = vmatpush.bf16.xpose.msra.mxu0 0
  %958 = vmatpush.bf16.xpose.msra.mxu0 0
  %959 = vmatpush.bf16.xpose.msra.mxu0 0
  %960 = vmatpush.bf16.xpose.msra.mxu0 0
  %961 = vmatpush.bf16.xpose.msra.mxu0 %v952
  %962 = vmatmul.bf16.gmra.mxu0 %v949
  %v963 = vpop.f32.mrf.mxu0
  %v964 = vadd.f32 0.0, %v963
  %v965 = vpop.f32.mrf.mxu0
  %v966 = vadd.f32 0.0, %v965
  %967 = vdwg.mxu0
  %v970 = vunpack.c.l.b16 %v750
  %v971 = vunpack.c.l.b16 %v751
  %v972 = vpack.c.b16 %v971, %v970
  %v975 = vunpack.c.l.b16 %v767
  %v976 = vunpack.c.l.b16 %v768
  %v977 = vpack.c.b16 %v976, %v975
  %v979 = vsel %vm73, %v972, 0
  %v982 = vsel %vm73, %v977, 0
  %984 = vmatpush.bf16.xpose.msra.mxu0 0
  %985 = vmatpush.bf16.xpose.msra.mxu0 0
  %986 = vmatpush.bf16.xpose.msra.mxu0 0
  %987 = vmatpush.bf16.xpose.msra.mxu0 0
  %988 = vmatpush.bf16.xpose.msra.mxu0 0
  %989 = vmatpush.bf16.xpose.msra.mxu0 0
  %990 = vmatpush.bf16.xpose.msra.mxu0 0
  %991 = vmatpush.bf16.xpose.msra.mxu0 %v982
  %992 = vmatmul.bf16.gmra.mxu0 %v979
  %v993 = vpop.f32.mrf.mxu0
  %v994 = vadd.f32 0.0, %v993
  %v995 = vpop.f32.mrf.mxu0
  %v996 = vadd.f32 0.0, %v995
  %997 = vdwg.mxu0
  %v1000 = vunpack.c.l.b16 %v752
  %v1001 = vunpack.c.l.b16 %v753
  %v1002 = vpack.c.b16 %v1001, %v1000
  %v1005 = vunpack.c.l.b16 %v769
  %v1006 = vunpack.c.l.b16 %v770
  %v1007 = vpack.c.b16 %v1006, %v1005
  %v1009 = vsel %vm73, %v1002, 0
  %v1012 = vsel %vm73, %v1007, 0
  %1014 = vmatpush.bf16.xpose.msra.mxu0 0
  %1015 = vmatpush.bf16.xpose.msra.mxu0 0
  %1016 = vmatpush.bf16.xpose.msra.mxu0 0
  %1017 = vmatpush.bf16.xpose.msra.mxu0 0
  %1018 = vmatpush.bf16.xpose.msra.mxu0 0
  %1019 = vmatpush.bf16.xpose.msra.mxu0 0
  %1020 = vmatpush.bf16.xpose.msra.mxu0 0
  %1021 = vmatpush.bf16.xpose.msra.mxu0 %v1012
  %1022 = vmatmul.bf16.gmra.mxu0 %v1009
  %v1023 = vpop.f32.mrf.mxu0
  %v1024 = vadd.f32 0.0, %v1023
  %v1025 = vpop.f32.mrf.mxu0
  %v1026 = vadd.f32 0.0, %v1025
  %1027 = vdwg.mxu0
  %v1028 = vmul.f32 %v814, 0.35355338
  %v1029 = vmul.f32 %v816, 0.35355338
  %v1030 = vmul.f32 %v844, 0.35355338
  %v1031 = vmul.f32 %v846, 0.35355338
  %v1032 = vmul.f32 %v874, 0.35355338
  %v1033 = vmul.f32 %v876, 0.35355338
  %v1034 = vmul.f32 %v904, 0.35355338
  %v1035 = vmul.f32 %v906, 0.35355338
  %v1036 = vmul.f32 %v934, 0.35355338
  %v1037 = vmul.f32 %v936, 0.35355338
  %v1038 = vmul.f32 %v964, 0.35355338
  %v1039 = vmul.f32 %v966, 0.35355338
  %v1040 = vmul.f32 %v994, 0.35355338
  %v1041 = vmul.f32 %v996, 0.35355338
  %v1042 = vmul.f32 %v1024, 0.35355338
  %v1043 = vmul.f32 %v1026, 0.35355338
  %v1044 = vsel %vm320, %v1028, -inf
  %1045 = vmax.xlane.f32.xlu0 %v1044
  %v1046 = vpop.xlane.xlu0 %1045
  %v1047 = vsel %vm320, %v1029, -inf
  %1048 = vmax.xlane.f32.xlu0 %v1047
  %v1049 = vpop.xlane.xlu0 %1048
  %v1050 = vsel %vm320, %v1030, -inf
  %1051 = vmax.xlane.f32.xlu0 %v1050
  %v1052 = vpop.xlane.xlu0 %1051
  %v1053 = vsel %vm320, %v1031, -inf
  %1054 = vmax.xlane.f32.xlu0 %v1053
  %v1055 = vpop.xlane.xlu0 %1054
  %v1056 = vsel %vm320, %v1032, -inf
  %1057 = vmax.xlane.f32.xlu0 %v1056
  %v1058 = vpop.xlane.xlu0 %1057
  %v1059 = vsel %vm320, %v1033, -inf
  %1060 = vmax.xlane.f32.xlu0 %v1059
  %v1061 = vpop.xlane.xlu0 %1060
  %v1062 = vsel %vm320, %v1034, -inf
  %1063 = vmax.xlane.f32.xlu0 %v1062
  %v1064 = vpop.xlane.xlu0 %1063
  %v1065 = vsel %vm320, %v1035, -inf
  %1066 = vmax.xlane.f32.xlu0 %v1065
  %v1067 = vpop.xlane.xlu0 %1066
  %v1068 = vsel %vm320, %v1036, -inf
  %1069 = vmax.xlane.f32.xlu0 %v1068
  %v1070 = vpop.xlane.xlu0 %1069
  %v1071 = vsel %vm320, %v1037, -inf
  %1072 = vmax.xlane.f32.xlu0 %v1071
  %v1073 = vpop.xlane.xlu0 %1072
  %v1074 = vsel %vm320, %v1038, -inf
  %1075 = vmax.xlane.f32.xlu0 %v1074
  %v1076 = vpop.xlane.xlu0 %1075
  %v1077 = vsel %vm320, %v1039, -inf
  %1078 = vmax.xlane.f32.xlu0 %v1077
  %v1079 = vpop.xlane.xlu0 %1078
  %v1080 = vsel %vm320, %v1040, -inf
  %1081 = vmax.xlane.f32.xlu0 %v1080
  %v1082 = vpop.xlane.xlu0 %1081
  %v1083 = vsel %vm320, %v1041, -inf
  %1084 = vmax.xlane.f32.xlu0 %v1083
  %v1085 = vpop.xlane.xlu0 %1084
  %v1086 = vsel %vm320, %v1042, -inf
  %1087 = vmax.xlane.f32.xlu0 %v1086
  %v1088 = vpop.xlane.xlu0 %1087
  %v1089 = vsel %vm320, %v1043, -inf
  %1090 = vmax.xlane.f32.xlu0 %v1089
  %v1091 = vpop.xlane.xlu0 %1090
  %v1092 = vsub.f32 %v1028, %v1046
  %v1093 = vsub.f32 %v1029, %v1049
  %v1094 = vsub.f32 %v1030, %v1052
  %v1095 = vsub.f32 %v1031, %v1055
  %v1096 = vsub.f32 %v1032, %v1058
  %v1097 = vsub.f32 %v1033, %v1061
  %v1098 = vsub.f32 %v1034, %v1064
  %v1099 = vsub.f32 %v1035, %v1067
  %v1100 = vsub.f32 %v1036, %v1070
  %v1101 = vsub.f32 %v1037, %v1073
  %v1102 = vsub.f32 %v1038, %v1076
  %v1103 = vsub.f32 %v1039, %v1079
  %v1104 = vsub.f32 %v1040, %v1082
  %v1105 = vsub.f32 %v1041, %v1085
  %v1106 = vsub.f32 %v1042, %v1088
  %v1107 = vsub.f32 %v1043, %v1091
  %v1108 = vmul.f32 %v1092, 1.442695
  %v1109 = vpow.pop %v1108
  %v1110 = vmul.f32 %v1093, 1.442695
  %v1111 = vpow.pop %v1110
  %v1112 = vmul.f32 %v1094, 1.442695
  %v1113 = vpow.pop %v1112
  %v1114 = vmul.f32 %v1095, 1.442695
  %v1115 = vpow.pop %v1114
  %v1116 = vmul.f32 %v1096, 1.442695
  %v1117 = vpow.pop %v1116
  %v1118 = vmul.f32 %v1097, 1.442695
  %v1119 = vpow.pop %v1118
  %v1120 = vmul.f32 %v1098, 1.442695
  %v1121 = vpow.pop %v1120
  %v1122 = vmul.f32 %v1099, 1.442695
  %v1123 = vpow.pop %v1122
  %v1124 = vmul.f32 %v1100, 1.442695
  %v1125 = vpow.pop %v1124
  %v1126 = vmul.f32 %v1101, 1.442695
  %v1127 = vpow.pop %v1126
  %v1128 = vmul.f32 %v1102, 1.442695
  %v1129 = vpow.pop %v1128
  %v1130 = vmul.f32 %v1103, 1.442695
  %v1131 = vpow.pop %v1130
  %v1132 = vmul.f32 %v1104, 1.442695
  %v1133 = vpow.pop %v1132
  %v1134 = vmul.f32 %v1105, 1.442695
  %v1135 = vpow.pop %v1134
  %v1136 = vmul.f32 %v1106, 1.442695
  %v1137 = vpow.pop %v1136
  %v1138 = vmul.f32 %v1107, 1.442695
  %v1139 = vpow.pop %v1138
  %v1140 = vsel %vm320, %v1109, 0.0
  %1141 = vadd.xlane.f32.xlu0 %v1140
  %v1142 = vpop.xlane.xlu0 %1141
  %v1143 = vsel %vm320, %v1111, 0.0
  %1144 = vadd.xlane.f32.xlu0 %v1143
  %v1145 = vpop.xlane.xlu0 %1144
  %v1146 = vsel %vm320, %v1113, 0.0
  %1147 = vadd.xlane.f32.xlu0 %v1146
  %v1148 = vpop.xlane.xlu0 %1147
  %v1149 = vsel %vm320, %v1115, 0.0
  %1150 = vadd.xlane.f32.xlu0 %v1149
  %v1151 = vpop.xlane.xlu0 %1150
  %v1152 = vsel %vm320, %v1117, 0.0
  %1153 = vadd.xlane.f32.xlu0 %v1152
  %v1154 = vpop.xlane.xlu0 %1153
  %v1155 = vsel %vm320, %v1119, 0.0
  %1156 = vadd.xlane.f32.xlu0 %v1155
  %v1157 = vpop.xlane.xlu0 %1156
  %v1158 = vsel %vm320, %v1121, 0.0
  %1159 = vadd.xlane.f32.xlu0 %v1158
  %v1160 = vpop.xlane.xlu0 %1159
  %v1161 = vsel %vm320, %v1123, 0.0
  %1162 = vadd.xlane.f32.xlu0 %v1161
  %v1163 = vpop.xlane.xlu0 %1162
  %v1164 = vsel %vm320, %v1125, 0.0
  %1165 = vadd.xlane.f32.xlu0 %v1164
  %v1166 = vpop.xlane.xlu0 %1165
  %v1167 = vsel %vm320, %v1127, 0.0
  %1168 = vadd.xlane.f32.xlu0 %v1167
  %v1169 = vpop.xlane.xlu0 %1168
  %v1170 = vsel %vm320, %v1129, 0.0
  %1171 = vadd.xlane.f32.xlu0 %v1170
  %v1172 = vpop.xlane.xlu0 %1171
  %v1173 = vsel %vm320, %v1131, 0.0
  %1174 = vadd.xlane.f32.xlu0 %v1173
  %v1175 = vpop.xlane.xlu0 %1174
  %v1176 = vsel %vm320, %v1133, 0.0
  %1177 = vadd.xlane.f32.xlu0 %v1176
  %v1178 = vpop.xlane.xlu0 %1177
  %v1179 = vsel %vm320, %v1135, 0.0
  %1180 = vadd.xlane.f32.xlu0 %v1179
  %v1181 = vpop.xlane.xlu0 %1180
  %v1182 = vsel %vm320, %v1137, 0.0
  %1183 = vadd.xlane.f32.xlu0 %v1182
  %v1184 = vpop.xlane.xlu0 %1183
  %v1185 = vsel %vm320, %v1139, 0.0
  %1186 = vadd.xlane.f32.xlu0 %v1185
  %v1187 = vpop.xlane.xlu0 %1186
  %v1188 = vrcp.pop %v1142
  %v1189 = vrcp.pop %v1145
  %v1190 = vrcp.pop %v1148
  %v1191 = vrcp.pop %v1151
  %v1192 = vrcp.pop %v1154
  %v1193 = vrcp.pop %v1157
  %v1194 = vrcp.pop %v1160
  %v1195 = vrcp.pop %v1163
  %v1196 = vrcp.pop %v1166
  %v1197 = vrcp.pop %v1169
  %v1198 = vrcp.pop %v1172
  %v1199 = vrcp.pop %v1175
  %v1200 = vrcp.pop %v1178
  %v1201 = vrcp.pop %v1181
  %v1202 = vrcp.pop %v1184
  %v1203 = vrcp.pop %v1187
  %v1204 = vmul.f32 %v1109, %v1188
  %v1205 = vmul.f32 %v1111, %v1189
  %v1206 = vmul.f32 %v1113, %v1190
  %v1207 = vmul.f32 %v1115, %v1191
  %v1208 = vmul.f32 %v1117, %v1192
  %v1209 = vmul.f32 %v1119, %v1193
  %v1210 = vmul.f32 %v1121, %v1194
  %v1211 = vmul.f32 %v1123, %v1195
  %v1212 = vmul.f32 %v1125, %v1196
  %v1213 = vmul.f32 %v1127, %v1197
  %v1214 = vmul.f32 %v1129, %v1198
  %v1215 = vmul.f32 %v1131, %v1199
  %v1216 = vmul.f32 %v1133, %v1200
  %v1217 = vmul.f32 %v1135, %v1201
  %v1218 = vmul.f32 %v1137, %v1202
  %v1219 = vmul.f32 %v1139, %v1203
  %v1220 = vpack.c.bf16 %v1204, %v1204
  %v1221 = vpack.c.bf16 %v1205, %v1205
  %v1222 = vpack.c.bf16 %v1206, %v1206
  %v1223 = vpack.c.bf16 %v1207, %v1207
  %v1224 = vpack.c.bf16 %v1208, %v1208
  %v1225 = vpack.c.bf16 %v1209, %v1209
  %v1226 = vpack.c.bf16 %v1210, %v1210
  %v1227 = vpack.c.bf16 %v1211, %v1211
  %v1228 = vpack.c.bf16 %v1212, %v1212
  %v1229 = vpack.c.bf16 %v1213, %v1213
  %v1230 = vpack.c.bf16 %v1214, %v1214
  %v1231 = vpack.c.bf16 %v1215, %v1215
  %v1232 = vpack.c.bf16 %v1216, %v1216
  %v1233 = vpack.c.bf16 %v1217, %v1217
  %v1234 = vpack.c.bf16 %v1218, %v1218
  %v1235 = vpack.c.bf16 %v1219, %v1219
  %v1238 = vunpack.c.l.b16 %v1220
  %v1239 = vunpack.c.l.b16 %v1221
  %v1240 = vpack.c.b16 %v1239, %v1238
  %v1243 = vunpack.c.l.b16 %v772
  %v1244 = vunpack.c.l.b16 %v773
  %v1245 = vpack.c.b16 %v1244, %v1243
  %v1248 = vsel %vm320, %v1240, 0
  %1250 = vmatpush.bf16.msra.mxu0 0
  %1251 = vmatpush.bf16.msra.mxu0 0
  %1252 = vmatpush.bf16.msra.mxu0 0
  %1253 = vmatpush.bf16.msra.mxu0 0
  %1254 = vmatpush.bf16.msra.mxu0 0
  %1255 = vmatpush.bf16.msra.mxu0 0
  %1256 = vmatpush.bf16.msra.mxu0 0
  %1257 = vmatpush.bf16.msra.mxu0 %v1245
  %1258 = vmatmul.bf16.gmra.mxu0 %v1248
  %v1259 = vpop.f32.mrf.mxu0
  %v1260 = vadd.f32 0.0, %v1259
  %v1261 = vpop.f32.mrf.mxu0
  %v1262 = vadd.f32 0.0, %v1261
  %1263 = vdwg.mxu0
  %v1266 = vunpack.c.l.b16 %v1222
  %v1267 = vunpack.c.l.b16 %v1223
  %v1268 = vpack.c.b16 %v1267, %v1266
  %v1271 = vunpack.c.l.b16 %v774
  %v1272 = vunpack.c.l.b16 %v775
  %v1273 = vpack.c.b16 %v1272, %v1271
  %v1276 = vsel %vm320, %v1268, 0
  %1278 = vmatpush.bf16.msra.mxu0 0
  %1279 = vmatpush.bf16.msra.mxu0 0
  %1280 = vmatpush.bf16.msra.mxu0 0
  %1281 = vmatpush.bf16.msra.mxu0 0
  %1282 = vmatpush.bf16.msra.mxu0 0
  %1283 = vmatpush.bf16.msra.mxu0 0
  %1284 = vmatpush.bf16.msra.mxu0 0
  %1285 = vmatpush.bf16.msra.mxu0 %v1273
  %1286 = vmatmul.bf16.gmra.mxu0 %v1276
  %v1287 = vpop.f32.mrf.mxu0
  %v1288 = vadd.f32 0.0, %v1287
  %v1289 = vpop.f32.mrf.mxu0
  %v1290 = vadd.f32 0.0, %v1289
  %1291 = vdwg.mxu0
  %v1294 = vunpack.c.l.b16 %v1224
  %v1295 = vunpack.c.l.b16 %v1225
  %v1296 = vpack.c.b16 %v1295, %v1294
  %v1299 = vunpack.c.l.b16 %v776
  %v1300 = vunpack.c.l.b16 %v777
  %v1301 = vpack.c.b16 %v1300, %v1299
  %v1304 = vsel %vm320, %v1296, 0
  %1306 = vmatpush.bf16.msra.mxu0 0
  %1307 = vmatpush.bf16.msra.mxu0 0
  %1308 = vmatpush.bf16.msra.mxu0 0
  %1309 = vmatpush.bf16.msra.mxu0 0
  %1310 = vmatpush.bf16.msra.mxu0 0
  %1311 = vmatpush.bf16.msra.mxu0 0
  %1312 = vmatpush.bf16.msra.mxu0 0
  %1313 = vmatpush.bf16.msra.mxu0 %v1301
  %1314 = vmatmul.bf16.gmra.mxu0 %v1304
  %v1315 = vpop.f32.mrf.mxu0
  %v1316 = vadd.f32 0.0, %v1315
  %v1317 = vpop.f32.mrf.mxu0
  %v1318 = vadd.f32 0.0, %v1317
  %1319 = vdwg.mxu0
  %v1322 = vunpack.c.l.b16 %v1226
  %v1323 = vunpack.c.l.b16 %v1227
  %v1324 = vpack.c.b16 %v1323, %v1322
  %v1327 = vunpack.c.l.b16 %v778
  %v1328 = vunpack.c.l.b16 %v779
  %v1329 = vpack.c.b16 %v1328, %v1327
  %v1332 = vsel %vm320, %v1324, 0
  %1334 = vmatpush.bf16.msra.mxu0 0
  %1335 = vmatpush.bf16.msra.mxu0 0
  %1336 = vmatpush.bf16.msra.mxu0 0
  %1337 = vmatpush.bf16.msra.mxu0 0
  %1338 = vmatpush.bf16.msra.mxu0 0
  %1339 = vmatpush.bf16.msra.mxu0 0
  %1340 = vmatpush.bf16.msra.mxu0 0
  %1341 = vmatpush.bf16.msra.mxu0 %v1329
  %1342 = vmatmul.bf16.gmra.mxu0 %v1332
  %v1343 = vpop.f32.mrf.mxu0
  %v1344 = vadd.f32 0.0, %v1343
  %v1345 = vpop.f32.mrf.mxu0
  %v1346 = vadd.f32 0.0, %v1345
  %1347 = vdwg.mxu0
  %v1350 = vunpack.c.l.b16 %v1228
  %v1351 = vunpack.c.l.b16 %v1229
  %v1352 = vpack.c.b16 %v1351, %v1350
  %v1355 = vunpack.c.l.b16 %v780
  %v1356 = vunpack.c.l.b16 %v781
  %v1357 = vpack.c.b16 %v1356, %v1355
  %v1360 = vsel %vm320, %v1352, 0
  %1362 = vmatpush.bf16.msra.mxu0 0
  %1363 = vmatpush.bf16.msra.mxu0 0
  %1364 = vmatpush.bf16.msra.mxu0 0
  %1365 = vmatpush.bf16.msra.mxu0 0
  %1366 = vmatpush.bf16.msra.mxu0 0
  %1367 = vmatpush.bf16.msra.mxu0 0
  %1368 = vmatpush.bf16.msra.mxu0 0
  %1369 = vmatpush.bf16.msra.mxu0 %v1357
  %1370 = vmatmul.bf16.gmra.mxu0 %v1360
  %v1371 = vpop.f32.mrf.mxu0
  %v1372 = vadd.f32 0.0, %v1371
  %v1373 = vpop.f32.mrf.mxu0
  %v1374 = vadd.f32 0.0, %v1373
  %1375 = vdwg.mxu0
  %v1378 = vunpack.c.l.b16 %v1230
  %v1379 = vunpack.c.l.b16 %v1231
  %v1380 = vpack.c.b16 %v1379, %v1378
  %v1383 = vunpack.c.l.b16 %v782
  %v1384 = vunpack.c.l.b16 %v783
  %v1385 = vpack.c.b16 %v1384, %v1383
  %v1388 = vsel %vm320, %v1380, 0
  %1390 = vmatpush.bf16.msra.mxu0 0
  %1391 = vmatpush.bf16.msra.mxu0 0
  %1392 = vmatpush.bf16.msra.mxu0 0
  %1393 = vmatpush.bf16.msra.mxu0 0
  %1394 = vmatpush.bf16.msra.mxu0 0
  %1395 = vmatpush.bf16.msra.mxu0 0
  %1396 = vmatpush.bf16.msra.mxu0 0
  %1397 = vmatpush.bf16.msra.mxu0 %v1385
  %1398 = vmatmul.bf16.gmra.mxu0 %v1388
  %v1399 = vpop.f32.mrf.mxu0
  %v1400 = vadd.f32 0.0, %v1399
  %v1401 = vpop.f32.mrf.mxu0
  %v1402 = vadd.f32 0.0, %v1401
  %1403 = vdwg.mxu0
  %v1406 = vunpack.c.l.b16 %v1232
  %v1407 = vunpack.c.l.b16 %v1233
  %v1408 = vpack.c.b16 %v1407, %v1406
  %v1411 = vunpack.c.l.b16 %v784
  %v1412 = vunpack.c.l.b16 %v785
  %v1413 = vpack.c.b16 %v1412, %v1411
  %v1416 = vsel %vm320, %v1408, 0
  %1418 = vmatpush.bf16.msra.mxu0 0
  %1419 = vmatpush.bf16.msra.mxu0 0
  %1420 = vmatpush.bf16.msra.mxu0 0
  %1421 = vmatpush.bf16.msra.mxu0 0
  %1422 = vmatpush.bf16.msra.mxu0 0
  %1423 = vmatpush.bf16.msra.mxu0 0
  %1424 = vmatpush.bf16.msra.mxu0 0
  %1425 = vmatpush.bf16.msra.mxu0 %v1413
  %1426 = vmatmul.bf16.gmra.mxu0 %v1416
  %v1427 = vpop.f32.mrf.mxu0
  %v1428 = vadd.f32 0.0, %v1427
  %v1429 = vpop.f32.mrf.mxu0
  %v1430 = vadd.f32 0.0, %v1429
  %1431 = vdwg.mxu0
  %v1434 = vunpack.c.l.b16 %v1234
  %v1435 = vunpack.c.l.b16 %v1235
  %v1436 = vpack.c.b16 %v1435, %v1434
  %v1439 = vunpack.c.l.b16 %v786
  %v1440 = vunpack.c.l.b16 %v787
  %v1441 = vpack.c.b16 %v1440, %v1439
  %v1444 = vsel %vm320, %v1436, 0
  %1446 = vmatpush.bf16.msra.mxu0 0
  %1447 = vmatpush.bf16.msra.mxu0 0
  %1448 = vmatpush.bf16.msra.mxu0 0
  %1449 = vmatpush.bf16.msra.mxu0 0
  %1450 = vmatpush.bf16.msra.mxu0 0
  %1451 = vmatpush.bf16.msra.mxu0 0
  %1452 = vmatpush.bf16.msra.mxu0 0
  %1453 = vmatpush.bf16.msra.mxu0 %v1441
  %1454 = vmatmul.bf16.gmra.mxu0 %v1444
  %v1455 = vpop.f32.mrf.mxu0
  %v1456 = vadd.f32 0.0, %v1455
  %v1457 = vpop.f32.mrf.mxu0
  %v1458 = vadd.f32 0.0, %v1457
  %1459 = vdwg.mxu0
  %s1460 = scalar_lea.vmem %s0, 16
  %v1461 = vld [vmem:[%s1460] sm:$0xf]
  %v1462 = vld [vmem:[%s1460 + $0x4] sm:$0xf]
  %v1463 = vld [vmem:[%s1460 + $0x20] sm:$0xf]
  %v1464 = vld [vmem:[%s1460 + $0x24] sm:$0xf]
  %v1465 = vld [vmem:[%s1460 + $0x40] sm:$0xf]
  %v1466 = vld [vmem:[%s1460 + $0x44] sm:$0xf]
  %v1467 = vld [vmem:[%s1460 + $0x60] sm:$0xf]
  %v1468 = vld [vmem:[%s1460 + $0x64] sm:$0xf]
  %v1469 = vld [vmem:[%s1460 + $0x80] sm:$0xf]
  %v1470 = vld [vmem:[%s1460 + $0x84] sm:$0xf]
  %v1471 = vld [vmem:[%s1460 + $0xa0] sm:$0xf]
  %v1472 = vld [vmem:[%s1460 + $0xa4] sm:$0xf]
  %v1473 = vld [vmem:[%s1460 + $0xc0] sm:$0xf]
  %v1474 = vld [vmem:[%s1460 + $0xc4] sm:$0xf]
  %v1475 = vld [vmem:[%s1460 + $0xe0] sm:$0xf]
  %v1476 = vld [vmem:[%s1460 + $0xe4] sm:$0xf]
  %s1477 = scalar_lea.vmem %s1, 16
  %v1478 = vld [vmem:[%s1477] sm:$0xf]
  %v1479 = vld [vmem:[%s1477 + $0x4] sm:$0xf]
  %v1480 = vld [vmem:[%s1477 + $0x20] sm:$0xf]
  %v1481 = vld [vmem:[%s1477 + $0x24] sm:$0xf]
  %v1482 = vld [vmem:[%s1477 + $0x40] sm:$0xf]
  %v1483 = vld [vmem:[%s1477 + $0x44] sm:$0xf]
  %v1484 = vld [vmem:[%s1477 + $0x60] sm:$0xf]
  %v1485 = vld [vmem:[%s1477 + $0x64] sm:$0xf]
  %v1486 = vld [vmem:[%s1477 + $0x80] sm:$0xf]
  %v1487 = vld [vmem:[%s1477 + $0x84] sm:$0xf]
  %v1488 = vld [vmem:[%s1477 + $0xa0] sm:$0xf]
  %v1489 = vld [vmem:[%s1477 + $0xa4] sm:$0xf]
  %v1490 = vld [vmem:[%s1477 + $0xc0] sm:$0xf]
  %v1491 = vld [vmem:[%s1477 + $0xc4] sm:$0xf]
  %v1492 = vld [vmem:[%s1477 + $0xe0] sm:$0xf]
  %v1493 = vld [vmem:[%s1477 + $0xe4] sm:$0xf]
  %s1494 = scalar_lea.vmem %s2, 16
  %v1495 = vld [vmem:[%s1494] sm:$0xf]
  %v1496 = vld [vmem:[%s1494 + $0x4] sm:$0xf]
  %v1497 = vld [vmem:[%s1494 + $0x20] sm:$0xf]
  %v1498 = vld [vmem:[%s1494 + $0x24] sm:$0xf]
  %v1499 = vld [vmem:[%s1494 + $0x40] sm:$0xf]
  %v1500 = vld [vmem:[%s1494 + $0x44] sm:$0xf]
  %v1501 = vld [vmem:[%s1494 + $0x60] sm:$0xf]
  %v1502 = vld [vmem:[%s1494 + $0x64] sm:$0xf]
  %v1503 = vld [vmem:[%s1494 + $0x80] sm:$0xf]
  %v1504 = vld [vmem:[%s1494 + $0x84] sm:$0xf]
  %v1505 = vld [vmem:[%s1494 + $0xa0] sm:$0xf]
  %v1506 = vld [vmem:[%s1494 + $0xa4] sm:$0xf]
  %v1507 = vld [vmem:[%s1494 + $0xc0] sm:$0xf]
  %v1508 = vld [vmem:[%s1494 + $0xc4] sm:$0xf]
  %v1509 = vld [vmem:[%s1494 + $0xe0] sm:$0xf]
  %v1510 = vld [vmem:[%s1494 + $0xe4] sm:$0xf]
  %v1513 = vunpack.c.l.b16 %v1461
  %v1514 = vunpack.c.l.b16 %v1462
  %v1515 = vpack.c.b16 %v1514, %v1513
  %v1518 = vunpack.c.l.b16 %v1478
  %v1519 = vunpack.c.l.b16 %v1479
  %v1520 = vpack.c.b16 %v1519, %v1518
  %v1522 = vsel %vm73, %v1515, 0
  %v1525 = vsel %vm73, %v1520, 0
  %1527 = vmatpush.bf16.xpose.msra.mxu0 0
  %1528 = vmatpush.bf16.xpose.msra.mxu0 0
  %1529 = vmatpush.bf16.xpose.msra.mxu0 0
  %1530 = vmatpush.bf16.xpose.msra.mxu0 0
  %1531 = vmatpush.bf16.xpose.msra.mxu0 0
  %1532 = vmatpush.bf16.xpose.msra.mxu0 0
  %1533 = vmatpush.bf16.xpose.msra.mxu0 0
  %1534 = vmatpush.bf16.xpose.msra.mxu0 %v1525
  %1535 = vmatmul.bf16.gmra.mxu0 %v1522
  %v1536 = vpop.f32.mrf.mxu0
  %v1537 = vadd.f32 0.0, %v1536
  %v1538 = vpop.f32.mrf.mxu0
  %v1539 = vadd.f32 0.0, %v1538
  %1540 = vdwg.mxu0
  %v1543 = vunpack.c.l.b16 %v1463
  %v1544 = vunpack.c.l.b16 %v1464
  %v1545 = vpack.c.b16 %v1544, %v1543
  %v1548 = vunpack.c.l.b16 %v1480
  %v1549 = vunpack.c.l.b16 %v1481
  %v1550 = vpack.c.b16 %v1549, %v1548
  %v1552 = vsel %vm73, %v1545, 0
  %v1555 = vsel %vm73, %v1550, 0
  %1557 = vmatpush.bf16.xpose.msra.mxu0 0
  %1558 = vmatpush.bf16.xpose.msra.mxu0 0
  %1559 = vmatpush.bf16.xpose.msra.mxu0 0
  %1560 = vmatpush.bf16.xpose.msra.mxu0 0
  %1561 = vmatpush.bf16.xpose.msra.mxu0 0
  %1562 = vmatpush.bf16.xpose.msra.mxu0 0
  %1563 = vmatpush.bf16.xpose.msra.mxu0 0
  %1564 = vmatpush.bf16.xpose.msra.mxu0 %v1555
  %1565 = vmatmul.bf16.gmra.mxu0 %v1552
  %v1566 = vpop.f32.mrf.mxu0
  %v1567 = vadd.f32 0.0, %v1566
  %v1568 = vpop.f32.mrf.mxu0
  %v1569 = vadd.f32 0.0, %v1568
  %1570 = vdwg.mxu0
  %v1573 = vunpack.c.l.b16 %v1465
  %v1574 = vunpack.c.l.b16 %v1466
  %v1575 = vpack.c.b16 %v1574, %v1573
  %v1578 = vunpack.c.l.b16 %v1482
  %v1579 = vunpack.c.l.b16 %v1483
  %v1580 = vpack.c.b16 %v1579, %v1578
  %v1582 = vsel %vm73, %v1575, 0
  %v1585 = vsel %vm73, %v1580, 0
  %1587 = vmatpush.bf16.xpose.msra.mxu0 0
  %1588 = vmatpush.bf16.xpose.msra.mxu0 0
  %1589 = vmatpush.bf16.xpose.msra.mxu0 0
  %1590 = vmatpush.bf16.xpose.msra.mxu0 0
  %1591 = vmatpush.bf16.xpose.msra.mxu0 0
  %1592 = vmatpush.bf16.xpose.msra.mxu0 0
  %1593 = vmatpush.bf16.xpose.msra.mxu0 0
  %1594 = vmatpush.bf16.xpose.msra.mxu0 %v1585
  %1595 = vmatmul.bf16.gmra.mxu0 %v1582
  %v1596 = vpop.f32.mrf.mxu0
  %v1597 = vadd.f32 0.0, %v1596
  %v1598 = vpop.f32.mrf.mxu0
  %v1599 = vadd.f32 0.0, %v1598
  %1600 = vdwg.mxu0
  %v1603 = vunpack.c.l.b16 %v1467
  %v1604 = vunpack.c.l.b16 %v1468
  %v1605 = vpack.c.b16 %v1604, %v1603
  %v1608 = vunpack.c.l.b16 %v1484
  %v1609 = vunpack.c.l.b16 %v1485
  %v1610 = vpack.c.b16 %v1609, %v1608
  %v1612 = vsel %vm73, %v1605, 0
  %v1615 = vsel %vm73, %v1610, 0
  %1617 = vmatpush.bf16.xpose.msra.mxu0 0
  %1618 = vmatpush.bf16.xpose.msra.mxu0 0
  %1619 = vmatpush.bf16.xpose.msra.mxu0 0
  %1620 = vmatpush.bf16.xpose.msra.mxu0 0
  %1621 = vmatpush.bf16.xpose.msra.mxu0 0
  %1622 = vmatpush.bf16.xpose.msra.mxu0 0
  %1623 = vmatpush.bf16.xpose.msra.mxu0 0
  %1624 = vmatpush.bf16.xpose.msra.mxu0 %v1615
  %1625 = vmatmul.bf16.gmra.mxu0 %v1612
  %v1626 = vpop.f32.mrf.mxu0
  %v1627 = vadd.f32 0.0, %v1626
  %v1628 = vpop.f32.mrf.mxu0
  %v1629 = vadd.f32 0.0, %v1628
  %1630 = vdwg.mxu0
  %v1633 = vunpack.c.l.b16 %v1469
  %v1634 = vunpack.c.l.b16 %v1470
  %v1635 = vpack.c.b16 %v1634, %v1633
  %v1638 = vunpack.c.l.b16 %v1486
  %v1639 = vunpack.c.l.b16 %v1487
  %v1640 = vpack.c.b16 %v1639, %v1638
  %v1642 = vsel %vm73, %v1635, 0
  %v1645 = vsel %vm73, %v1640, 0
  %1647 = vmatpush.bf16.xpose.msra.mxu0 0
  %1648 = vmatpush.bf16.xpose.msra.mxu0 0
  %1649 = vmatpush.bf16.xpose.msra.mxu0 0
  %1650 = vmatpush.bf16.xpose.msra.mxu0 0
  %1651 = vmatpush.bf16.xpose.msra.mxu0 0
  %1652 = vmatpush.bf16.xpose.msra.mxu0 0
  %1653 = vmatpush.bf16.xpose.msra.mxu0 0
  %1654 = vmatpush.bf16.xpose.msra.mxu0 %v1645
  %1655 = vmatmul.bf16.gmra.mxu0 %v1642
  %v1656 = vpop.f32.mrf.mxu0
  %v1657 = vadd.f32 0.0, %v1656
  %v1658 = vpop.f32.mrf.mxu0
  %v1659 = vadd.f32 0.0, %v1658
  %1660 = vdwg.mxu0
  %v1663 = vunpack.c.l.b16 %v1471
  %v1664 = vunpack.c.l.b16 %v1472
  %v1665 = vpack.c.b16 %v1664, %v1663
  %v1668 = vunpack.c.l.b16 %v1488
  %v1669 = vunpack.c.l.b16 %v1489
  %v1670 = vpack.c.b16 %v1669, %v1668
  %v1672 = vsel %vm73, %v1665, 0
  %v1675 = vsel %vm73, %v1670, 0
  %1677 = vmatpush.bf16.xpose.msra.mxu0 0
  %1678 = vmatpush.bf16.xpose.msra.mxu0 0
  %1679 = vmatpush.bf16.xpose.msra.mxu0 0
  %1680 = vmatpush.bf16.xpose.msra.mxu0 0
  %1681 = vmatpush.bf16.xpose.msra.mxu0 0
  %1682 = vmatpush.bf16.xpose.msra.mxu0 0
  %1683 = vmatpush.bf16.xpose.msra.mxu0 0
  %1684 = vmatpush.bf16.xpose.msra.mxu0 %v1675
  %1685 = vmatmul.bf16.gmra.mxu0 %v1672
  %v1686 = vpop.f32.mrf.mxu0
  %v1687 = vadd.f32 0.0, %v1686
  %v1688 = vpop.f32.mrf.mxu0
  %v1689 = vadd.f32 0.0, %v1688
  %1690 = vdwg.mxu0
  %v1693 = vunpack.c.l.b16 %v1473
  %v1694 = vunpack.c.l.b16 %v1474
  %v1695 = vpack.c.b16 %v1694, %v1693
  %v1698 = vunpack.c.l.b16 %v1490
  %v1699 = vunpack.c.l.b16 %v1491
  %v1700 = vpack.c.b16 %v1699, %v1698
  %v1702 = vsel %vm73, %v1695, 0
  %v1705 = vsel %vm73, %v1700, 0
  %1707 = vmatpush.bf16.xpose.msra.mxu0 0
  %1708 = vmatpush.bf16.xpose.msra.mxu0 0
  %1709 = vmatpush.bf16.xpose.msra.mxu0 0
  %1710 = vmatpush.bf16.xpose.msra.mxu0 0
  %1711 = vmatpush.bf16.xpose.msra.mxu0 0
  %1712 = vmatpush.bf16.xpose.msra.mxu0 0
  %1713 = vmatpush.bf16.xpose.msra.mxu0 0
  %1714 = vmatpush.bf16.xpose.msra.mxu0 %v1705
  %1715 = vmatmul.bf16.gmra.mxu0 %v1702
  %v1716 = vpop.f32.mrf.mxu0
  %v1717 = vadd.f32 0.0, %v1716
  %v1718 = vpop.f32.mrf.mxu0
  %v1719 = vadd.f32 0.0, %v1718
  %1720 = vdwg.mxu0
  %v1723 = vunpack.c.l.b16 %v1475
  %v1724 = vunpack.c.l.b16 %v1476
  %v1725 = vpack.c.b16 %v1724, %v1723
  %v1728 = vunpack.c.l.b16 %v1492
  %v1729 = vunpack.c.l.b16 %v1493
  %v1730 = vpack.c.b16 %v1729, %v1728
  %v1732 = vsel %vm73, %v1725, 0
  %v1735 = vsel %vm73, %v1730, 0
  %1737 = vmatpush.bf16.xpose.msra.mxu0 0
  %1738 = vmatpush.bf16.xpose.msra.mxu0 0
  %1739 = vmatpush.bf16.xpose.msra.mxu0 0
  %1740 = vmatpush.bf16.xpose.msra.mxu0 0
  %1741 = vmatpush.bf16.xpose.msra.mxu0 0
  %1742 = vmatpush.bf16.xpose.msra.mxu0 0
  %1743 = vmatpush.bf16.xpose.msra.mxu0 0
  %1744 = vmatpush.bf16.xpose.msra.mxu0 %v1735
  %1745 = vmatmul.bf16.gmra.mxu0 %v1732
  %v1746 = vpop.f32.mrf.mxu0
  %v1747 = vadd.f32 0.0, %v1746
  %v1748 = vpop.f32.mrf.mxu0
  %v1749 = vadd.f32 0.0, %v1748
  %1750 = vdwg.mxu0
  %v1751 = vmul.f32 %v1537, 0.35355338
  %v1752 = vmul.f32 %v1539, 0.35355338
  %v1753 = vmul.f32 %v1567, 0.35355338
  %v1754 = vmul.f32 %v1569, 0.35355338
  %v1755 = vmul.f32 %v1597, 0.35355338
  %v1756 = vmul.f32 %v1599, 0.35355338
  %v1757 = vmul.f32 %v1627, 0.35355338
  %v1758 = vmul.f32 %v1629, 0.35355338
  %v1759 = vmul.f32 %v1657, 0.35355338
  %v1760 = vmul.f32 %v1659, 0.35355338
  %v1761 = vmul.f32 %v1687, 0.35355338
  %v1762 = vmul.f32 %v1689, 0.35355338
  %v1763 = vmul.f32 %v1717, 0.35355338
  %v1764 = vmul.f32 %v1719, 0.35355338
  %v1765 = vmul.f32 %v1747, 0.35355338
  %v1766 = vmul.f32 %v1749, 0.35355338
  %v1767 = vsel %vm320, %v1751, -inf
  %1768 = vmax.xlane.f32.xlu0 %v1767
  %v1769 = vpop.xlane.xlu0 %1768
  %v1770 = vsel %vm320, %v1752, -inf
  %1771 = vmax.xlane.f32.xlu0 %v1770
  %v1772 = vpop.xlane.xlu0 %1771
  %v1773 = vsel %vm320, %v1753, -inf
  %1774 = vmax.xlane.f32.xlu0 %v1773
  %v1775 = vpop.xlane.xlu0 %1774
  %v1776 = vsel %vm320, %v1754, -inf
  %1777 = vmax.xlane.f32.xlu0 %v1776
  %v1778 = vpop.xlane.xlu0 %1777
  %v1779 = vsel %vm320, %v1755, -inf
  %1780 = vmax.xlane.f32.xlu0 %v1779
  %v1781 = vpop.xlane.xlu0 %1780
  %v1782 = vsel %vm320, %v1756, -inf
  %1783 = vmax.xlane.f32.xlu0 %v1782
  %v1784 = vpop.xlane.xlu0 %1783
  %v1785 = vsel %vm320, %v1757, -inf
  %1786 = vmax.xlane.f32.xlu0 %v1785
  %v1787 = vpop.xlane.xlu0 %1786
  %v1788 = vsel %vm320, %v1758, -inf
  %1789 = vmax.xlane.f32.xlu0 %v1788
  %v1790 = vpop.xlane.xlu0 %1789
  %v1791 = vsel %vm320, %v1759, -inf
  %1792 = vmax.xlane.f32.xlu0 %v1791
  %v1793 = vpop.xlane.xlu0 %1792
  %v1794 = vsel %vm320, %v1760, -inf
  %1795 = vmax.xlane.f32.xlu0 %v1794
  %v1796 = vpop.xlane.xlu0 %1795
  %v1797 = vsel %vm320, %v1761, -inf
  %1798 = vmax.xlane.f32.xlu0 %v1797
  %v1799 = vpop.xlane.xlu0 %1798
  %v1800 = vsel %vm320, %v1762, -inf
  %1801 = vmax.xlane.f32.xlu0 %v1800
  %v1802 = vpop.xlane.xlu0 %1801
  %v1803 = vsel %vm320, %v1763, -inf
  %1804 = vmax.xlane.f32.xlu0 %v1803
  %v1805 = vpop.xlane.xlu0 %1804
  %v1806 = vsel %vm320, %v1764, -inf
  %1807 = vmax.xlane.f32.xlu0 %v1806
  %v1808 = vpop.xlane.xlu0 %1807
  %v1809 = vsel %vm320, %v1765, -inf
  %1810 = vmax.xlane.f32.xlu0 %v1809
  %v1811 = vpop.xlane.xlu0 %1810
  %v1812 = vsel %vm320, %v1766, -inf
  %1813 = vmax.xlane.f32.xlu0 %v1812
  %v1814 = vpop.xlane.xlu0 %1813
  %v1815 = vsub.f32 %v1751, %v1769
  %v1816 = vsub.f32 %v1752, %v1772
  %v1817 = vsub.f32 %v1753, %v1775
  %v1818 = vsub.f32 %v1754, %v1778
  %v1819 = vsub.f32 %v1755, %v1781
  %v1820 = vsub.f32 %v1756, %v1784
  %v1821 = vsub.f32 %v1757, %v1787
  %v1822 = vsub.f32 %v1758, %v1790
  %v1823 = vsub.f32 %v1759, %v1793
  %v1824 = vsub.f32 %v1760, %v1796
  %v1825 = vsub.f32 %v1761, %v1799
  %v1826 = vsub.f32 %v1762, %v1802
  %v1827 = vsub.f32 %v1763, %v1805
  %v1828 = vsub.f32 %v1764, %v1808
  %v1829 = vsub.f32 %v1765, %v1811
  %v1830 = vsub.f32 %v1766, %v1814
  %v1831 = vmul.f32 %v1815, 1.442695
  %v1832 = vpow.pop %v1831
  %v1833 = vmul.f32 %v1816, 1.442695
  %v1834 = vpow.pop %v1833
  %v1835 = vmul.f32 %v1817, 1.442695
  %v1836 = vpow.pop %v1835
  %v1837 = vmul.f32 %v1818, 1.442695
  %v1838 = vpow.pop %v1837
  %v1839 = vmul.f32 %v1819, 1.442695
  %v1840 = vpow.pop %v1839
  %v1841 = vmul.f32 %v1820, 1.442695
  %v1842 = vpow.pop %v1841
  %v1843 = vmul.f32 %v1821, 1.442695
  %v1844 = vpow.pop %v1843
  %v1845 = vmul.f32 %v1822, 1.442695
  %v1846 = vpow.pop %v1845
  %v1847 = vmul.f32 %v1823, 1.442695
  %v1848 = vpow.pop %v1847
  %v1849 = vmul.f32 %v1824, 1.442695
  %v1850 = vpow.pop %v1849
  %v1851 = vmul.f32 %v1825, 1.442695
  %v1852 = vpow.pop %v1851
  %v1853 = vmul.f32 %v1826, 1.442695
  %v1854 = vpow.pop %v1853
  %v1855 = vmul.f32 %v1827, 1.442695
  %v1856 = vpow.pop %v1855
  %v1857 = vmul.f32 %v1828, 1.442695
  %v1858 = vpow.pop %v1857
  %v1859 = vmul.f32 %v1829, 1.442695
  %v1860 = vpow.pop %v1859
  %v1861 = vmul.f32 %v1830, 1.442695
  %v1862 = vpow.pop %v1861
  %v1863 = vsel %vm320, %v1832, 0.0
  %1864 = vadd.xlane.f32.xlu0 %v1863
  %v1865 = vpop.xlane.xlu0 %1864
  %v1866 = vsel %vm320, %v1834, 0.0
  %1867 = vadd.xlane.f32.xlu0 %v1866
  %v1868 = vpop.xlane.xlu0 %1867
  %v1869 = vsel %vm320, %v1836, 0.0
  %1870 = vadd.xlane.f32.xlu0 %v1869
  %v1871 = vpop.xlane.xlu0 %1870
  %v1872 = vsel %vm320, %v1838, 0.0
  %1873 = vadd.xlane.f32.xlu0 %v1872
  %v1874 = vpop.xlane.xlu0 %1873
  %v1875 = vsel %vm320, %v1840, 0.0
  %1876 = vadd.xlane.f32.xlu0 %v1875
  %v1877 = vpop.xlane.xlu0 %1876
  %v1878 = vsel %vm320, %v1842, 0.0
  %1879 = vadd.xlane.f32.xlu0 %v1878
  %v1880 = vpop.xlane.xlu0 %1879
  %v1881 = vsel %vm320, %v1844, 0.0
  %1882 = vadd.xlane.f32.xlu0 %v1881
  %v1883 = vpop.xlane.xlu0 %1882
  %v1884 = vsel %vm320, %v1846, 0.0
  %1885 = vadd.xlane.f32.xlu0 %v1884
  %v1886 = vpop.xlane.xlu0 %1885
  %v1887 = vsel %vm320, %v1848, 0.0
  %1888 = vadd.xlane.f32.xlu0 %v1887
  %v1889 = vpop.xlane.xlu0 %1888
  %v1890 = vsel %vm320, %v1850, 0.0
  %1891 = vadd.xlane.f32.xlu0 %v1890
  %v1892 = vpop.xlane.xlu0 %1891
  %v1893 = vsel %vm320, %v1852, 0.0
  %1894 = vadd.xlane.f32.xlu0 %v1893
  %v1895 = vpop.xlane.xlu0 %1894
  %v1896 = vsel %vm320, %v1854, 0.0
  %1897 = vadd.xlane.f32.xlu0 %v1896
  %v1898 = vpop.xlane.xlu0 %1897
  %v1899 = vsel %vm320, %v1856, 0.0
  %1900 = vadd.xlane.f32.xlu0 %v1899
  %v1901 = vpop.xlane.xlu0 %1900
  %v1902 = vsel %vm320, %v1858, 0.0
  %1903 = vadd.xlane.f32.xlu0 %v1902
  %v1904 = vpop.xlane.xlu0 %1903
  %v1905 = vsel %vm320, %v1860, 0.0
  %1906 = vadd.xlane.f32.xlu0 %v1905
  %v1907 = vpop.xlane.xlu0 %1906
  %v1908 = vsel %vm320, %v1862, 0.0
  %1909 = vadd.xlane.f32.xlu0 %v1908
  %v1910 = vpop.xlane.xlu0 %1909
  %v1911 = vrcp.pop %v1865
  %v1912 = vrcp.pop %v1868
  %v1913 = vrcp.pop %v1871
  %v1914 = vrcp.pop %v1874
  %v1915 = vrcp.pop %v1877
  %v1916 = vrcp.pop %v1880
  %v1917 = vrcp.pop %v1883
  %v1918 = vrcp.pop %v1886
  %v1919 = vrcp.pop %v1889
  %v1920 = vrcp.pop %v1892
  %v1921 = vrcp.pop %v1895
  %v1922 = vrcp.pop %v1898
  %v1923 = vrcp.pop %v1901
  %v1924 = vrcp.pop %v1904
  %v1925 = vrcp.pop %v1907
  %v1926 = vrcp.pop %v1910
  %v1927 = vmul.f32 %v1832, %v1911
  %v1928 = vmul.f32 %v1834, %v1912
  %v1929 = vmul.f32 %v1836, %v1913
  %v1930 = vmul.f32 %v1838, %v1914
  %v1931 = vmul.f32 %v1840, %v1915
  %v1932 = vmul.f32 %v1842, %v1916
  %v1933 = vmul.f32 %v1844, %v1917
  %v1934 = vmul.f32 %v1846, %v1918
  %v1935 = vmul.f32 %v1848, %v1919
  %v1936 = vmul.f32 %v1850, %v1920
  %v1937 = vmul.f32 %v1852, %v1921
  %v1938 = vmul.f32 %v1854, %v1922
  %v1939 = vmul.f32 %v1856, %v1923
  %v1940 = vmul.f32 %v1858, %v1924
  %v1941 = vmul.f32 %v1860, %v1925
  %v1942 = vmul.f32 %v1862, %v1926
  %v1943 = vpack.c.bf16 %v1927, %v1927
  %v1944 = vpack.c.bf16 %v1928, %v1928
  %v1945 = vpack.c.bf16 %v1929, %v1929
  %v1946 = vpack.c.bf16 %v1930, %v1930
  %v1947 = vpack.c.bf16 %v1931, %v1931
  %v1948 = vpack.c.bf16 %v1932, %v1932
  %v1949 = vpack.c.bf16 %v1933, %v1933
  %v1950 = vpack.c.bf16 %v1934, %v1934
  %v1951 = vpack.c.bf16 %v1935, %v1935
  %v1952 = vpack.c.bf16 %v1936, %v1936
  %v1953 = vpack.c.bf16 %v1937, %v1937
  %v1954 = vpack.c.bf16 %v1938, %v1938
  %v1955 = vpack.c.bf16 %v1939, %v1939
  %v1956 = vpack.c.bf16 %v1940, %v1940
  %v1957 = vpack.c.bf16 %v1941, %v1941
  %v1958 = vpack.c.bf16 %v1942, %v1942
  %v1961 = vunpack.c.l.b16 %v1943
  %v1962 = vunpack.c.l.b16 %v1944
  %v1963 = vpack.c.b16 %v1962, %v1961
  %v1966 = vunpack.c.l.b16 %v1495
  %v1967 = vunpack.c.l.b16 %v1496
  %v1968 = vpack.c.b16 %v1967, %v1966
  %v1971 = vsel %vm320, %v1963, 0
  %1973 = vmatpush.bf16.msra.mxu0 0
  %1974 = vmatpush.bf16.msra.mxu0 0
  %1975 = vmatpush.bf16.msra.mxu0 0
  %1976 = vmatpush.bf16.msra.mxu0 0
  %1977 = vmatpush.bf16.msra.mxu0 0
  %1978 = vmatpush.bf16.msra.mxu0 0
  %1979 = vmatpush.bf16.msra.mxu0 0
  %1980 = vmatpush.bf16.msra.mxu0 %v1968
  %1981 = vmatmul.bf16.gmra.mxu0 %v1971
  %v1982 = vpop.f32.mrf.mxu0
  %v1983 = vadd.f32 0.0, %v1982
  %v1984 = vpop.f32.mrf.mxu0
  %v1985 = vadd.f32 0.0, %v1984
  %1986 = vdwg.mxu0
  %v1989 = vunpack.c.l.b16 %v1945
  %v1990 = vunpack.c.l.b16 %v1946
  %v1991 = vpack.c.b16 %v1990, %v1989
  %v1994 = vunpack.c.l.b16 %v1497
  %v1995 = vunpack.c.l.b16 %v1498
  %v1996 = vpack.c.b16 %v1995, %v1994
  %v1999 = vsel %vm320, %v1991, 0
  %2001 = vmatpush.bf16.msra.mxu0 0
  %2002 = vmatpush.bf16.msra.mxu0 0
  %2003 = vmatpush.bf16.msra.mxu0 0
  %2004 = vmatpush.bf16.msra.mxu0 0
  %2005 = vmatpush.bf16.msra.mxu0 0
  %2006 = vmatpush.bf16.msra.mxu0 0
  %2007 = vmatpush.bf16.msra.mxu0 0
  %2008 = vmatpush.bf16.msra.mxu0 %v1996
  %2009 = vmatmul.bf16.gmra.mxu0 %v1999
  %v2010 = vpop.f32.mrf.mxu0
  %v2011 = vadd.f32 0.0, %v2010
  %v2012 = vpop.f32.mrf.mxu0
  %v2013 = vadd.f32 0.0, %v2012
  %2014 = vdwg.mxu0
  %v2017 = vunpack.c.l.b16 %v1947
  %v2018 = vunpack.c.l.b16 %v1948
  %v2019 = vpack.c.b16 %v2018, %v2017
  %v2022 = vunpack.c.l.b16 %v1499
  %v2023 = vunpack.c.l.b16 %v1500
  %v2024 = vpack.c.b16 %v2023, %v2022
  %v2027 = vsel %vm320, %v2019, 0
  %2029 = vmatpush.bf16.msra.mxu0 0
  %2030 = vmatpush.bf16.msra.mxu0 0
  %2031 = vmatpush.bf16.msra.mxu0 0
  %2032 = vmatpush.bf16.msra.mxu0 0
  %2033 = vmatpush.bf16.msra.mxu0 0
  %2034 = vmatpush.bf16.msra.mxu0 0
  %2035 = vmatpush.bf16.msra.mxu0 0
  %2036 = vmatpush.bf16.msra.mxu0 %v2024
  %2037 = vmatmul.bf16.gmra.mxu0 %v2027
  %v2038 = vpop.f32.mrf.mxu0
  %v2039 = vadd.f32 0.0, %v2038
  %v2040 = vpop.f32.mrf.mxu0
  %v2041 = vadd.f32 0.0, %v2040
  %2042 = vdwg.mxu0
  %v2045 = vunpack.c.l.b16 %v1949
  %v2046 = vunpack.c.l.b16 %v1950
  %v2047 = vpack.c.b16 %v2046, %v2045
  %v2050 = vunpack.c.l.b16 %v1501
  %v2051 = vunpack.c.l.b16 %v1502
  %v2052 = vpack.c.b16 %v2051, %v2050
  %v2055 = vsel %vm320, %v2047, 0
  %2057 = vmatpush.bf16.msra.mxu0 0
  %2058 = vmatpush.bf16.msra.mxu0 0
  %2059 = vmatpush.bf16.msra.mxu0 0
  %2060 = vmatpush.bf16.msra.mxu0 0
  %2061 = vmatpush.bf16.msra.mxu0 0
  %2062 = vmatpush.bf16.msra.mxu0 0
  %2063 = vmatpush.bf16.msra.mxu0 0
  %2064 = vmatpush.bf16.msra.mxu0 %v2052
  %2065 = vmatmul.bf16.gmra.mxu0 %v2055
  %v2066 = vpop.f32.mrf.mxu0
  %v2067 = vadd.f32 0.0, %v2066
  %v2068 = vpop.f32.mrf.mxu0
  %v2069 = vadd.f32 0.0, %v2068
  %2070 = vdwg.mxu0
  %v2073 = vunpack.c.l.b16 %v1951
  %v2074 = vunpack.c.l.b16 %v1952
  %v2075 = vpack.c.b16 %v2074, %v2073
  %v2078 = vunpack.c.l.b16 %v1503
  %v2079 = vunpack.c.l.b16 %v1504
  %v2080 = vpack.c.b16 %v2079, %v2078
  %v2083 = vsel %vm320, %v2075, 0
  %2085 = vmatpush.bf16.msra.mxu0 0
  %2086 = vmatpush.bf16.msra.mxu0 0
  %2087 = vmatpush.bf16.msra.mxu0 0
  %2088 = vmatpush.bf16.msra.mxu0 0
  %2089 = vmatpush.bf16.msra.mxu0 0
  %2090 = vmatpush.bf16.msra.mxu0 0
  %2091 = vmatpush.bf16.msra.mxu0 0
  %2092 = vmatpush.bf16.msra.mxu0 %v2080
  %2093 = vmatmul.bf16.gmra.mxu0 %v2083
  %v2094 = vpop.f32.mrf.mxu0
  %v2095 = vadd.f32 0.0, %v2094
  %v2096 = vpop.f32.mrf.mxu0
  %v2097 = vadd.f32 0.0, %v2096
  %2098 = vdwg.mxu0
  %v2101 = vunpack.c.l.b16 %v1953
  %v2102 = vunpack.c.l.b16 %v1954
  %v2103 = vpack.c.b16 %v2102, %v2101
  %v2106 = vunpack.c.l.b16 %v1505
  %v2107 = vunpack.c.l.b16 %v1506
  %v2108 = vpack.c.b16 %v2107, %v2106
  %v2111 = vsel %vm320, %v2103, 0
  %2113 = vmatpush.bf16.msra.mxu0 0
  %2114 = vmatpush.bf16.msra.mxu0 0
  %2115 = vmatpush.bf16.msra.mxu0 0
  %2116 = vmatpush.bf16.msra.mxu0 0
  %2117 = vmatpush.bf16.msra.mxu0 0
  %2118 = vmatpush.bf16.msra.mxu0 0
  %2119 = vmatpush.bf16.msra.mxu0 0
  %2120 = vmatpush.bf16.msra.mxu0 %v2108
  %2121 = vmatmul.bf16.gmra.mxu0 %v2111
  %v2122 = vpop.f32.mrf.mxu0
  %v2123 = vadd.f32 0.0, %v2122
  %v2124 = vpop.f32.mrf.mxu0
  %v2125 = vadd.f32 0.0, %v2124
  %2126 = vdwg.mxu0
  %v2129 = vunpack.c.l.b16 %v1955
  %v2130 = vunpack.c.l.b16 %v1956
  %v2131 = vpack.c.b16 %v2130, %v2129
  %v2134 = vunpack.c.l.b16 %v1507
  %v2135 = vunpack.c.l.b16 %v1508
  %v2136 = vpack.c.b16 %v2135, %v2134
  %v2139 = vsel %vm320, %v2131, 0
  %2141 = vmatpush.bf16.msra.mxu0 0
  %2142 = vmatpush.bf16.msra.mxu0 0
  %2143 = vmatpush.bf16.msra.mxu0 0
  %2144 = vmatpush.bf16.msra.mxu0 0
  %2145 = vmatpush.bf16.msra.mxu0 0
  %2146 = vmatpush.bf16.msra.mxu0 0
  %2147 = vmatpush.bf16.msra.mxu0 0
  %2148 = vmatpush.bf16.msra.mxu0 %v2136
  %2149 = vmatmul.bf16.gmra.mxu0 %v2139
  %v2150 = vpop.f32.mrf.mxu0
  %v2151 = vadd.f32 0.0, %v2150
  %v2152 = vpop.f32.mrf.mxu0
  %v2153 = vadd.f32 0.0, %v2152
  %2154 = vdwg.mxu0
  %v2157 = vunpack.c.l.b16 %v1957
  %v2158 = vunpack.c.l.b16 %v1958
  %v2159 = vpack.c.b16 %v2158, %v2157
  %v2162 = vunpack.c.l.b16 %v1509
  %v2163 = vunpack.c.l.b16 %v1510
  %v2164 = vpack.c.b16 %v2163, %v2162
  %v2167 = vsel %vm320, %v2159, 0
  %2169 = vmatpush.bf16.msra.mxu0 0
  %2170 = vmatpush.bf16.msra.mxu0 0
  %2171 = vmatpush.bf16.msra.mxu0 0
  %2172 = vmatpush.bf16.msra.mxu0 0
  %2173 = vmatpush.bf16.msra.mxu0 0
  %2174 = vmatpush.bf16.msra.mxu0 0
  %2175 = vmatpush.bf16.msra.mxu0 0
  %2176 = vmatpush.bf16.msra.mxu0 %v2164
  %2177 = vmatmul.bf16.gmra.mxu0 %v2167
  %v2178 = vpop.f32.mrf.mxu0
  %v2179 = vadd.f32 0.0, %v2178
  %v2180 = vpop.f32.mrf.mxu0
  %v2181 = vadd.f32 0.0, %v2180
  %2182 = vdwg.mxu0
  %s2183 = scalar_lea.vmem %s0, 24
  %v2184 = vld [vmem:[%s2183] sm:$0xf]
  %v2185 = vld [vmem:[%s2183 + $0x4] sm:$0xf]
  %v2186 = vld [vmem:[%s2183 + $0x20] sm:$0xf]
  %v2187 = vld [vmem:[%s2183 + $0x24] sm:$0xf]
  %v2188 = vld [vmem:[%s2183 + $0x40] sm:$0xf]
  %v2189 = vld [vmem:[%s2183 + $0x44] sm:$0xf]
  %v2190 = vld [vmem:[%s2183 + $0x60] sm:$0xf]
  %v2191 = vld [vmem:[%s2183 + $0x64] sm:$0xf]
  %v2192 = vld [vmem:[%s2183 + $0x80] sm:$0xf]
  %v2193 = vld [vmem:[%s2183 + $0x84] sm:$0xf]
  %v2194 = vld [vmem:[%s2183 + $0xa0] sm:$0xf]
  %v2195 = vld [vmem:[%s2183 + $0xa4] sm:$0xf]
  %v2196 = vld [vmem:[%s2183 + $0xc0] sm:$0xf]
  %v2197 = vld [vmem:[%s2183 + $0xc4] sm:$0xf]
  %v2198 = vld [vmem:[%s2183 + $0xe0] sm:$0xf]
  %v2199 = vld [vmem:[%s2183 + $0xe4] sm:$0xf]
  %s2200 = scalar_lea.vmem %s1, 24
  %v2201 = vld [vmem:[%s2200] sm:$0xf]
  %v2202 = vld [vmem:[%s2200 + $0x4] sm:$0xf]
  %v2203 = vld [vmem:[%s2200 + $0x20] sm:$0xf]
  %v2204 = vld [vmem:[%s2200 + $0x24] sm:$0xf]
  %v2205 = vld [vmem:[%s2200 + $0x40] sm:$0xf]
  %v2206 = vld [vmem:[%s2200 + $0x44] sm:$0xf]
  %v2207 = vld [vmem:[%s2200 + $0x60] sm:$0xf]
  %v2208 = vld [vmem:[%s2200 + $0x64] sm:$0xf]
  %v2209 = vld [vmem:[%s2200 + $0x80] sm:$0xf]
  %v2210 = vld [vmem:[%s2200 + $0x84] sm:$0xf]
  %v2211 = vld [vmem:[%s2200 + $0xa0] sm:$0xf]
  %v2212 = vld [vmem:[%s2200 + $0xa4] sm:$0xf]
  %v2213 = vld [vmem:[%s2200 + $0xc0] sm:$0xf]
  %v2214 = vld [vmem:[%s2200 + $0xc4] sm:$0xf]
  %v2215 = vld [vmem:[%s2200 + $0xe0] sm:$0xf]
  %v2216 = vld [vmem:[%s2200 + $0xe4] sm:$0xf]
  %s2217 = scalar_lea.vmem %s2, 24
  %v2218 = vld [vmem:[%s2217] sm:$0xf]
  %v2219 = vld [vmem:[%s2217 + $0x4] sm:$0xf]
  %v2220 = vld [vmem:[%s2217 + $0x20] sm:$0xf]
  %v2221 = vld [vmem:[%s2217 + $0x24] sm:$0xf]
  %v2222 = vld [vmem:[%s2217 + $0x40] sm:$0xf]
  %v2223 = vld [vmem:[%s2217 + $0x44] sm:$0xf]
  %v2224 = vld [vmem:[%s2217 + $0x60] sm:$0xf]
  %v2225 = vld [vmem:[%s2217 + $0x64] sm:$0xf]
  %v2226 = vld [vmem:[%s2217 + $0x80] sm:$0xf]
  %v2227 = vld [vmem:[%s2217 + $0x84] sm:$0xf]
  %v2228 = vld [vmem:[%s2217 + $0xa0] sm:$0xf]
  %v2229 = vld [vmem:[%s2217 + $0xa4] sm:$0xf]
  %v2230 = vld [vmem:[%s2217 + $0xc0] sm:$0xf]
  %v2231 = vld [vmem:[%s2217 + $0xc4] sm:$0xf]
  %v2232 = vld [vmem:[%s2217 + $0xe0] sm:$0xf]
  %v2233 = vld [vmem:[%s2217 + $0xe4] sm:$0xf]
  %v2236 = vunpack.c.l.b16 %v2184
  %v2237 = vunpack.c.l.b16 %v2185
  %v2238 = vpack.c.b16 %v2237, %v2236
  %v2241 = vunpack.c.l.b16 %v2201
  %v2242 = vunpack.c.l.b16 %v2202
  %v2243 = vpack.c.b16 %v2242, %v2241
  %v2245 = vsel %vm73, %v2238, 0
  %v2248 = vsel %vm73, %v2243, 0
  %2250 = vmatpush.bf16.xpose.msra.mxu0 0
  %2251 = vmatpush.bf16.xpose.msra.mxu0 0
  %2252 = vmatpush.bf16.xpose.msra.mxu0 0
  %2253 = vmatpush.bf16.xpose.msra.mxu0 0
  %2254 = vmatpush.bf16.xpose.msra.mxu0 0
  %2255 = vmatpush.bf16.xpose.msra.mxu0 0
  %2256 = vmatpush.bf16.xpose.msra.mxu0 0
  %2257 = vmatpush.bf16.xpose.msra.mxu0 %v2248
  %2258 = vmatmul.bf16.gmra.mxu0 %v2245
  %v2259 = vpop.f32.mrf.mxu0
  %v2260 = vadd.f32 0.0, %v2259
  %v2261 = vpop.f32.mrf.mxu0
  %v2262 = vadd.f32 0.0, %v2261
  %2263 = vdwg.mxu0
  %v2266 = vunpack.c.l.b16 %v2186
  %v2267 = vunpack.c.l.b16 %v2187
  %v2268 = vpack.c.b16 %v2267, %v2266
  %v2271 = vunpack.c.l.b16 %v2203
  %v2272 = vunpack.c.l.b16 %v2204
  %v2273 = vpack.c.b16 %v2272, %v2271
  %v2275 = vsel %vm73, %v2268, 0
  %v2278 = vsel %vm73, %v2273, 0
  %2280 = vmatpush.bf16.xpose.msra.mxu0 0
  %2281 = vmatpush.bf16.xpose.msra.mxu0 0
  %2282 = vmatpush.bf16.xpose.msra.mxu0 0
  %2283 = vmatpush.bf16.xpose.msra.mxu0 0
  %2284 = vmatpush.bf16.xpose.msra.mxu0 0
  %2285 = vmatpush.bf16.xpose.msra.mxu0 0
  %2286 = vmatpush.bf16.xpose.msra.mxu0 0
  %2287 = vmatpush.bf16.xpose.msra.mxu0 %v2278
  %2288 = vmatmul.bf16.gmra.mxu0 %v2275
  %v2289 = vpop.f32.mrf.mxu0
  %v2290 = vadd.f32 0.0, %v2289
  %v2291 = vpop.f32.mrf.mxu0
  %v2292 = vadd.f32 0.0, %v2291
  %2293 = vdwg.mxu0
  %v2296 = vunpack.c.l.b16 %v2188
  %v2297 = vunpack.c.l.b16 %v2189
  %v2298 = vpack.c.b16 %v2297, %v2296
  %v2301 = vunpack.c.l.b16 %v2205
  %v2302 = vunpack.c.l.b16 %v2206
  %v2303 = vpack.c.b16 %v2302, %v2301
  %v2305 = vsel %vm73, %v2298, 0
  %v2308 = vsel %vm73, %v2303, 0
  %2310 = vmatpush.bf16.xpose.msra.mxu0 0
  %2311 = vmatpush.bf16.xpose.msra.mxu0 0
  %2312 = vmatpush.bf16.xpose.msra.mxu0 0
  %2313 = vmatpush.bf16.xpose.msra.mxu0 0
  %2314 = vmatpush.bf16.xpose.msra.mxu0 0
  %2315 = vmatpush.bf16.xpose.msra.mxu0 0
  %2316 = vmatpush.bf16.xpose.msra.mxu0 0
  %2317 = vmatpush.bf16.xpose.msra.mxu0 %v2308
  %2318 = vmatmul.bf16.gmra.mxu0 %v2305
  %v2319 = vpop.f32.mrf.mxu0
  %v2320 = vadd.f32 0.0, %v2319
  %v2321 = vpop.f32.mrf.mxu0
  %v2322 = vadd.f32 0.0, %v2321
  %2323 = vdwg.mxu0
  %v2326 = vunpack.c.l.b16 %v2190
  %v2327 = vunpack.c.l.b16 %v2191
  %v2328 = vpack.c.b16 %v2327, %v2326
  %v2331 = vunpack.c.l.b16 %v2207
  %v2332 = vunpack.c.l.b16 %v2208
  %v2333 = vpack.c.b16 %v2332, %v2331
  %v2335 = vsel %vm73, %v2328, 0
  %v2338 = vsel %vm73, %v2333, 0
  %2340 = vmatpush.bf16.xpose.msra.mxu0 0
  %2341 = vmatpush.bf16.xpose.msra.mxu0 0
  %2342 = vmatpush.bf16.xpose.msra.mxu0 0
  %2343 = vmatpush.bf16.xpose.msra.mxu0 0
  %2344 = vmatpush.bf16.xpose.msra.mxu0 0
  %2345 = vmatpush.bf16.xpose.msra.mxu0 0
  %2346 = vmatpush.bf16.xpose.msra.mxu0 0
  %2347 = vmatpush.bf16.xpose.msra.mxu0 %v2338
  %2348 = vmatmul.bf16.gmra.mxu0 %v2335
  %v2349 = vpop.f32.mrf.mxu0
  %v2350 = vadd.f32 0.0, %v2349
  %v2351 = vpop.f32.mrf.mxu0
  %v2352 = vadd.f32 0.0, %v2351
  %2353 = vdwg.mxu0
  %v2356 = vunpack.c.l.b16 %v2192
  %v2357 = vunpack.c.l.b16 %v2193
  %v2358 = vpack.c.b16 %v2357, %v2356
  %v2361 = vunpack.c.l.b16 %v2209
  %v2362 = vunpack.c.l.b16 %v2210
  %v2363 = vpack.c.b16 %v2362, %v2361
  %v2365 = vsel %vm73, %v2358, 0
  %v2368 = vsel %vm73, %v2363, 0
  %2370 = vmatpush.bf16.xpose.msra.mxu0 0
  %2371 = vmatpush.bf16.xpose.msra.mxu0 0
  %2372 = vmatpush.bf16.xpose.msra.mxu0 0
  %2373 = vmatpush.bf16.xpose.msra.mxu0 0
  %2374 = vmatpush.bf16.xpose.msra.mxu0 0
  %2375 = vmatpush.bf16.xpose.msra.mxu0 0
  %2376 = vmatpush.bf16.xpose.msra.mxu0 0
  %2377 = vmatpush.bf16.xpose.msra.mxu0 %v2368
  %2378 = vmatmul.bf16.gmra.mxu0 %v2365
  %v2379 = vpop.f32.mrf.mxu0
  %v2380 = vadd.f32 0.0, %v2379
  %v2381 = vpop.f32.mrf.mxu0
  %v2382 = vadd.f32 0.0, %v2381
  %2383 = vdwg.mxu0
  %v2386 = vunpack.c.l.b16 %v2194
  %v2387 = vunpack.c.l.b16 %v2195
  %v2388 = vpack.c.b16 %v2387, %v2386
  %v2391 = vunpack.c.l.b16 %v2211
  %v2392 = vunpack.c.l.b16 %v2212
  %v2393 = vpack.c.b16 %v2392, %v2391
  %v2395 = vsel %vm73, %v2388, 0
  %v2398 = vsel %vm73, %v2393, 0
  %2400 = vmatpush.bf16.xpose.msra.mxu0 0
  %2401 = vmatpush.bf16.xpose.msra.mxu0 0
  %2402 = vmatpush.bf16.xpose.msra.mxu0 0
  %2403 = vmatpush.bf16.xpose.msra.mxu0 0
  %2404 = vmatpush.bf16.xpose.msra.mxu0 0
  %2405 = vmatpush.bf16.xpose.msra.mxu0 0
  %2406 = vmatpush.bf16.xpose.msra.mxu0 0
  %2407 = vmatpush.bf16.xpose.msra.mxu0 %v2398
  %2408 = vmatmul.bf16.gmra.mxu0 %v2395
  %v2409 = vpop.f32.mrf.mxu0
  %v2410 = vadd.f32 0.0, %v2409
  %v2411 = vpop.f32.mrf.mxu0
  %v2412 = vadd.f32 0.0, %v2411
  %2413 = vdwg.mxu0
  %v2416 = vunpack.c.l.b16 %v2196
  %v2417 = vunpack.c.l.b16 %v2197
  %v2418 = vpack.c.b16 %v2417, %v2416
  %v2421 = vunpack.c.l.b16 %v2213
  %v2422 = vunpack.c.l.b16 %v2214
  %v2423 = vpack.c.b16 %v2422, %v2421
  %v2425 = vsel %vm73, %v2418, 0
  %v2428 = vsel %vm73, %v2423, 0
  %2430 = vmatpush.bf16.xpose.msra.mxu0 0
  %2431 = vmatpush.bf16.xpose.msra.mxu0 0
  %2432 = vmatpush.bf16.xpose.msra.mxu0 0
  %2433 = vmatpush.bf16.xpose.msra.mxu0 0
  %2434 = vmatpush.bf16.xpose.msra.mxu0 0
  %2435 = vmatpush.bf16.xpose.msra.mxu0 0
  %2436 = vmatpush.bf16.xpose.msra.mxu0 0
  %2437 = vmatpush.bf16.xpose.msra.mxu0 %v2428
  %2438 = vmatmul.bf16.gmra.mxu0 %v2425
  %v2439 = vpop.f32.mrf.mxu0
  %v2440 = vadd.f32 0.0, %v2439
  %v2441 = vpop.f32.mrf.mxu0
  %v2442 = vadd.f32 0.0, %v2441
  %2443 = vdwg.mxu0
  %v2446 = vunpack.c.l.b16 %v2198
  %v2447 = vunpack.c.l.b16 %v2199
  %v2448 = vpack.c.b16 %v2447, %v2446
  %v2451 = vunpack.c.l.b16 %v2215
  %v2452 = vunpack.c.l.b16 %v2216
  %v2453 = vpack.c.b16 %v2452, %v2451
  %v2455 = vsel %vm73, %v2448, 0
  %v2458 = vsel %vm73, %v2453, 0
  %2460 = vmatpush.bf16.xpose.msra.mxu0 0
  %2461 = vmatpush.bf16.xpose.msra.mxu0 0
  %2462 = vmatpush.bf16.xpose.msra.mxu0 0
  %2463 = vmatpush.bf16.xpose.msra.mxu0 0
  %2464 = vmatpush.bf16.xpose.msra.mxu0 0
  %2465 = vmatpush.bf16.xpose.msra.mxu0 0
  %2466 = vmatpush.bf16.xpose.msra.mxu0 0
  %2467 = vmatpush.bf16.xpose.msra.mxu0 %v2458
  %2468 = vmatmul.bf16.gmra.mxu0 %v2455
  %v2469 = vpop.f32.mrf.mxu0
  %v2470 = vadd.f32 0.0, %v2469
  %v2471 = vpop.f32.mrf.mxu0
  %v2472 = vadd.f32 0.0, %v2471
  %2473 = vdwg.mxu0
  %v2474 = vmul.f32 %v2260, 0.35355338
  %v2475 = vmul.f32 %v2262, 0.35355338
  %v2476 = vmul.f32 %v2290, 0.35355338
  %v2477 = vmul.f32 %v2292, 0.35355338
  %v2478 = vmul.f32 %v2320, 0.35355338
  %v2479 = vmul.f32 %v2322, 0.35355338
  %v2480 = vmul.f32 %v2350, 0.35355338
  %v2481 = vmul.f32 %v2352, 0.35355338
  %v2482 = vmul.f32 %v2380, 0.35355338
  %v2483 = vmul.f32 %v2382, 0.35355338
  %v2484 = vmul.f32 %v2410, 0.35355338
  %v2485 = vmul.f32 %v2412, 0.35355338
  %v2486 = vmul.f32 %v2440, 0.35355338
  %v2487 = vmul.f32 %v2442, 0.35355338
  %v2488 = vmul.f32 %v2470, 0.35355338
  %v2489 = vmul.f32 %v2472, 0.35355338
  %v2490 = vsel %vm320, %v2474, -inf
  %2491 = vmax.xlane.f32.xlu0 %v2490
  %v2492 = vpop.xlane.xlu0 %2491
  %v2493 = vsel %vm320, %v2475, -inf
  %2494 = vmax.xlane.f32.xlu0 %v2493
  %v2495 = vpop.xlane.xlu0 %2494
  %v2496 = vsel %vm320, %v2476, -inf
  %2497 = vmax.xlane.f32.xlu0 %v2496
  %v2498 = vpop.xlane.xlu0 %2497
  %v2499 = vsel %vm320, %v2477, -inf
  %2500 = vmax.xlane.f32.xlu0 %v2499
  %v2501 = vpop.xlane.xlu0 %2500
  %v2502 = vsel %vm320, %v2478, -inf
  %2503 = vmax.xlane.f32.xlu0 %v2502
  %v2504 = vpop.xlane.xlu0 %2503
  %v2505 = vsel %vm320, %v2479, -inf
  %2506 = vmax.xlane.f32.xlu0 %v2505
  %v2507 = vpop.xlane.xlu0 %2506
  %v2508 = vsel %vm320, %v2480, -inf
  %2509 = vmax.xlane.f32.xlu0 %v2508
  %v2510 = vpop.xlane.xlu0 %2509
  %v2511 = vsel %vm320, %v2481, -inf
  %2512 = vmax.xlane.f32.xlu0 %v2511
  %v2513 = vpop.xlane.xlu0 %2512
  %v2514 = vsel %vm320, %v2482, -inf
  %2515 = vmax.xlane.f32.xlu0 %v2514
  %v2516 = vpop.xlane.xlu0 %2515
  %v2517 = vsel %vm320, %v2483, -inf
  %2518 = vmax.xlane.f32.xlu0 %v2517
  %v2519 = vpop.xlane.xlu0 %2518
  %v2520 = vsel %vm320, %v2484, -inf
  %2521 = vmax.xlane.f32.xlu0 %v2520
  %v2522 = vpop.xlane.xlu0 %2521
  %v2523 = vsel %vm320, %v2485, -inf
  %2524 = vmax.xlane.f32.xlu0 %v2523
  %v2525 = vpop.xlane.xlu0 %2524
  %v2526 = vsel %vm320, %v2486, -inf
  %2527 = vmax.xlane.f32.xlu0 %v2526
  %v2528 = vpop.xlane.xlu0 %2527
  %v2529 = vsel %vm320, %v2487, -inf
  %2530 = vmax.xlane.f32.xlu0 %v2529
  %v2531 = vpop.xlane.xlu0 %2530
  %v2532 = vsel %vm320, %v2488, -inf
  %2533 = vmax.xlane.f32.xlu0 %v2532
  %v2534 = vpop.xlane.xlu0 %2533
  %v2535 = vsel %vm320, %v2489, -inf
  %2536 = vmax.xlane.f32.xlu0 %v2535
  %v2537 = vpop.xlane.xlu0 %2536
  %v2538 = vsub.f32 %v2474, %v2492
  %v2539 = vsub.f32 %v2475, %v2495
  %v2540 = vsub.f32 %v2476, %v2498
  %v2541 = vsub.f32 %v2477, %v2501
  %v2542 = vsub.f32 %v2478, %v2504
  %v2543 = vsub.f32 %v2479, %v2507
  %v2544 = vsub.f32 %v2480, %v2510
  %v2545 = vsub.f32 %v2481, %v2513
  %v2546 = vsub.f32 %v2482, %v2516
  %v2547 = vsub.f32 %v2483, %v2519
  %v2548 = vsub.f32 %v2484, %v2522
  %v2549 = vsub.f32 %v2485, %v2525
  %v2550 = vsub.f32 %v2486, %v2528
  %v2551 = vsub.f32 %v2487, %v2531
  %v2552 = vsub.f32 %v2488, %v2534
  %v2553 = vsub.f32 %v2489, %v2537
  %v2554 = vmul.f32 %v2538, 1.442695
  %v2555 = vpow.pop %v2554
  %v2556 = vmul.f32 %v2539, 1.442695
  %v2557 = vpow.pop %v2556
  %v2558 = vmul.f32 %v2540, 1.442695
  %v2559 = vpow.pop %v2558
  %v2560 = vmul.f32 %v2541, 1.442695
  %v2561 = vpow.pop %v2560
  %v2562 = vmul.f32 %v2542, 1.442695
  %v2563 = vpow.pop %v2562
  %v2564 = vmul.f32 %v2543, 1.442695
  %v2565 = vpow.pop %v2564
  %v2566 = vmul.f32 %v2544, 1.442695
  %v2567 = vpow.pop %v2566
  %v2568 = vmul.f32 %v2545, 1.442695
  %v2569 = vpow.pop %v2568
  %v2570 = vmul.f32 %v2546, 1.442695
  %v2571 = vpow.pop %v2570
  %v2572 = vmul.f32 %v2547, 1.442695
  %v2573 = vpow.pop %v2572
  %v2574 = vmul.f32 %v2548, 1.442695
  %v2575 = vpow.pop %v2574
  %v2576 = vmul.f32 %v2549, 1.442695
  %v2577 = vpow.pop %v2576
  %v2578 = vmul.f32 %v2550, 1.442695
  %v2579 = vpow.pop %v2578
  %v2580 = vmul.f32 %v2551, 1.442695
  %v2581 = vpow.pop %v2580
  %v2582 = vmul.f32 %v2552, 1.442695
  %v2583 = vpow.pop %v2582
  %v2584 = vmul.f32 %v2553, 1.442695
  %v2585 = vpow.pop %v2584
  %v2586 = vsel %vm320, %v2555, 0.0
  %2587 = vadd.xlane.f32.xlu0 %v2586
  %v2588 = vpop.xlane.xlu0 %2587
  %v2589 = vsel %vm320, %v2557, 0.0
  %2590 = vadd.xlane.f32.xlu0 %v2589
  %v2591 = vpop.xlane.xlu0 %2590
  %v2592 = vsel %vm320, %v2559, 0.0
  %2593 = vadd.xlane.f32.xlu0 %v2592
  %v2594 = vpop.xlane.xlu0 %2593
  %v2595 = vsel %vm320, %v2561, 0.0
  %2596 = vadd.xlane.f32.xlu0 %v2595
  %v2597 = vpop.xlane.xlu0 %2596
  %v2598 = vsel %vm320, %v2563, 0.0
  %2599 = vadd.xlane.f32.xlu0 %v2598
  %v2600 = vpop.xlane.xlu0 %2599
  %v2601 = vsel %vm320, %v2565, 0.0
  %2602 = vadd.xlane.f32.xlu0 %v2601
  %v2603 = vpop.xlane.xlu0 %2602
  %v2604 = vsel %vm320, %v2567, 0.0
  %2605 = vadd.xlane.f32.xlu0 %v2604
  %v2606 = vpop.xlane.xlu0 %2605
  %v2607 = vsel %vm320, %v2569, 0.0
  %2608 = vadd.xlane.f32.xlu0 %v2607
  %v2609 = vpop.xlane.xlu0 %2608
  %v2610 = vsel %vm320, %v2571, 0.0
  %2611 = vadd.xlane.f32.xlu0 %v2610
  %v2612 = vpop.xlane.xlu0 %2611
  %v2613 = vsel %vm320, %v2573, 0.0
  %2614 = vadd.xlane.f32.xlu0 %v2613
  %v2615 = vpop.xlane.xlu0 %2614
  %v2616 = vsel %vm320, %v2575, 0.0
  %2617 = vadd.xlane.f32.xlu0 %v2616
  %v2618 = vpop.xlane.xlu0 %2617
  %v2619 = vsel %vm320, %v2577, 0.0
  %2620 = vadd.xlane.f32.xlu0 %v2619
  %v2621 = vpop.xlane.xlu0 %2620
  %v2622 = vsel %vm320, %v2579, 0.0
  %2623 = vadd.xlane.f32.xlu0 %v2622
  %v2624 = vpop.xlane.xlu0 %2623
  %v2625 = vsel %vm320, %v2581, 0.0
  %2626 = vadd.xlane.f32.xlu0 %v2625
  %v2627 = vpop.xlane.xlu0 %2626
  %v2628 = vsel %vm320, %v2583, 0.0
  %2629 = vadd.xlane.f32.xlu0 %v2628
  %v2630 = vpop.xlane.xlu0 %2629
  %v2631 = vsel %vm320, %v2585, 0.0
  %2632 = vadd.xlane.f32.xlu0 %v2631
  %v2633 = vpop.xlane.xlu0 %2632
  %v2634 = vrcp.pop %v2588
  %v2635 = vrcp.pop %v2591
  %v2636 = vrcp.pop %v2594
  %v2637 = vrcp.pop %v2597
  %v2638 = vrcp.pop %v2600
  %v2639 = vrcp.pop %v2603
  %v2640 = vrcp.pop %v2606
  %v2641 = vrcp.pop %v2609
  %v2642 = vrcp.pop %v2612
  %v2643 = vrcp.pop %v2615
  %v2644 = vrcp.pop %v2618
  %v2645 = vrcp.pop %v2621
  %v2646 = vrcp.pop %v2624
  %v2647 = vrcp.pop %v2627
  %v2648 = vrcp.pop %v2630
  %v2649 = vrcp.pop %v2633
  %v2650 = vmul.f32 %v2555, %v2634
  %v2651 = vmul.f32 %v2557, %v2635
  %v2652 = vmul.f32 %v2559, %v2636
  %v2653 = vmul.f32 %v2561, %v2637
  %v2654 = vmul.f32 %v2563, %v2638
  %v2655 = vmul.f32 %v2565, %v2639
  %v2656 = vmul.f32 %v2567, %v2640
  %v2657 = vmul.f32 %v2569, %v2641
  %v2658 = vmul.f32 %v2571, %v2642
  %v2659 = vmul.f32 %v2573, %v2643
  %v2660 = vmul.f32 %v2575, %v2644
  %v2661 = vmul.f32 %v2577, %v2645
  %v2662 = vmul.f32 %v2579, %v2646
  %v2663 = vmul.f32 %v2581, %v2647
  %v2664 = vmul.f32 %v2583, %v2648
  %v2665 = vmul.f32 %v2585, %v2649
  %v2666 = vpack.c.bf16 %v2650, %v2650
  %v2667 = vpack.c.bf16 %v2651, %v2651
  %v2668 = vpack.c.bf16 %v2652, %v2652
  %v2669 = vpack.c.bf16 %v2653, %v2653
  %v2670 = vpack.c.bf16 %v2654, %v2654
  %v2671 = vpack.c.bf16 %v2655, %v2655
  %v2672 = vpack.c.bf16 %v2656, %v2656
  %v2673 = vpack.c.bf16 %v2657, %v2657
  %v2674 = vpack.c.bf16 %v2658, %v2658
  %v2675 = vpack.c.bf16 %v2659, %v2659
  %v2676 = vpack.c.bf16 %v2660, %v2660
  %v2677 = vpack.c.bf16 %v2661, %v2661
  %v2678 = vpack.c.bf16 %v2662, %v2662
  %v2679 = vpack.c.bf16 %v2663, %v2663
  %v2680 = vpack.c.bf16 %v2664, %v2664
  %v2681 = vpack.c.bf16 %v2665, %v2665
  %v2684 = vunpack.c.l.b16 %v2666
  %v2685 = vunpack.c.l.b16 %v2667
  %v2686 = vpack.c.b16 %v2685, %v2684
  %v2689 = vunpack.c.l.b16 %v2218
  %v2690 = vunpack.c.l.b16 %v2219
  %v2691 = vpack.c.b16 %v2690, %v2689
  %v2694 = vsel %vm320, %v2686, 0
  %2696 = vmatpush.bf16.msra.mxu0 0
  %2697 = vmatpush.bf16.msra.mxu0 0
  %2698 = vmatpush.bf16.msra.mxu0 0
  %2699 = vmatpush.bf16.msra.mxu0 0
  %2700 = vmatpush.bf16.msra.mxu0 0
  %2701 = vmatpush.bf16.msra.mxu0 0
  %2702 = vmatpush.bf16.msra.mxu0 0
  %2703 = vmatpush.bf16.msra.mxu0 %v2691
  %2704 = vmatmul.bf16.gmra.mxu0 %v2694
  %v2705 = vpop.f32.mrf.mxu0
  %v2706 = vadd.f32 0.0, %v2705
  %v2707 = vpop.f32.mrf.mxu0
  %v2708 = vadd.f32 0.0, %v2707
  %2709 = vdwg.mxu0
  %v2712 = vunpack.c.l.b16 %v2668
  %v2713 = vunpack.c.l.b16 %v2669
  %v2714 = vpack.c.b16 %v2713, %v2712
  %v2717 = vunpack.c.l.b16 %v2220
  %v2718 = vunpack.c.l.b16 %v2221
  %v2719 = vpack.c.b16 %v2718, %v2717
  %v2722 = vsel %vm320, %v2714, 0
  %2724 = vmatpush.bf16.msra.mxu0 0
  %2725 = vmatpush.bf16.msra.mxu0 0
  %2726 = vmatpush.bf16.msra.mxu0 0
  %2727 = vmatpush.bf16.msra.mxu0 0
  %2728 = vmatpush.bf16.msra.mxu0 0
  %2729 = vmatpush.bf16.msra.mxu0 0
  %2730 = vmatpush.bf16.msra.mxu0 0
  %2731 = vmatpush.bf16.msra.mxu0 %v2719
  %2732 = vmatmul.bf16.gmra.mxu0 %v2722
  %v2733 = vpop.f32.mrf.mxu0
  %v2734 = vadd.f32 0.0, %v2733
  %v2735 = vpop.f32.mrf.mxu0
  %v2736 = vadd.f32 0.0, %v2735
  %2737 = vdwg.mxu0
  %v2740 = vunpack.c.l.b16 %v2670
  %v2741 = vunpack.c.l.b16 %v2671
  %v2742 = vpack.c.b16 %v2741, %v2740
  %v2745 = vunpack.c.l.b16 %v2222
  %v2746 = vunpack.c.l.b16 %v2223
  %v2747 = vpack.c.b16 %v2746, %v2745
  %v2750 = vsel %vm320, %v2742, 0
  %2752 = vmatpush.bf16.msra.mxu0 0
  %2753 = vmatpush.bf16.msra.mxu0 0
  %2754 = vmatpush.bf16.msra.mxu0 0
  %2755 = vmatpush.bf16.msra.mxu0 0
  %2756 = vmatpush.bf16.msra.mxu0 0
  %2757 = vmatpush.bf16.msra.mxu0 0
  %2758 = vmatpush.bf16.msra.mxu0 0
  %2759 = vmatpush.bf16.msra.mxu0 %v2747
  %2760 = vmatmul.bf16.gmra.mxu0 %v2750
  %v2761 = vpop.f32.mrf.mxu0
  %v2762 = vadd.f32 0.0, %v2761
  %v2763 = vpop.f32.mrf.mxu0
  %v2764 = vadd.f32 0.0, %v2763
  %2765 = vdwg.mxu0
  %v2768 = vunpack.c.l.b16 %v2672
  %v2769 = vunpack.c.l.b16 %v2673
  %v2770 = vpack.c.b16 %v2769, %v2768
  %v2773 = vunpack.c.l.b16 %v2224
  %v2774 = vunpack.c.l.b16 %v2225
  %v2775 = vpack.c.b16 %v2774, %v2773
  %v2778 = vsel %vm320, %v2770, 0
  %2780 = vmatpush.bf16.msra.mxu0 0
  %2781 = vmatpush.bf16.msra.mxu0 0
  %2782 = vmatpush.bf16.msra.mxu0 0
  %2783 = vmatpush.bf16.msra.mxu0 0
  %2784 = vmatpush.bf16.msra.mxu0 0
  %2785 = vmatpush.bf16.msra.mxu0 0
  %2786 = vmatpush.bf16.msra.mxu0 0
  %2787 = vmatpush.bf16.msra.mxu0 %v2775
  %2788 = vmatmul.bf16.gmra.mxu0 %v2778
  %v2789 = vpop.f32.mrf.mxu0
  %v2790 = vadd.f32 0.0, %v2789
  %v2791 = vpop.f32.mrf.mxu0
  %v2792 = vadd.f32 0.0, %v2791
  %2793 = vdwg.mxu0
  %v2796 = vunpack.c.l.b16 %v2674
  %v2797 = vunpack.c.l.b16 %v2675
  %v2798 = vpack.c.b16 %v2797, %v2796
  %v2801 = vunpack.c.l.b16 %v2226
  %v2802 = vunpack.c.l.b16 %v2227
  %v2803 = vpack.c.b16 %v2802, %v2801
  %v2806 = vsel %vm320, %v2798, 0
  %2808 = vmatpush.bf16.msra.mxu0 0
  %2809 = vmatpush.bf16.msra.mxu0 0
  %2810 = vmatpush.bf16.msra.mxu0 0
  %2811 = vmatpush.bf16.msra.mxu0 0
  %2812 = vmatpush.bf16.msra.mxu0 0
  %2813 = vmatpush.bf16.msra.mxu0 0
  %2814 = vmatpush.bf16.msra.mxu0 0
  %2815 = vmatpush.bf16.msra.mxu0 %v2803
  %2816 = vmatmul.bf16.gmra.mxu0 %v2806
  %v2817 = vpop.f32.mrf.mxu0
  %v2818 = vadd.f32 0.0, %v2817
  %v2819 = vpop.f32.mrf.mxu0
  %v2820 = vadd.f32 0.0, %v2819
  %2821 = vdwg.mxu0
  %v2824 = vunpack.c.l.b16 %v2676
  %v2825 = vunpack.c.l.b16 %v2677
  %v2826 = vpack.c.b16 %v2825, %v2824
  %v2829 = vunpack.c.l.b16 %v2228
  %v2830 = vunpack.c.l.b16 %v2229
  %v2831 = vpack.c.b16 %v2830, %v2829
  %v2834 = vsel %vm320, %v2826, 0
  %2836 = vmatpush.bf16.msra.mxu0 0
  %2837 = vmatpush.bf16.msra.mxu0 0
  %2838 = vmatpush.bf16.msra.mxu0 0
  %2839 = vmatpush.bf16.msra.mxu0 0
  %2840 = vmatpush.bf16.msra.mxu0 0
  %2841 = vmatpush.bf16.msra.mxu0 0
  %2842 = vmatpush.bf16.msra.mxu0 0
  %2843 = vmatpush.bf16.msra.mxu0 %v2831
  %2844 = vmatmul.bf16.gmra.mxu0 %v2834
  %v2845 = vpop.f32.mrf.mxu0
  %v2846 = vadd.f32 0.0, %v2845
  %v2847 = vpop.f32.mrf.mxu0
  %v2848 = vadd.f32 0.0, %v2847
  %2849 = vdwg.mxu0
  %v2852 = vunpack.c.l.b16 %v2678
  %v2853 = vunpack.c.l.b16 %v2679
  %v2854 = vpack.c.b16 %v2853, %v2852
  %v2857 = vunpack.c.l.b16 %v2230
  %v2858 = vunpack.c.l.b16 %v2231
  %v2859 = vpack.c.b16 %v2858, %v2857
  %v2862 = vsel %vm320, %v2854, 0
  %2864 = vmatpush.bf16.msra.mxu0 0
  %2865 = vmatpush.bf16.msra.mxu0 0
  %2866 = vmatpush.bf16.msra.mxu0 0
  %2867 = vmatpush.bf16.msra.mxu0 0
  %2868 = vmatpush.bf16.msra.mxu0 0
  %2869 = vmatpush.bf16.msra.mxu0 0
  %2870 = vmatpush.bf16.msra.mxu0 0
  %2871 = vmatpush.bf16.msra.mxu0 %v2859
  %2872 = vmatmul.bf16.gmra.mxu0 %v2862
  %v2873 = vpop.f32.mrf.mxu0
  %v2874 = vadd.f32 0.0, %v2873
  %v2875 = vpop.f32.mrf.mxu0
  %v2876 = vadd.f32 0.0, %v2875
  %2877 = vdwg.mxu0
  %v2880 = vunpack.c.l.b16 %v2680
  %v2881 = vunpack.c.l.b16 %v2681
  %v2882 = vpack.c.b16 %v2881, %v2880
  %v2885 = vunpack.c.l.b16 %v2232
  %v2886 = vunpack.c.l.b16 %v2233
  %v2887 = vpack.c.b16 %v2886, %v2885
  %v2890 = vsel %vm320, %v2882, 0
  %2892 = vmatpush.bf16.msra.mxu0 0
  %2893 = vmatpush.bf16.msra.mxu0 0
  %2894 = vmatpush.bf16.msra.mxu0 0
  %2895 = vmatpush.bf16.msra.mxu0 0
  %2896 = vmatpush.bf16.msra.mxu0 0
  %2897 = vmatpush.bf16.msra.mxu0 0
  %2898 = vmatpush.bf16.msra.mxu0 0
  %2899 = vmatpush.bf16.msra.mxu0 %v2887
  %2900 = vmatmul.bf16.gmra.mxu0 %v2890
  %v2901 = vpop.f32.mrf.mxu0
  %v2902 = vadd.f32 0.0, %v2901
  %v2903 = vpop.f32.mrf.mxu0
  %v2904 = vadd.f32 0.0, %v2903
  %2905 = vdwg.mxu0
  %2922 = vrot.lane.b32.xlu0 %v1260, 8
  %v2923 = vpop.permute.xlu0 %2922
  %2924 = vrot.lane.b32.xlu0 %v1262, 8
  %v2925 = vpop.permute.xlu0 %2924
  %2926 = vrot.lane.b32.xlu0 %v1288, 8
  %v2927 = vpop.permute.xlu0 %2926
  %2928 = vrot.lane.b32.xlu0 %v1290, 8
  %v2929 = vpop.permute.xlu0 %2928
  %2930 = vrot.lane.b32.xlu0 %v1316, 8
  %v2931 = vpop.permute.xlu0 %2930
  %2932 = vrot.lane.b32.xlu0 %v1318, 8
  %v2933 = vpop.permute.xlu0 %2932
  %2934 = vrot.lane.b32.xlu0 %v1344, 8
  %v2935 = vpop.permute.xlu0 %2934
  %2936 = vrot.lane.b32.xlu0 %v1346, 8
  %v2937 = vpop.permute.xlu0 %2936
  %2938 = vrot.lane.b32.xlu0 %v1372, 8
  %v2939 = vpop.permute.xlu0 %2938
  %2940 = vrot.lane.b32.xlu0 %v1374, 8
  %v2941 = vpop.permute.xlu0 %2940
  %2942 = vrot.lane.b32.xlu0 %v1400, 8
  %v2943 = vpop.permute.xlu0 %2942
  %2944 = vrot.lane.b32.xlu0 %v1402, 8
  %v2945 = vpop.permute.xlu0 %2944
  %2946 = vrot.lane.b32.xlu0 %v1428, 8
  %v2947 = vpop.permute.xlu0 %2946
  %2948 = vrot.lane.b32.xlu0 %v1430, 8
  %v2949 = vpop.permute.xlu0 %2948
  %2950 = vrot.lane.b32.xlu0 %v1456, 8
  %v2951 = vpop.permute.xlu0 %2950
  %2952 = vrot.lane.b32.xlu0 %v1458, 8
  %v2953 = vpop.permute.xlu0 %2952
  %2986 = vrot.lane.b32.xlu0 %v1983, 16
  %v2987 = vpop.permute.xlu0 %2986
  %2988 = vrot.lane.b32.xlu0 %v1985, 16
  %v2989 = vpop.permute.xlu0 %2988
  %2990 = vrot.lane.b32.xlu0 %v2011, 16
  %v2991 = vpop.permute.xlu0 %2990
  %2992 = vrot.lane.b32.xlu0 %v2013, 16
  %v2993 = vpop.permute.xlu0 %2992
  %2994 = vrot.lane.b32.xlu0 %v2039, 16
  %v2995 = vpop.permute.xlu0 %2994
  %2996 = vrot.lane.b32.xlu0 %v2041, 16
  %v2997 = vpop.permute.xlu0 %2996
  %2998 = vrot.lane.b32.xlu0 %v2067, 16
  %v2999 = vpop.permute.xlu0 %2998
  %3000 = vrot.lane.b32.xlu0 %v2069, 16
  %v3001 = vpop.permute.xlu0 %3000
  %3002 = vrot.lane.b32.xlu0 %v2095, 16
  %v3003 = vpop.permute.xlu0 %3002
  %3004 = vrot.lane.b32.xlu0 %v2097, 16
  %v3005 = vpop.permute.xlu0 %3004
  %3006 = vrot.lane.b32.xlu0 %v2123, 16
  %v3007 = vpop.permute.xlu0 %3006
  %3008 = vrot.lane.b32.xlu0 %v2125, 16
  %v3009 = vpop.permute.xlu0 %3008
  %3010 = vrot.lane.b32.xlu0 %v2151, 16
  %v3011 = vpop.permute.xlu0 %3010
  %3012 = vrot.lane.b32.xlu0 %v2153, 16
  %v3013 = vpop.permute.xlu0 %3012
  %3014 = vrot.lane.b32.xlu0 %v2179, 16
  %v3015 = vpop.permute.xlu0 %3014
  %3016 = vrot.lane.b32.xlu0 %v2181, 16
  %v3017 = vpop.permute.xlu0 %3016
  %3050 = vrot.lane.b32.xlu0 %v2706, 24
  %v3051 = vpop.permute.xlu0 %3050
  %3052 = vrot.lane.b32.xlu0 %v2708, 24
  %v3053 = vpop.permute.xlu0 %3052
  %3054 = vrot.lane.b32.xlu0 %v2734, 24
  %v3055 = vpop.permute.xlu0 %3054
  %3056 = vrot.lane.b32.xlu0 %v2736, 24
  %v3057 = vpop.permute.xlu0 %3056
  %3058 = vrot.lane.b32.xlu0 %v2762, 24
  %v3059 = vpop.permute.xlu0 %3058
  %3060 = vrot.lane.b32.xlu0 %v2764, 24
  %v3061 = vpop.permute.xlu0 %3060
  %3062 = vrot.lane.b32.xlu0 %v2790, 24
  %v3063 = vpop.permute.xlu0 %3062
  %3064 = vrot.lane.b32.xlu0 %v2792, 24
  %v3065 = vpop.permute.xlu0 %3064
  %3066 = vrot.lane.b32.xlu0 %v2818, 24
  %v3067 = vpop.permute.xlu0 %3066
  %3068 = vrot.lane.b32.xlu0 %v2820, 24
  %v3069 = vpop.permute.xlu0 %3068
  %3070 = vrot.lane.b32.xlu0 %v2846, 24
  %v3071 = vpop.permute.xlu0 %3070
  %3072 = vrot.lane.b32.xlu0 %v2848, 24
  %v3073 = vpop.permute.xlu0 %3072
  %3074 = vrot.lane.b32.xlu0 %v2874, 24
  %v3075 = vpop.permute.xlu0 %3074
  %3076 = vrot.lane.b32.xlu0 %v2876, 24
  %v3077 = vpop.permute.xlu0 %3076
  %3078 = vrot.lane.b32.xlu0 %v2902, 24
  %v3079 = vpop.permute.xlu0 %3078
  %3080 = vrot.lane.b32.xlu0 %v2904, 24
  %v3081 = vpop.permute.xlu0 %3080
  %v3098 = vsel %vm73, %v537, %v2923
  %v3099 = vsel %vm73, %v539, %v2925
  %v3100 = vsel %vm73, %v565, %v2927
  %v3101 = vsel %vm73, %v567, %v2929
  %v3102 = vsel %vm73, %v593, %v2931
  %v3103 = vsel %vm73, %v595, %v2933
  %v3104 = vsel %vm73, %v621, %v2935
  %v3105 = vsel %vm73, %v623, %v2937
  %v3106 = vsel %vm73, %v649, %v2939
  %v3107 = vsel %vm73, %v651, %v2941
  %v3108 = vsel %vm73, %v677, %v2943
  %v3109 = vsel %vm73, %v679, %v2945
  %v3110 = vsel %vm73, %v705, %v2947
  %v3111 = vsel %vm73, %v707, %v2949
  %v3112 = vsel %vm73, %v733, %v2951
  %v3113 = vsel %vm73, %v735, %v2953
  %v3114 = vsel %vm320, %v3098, %v2987
  %v3115 = vsel %vm320, %v3099, %v2989
  %v3116 = vsel %vm320, %v3100, %v2991
  %v3117 = vsel %vm320, %v3101, %v2993
  %v3118 = vsel %vm320, %v3102, %v2995
  %v3119 = vsel %vm320, %v3103, %v2997
  %v3120 = vsel %vm320, %v3104, %v2999
  %v3121 = vsel %vm320, %v3105, %v3001
  %v3122 = vsel %vm320, %v3106, %v3003
  %v3123 = vsel %vm320, %v3107, %v3005
  %v3124 = vsel %vm320, %v3108, %v3007
  %v3125 = vsel %vm320, %v3109, %v3009
  %v3126 = vsel %vm320, %v3110, %v3011
  %v3127 = vsel %vm320, %v3111, %v3013
  %v3128 = vsel %vm320, %v3112, %v3015
  %v3129 = vsel %vm320, %v3113, %v3017
  %vm3130 = vcmask 195584
  %v3131 = vsel %vm3130, %v3114, %v3051
  %v3132 = vsel %vm3130, %v3115, %v3053
  %v3133 = vsel %vm3130, %v3116, %v3055
  %v3134 = vsel %vm3130, %v3117, %v3057
  %v3135 = vsel %vm3130, %v3118, %v3059
  %v3136 = vsel %vm3130, %v3119, %v3061
  %v3137 = vsel %vm3130, %v3120, %v3063
  %v3138 = vsel %vm3130, %v3121, %v3065
  %v3139 = vsel %vm3130, %v3122, %v3067
  %v3140 = vsel %vm3130, %v3123, %v3069
  %v3141 = vsel %vm3130, %v3124, %v3071
  %v3142 = vsel %vm3130, %v3125, %v3073
  %v3143 = vsel %vm3130, %v3126, %v3075
  %v3144 = vsel %vm3130, %v3127, %v3077
  %v3145 = vsel %vm3130, %v3128, %v3079
  %v3146 = vsel %vm3130, %v3129, %v3081
  %vm3147 = vcmask 261120
  %3148 = vst.msk [vmem:[%s3] sm:$0xff] %vm3147, %v3131
  %3149 = vst.msk [vmem:[%s3 + $0x8] sm:$0xff] %vm3147, %v3132
  %3150 = vst.msk [vmem:[%s3 + $0x10] sm:$0xff] %vm3147, %v3133
  %3151 = vst.msk [vmem:[%s3 + $0x18] sm:$0xff] %vm3147, %v3134
  %3152 = vst.msk [vmem:[%s3 + $0x20] sm:$0xff] %vm3147, %v3135
  %3153 = vst.msk [vmem:[%s3 + $0x28] sm:$0xff] %vm3147, %v3136
  %3154 = vst.msk [vmem:[%s3 + $0x30] sm:$0xff] %vm3147, %v3137
  %3155 = vst.msk [vmem:[%s3 + $0x38] sm:$0xff] %vm3147, %v3138
  %3156 = vst.msk [vmem:[%s3 + $0x40] sm:$0xff] %vm3147, %v3139
  %3157 = vst.msk [vmem:[%s3 + $0x48] sm:$0xff] %vm3147, %v3140
  %3158 = vst.msk [vmem:[%s3 + $0x50] sm:$0xff] %vm3147, %v3141
  %3159 = vst.msk [vmem:[%s3 + $0x58] sm:$0xff] %vm3147, %v3142
  %3160 = vst.msk [vmem:[%s3 + $0x60] sm:$0xff] %vm3147, %v3143
  %3161 = vst.msk [vmem:[%s3 + $0x68] sm:$0xff] %vm3147, %v3144
  %3162 = vst.msk [vmem:[%s3 + $0x70] sm:$0xff] %vm3147, %v3145
  %3163 = vst.msk [vmem:[%s3 + $0x78] sm:$0xff] %vm3147, %v3146
  // Predicated region
  $region14: #{_lambda_.9} parent=0 // pred_check
    _
  $region15: #{_lambda_.9} parent=0 // pred_check_branch
    %3165 = sbr.rel (0) target = $region17
  $region16: #{_lambda_.9} parent=0 // pred_region
    _
  $region17: #{_lambda_.9} parent=0 // pred_fallthru
    _
  // Predicated region
  $region18: #{_lambda_.9} parent=0 // pred_check
    _
  $region19: #{_lambda_.9} parent=0 // pred_check_branch
    %3167 = sbr.rel (0) target = $region21
  $region20: #{_lambda_.9} parent=0 // pred_region
    _
  $region21: #{_lambda_.9} parent=0 // pred_fallthru
    _

</llo_original>
